<compile_context>
chip_gen: v7x
topology: tpu7x:2x2x1
jax: 0.10.0
libtpu: 0.0.40
codegen_flags: <defaults>
</compile_context>

<pallas_src>
import math
from functools import partial

import jax
import jax.numpy as jnp
from jax import lax
from jax.experimental import pallas as pl
from jax.experimental.pallas import tpu as pltpu

# ----------------------------- configuration --------------------------------
C, H, W = 4, 16, 16              # feature map (CHW, N=1 squeezed)
IMG_W, IMG_H = 32.0, 32.0        # image_shape = (w, h)
SPATIAL_SCALE = H / IMG_H        # feature stride^-1
P = 7                            # RoIAlign output size
SAMPLING = 2                     # RoIAlign sampling_ratio
N_ROI = 16                       # number of proposals (small demo size)
ROI_BLOCK = 8                    # ROIs per grid step (8-row aligned blocks)
HIDDEN = 32
NUM_CLASSES = 3
REG_WEIGHTS = (10.0, 10.0, 5.0, 5.0)
SCORE_THRESH = 0.1               # module uses `score >= score_thresh`
NMS_THRESH = 0.6
NUM_DETECTIONS = 4
MIN_SIZE = 1.0
BBOX_CLIP = math.log(1000.0 / 16.0)
OUT_W = 128                      # lane-dense padded output width (>= 5*K)


# --------------------- glue: separable RoIAlign weights ---------------------
def _lin_weight_matrix(coords, size):
    """coords: (N, M) sample positions -> (N, M, size) bilinear weight rows."""
    valid = (coords >= -1.0) & (coords <= float(size))
    c = jnp.clip(coords, 0.0, float(size) - 1.0)
    low = jnp.floor(c)
    frac = c - low
    low_i = low.astype(jnp.int32)
    high_i = jnp.minimum(low_i + 1, size - 1)
    grid = jnp.arange(size, dtype=jnp.int32)
    w = ((grid[None, None, :] == low_i[..., None]).astype(jnp.float32) * (1.0 - frac)[..., None]
         + (grid[None, None, :] == high_i[..., None]).astype(jnp.float32) * frac[..., None])
    return w * valid[..., None].astype(jnp.float32)


def make_interp_weights(proposal, spatial_scale, pool, samples, fh, fw):
    """Per-ROI separable interpolation matrices Wy (N,P,H), Wx (N,P,W).
    # TODO(synk): matches legacy aligned=False roi_align (no -0.5 pixel offset)."""
    n = proposal.shape[0]
    x0 = proposal[:, 0] * spatial_scale
    y0 = proposal[:, 1] * spatial_scale
    x1 = proposal[:, 2] * spatial_scale
    y1 = proposal[:, 3] * spatial_scale
    roi_w = jnp.maximum(x1 - x0, 1.0)
    roi_h = jnp.maximum(y1 - y0, 1.0)
    bin_w = roi_w / pool
    bin_h = roi_h / pool
    k = (jnp.arange(samples, dtype=jnp.float32) + 0.5) / samples      # (s,)
    i = jnp.arange(pool, dtype=jnp.float32)                           # (P,)
    ys = y0[:, None, None] + (i[None, :, None] + k[None, None, :]) * bin_h[:, None, None]
    xs = x0[:, None, None] + (i[None, :, None] + k[None, None, :]) * bin_w[:, None, None]
    wy = _lin_weight_matrix(ys.reshape(n, pool * samples), fh)
    wy = wy.reshape(n, pool, samples, fh).sum(2) / samples
    wx = _lin_weight_matrix(xs.reshape(n, pool * samples), fw)
    wx = wx.reshape(n, pool, samples, fw).sum(2) / samples
    return wy, wx


# --------- fused Pallas kernel: (RoIAlign+fc1) + fc2 + head + decode ---------
def _make_fused_kernel(img_w, img_h):
    k = NUM_CLASSES
    inv_wx = 1.0 / float(REG_WEIGHTS[0])
    inv_wy = 1.0 / float(REG_WEIGHTS[1])
    inv_ww = 1.0 / float(REG_WEIGHTS[2])
    inv_wh = 1.0 / float(REG_WEIGHTS[3])

    def kernel(wfull_ref, a_ref, w2_ref, whead_ref, b1_ref, b2_ref, bhead_ref,
               prop_ref, out_ref):
        # ---- RoIAlign + fc1 (channel fold + spatial sum) fused: ONE MXU matmul
        # h1_pre[n, h] = sum_{pp,hw} wfull[n, pp*HW + hw] * A[pp*HW + hw, h]
        # Operands are bf16; accumulation is f32.
        h1 = jnp.dot(wfull_ref[...], a_ref[...],
                     preferred_element_type=jnp.float32)              # (TR, HID)
        h1 = jnp.maximum(h1 + b1_ref[...], 0.0)

        # ---- fc2 + merged cls/bbox head (wc|wb packed column-wise) ----
        h2 = jnp.maximum(
            jnp.dot(h1, w2_ref[...], preferred_element_type=jnp.float32)
            + b2_ref[...], 0.0)                                       # (TR, HID)
        head = (jnp.dot(h2, whead_ref[...], preferred_element_type=jnp.float32)
                + bhead_ref[...])                                     # (TR, 5K)
        logit = head[:, 0:k]                                          # (TR, K)
        breg = head[:, k:5 * k]                                       # [dx|dy|dw|dh]

        # ---- softmax over classes (f32 VPU; reciprocal on the EUP) ----
        m = jnp.max(logit, axis=-1, keepdims=True)
        e = jnp.exp(logit - m)
        prob = e * pl.reciprocal(jnp.sum(e, axis=-1, keepdims=True), approx=True)

        # ---- BoxCoder.decode + process_box (clip, min-size) + score mask ----
        prop = prop_ref[...]                                          # (TR, 4)
        pw = prop[:, 2:3] - prop[:, 0:1]
        ph = prop[:, 3:4] - prop[:, 1:2]
        cx = prop[:, 0:1] + 0.5 * pw
        cy = prop[:, 1:2] + 0.5 * ph

        dx = breg[:, 0:k] * inv_wx
        dy = breg[:, k:2 * k] * inv_wy
        dw = jnp.minimum(breg[:, 2 * k:3 * k] * inv_ww, BBOX_CLIP)
        dh = jnp.minimum(breg[:, 3 * k:4 * k] * inv_wh, BBOX_CLIP)

        pcx = dx * pw + cx
        pcy = dy * ph + cy
        pbw = jnp.exp(dw) * pw
        pbh = jnp.exp(dh) * ph

        x0 = jnp.clip(pcx - 0.5 * pbw, 0.0, img_w)
        y0 = jnp.clip(pcy - 0.5 * pbh, 0.0, img_h)
        x1 = jnp.clip(pcx + 0.5 * pbw, 0.0, img_w)
        y1 = jnp.clip(pcy + 0.5 * pbh, 0.0, img_h)

        keep = ((prob >= SCORE_THRESH)
                & ((x1 - x0) >= MIN_SIZE)
                & ((y1 - y0) >= MIN_SIZE))
        masked = jnp.where(keep, prob, -jnp.inf)

        # ---- single lane-dense store: [scores | x0 | y0 | x1 | y1 | 0-pad] ----
        rows = masked.shape[0]
        pad = jnp.zeros((rows, OUT_W - 5 * k), jnp.float32)
        out_ref[...] = jnp.concatenate([masked, x0, y0, x1, y1, pad], axis=-1)

    return kernel


# -------------------- plain-JAX glue: fixed-size greedy NMS ------------------
def nms_fixed(boxes, scores, iou_thresh, topk):
    """Greedy NMS over a fixed-size candidate set; returns (indices, valid)."""
    areas = (boxes[:, 2] - boxes[:, 0]) * (boxes[:, 3] - boxes[:, 1])

    def body(i, state):
        sel, valid, sc = state
        idx = jnp.argmax(sc)
        best = sc[idx]
        is_valid = best > -jnp.inf
        sel = sel.at[i].set(idx.astype(jnp.int32))
        valid = valid.at[i].set(is_valid)
        b = boxes[idx]
        xx0 = jnp.maximum(b[0], boxes[:, 0])
        yy0 = jnp.maximum(b[1], boxes[:, 1])
        xx1 = jnp.minimum(b[2], boxes[:, 2])
        yy1 = jnp.minimum(b[3], boxes[:, 3])
        inter = jnp.clip(xx1 - xx0, 0.0) * jnp.clip(yy1 - yy0, 0.0)
        iou = inter / (areas[idx] + areas - inter + 1e-9)
        sc = jnp.where(iou > iou_thresh, -jnp.inf, sc)
        sc = sc.at[idx].set(-jnp.inf)
        return sel, valid, sc

    sel0 = jnp.zeros((topk,), jnp.int32)
    valid0 = jnp.zeros((topk,), bool)
    sel, valid, _ = lax.fori_loop(0, topk, body, (sel0, valid0, scores))
    return sel, valid


# ------------------------------ RoIHeads forward -----------------------------
@partial(jax.jit, static_argnums=(2,))
def roi_heads_forward(feature, proposal, image_shape, params):
    """Eval-mode RoIHeads.forward (mask head disabled: has_mask() is False)."""
    # TODO(synk): dynamic-length per-class detections replaced by fixed-size
    # (num_detections per foreground class) outputs plus a `valid` mask.
    w1, b1, w2, b2, wc, bc, wb, bb = params
    n = proposal.shape[0]
    k = NUM_CLASSES
    tr = ROI_BLOCK
    assert n % tr == 0
    img_w, img_h = float(image_shape[0]), float(image_shape[1])

    # ---- RoIAlign separable weights -> per-ROI kron, flattened over (pp, hw) ----
    wy, wx = make_interp_weights(proposal, SPATIAL_SCALE, P, SAMPLING, H, W)
    wfull = jnp.einsum('nay,nbx->nabyx', wy, wx).reshape(n, P * P * H * W)
    wfull = wfull.astype(jnp.bfloat16)                                # MXU operand

    # ---- fold fc1's channel contraction into a feature-only matrix A ----
    # A[(pp, hw), h] = sum_c W1[c*P*P + pp, h] * feat[c, hw]
    # (proposal-independent: in a real serving loop this is cached per image)
    feat2 = feature.reshape(C, H * W)
    w1_c = w1.reshape(C, P * P, HIDDEN)
    a_flat = jnp.einsum('cph,cq->pqh', w1_c, feat2).reshape(P * P * H * W, HIDDEN)
    a_flat = a_flat.astype(jnp.bfloat16)                              # MXU operand

    # ---- merged cls/bbox head; bbox columns regrouped to [dx(K)|dy(K)|dw(K)|dh(K)] ----
    wb_p = wb.reshape(HIDDEN, k, 4).transpose(0, 2, 1).reshape(HIDDEN, 4 * k)
    bb_p = bb.reshape(1, k, 4).transpose(0, 2, 1).reshape(1, 4 * k)
    whead = jnp.concatenate([wc, wb_p], axis=1)                       # (HID, 5K)
    bhead = jnp.concatenate([bc, bb_p], axis=1)                       # (1, 5K)

    hw_flat = P * P * H * W
    out = pl.pallas_call(
        _make_fused_kernel(img_w, img_h),
        out_shape=jax.ShapeDtypeStruct((n, OUT_W), jnp.float32),
        grid=(n // tr,),
        in_specs=[
            pl.BlockSpec((tr, hw_flat), lambda i: (i, 0)),            # wfull
            pl.BlockSpec((hw_flat, HIDDEN), lambda i: (0, 0)),        # A
            pl.BlockSpec((HIDDEN, HIDDEN), lambda i: (0, 0)),         # w2
            pl.BlockSpec((HIDDEN, 5 * k), lambda i: (0, 0)),          # whead
            pl.BlockSpec((1, HIDDEN), lambda i: (0, 0)),              # b1
            pl.BlockSpec((1, HIDDEN), lambda i: (0, 0)),              # b2
            pl.BlockSpec((1, 5 * k), lambda i: (0, 0)),               # bhead
            pl.BlockSpec((tr, 4), lambda i: (i, 0)),                  # proposals
        ],
        out_specs=pl.BlockSpec((tr, OUT_W), lambda i: (i, 0)),
        compiler_params=pltpu.CompilerParams(
            dimension_semantics=("parallel",)),                       # v7x megacore
    )(wfull, a_flat, w2, whead, b1, b2, bhead, proposal)

    # ---- per-class fixed-size NMS + top-k (vmapped over foreground classes) ----
    score = out[:, 0:k]
    x0 = out[:, k:2 * k]
    y0 = out[:, 2 * k:3 * k]
    x1 = out[:, 3 * k:4 * k]
    y1 = out[:, 4 * k:5 * k]
    boxes_all = jnp.stack([x0, y0, x1, y1], axis=-1)                  # (N, K, 4)
    boxes_cls = jnp.transpose(boxes_all, (1, 0, 2))[1:]               # (K-1, N, 4)
    scores_cls = score.T[1:]                                          # (K-1, N)

    sel, valid = jax.vmap(
        lambda b, s: nms_fixed(b, s, NMS_THRESH, NUM_DETECTIONS))(boxes_cls, scores_cls)

    boxes_det = jax.vmap(lambda b, idx: b[idx])(boxes_cls, sel)       # (K-1, topk, 4)
    scores_det = jax.vmap(lambda s, idx: s[idx])(scores_cls, sel)     # (K-1, topk)
    boxes_det = boxes_det * valid[:, :, None].astype(jnp.float32)
    scores_det = jnp.where(valid, scores_det, 0.0)
    labels_det = jnp.broadcast_to(
        jnp.arange(1, k, dtype=jnp.int32)[:, None], (k - 1, NUM_DETECTIONS))

    result = dict(
        boxes=boxes_det.reshape(-1, 4),
        labels=labels_det.reshape(-1),
        scores=scores_det.reshape(-1),
        valid=valid.reshape(-1),
    )
    losses = {}
    return result, losses


# ---------------------------------- main -------------------------------------
if __name__ == "__main__":
    key = jax.random.PRNGKey(0)
    ks = jax.random.split(key, 8)

    # deterministic synthetic parameters (FastRCNNPredictor shapes)
    in_features = C * P * P
    w1 = jax.random.normal(ks[0], (in_features, HIDDEN), jnp.float32) * 0.05
    b1 = jnp.zeros((1, HIDDEN), jnp.float32)
    w2 = jax.random.normal(ks[1], (HIDDEN, HIDDEN), jnp.float32) * 0.05
    b2 = jnp.zeros((1, HIDDEN), jnp.float32)
    wc = jax.random.normal(ks[2], (HIDDEN, NUM_CLASSES), jnp.float32) * 0.05
    bc = jnp.zeros((1, NUM_CLASSES), jnp.float32)
    wb = jax.random.normal(ks[3], (HIDDEN, NUM_CLASSES * 4), jnp.float32) * 0.05
    bb = jnp.zeros((1, NUM_CLASSES * 4), jnp.float32)
    params = (w1, b1, w2, b2, wc, bc, wb, bb)

    # inputs
    feature = jax.random.normal(ks[4], (C, H, W), jnp.float32)        # CHW (N=1)
    u = jax.random.uniform(ks[5], (N_ROI, 4), jnp.float32)
    px0 = u[:, 0] * 18.0
    py0 = u[:, 1] * 18.0
    px1 = jnp.minimum(px0 + 4.0 + u[:, 2] * 10.0, IMG_W)
    py1 = jnp.minimum(py0 + 4.0 + u[:, 3] * 10.0, IMG_H)
    proposal = jnp.stack([px0, py0, px1, py1], axis=-1)               # (N, 4)
    image_shape = (IMG_W, IMG_H)                                      # (w, h) as in the module

    result, losses = roi_heads_forward(feature, proposal, image_shape, params)
    jax.block_until_ready(result)
    assert result["boxes"].shape == ((NUM_CLASSES - 1) * NUM_DETECTIONS, 4)
    assert result["scores"].shape == ((NUM_CLASSES - 1) * NUM_DETECTIONS,)
    print("KERNEL_OK")
</pallas_src>

<mosaic_0001>
module attributes {stable_mosaic.version = 11 : i64} {
  func.func @kernel(%arg0: i32, %arg1: memref<8x12544xbf16, #tpu.memory_space<vmem>>, %arg2: memref<12544x32xbf16, #tpu.memory_space<vmem>>, %arg3: memref<32x32xf32, #tpu.memory_space<vmem>>, %arg4: memref<32x15xf32, #tpu.memory_space<vmem>>, %arg5: memref<1x32xf32, #tpu.memory_space<vmem>>, %arg6: memref<1x32xf32, #tpu.memory_space<vmem>>, %arg7: memref<1x15xf32, #tpu.memory_space<vmem>>, %arg8: memref<8x4xf32, #tpu.memory_space<vmem>>, %arg9: memref<8x128xf32, #tpu.memory_space<vmem>>) attributes {dimension_semantics = [#tpu.dimension_semantics<parallel>], iteration_bounds = array<i64: 2>, scalar_prefetch = 0 : i64, scratch_operands = 0 : i64, tpu.core_type = #tpu.core_type<tc>, window_params = [{transform_indices = @transform_0, window_bounds = array<i64: 8, 12544>}, {pipeline_mode = #tpu.pipeline_mode<synchronous>, transform_indices = @transform_1, window_bounds = array<i64: 12544, 32>}, {pipeline_mode = #tpu.pipeline_mode<synchronous>, transform_indices = @transform_2, window_bounds = array<i64: 32, 32>}, {pipeline_mode = #tpu.pipeline_mode<synchronous>, transform_indices = @transform_3, window_bounds = array<i64: 32, 15>}, {pipeline_mode = #tpu.pipeline_mode<synchronous>, transform_indices = @transform_4, window_bounds = array<i64: 1, 32>}, {pipeline_mode = #tpu.pipeline_mode<synchronous>, transform_indices = @transform_5, window_bounds = array<i64: 1, 32>}, {pipeline_mode = #tpu.pipeline_mode<synchronous>, transform_indices = @transform_6, window_bounds = array<i64: 1, 15>}, {transform_indices = @transform_7, window_bounds = array<i64: 8, 4>}, {transform_indices = @transform_8, window_bounds = array<i64: 8, 128>}]} {
    %c0 = arith.constant 0 : index
    %c0_0 = arith.constant 0 : index
    %0 = vector.load %arg1[%c0, %c0_0] : memref<8x12544xbf16, #tpu.memory_space<vmem>>, vector<8x12544xbf16>
    %c0_1 = arith.constant 0 : index
    %c0_2 = arith.constant 0 : index
    %1 = vector.load %arg2[%c0_1, %c0_2] : memref<12544x32xbf16, #tpu.memory_space<vmem>>, vector<12544x32xbf16>
    %cst = arith.constant dense<0.000000e+00> : vector<8x32xf32>
    %2 = tpu.matmul %0, %1, %cst {dimension_numbers = #tpu.dot_dimension_numbers<[1], [0], [0], [1], [0, 0, 1, 1], [], []>} : vector<8x12544xbf16>, vector<12544x32xbf16>, vector<8x32xf32> -> vector<8x32xf32>
    %c0_3 = arith.constant 0 : index
    %c0_4 = arith.constant 0 : index
    %3 = vector.load %arg5[%c0_3, %c0_4] : memref<1x32xf32, #tpu.memory_space<vmem>>, vector<1x32xf32>
    %4 = vector.broadcast %3 : vector<1x32xf32> to vector<8x32xf32>
    %5 = arith.addf %2, %4 : vector<8x32xf32>
    %cst_5 = arith.constant 0.000000e+00 : f32
    %6 = vector.broadcast %cst_5 : f32 to vector<8x32xf32>
    %7 = arith.maximumf %5, %6 : vector<8x32xf32>
    %c0_6 = arith.constant 0 : index
    %c0_7 = arith.constant 0 : index
    %8 = vector.load %arg3[%c0_6, %c0_7] : memref<32x32xf32, #tpu.memory_space<vmem>>, vector<32x32xf32>
    %cst_8 = arith.constant dense<0.000000e+00> : vector<8x32xf32>
    %9 = tpu.matmul %7, %8, %cst_8 {dimension_numbers = #tpu.dot_dimension_numbers<[1], [0], [0], [1], [0, 0, 1, 1], [], []>} : vector<8x32xf32>, vector<32x32xf32>, vector<8x32xf32> -> vector<8x32xf32>
    %c0_9 = arith.constant 0 : index
    %c0_10 = arith.constant 0 : index
    %10 = vector.load %arg6[%c0_9, %c0_10] : memref<1x32xf32, #tpu.memory_space<vmem>>, vector<1x32xf32>
    %11 = vector.broadcast %10 : vector<1x32xf32> to vector<8x32xf32>
    %12 = arith.addf %9, %11 : vector<8x32xf32>
    %cst_11 = arith.constant 0.000000e+00 : f32
    %13 = vector.broadcast %cst_11 : f32 to vector<8x32xf32>
    %14 = arith.maximumf %12, %13 : vector<8x32xf32>
    %c0_12 = arith.constant 0 : index
    %c0_13 = arith.constant 0 : index
    %15 = vector.load %arg4[%c0_12, %c0_13] : memref<32x15xf32, #tpu.memory_space<vmem>>, vector<32x15xf32>
    %cst_14 = arith.constant dense<0.000000e+00> : vector<8x15xf32>
    %16 = tpu.matmul %14, %15, %cst_14 {dimension_numbers = #tpu.dot_dimension_numbers<[1], [0], [0], [1], [0, 0, 1, 1], [], []>} : vector<8x32xf32>, vector<32x15xf32>, vector<8x15xf32> -> vector<8x15xf32>
    %c0_15 = arith.constant 0 : index
    %c0_16 = arith.constant 0 : index
    %17 = vector.load %arg7[%c0_15, %c0_16] : memref<1x15xf32, #tpu.memory_space<vmem>>, vector<1x15xf32>
    %18 = vector.broadcast %17 : vector<1x15xf32> to vector<8x15xf32>
    %19 = arith.addf %16, %18 : vector<8x15xf32>
    %20 = vector.extract_strided_slice %19 {offsets = [0, 0], sizes = [8, 3], strides = [1, 1]} : vector<8x15xf32> to vector<8x3xf32>
    %21 = vector.extract_strided_slice %19 {offsets = [0, 3], sizes = [8, 12], strides = [1, 1]} : vector<8x15xf32> to vector<8x12xf32>
    %cst_17 = arith.constant dense<0xFF800000> : vector<8xf32>
    %22 = vector.multi_reduction <maximumf>, %20, %cst_17 [1] : vector<8x3xf32> to vector<8xf32>
    %23 = vector.shape_cast %22 : vector<8xf32> to vector<8x1xf32>
    %24 = vector.broadcast %23 : vector<8x1xf32> to vector<8x3xf32>
    %25 = arith.subf %20, %24 : vector<8x3xf32>
    %26 = math.exp %25 : vector<8x3xf32>
    %cst_18 = arith.constant dense<0.000000e+00> : vector<8xf32>
    %27 = vector.multi_reduction <add>, %26, %cst_18 [1] : vector<8x3xf32> to vector<8xf32>
    %28 = vector.shape_cast %27 : vector<8xf32> to vector<8x1xf32>
    %29 = tpu.reciprocal %28 {approx = true} : vector<8x1xf32> -> vector<8x1xf32>
    %30 = vector.broadcast %29 : vector<8x1xf32> to vector<8x3xf32>
    %31 = arith.mulf %26, %30 : vector<8x3xf32>
    %c0_19 = arith.constant 0 : index
    %c0_20 = arith.constant 0 : index
    %32 = vector.load %arg8[%c0_19, %c0_20] : memref<8x4xf32, #tpu.memory_space<vmem>>, vector<8x4xf32>
    %33 = vector.extract_strided_slice %32 {offsets = [0, 2], sizes = [8, 1], strides = [1, 1]} : vector<8x4xf32> to vector<8x1xf32>
    %34 = vector.extract_strided_slice %32 {offsets = [0, 0], sizes = [8, 1], strides = [1, 1]} : vector<8x4xf32> to vector<8x1xf32>
    %35 = arith.subf %33, %34 : vector<8x1xf32>
    %36 = vector.extract_strided_slice %32 {offsets = [0, 3], sizes = [8, 1], strides = [1, 1]} : vector<8x4xf32> to vector<8x1xf32>
    %37 = vector.extract_strided_slice %32 {offsets = [0, 1], sizes = [8, 1], strides = [1, 1]} : vector<8x4xf32> to vector<8x1xf32>
    %38 = arith.subf %36, %37 : vector<8x1xf32>
    %39 = vector.extract_strided_slice %32 {offsets = [0, 0], sizes = [8, 1], strides = [1, 1]} : vector<8x4xf32> to vector<8x1xf32>
    %cst_21 = arith.constant 5.000000e-01 : f32
    %40 = vector.broadcast %cst_21 : f32 to vector<8x1xf32>
    %41 = arith.mulf %40, %35 : vector<8x1xf32>
    %42 = arith.addf %39, %41 : vector<8x1xf32>
    %43 = vector.extract_strided_slice %32 {offsets = [0, 1], sizes = [8, 1], strides = [1, 1]} : vector<8x4xf32> to vector<8x1xf32>
    %cst_22 = arith.constant 5.000000e-01 : f32
    %44 = vector.broadcast %cst_22 : f32 to vector<8x1xf32>
    %45 = arith.mulf %44, %38 : vector<8x1xf32>
    %46 = arith.addf %43, %45 : vector<8x1xf32>
    %47 = vector.extract_strided_slice %21 {offsets = [0, 0], sizes = [8, 3], strides = [1, 1]} : vector<8x12xf32> to vector<8x3xf32>
    %cst_23 = arith.constant 1.000000e-01 : f32
    %48 = vector.broadcast %cst_23 : f32 to vector<8x3xf32>
    %49 = arith.mulf %47, %48 : vector<8x3xf32>
    %50 = vector.extract_strided_slice %21 {offsets = [0, 3], sizes = [8, 3], strides = [1, 1]} : vector<8x12xf32> to vector<8x3xf32>
    %cst_24 = arith.constant 1.000000e-01 : f32
    %51 = vector.broadcast %cst_24 : f32 to vector<8x3xf32>
    %52 = arith.mulf %50, %51 : vector<8x3xf32>
    %53 = vector.extract_strided_slice %21 {offsets = [0, 6], sizes = [8, 3], strides = [1, 1]} : vector<8x12xf32> to vector<8x3xf32>
    %cst_25 = arith.constant 2.000000e-01 : f32
    %54 = vector.broadcast %cst_25 : f32 to vector<8x3xf32>
    %55 = arith.mulf %53, %54 : vector<8x3xf32>
    %cst_26 = arith.constant 4.13516665 : f32
    %56 = vector.broadcast %cst_26 : f32 to vector<8x3xf32>
    %57 = arith.minimumf %55, %56 : vector<8x3xf32>
    %58 = vector.extract_strided_slice %21 {offsets = [0, 9], sizes = [8, 3], strides = [1, 1]} : vector<8x12xf32> to vector<8x3xf32>
    %cst_27 = arith.constant 2.000000e-01 : f32
    %59 = vector.broadcast %cst_27 : f32 to vector<8x3xf32>
    %60 = arith.mulf %58, %59 : vector<8x3xf32>
    %cst_28 = arith.constant 4.13516665 : f32
    %61 = vector.broadcast %cst_28 : f32 to vector<8x3xf32>
    %62 = arith.minimumf %60, %61 : vector<8x3xf32>
    %63 = vector.broadcast %35 : vector<8x1xf32> to vector<8x3xf32>
    %64 = arith.mulf %49, %63 : vector<8x3xf32>
    %65 = vector.broadcast %42 : vector<8x1xf32> to vector<8x3xf32>
    %66 = arith.addf %64, %65 : vector<8x3xf32>
    %67 = vector.broadcast %38 : vector<8x1xf32> to vector<8x3xf32>
    %68 = arith.mulf %52, %67 : vector<8x3xf32>
    %69 = vector.broadcast %46 : vector<8x1xf32> to vector<8x3xf32>
    %70 = arith.addf %68, %69 : vector<8x3xf32>
    %71 = math.exp %57 : vector<8x3xf32>
    %72 = vector.broadcast %35 : vector<8x1xf32> to vector<8x3xf32>
    %73 = arith.mulf %71, %72 : vector<8x3xf32>
    %74 = math.exp %62 : vector<8x3xf32>
    %75 = vector.broadcast %38 : vector<8x1xf32> to vector<8x3xf32>
    %76 = arith.mulf %74, %75 : vector<8x3xf32>
    %cst_29 = arith.constant 5.000000e-01 : f32
    %77 = vector.broadcast %cst_29 : f32 to vector<8x3xf32>
    %78 = arith.mulf %77, %73 : vector<8x3xf32>
    %79 = arith.subf %66, %78 : vector<8x3xf32>
    %cst_30 = arith.constant 0.000000e+00 : f32
    %cst_31 = arith.constant 3.200000e+01 : f32
    %80 = vector.broadcast %cst_30 : f32 to vector<8x3xf32>
    %81 = arith.maximumf %80, %79 : vector<8x3xf32>
    %82 = vector.broadcast %cst_31 : f32 to vector<8x3xf32>
    %83 = arith.minimumf %82, %81 : vector<8x3xf32>
    %cst_32 = arith.constant 5.000000e-01 : f32
    %84 = vector.broadcast %cst_32 : f32 to vector<8x3xf32>
    %85 = arith.mulf %84, %76 : vector<8x3xf32>
    %86 = arith.subf %70, %85 : vector<8x3xf32>
    %cst_33 = arith.constant 0.000000e+00 : f32
    %cst_34 = arith.constant 3.200000e+01 : f32
    %87 = vector.broadcast %cst_33 : f32 to vector<8x3xf32>
    %88 = arith.maximumf %87, %86 : vector<8x3xf32>
    %89 = vector.broadcast %cst_34 : f32 to vector<8x3xf32>
    %90 = arith.minimumf %89, %88 : vector<8x3xf32>
    %cst_35 = arith.constant 5.000000e-01 : f32
    %91 = vector.broadcast %cst_35 : f32 to vector<8x3xf32>
    %92 = arith.mulf %91, %73 : vector<8x3xf32>
    %93 = arith.addf %66, %92 : vector<8x3xf32>
    %cst_36 = arith.constant 0.000000e+00 : f32
    %cst_37 = arith.constant 3.200000e+01 : f32
    %94 = vector.broadcast %cst_36 : f32 to vector<8x3xf32>
    %95 = arith.maximumf %94, %93 : vector<8x3xf32>
    %96 = vector.broadcast %cst_37 : f32 to vector<8x3xf32>
    %97 = arith.minimumf %96, %95 : vector<8x3xf32>
    %cst_38 = arith.constant 5.000000e-01 : f32
    %98 = vector.broadcast %cst_38 : f32 to vector<8x3xf32>
    %99 = arith.mulf %98, %76 : vector<8x3xf32>
    %100 = arith.addf %70, %99 : vector<8x3xf32>
    %cst_39 = arith.constant 0.000000e+00 : f32
    %cst_40 = arith.constant 3.200000e+01 : f32
    %101 = vector.broadcast %cst_39 : f32 to vector<8x3xf32>
    %102 = arith.maximumf %101, %100 : vector<8x3xf32>
    %103 = vector.broadcast %cst_40 : f32 to vector<8x3xf32>
    %104 = arith.minimumf %103, %102 : vector<8x3xf32>
    %cst_41 = arith.constant 1.000000e-01 : f32
    %105 = vector.broadcast %cst_41 : f32 to vector<8x3xf32>
    %106 = arith.cmpf oge, %31, %105 : vector<8x3xf32>
    %107 = arith.subf %97, %83 : vector<8x3xf32>
    %cst_42 = arith.constant 1.000000e+00 : f32
    %108 = vector.broadcast %cst_42 : f32 to vector<8x3xf32>
    %109 = arith.cmpf oge, %107, %108 : vector<8x3xf32>
    %110 = arith.andi %106, %109 : vector<8x3xi1>
    %111 = arith.subf %104, %90 : vector<8x3xf32>
    %cst_43 = arith.constant 1.000000e+00 : f32
    %112 = vector.broadcast %cst_43 : f32 to vector<8x3xf32>
    %113 = arith.cmpf oge, %111, %112 : vector<8x3xf32>
    %114 = arith.andi %110, %113 : vector<8x3xi1>
    %cst_44 = arith.constant 0xFF800000 : f32
    %115 = vector.broadcast %cst_44 : f32 to vector<8x3xf32>
    %116 = arith.select %114, %31, %115 : vector<8x3xi1>, vector<8x3xf32>
    %cst_45 = arith.constant 0.000000e+00 : f32
    %117 = vector.broadcast %cst_45 : f32 to vector<8x113xf32>
    %118 = tpu.concatenate %116, %83, %90, %97, %104, %117 in 1 : vector<8x3xf32>, vector<8x3xf32>, vector<8x3xf32>, vector<8x3xf32>, vector<8x3xf32>, vector<8x113xf32> -> vector<8x128xf32>
    %c0_46 = arith.constant 0 : index
    %c0_47 = arith.constant 0 : index
    %119 = vector.load %arg9[%c0_46, %c0_47] : memref<8x128xf32, #tpu.memory_space<vmem>>, vector<8x128xf32>
    tpu.vector_store %arg9[%c0_46, %c0_47], %118 {strides = array<i32>} : memref<8x128xf32, #tpu.memory_space<vmem>>, vector<8x128xf32>,
    return
  }
  func.func @transform_0(%arg0: i32) -> (i32, i32) {
    %c0_i32 = arith.constant 0 : i32
    %c0_i32_0 = arith.constant 0 : i32
    return %arg0, %c0_i32 : i32, i32
  }
  func.func @transform_1(%arg0: i32) -> (i32, i32) {
    %c0_i32 = arith.constant 0 : i32
    %c0_i32_0 = arith.constant 0 : i32
    %c0_i32_1 = arith.constant 0 : i32
    return %c0_i32, %c0_i32_0 : i32, i32
  }
  func.func @transform_2(%arg0: i32) -> (i32, i32) {
    %c0_i32 = arith.constant 0 : i32
    %c0_i32_0 = arith.constant 0 : i32
    %c0_i32_1 = arith.constant 0 : i32
    return %c0_i32, %c0_i32_0 : i32, i32
  }
  func.func @transform_3(%arg0: i32) -> (i32, i32) {
    %c0_i32 = arith.constant 0 : i32
    %c0_i32_0 = arith.constant 0 : i32
    %c0_i32_1 = arith.constant 0 : i32
    return %c0_i32, %c0_i32_0 : i32, i32
  }
  func.func @transform_4(%arg0: i32) -> (i32, i32) {
    %c0_i32 = arith.constant 0 : i32
    %c0_i32_0 = arith.constant 0 : i32
    %c0_i32_1 = arith.constant 0 : i32
    return %c0_i32, %c0_i32_0 : i32, i32
  }
  func.func @transform_5(%arg0: i32) -> (i32, i32) {
    %c0_i32 = arith.constant 0 : i32
    %c0_i32_0 = arith.constant 0 : i32
    %c0_i32_1 = arith.constant 0 : i32
    return %c0_i32, %c0_i32_0 : i32, i32
  }
  func.func @transform_6(%arg0: i32) -> (i32, i32) {
    %c0_i32 = arith.constant 0 : i32
    %c0_i32_0 = arith.constant 0 : i32
    %c0_i32_1 = arith.constant 0 : i32
    return %c0_i32, %c0_i32_0 : i32, i32
  }
  func.func @transform_7(%arg0: i32) -> (i32, i32) {
    %c0_i32 = arith.constant 0 : i32
    %c0_i32_0 = arith.constant 0 : i32
    return %arg0, %c0_i32 : i32, i32
  }
  func.func @transform_8(%arg0: i32) -> (i32, i32) {
    %c0_i32 = arith.constant 0 : i32
    %c0_i32_0 = arith.constant 0 : i32
    return %arg0, %c0_i32 : i32, i32
  }
}

</mosaic_0001>

<llo_original>
// kernel: roi_heads_forward.1
$region0: #{roi_heads_forward.1}
  #allocation0 [shape = 'u32[]', space=smem, size = 0x4, offset = 0x4, fixed_abs, tag = 'smem constant byte address 0x4 - core index']
  #allocation1 [shape = 'u32[144,128]{1,0:T(1,128)}', space=vmem, size = 0x12000, scoped, tag = 'internal scratch']
  %s0 = inlined_call_operand.vmem [shape: bf16[16,12544], index: 0, kind: input, shape index: {}]
  %s1 = inlined_call_operand.vmem [shape: bf16[12544,32], index: 1, kind: input, shape index: {}]
  %s2 = inlined_call_operand.vmem [shape: f32[32,32], index: 2, kind: input, shape index: {}]
  %s3 = inlined_call_operand.vmem [shape: f32[32,15], index: 3, kind: input, shape index: {}]
  %s4 = inlined_call_operand.vmem [shape: f32[1,32], index: 4, kind: input, shape index: {}]
  %s5 = inlined_call_operand.vmem [shape: f32[1,32], index: 5, kind: input, shape index: {}]
  %s6 = inlined_call_operand.vmem [shape: f32[1,15], index: 6, kind: input, shape index: {}]
  %s7 = inlined_call_operand.vmem [shape: f32[16,4], index: 7, kind: input, shape index: {}]
  %s8 = inlined_call_operand.vmem [shape: f32[16,128], index: 8, kind: output, shape index: {}]
  %s9 = sld [smem:[#allocation0]]
  $region65: #{roi_heads_forward.1} parent=0
    _
  %s11 = ssub.s32 1, %s9
  %s12 = scalar_select 0, %s11, %s9
  loop: start=0, step=1, limit=4
  $region2: #{roi_heads_forward.1} parent=0 // loop_pre_header
    _
  $region3: #{roi_heads_forward.1} parent=0 // loop_header
    %s14 = sphi 0, %s18
    %p15 = scmp.ge.s32.totalorder %s14, 4
    %s24 = sphi 0, %s26
    %s27 = sphi 0, %s24
    %s28 = sphi 0, %s27
    %s44 = sphi 0, %s28
    %s48 = sphi 0, %s48
    %s50 = sphi 0, %s48
    %s51 = sphi 0, %s50
    %s65 = sphi 0, %s51
    %s69 = sphi 0, %s69
    %s71 = sphi 0, %s69
    %s72 = sphi 0, %s71
    %s86 = sphi 0, %s72
    %s90 = sphi 0, %s90
    %s92 = sphi 0, %s90
    %s93 = sphi 0, %s92
    %s107 = sphi 0, %s93
    %s111 = sphi 0, %s111
    %s113 = sphi 0, %s111
    %s114 = sphi 0, %s113
    %s128 = sphi 0, %s114
    %s132 = sphi 0, %s132
    %s134 = sphi 0, %s132
    %s135 = sphi 0, %s134
    %s149 = sphi 0, %s135
    %s153 = sphi 0, %s153
    %s155 = sphi 0, %s153
    %s156 = sphi 0, %s155
    %s170 = sphi 0, %s156
    %s176 = sphi 0, %s178
    %s179 = sphi 0, %s176
    %s180 = sphi 0, %s179
    %s196 = sphi 0, %s180
    %s202 = sphi 0, %s204
    %s205 = sphi 0, %s202
    %s206 = sphi 0, %s205
    %s222 = sphi 0, %s206
  $region4: #{roi_heads_forward.1} parent=0 // loop_header_branch
    %17 = sbr.rel (%p15) target = $region8
  $region5: #{roi_heads_forward.1} parent=0 // loop_body
    %s19 = ssub.s32 %s14, 1
    %s20 = ssub.s32 %s14, 2
    %s21 = sadd.s32 %s14, 1
    %s22 = ssub.s32 %s14, %s21
    %p23 = scmp.eq.s32.totalorder %s22, 0
    %s25 = sadd.s32 %s24, 1
    %s26 = scalar_select %p23, %s24, %s25
    %p29 = pneg %p23
    %p30 = scmp.eq.s32.totalorder %s14, 1
    %p31 = por %p29, %p30
    %p32 = scmp.ne.s32.totalorder %s24, %s27
    %p33 = scmp.eq.s32.totalorder %s14, 0
    %p34 = por %p32, %p33
    %p35 = scmp.ne.s32.totalorder %s24, %s27
    %p36 = scmp.eq.s32.totalorder %s19, 1
    %p37 = por %p35, %p36
    %p38 = scmp.ne.s32.totalorder %s27, %s28
    %p39 = scmp.eq.s32.totalorder %s19, 0
    %p40 = por %p38, %p39
    %p41 = scmp.ne.s32.totalorder %s27, %s28
    %p42 = scmp.eq.s32.totalorder %s20, 1
    %p43 = por %p41, %p42
    %p45 = scmp.ne.s32.totalorder %s28, %s44
    %p46 = scmp.eq.s32.totalorder %s20, 0
    %p47 = por %p45, %p46
    %s49 = sadd.s32 %s48, 1
    %p52 = scmp.eq.s32.totalorder %s14, 1
    %p53 = scmp.ne.s32.totalorder %s48, %s50
    %p54 = scmp.eq.s32.totalorder %s14, 0
    %p55 = por %p53, %p54
    %p56 = scmp.ne.s32.totalorder %s48, %s50
    %p57 = scmp.eq.s32.totalorder %s19, 1
    %p58 = por %p56, %p57
    %p59 = scmp.ne.s32.totalorder %s50, %s51
    %p60 = scmp.eq.s32.totalorder %s19, 0
    %p61 = por %p59, %p60
    %p62 = scmp.ne.s32.totalorder %s50, %s51
    %p63 = scmp.eq.s32.totalorder %s20, 1
    %p64 = por %p62, %p63
    %p66 = scmp.ne.s32.totalorder %s51, %s65
    %p67 = scmp.eq.s32.totalorder %s20, 0
    %p68 = por %p66, %p67
    %s70 = sadd.s32 %s69, 1
    %p73 = scmp.eq.s32.totalorder %s14, 1
    %p74 = scmp.ne.s32.totalorder %s69, %s71
    %p75 = scmp.eq.s32.totalorder %s14, 0
    %p76 = por %p74, %p75
    %p77 = scmp.ne.s32.totalorder %s69, %s71
    %p78 = scmp.eq.s32.totalorder %s19, 1
    %p79 = por %p77, %p78
    %p80 = scmp.ne.s32.totalorder %s71, %s72
    %p81 = scmp.eq.s32.totalorder %s19, 0
    %p82 = por %p80, %p81
    %p83 = scmp.ne.s32.totalorder %s71, %s72
    %p84 = scmp.eq.s32.totalorder %s20, 1
    %p85 = por %p83, %p84
    %p87 = scmp.ne.s32.totalorder %s72, %s86
    %p88 = scmp.eq.s32.totalorder %s20, 0
    %p89 = por %p87, %p88
    %s91 = sadd.s32 %s90, 1
    %p94 = scmp.eq.s32.totalorder %s14, 1
    %p95 = scmp.ne.s32.totalorder %s90, %s92
    %p96 = scmp.eq.s32.totalorder %s14, 0
    %p97 = por %p95, %p96
    %p98 = scmp.ne.s32.totalorder %s90, %s92
    %p99 = scmp.eq.s32.totalorder %s19, 1
    %p100 = por %p98, %p99
    %p101 = scmp.ne.s32.totalorder %s92, %s93
    %p102 = scmp.eq.s32.totalorder %s19, 0
    %p103 = por %p101, %p102
    %p104 = scmp.ne.s32.totalorder %s92, %s93
    %p105 = scmp.eq.s32.totalorder %s20, 1
    %p106 = por %p104, %p105
    %p108 = scmp.ne.s32.totalorder %s93, %s107
    %p109 = scmp.eq.s32.totalorder %s20, 0
    %p110 = por %p108, %p109
    %s112 = sadd.s32 %s111, 1
    %p115 = scmp.eq.s32.totalorder %s14, 1
    %p116 = scmp.ne.s32.totalorder %s111, %s113
    %p117 = scmp.eq.s32.totalorder %s14, 0
    %p118 = por %p116, %p117
    %p119 = scmp.ne.s32.totalorder %s111, %s113
    %p120 = scmp.eq.s32.totalorder %s19, 1
    %p121 = por %p119, %p120
    %p122 = scmp.ne.s32.totalorder %s113, %s114
    %p123 = scmp.eq.s32.totalorder %s19, 0
    %p124 = por %p122, %p123
    %p125 = scmp.ne.s32.totalorder %s113, %s114
    %p126 = scmp.eq.s32.totalorder %s20, 1
    %p127 = por %p125, %p126
    %p129 = scmp.ne.s32.totalorder %s114, %s128
    %p130 = scmp.eq.s32.totalorder %s20, 0
    %p131 = por %p129, %p130
    %s133 = sadd.s32 %s132, 1
    %p136 = scmp.eq.s32.totalorder %s14, 1
    %p137 = scmp.ne.s32.totalorder %s132, %s134
    %p138 = scmp.eq.s32.totalorder %s14, 0
    %p139 = por %p137, %p138
    %p140 = scmp.ne.s32.totalorder %s132, %s134
    %p141 = scmp.eq.s32.totalorder %s19, 1
    %p142 = por %p140, %p141
    %p143 = scmp.ne.s32.totalorder %s134, %s135
    %p144 = scmp.eq.s32.totalorder %s19, 0
    %p145 = por %p143, %p144
    %p146 = scmp.ne.s32.totalorder %s134, %s135
    %p147 = scmp.eq.s32.totalorder %s20, 1
    %p148 = por %p146, %p147
    %p150 = scmp.ne.s32.totalorder %s135, %s149
    %p151 = scmp.eq.s32.totalorder %s20, 0
    %p152 = por %p150, %p151
    %s154 = sadd.s32 %s153, 1
    %p157 = scmp.eq.s32.totalorder %s14, 1
    %p158 = scmp.ne.s32.totalorder %s153, %s155
    %p159 = scmp.eq.s32.totalorder %s14, 0
    %p160 = por %p158, %p159
    %p161 = scmp.ne.s32.totalorder %s153, %s155
    %p162 = scmp.eq.s32.totalorder %s19, 1
    %p163 = por %p161, %p162
    %p164 = scmp.ne.s32.totalorder %s155, %s156
    %p165 = scmp.eq.s32.totalorder %s19, 0
    %p166 = por %p164, %p165
    %p167 = scmp.ne.s32.totalorder %s155, %s156
    %p168 = scmp.eq.s32.totalorder %s20, 1
    %p169 = por %p167, %p168
    %p171 = scmp.ne.s32.totalorder %s156, %s170
    %p172 = scmp.eq.s32.totalorder %s20, 0
    %p173 = por %p171, %p172
    %s174 = ssub.s32 %s14, %s21
    %p175 = scmp.eq.s32.totalorder %s174, 0
    %s177 = sadd.s32 %s176, 1
    %s178 = scalar_select %p175, %s176, %s177
    %p181 = pneg %p175
    %p182 = scmp.eq.s32.totalorder %s14, 1
    %p183 = por %p181, %p182
    %p184 = scmp.ne.s32.totalorder %s176, %s179
    %p185 = scmp.eq.s32.totalorder %s14, 0
    %p186 = por %p184, %p185
    %p187 = scmp.ne.s32.totalorder %s176, %s179
    %p188 = scmp.eq.s32.totalorder %s19, 1
    %p189 = por %p187, %p188
    %p190 = scmp.ne.s32.totalorder %s179, %s180
    %p191 = scmp.eq.s32.totalorder %s19, 0
    %p192 = por %p190, %p191
    %p193 = scmp.ne.s32.totalorder %s179, %s180
    %p194 = scmp.eq.s32.totalorder %s20, 1
    %p195 = por %p193, %p194
    %p197 = scmp.ne.s32.totalorder %s180, %s196
    %p198 = scmp.eq.s32.totalorder %s20, 0
    %p199 = por %p197, %p198
    %s200 = ssub.s32 %s14, %s21
    %p201 = scmp.eq.s32.totalorder %s200, 0
    %s203 = sadd.s32 %s202, 1
    %s204 = scalar_select %p201, %s202, %s203
    %p207 = pneg %p201
    %p208 = scmp.eq.s32.totalorder %s14, 1
    %p209 = por %p207, %p208
    %p210 = scmp.ne.s32.totalorder %s202, %s205
    %p211 = scmp.eq.s32.totalorder %s14, 0
    %p212 = por %p210, %p211
    %p213 = scmp.ne.s32.totalorder %s202, %s205
    %p214 = scmp.eq.s32.totalorder %s19, 1
    %p215 = por %p213, %p214
    %p216 = scmp.ne.s32.totalorder %s205, %s206
    %p217 = scmp.eq.s32.totalorder %s19, 0
    %p218 = por %p216, %p217
    %p219 = scmp.ne.s32.totalorder %s205, %s206
    %p220 = scmp.eq.s32.totalorder %s20, 1
    %p221 = por %p219, %p220
    %p223 = scmp.ne.s32.totalorder %s206, %s222
    %p224 = scmp.eq.s32.totalorder %s20, 0
    %p225 = por %p223, %p224
    %p226 = scmp.le.s32.totalorder 1, %s14
    %p227 = scmp.lt.s32.totalorder %s14, 3
    %p228 = pnand %p226, %p227
    %p229 = pneg %p228
    // Predicated region
    $region9: #{roi_heads_forward.1} parent=5 // pred_check
      _
    $region10: #{roi_heads_forward.1} parent=5 // pred_check_branch
      %231 = sbr.rel (%p228) target = $region12
    $region11: #{roi_heads_forward.1} parent=5 // pred_region
      %s232 = ssub.s32 %s14, 1
      // Predicated region
      $region13: #{roi_heads_forward.1} parent=11 // pred_check
        %p233 = pneg %p61
      $region14: #{roi_heads_forward.1} parent=11 // pred_check_branch
        %235 = sbr.rel (%p233) target = $region16
      $region15: #{roi_heads_forward.1} parent=11 // pred_region
        _
      $region16: #{roi_heads_forward.1} parent=11 // pred_fallthru
        _
      // Predicated region
      $region17: #{roi_heads_forward.1} parent=11 // pred_check
        %p236 = pneg %p82
      $region18: #{roi_heads_forward.1} parent=11 // pred_check_branch
        %238 = sbr.rel (%p236) target = $region20
      $region19: #{roi_heads_forward.1} parent=11 // pred_region
        _
      $region20: #{roi_heads_forward.1} parent=11 // pred_fallthru
        _
      // Predicated region
      $region21: #{roi_heads_forward.1} parent=11 // pred_check
        %p239 = pneg %p103
      $region22: #{roi_heads_forward.1} parent=11 // pred_check_branch
        %241 = sbr.rel (%p239) target = $region24
      $region23: #{roi_heads_forward.1} parent=11 // pred_region
        _
      $region24: #{roi_heads_forward.1} parent=11 // pred_fallthru
        _
      // Predicated region
      $region25: #{roi_heads_forward.1} parent=11 // pred_check
        %p242 = pneg %p124
      $region26: #{roi_heads_forward.1} parent=11 // pred_check_branch
        %244 = sbr.rel (%p242) target = $region28
      $region27: #{roi_heads_forward.1} parent=11 // pred_region
        _
      $region28: #{roi_heads_forward.1} parent=11 // pred_fallthru
        _
      // Predicated region
      $region29: #{roi_heads_forward.1} parent=11 // pred_check
        %p245 = pneg %p145
      $region30: #{roi_heads_forward.1} parent=11 // pred_check_branch
        %247 = sbr.rel (%p245) target = $region32
      $region31: #{roi_heads_forward.1} parent=11 // pred_region
        _
      $region32: #{roi_heads_forward.1} parent=11 // pred_fallthru
        _
      // Predicated region
      $region33: #{roi_heads_forward.1} parent=11 // pred_check
        %p248 = pneg %p166
      $region34: #{roi_heads_forward.1} parent=11 // pred_check_branch
        %250 = sbr.rel (%p248) target = $region36
      $region35: #{roi_heads_forward.1} parent=11 // pred_region
        _
      $region36: #{roi_heads_forward.1} parent=11 // pred_fallthru
        _
    $region12: #{roi_heads_forward.1} parent=5 // pred_fallthru
      _
    %p251 = scmp.lt.s32.totalorder %s14, 2
    // Predicated region
    $region37: #{roi_heads_forward.1} parent=5 // pred_check
      %p252 = pneg %p251
    $region38: #{roi_heads_forward.1} parent=5 // pred_check_branch
      %254 = sbr.rel (%p252) target = $region40
    $region39: #{roi_heads_forward.1} parent=5 // pred_region
      // Predicated region
      $region41: #{roi_heads_forward.1} parent=39 // pred_check
        %p255 = pneg %p34
      $region42: #{roi_heads_forward.1} parent=39 // pred_check_branch
        %257 = sbr.rel (%p255) target = $region44
      $region43: #{roi_heads_forward.1} parent=39 // pred_region
        %p258 = scmp.lt.s32.totalorder %s14, 1
        %s259 = scalar_select %p258, %s14, 1
        %s260 = smul.addr %s259, 98
        %s261 = smul.addr %s260, 4
        %s262 = scalar_lea.vmem %s0, %s261
      $region44: #{roi_heads_forward.1} parent=39 // pred_fallthru
        _
      // Predicated region
      $region45: #{roi_heads_forward.1} parent=39 // pred_check
        %p263 = pneg %p186
      $region46: #{roi_heads_forward.1} parent=39 // pred_check_branch
        %265 = sbr.rel (%p263) target = $region48
      $region47: #{roi_heads_forward.1} parent=39 // pred_region
        %p266 = scmp.lt.s32.totalorder %s14, 1
        %s267 = scalar_select %p266, %s14, 1
        %s268 = smul.addr %s267, 8
        %s269 = scalar_lea.vmem %s7, %s268
      $region48: #{roi_heads_forward.1} parent=39 // pred_fallthru
        _
    $region40: #{roi_heads_forward.1} parent=5 // pred_fallthru
      _
    %p270 = scmp.le.s32.totalorder 1, %s14
    %p271 = scmp.lt.s32.totalorder %s14, 3
    %p272 = pnand %p270, %p271
    %p273 = pneg %p272
    // Predicated region
    $region49: #{roi_heads_forward.1} parent=5 // pred_check
      _
    $region50: #{roi_heads_forward.1} parent=5 // pred_check_branch
      %275 = sbr.rel (%p272) target = $region52
    $region51: #{roi_heads_forward.1} parent=5 // pred_region
      %s276 = ssub.s32 %s14, 1
      %p277 = scmp.lt.s32.totalorder %s19, 1
      %s278 = scalar_select %p277, %s19, 1
      %s279 = smul.addr %s278, 98
      %s280 = smul.addr %s279, 4
      %s281 = scalar_lea.vmem %s0, %s280
      %p282 = pneg %p40
      %p283 = pneg %p37
      %p284 = pneg %p61
      %p285 = pneg %p58
      %p286 = pneg %p82
      %p287 = pneg %p79
      %p288 = pneg %p103
      %p289 = pneg %p100
      %p290 = pneg %p124
      %p291 = pneg %p121
      %p292 = pneg %p145
      %p293 = pneg %p142
      %p294 = pneg %p166
      %p295 = pneg %p163
      %p296 = scmp.lt.s32.totalorder %s19, 1
      %s297 = scalar_select %p296, %s19, 1
      %s298 = smul.addr %s297, 8
      %s299 = scalar_lea.vmem %s7, %s298
      %p300 = pneg %p192
      %p301 = pneg %p189
      %p302 = pneg %p218
      %p303 = pneg %p215
      %p304 = scmp.lt.s32.totalorder %s19, 1
      %s305 = scalar_select %p304, %s19, 1
      %s306 = smul.addr %s305, 8
      %s307 = scalar_lea.vmem %s8, %s306
      %p308 = scmp.lt.s32.totalorder %s19, 1
      %s309 = scalar_select %p308, %s19, 1
      %s310 = smul.addr %s309, 98
      %s311 = smul.addr %s310, 4
      %s312 = scalar_lea.vmem %s0, %s311
      %p313 = scmp.lt.s32.totalorder %s19, 1
      %s314 = scalar_select %p313, %s19, 1
      %s315 = smul.addr %s314, 8
      %s316 = scalar_lea.vmem %s7, %s315
      %p317 = scmp.lt.s32.totalorder %s19, 1
      %s318 = scalar_select %p317, %s19, 1
      %s319 = smul.addr %s318, 8
      %s320 = scalar_lea.vmem %s8, %s319
      %v322 = vld [vmem:[%s312] sm:$0xff]
      %v323 = vld [vmem:[%s312 + $0x8] sm:$0xff]
      %v324 = vld [vmem:[%s312 + $0x10] sm:$0xff]
      %v325 = vld [vmem:[%s312 + $0x18] sm:$0xff]
      %v326 = vld [vmem:[%s312 + $0x20] sm:$0xff]
      %v327 = vld [vmem:[%s312 + $0x28] sm:$0xff]
      %v328 = vld [vmem:[%s312 + $0x30] sm:$0xff]
      %v329 = vld [vmem:[%s312 + $0x38] sm:$0xff]
      %v330 = vld [vmem:[%s312 + $0x40] sm:$0xff]
      %v331 = vld [vmem:[%s312 + $0x48] sm:$0xff]
      %v332 = vld [vmem:[%s312 + $0x50] sm:$0xff]
      %v333 = vld [vmem:[%s312 + $0x58] sm:$0xff]
      %v334 = vld [vmem:[%s312 + $0x60] sm:$0xff]
      %v335 = vld [vmem:[%s312 + $0x68] sm:$0xff]
      %v336 = vld [vmem:[%s312 + $0x70] sm:$0xff]
      %v337 = vld [vmem:[%s312 + $0x78] sm:$0xff]
      %v338 = vld [vmem:[%s312 + $0x80] sm:$0xff]
      %v339 = vld [vmem:[%s312 + $0x88] sm:$0xff]
      %v340 = vld [vmem:[%s312 + $0x90] sm:$0xff]
      %v341 = vld [vmem:[%s312 + $0x98] sm:$0xff]
      %v342 = vld [vmem:[%s312 + $0xa0] sm:$0xff]
      %v343 = vld [vmem:[%s312 + $0xa8] sm:$0xff]
      %v344 = vld [vmem:[%s312 + $0xb0] sm:$0xff]
      %v345 = vld [vmem:[%s312 + $0xb8] sm:$0xff]
      %v346 = vld [vmem:[%s312 + $0xc0] sm:$0xff]
      %v347 = vld [vmem:[%s312 + $0xc8] sm:$0xff]
      %v348 = vld [vmem:[%s312 + $0xd0] sm:$0xff]
      %v349 = vld [vmem:[%s312 + $0xd8] sm:$0xff]
      %v350 = vld [vmem:[%s312 + $0xe0] sm:$0xff]
      %v351 = vld [vmem:[%s312 + $0xe8] sm:$0xff]
      %v352 = vld [vmem:[%s312 + $0xf0] sm:$0xff]
      %v353 = vld [vmem:[%s312 + $0xf8] sm:$0xff]
      %v354 = vld [vmem:[%s312 + $0x100] sm:$0xff]
      %v355 = vld [vmem:[%s312 + $0x108] sm:$0xff]
      %v356 = vld [vmem:[%s312 + $0x110] sm:$0xff]
      %v357 = vld [vmem:[%s312 + $0x118] sm:$0xff]
      %v358 = vld [vmem:[%s312 + $0x120] sm:$0xff]
      %v359 = vld [vmem:[%s312 + $0x128] sm:$0xff]
      %v360 = vld [vmem:[%s312 + $0x130] sm:$0xff]
      %v361 = vld [vmem:[%s312 + $0x138] sm:$0xff]
      %v362 = vld [vmem:[%s312 + $0x140] sm:$0xff]
      %v363 = vld [vmem:[%s312 + $0x148] sm:$0xff]
      %v364 = vld [vmem:[%s312 + $0x150] sm:$0xff]
      %v365 = vld [vmem:[%s312 + $0x158] sm:$0xff]
      %v366 = vld [vmem:[%s312 + $0x160] sm:$0xff]
      %v367 = vld [vmem:[%s312 + $0x168] sm:$0xff]
      %v368 = vld [vmem:[%s312 + $0x170] sm:$0xff]
      %v369 = vld [vmem:[%s312 + $0x178] sm:$0xff]
      %v370 = vld [vmem:[%s312 + $0x180] sm:$0xff]
      %v371 = vld [vmem:[%s1] sm:$0xf]
      %v372 = vld [vmem:[%s1 + $0x4] sm:$0xf]
      %v373 = vld [vmem:[%s1 + $0x8] sm:$0xf]
      %v374 = vld [vmem:[%s1 + $0xc] sm:$0xf]
      %v375 = vld [vmem:[%s1 + $0x10] sm:$0xf]
      %v376 = vld [vmem:[%s1 + $0x14] sm:$0xf]
      %v377 = vld [vmem:[%s1 + $0x18] sm:$0xf]
      %v378 = vld [vmem:[%s1 + $0x1c] sm:$0xf]
      %v379 = vld [vmem:[%s1 + $0x20] sm:$0xf]
      %v380 = vld [vmem:[%s1 + $0x24] sm:$0xf]
      %v381 = vld [vmem:[%s1 + $0x28] sm:$0xf]
      %v382 = vld [vmem:[%s1 + $0x2c] sm:$0xf]
      %v383 = vld [vmem:[%s1 + $0x30] sm:$0xf]
      %v384 = vld [vmem:[%s1 + $0x34] sm:$0xf]
      %v385 = vld [vmem:[%s1 + $0x38] sm:$0xf]
      %v386 = vld [vmem:[%s1 + $0x3c] sm:$0xf]
      %v387 = vld [vmem:[%s1 + $0x40] sm:$0xf]
      %v388 = vld [vmem:[%s1 + $0x44] sm:$0xf]
      %v389 = vld [vmem:[%s1 + $0x48] sm:$0xf]
      %v390 = vld [vmem:[%s1 + $0x4c] sm:$0xf]
      %v391 = vld [vmem:[%s1 + $0x50] sm:$0xf]
      %v392 = vld [vmem:[%s1 + $0x54] sm:$0xf]
      %v393 = vld [vmem:[%s1 + $0x58] sm:$0xf]
      %v394 = vld [vmem:[%s1 + $0x5c] sm:$0xf]
      %v395 = vld [vmem:[%s1 + $0x60] sm:$0xf]
      %v396 = vld [vmem:[%s1 + $0x64] sm:$0xf]
      %v397 = vld [vmem:[%s1 + $0x68] sm:$0xf]
      %v398 = vld [vmem:[%s1 + $0x6c] sm:$0xf]
      %v399 = vld [vmem:[%s1 + $0x70] sm:$0xf]
      %v400 = vld [vmem:[%s1 + $0x74] sm:$0xf]
      %v401 = vld [vmem:[%s1 + $0x78] sm:$0xf]
      %v402 = vld [vmem:[%s1 + $0x7c] sm:$0xf]
      %v403 = vld [vmem:[%s1 + $0x80] sm:$0xf]
      %v404 = vld [vmem:[%s1 + $0x84] sm:$0xf]
      %v405 = vld [vmem:[%s1 + $0x88] sm:$0xf]
      %v406 = vld [vmem:[%s1 + $0x8c] sm:$0xf]
      %v407 = vld [vmem:[%s1 + $0x90] sm:$0xf]
      %v408 = vld [vmem:[%s1 + $0x94] sm:$0xf]
      %v409 = vld [vmem:[%s1 + $0x98] sm:$0xf]
      %v410 = vld [vmem:[%s1 + $0x9c] sm:$0xf]
      %v411 = vld [vmem:[%s1 + $0xa0] sm:$0xf]
      %v412 = vld [vmem:[%s1 + $0xa4] sm:$0xf]
      %v413 = vld [vmem:[%s1 + $0xa8] sm:$0xf]
      %v414 = vld [vmem:[%s1 + $0xac] sm:$0xf]
      %v415 = vld [vmem:[%s1 + $0xb0] sm:$0xf]
      %v416 = vld [vmem:[%s1 + $0xb4] sm:$0xf]
      %v417 = vld [vmem:[%s1 + $0xb8] sm:$0xf]
      %v418 = vld [vmem:[%s1 + $0xbc] sm:$0xf]
      %v419 = vld [vmem:[%s1 + $0xc0] sm:$0xf]
      %v420 = vld [vmem:[%s1 + $0xc4] sm:$0xf]
      %v421 = vld [vmem:[%s1 + $0xc8] sm:$0xf]
      %v422 = vld [vmem:[%s1 + $0xcc] sm:$0xf]
      %v423 = vld [vmem:[%s1 + $0xd0] sm:$0xf]
      %v424 = vld [vmem:[%s1 + $0xd4] sm:$0xf]
      %v425 = vld [vmem:[%s1 + $0xd8] sm:$0xf]
      %v426 = vld [vmem:[%s1 + $0xdc] sm:$0xf]
      %v427 = vld [vmem:[%s1 + $0xe0] sm:$0xf]
      %v428 = vld [vmem:[%s1 + $0xe4] sm:$0xf]
      %v429 = vld [vmem:[%s1 + $0xe8] sm:$0xf]
      %v430 = vld [vmem:[%s1 + $0xec] sm:$0xf]
      %v431 = vld [vmem:[%s1 + $0xf0] sm:$0xf]
      %v432 = vld [vmem:[%s1 + $0xf4] sm:$0xf]
      %v433 = vld [vmem:[%s1 + $0xf8] sm:$0xf]
      %v434 = vld [vmem:[%s1 + $0xfc] sm:$0xf]
      %v435 = vld [vmem:[%s1 + $0x100] sm:$0xf]
      %v436 = vld [vmem:[%s1 + $0x104] sm:$0xf]
      %v437 = vld [vmem:[%s1 + $0x108] sm:$0xf]
      %v438 = vld [vmem:[%s1 + $0x10c] sm:$0xf]
      %v439 = vld [vmem:[%s1 + $0x110] sm:$0xf]
      %v440 = vld [vmem:[%s1 + $0x114] sm:$0xf]
      %v441 = vld [vmem:[%s1 + $0x118] sm:$0xf]
      %v442 = vld [vmem:[%s1 + $0x11c] sm:$0xf]
      %v443 = vld [vmem:[%s1 + $0x120] sm:$0xf]
      %v444 = vld [vmem:[%s1 + $0x124] sm:$0xf]
      %v445 = vld [vmem:[%s1 + $0x128] sm:$0xf]
      %v446 = vld [vmem:[%s1 + $0x12c] sm:$0xf]
      %v447 = vld [vmem:[%s1 + $0x130] sm:$0xf]
      %v448 = vld [vmem:[%s1 + $0x134] sm:$0xf]
      %v449 = vld [vmem:[%s1 + $0x138] sm:$0xf]
      %v450 = vld [vmem:[%s1 + $0x13c] sm:$0xf]
      %v451 = vld [vmem:[%s1 + $0x140] sm:$0xf]
      %v452 = vld [vmem:[%s1 + $0x144] sm:$0xf]
      %v453 = vld [vmem:[%s1 + $0x148] sm:$0xf]
      %v454 = vld [vmem:[%s1 + $0x14c] sm:$0xf]
      %v455 = vld [vmem:[%s1 + $0x150] sm:$0xf]
      %v456 = vld [vmem:[%s1 + $0x154] sm:$0xf]
      %v457 = vld [vmem:[%s1 + $0x158] sm:$0xf]
      %v458 = vld [vmem:[%s1 + $0x15c] sm:$0xf]
      %v459 = vld [vmem:[%s1 + $0x160] sm:$0xf]
      %v460 = vld [vmem:[%s1 + $0x164] sm:$0xf]
      %v461 = vld [vmem:[%s1 + $0x168] sm:$0xf]
      %v462 = vld [vmem:[%s1 + $0x16c] sm:$0xf]
      %v463 = vld [vmem:[%s1 + $0x170] sm:$0xf]
      %v464 = vld [vmem:[%s1 + $0x174] sm:$0xf]
      %v465 = vld [vmem:[%s1 + $0x178] sm:$0xf]
      %v466 = vld [vmem:[%s1 + $0x17c] sm:$0xf]
      %v467 = vld [vmem:[%s1 + $0x180] sm:$0xf]
      %v468 = vld [vmem:[%s1 + $0x184] sm:$0xf]
      %v469 = vld [vmem:[%s1 + $0x188] sm:$0xf]
      %v470 = vld [vmem:[%s1 + $0x18c] sm:$0xf]
      %v471 = vld [vmem:[%s1 + $0x190] sm:$0xf]
      %v472 = vld [vmem:[%s1 + $0x194] sm:$0xf]
      %v473 = vld [vmem:[%s1 + $0x198] sm:$0xf]
      %v474 = vld [vmem:[%s1 + $0x19c] sm:$0xf]
      %v475 = vld [vmem:[%s1 + $0x1a0] sm:$0xf]
      %v476 = vld [vmem:[%s1 + $0x1a4] sm:$0xf]
      %v477 = vld [vmem:[%s1 + $0x1a8] sm:$0xf]
      %v478 = vld [vmem:[%s1 + $0x1ac] sm:$0xf]
      %v479 = vld [vmem:[%s1 + $0x1b0] sm:$0xf]
      %v480 = vld [vmem:[%s1 + $0x1b4] sm:$0xf]
      %v481 = vld [vmem:[%s1 + $0x1b8] sm:$0xf]
      %v482 = vld [vmem:[%s1 + $0x1bc] sm:$0xf]
      %v483 = vld [vmem:[%s1 + $0x1c0] sm:$0xf]
      %v484 = vld [vmem:[%s1 + $0x1c4] sm:$0xf]
      %v485 = vld [vmem:[%s1 + $0x1c8] sm:$0xf]
      %v486 = vld [vmem:[%s1 + $0x1cc] sm:$0xf]
      %v487 = vld [vmem:[%s1 + $0x1d0] sm:$0xf]
      %v488 = vld [vmem:[%s1 + $0x1d4] sm:$0xf]
      %v489 = vld [vmem:[%s1 + $0x1d8] sm:$0xf]
      %v490 = vld [vmem:[%s1 + $0x1dc] sm:$0xf]
      %v491 = vld [vmem:[%s1 + $0x1e0] sm:$0xf]
      %v492 = vld [vmem:[%s1 + $0x1e4] sm:$0xf]
      %v493 = vld [vmem:[%s1 + $0x1e8] sm:$0xf]
      %v494 = vld [vmem:[%s1 + $0x1ec] sm:$0xf]
      %v495 = vld [vmem:[%s1 + $0x1f0] sm:$0xf]
      %v496 = vld [vmem:[%s1 + $0x1f4] sm:$0xf]
      %v497 = vld [vmem:[%s1 + $0x1f8] sm:$0xf]
      %v498 = vld [vmem:[%s1 + $0x1fc] sm:$0xf]
      %v499 = vld [vmem:[%s1 + $0x200] sm:$0xf]
      %v500 = vld [vmem:[%s1 + $0x204] sm:$0xf]
      %v501 = vld [vmem:[%s1 + $0x208] sm:$0xf]
      %v502 = vld [vmem:[%s1 + $0x20c] sm:$0xf]
      %v503 = vld [vmem:[%s1 + $0x210] sm:$0xf]
      %v504 = vld [vmem:[%s1 + $0x214] sm:$0xf]
      %v505 = vld [vmem:[%s1 + $0x218] sm:$0xf]
      %v506 = vld [vmem:[%s1 + $0x21c] sm:$0xf]
      %v507 = vld [vmem:[%s1 + $0x220] sm:$0xf]
      %v508 = vld [vmem:[%s1 + $0x224] sm:$0xf]
      %v509 = vld [vmem:[%s1 + $0x228] sm:$0xf]
      %v510 = vld [vmem:[%s1 + $0x22c] sm:$0xf]
      %v511 = vld [vmem:[%s1 + $0x230] sm:$0xf]
      %v512 = vld [vmem:[%s1 + $0x234] sm:$0xf]
      %v513 = vld [vmem:[%s1 + $0x238] sm:$0xf]
      %v514 = vld [vmem:[%s1 + $0x23c] sm:$0xf]
      %v515 = vld [vmem:[%s1 + $0x240] sm:$0xf]
      %v516 = vld [vmem:[%s1 + $0x244] sm:$0xf]
      %v517 = vld [vmem:[%s1 + $0x248] sm:$0xf]
      %v518 = vld [vmem:[%s1 + $0x24c] sm:$0xf]
      %v519 = vld [vmem:[%s1 + $0x250] sm:$0xf]
      %v520 = vld [vmem:[%s1 + $0x254] sm:$0xf]
      %v521 = vld [vmem:[%s1 + $0x258] sm:$0xf]
      %v522 = vld [vmem:[%s1 + $0x25c] sm:$0xf]
      %v523 = vld [vmem:[%s1 + $0x260] sm:$0xf]
      %v524 = vld [vmem:[%s1 + $0x264] sm:$0xf]
      %v525 = vld [vmem:[%s1 + $0x268] sm:$0xf]
      %v526 = vld [vmem:[%s1 + $0x26c] sm:$0xf]
      %v527 = vld [vmem:[%s1 + $0x270] sm:$0xf]
      %v528 = vld [vmem:[%s1 + $0x274] sm:$0xf]
      %v529 = vld [vmem:[%s1 + $0x278] sm:$0xf]
      %v530 = vld [vmem:[%s1 + $0x27c] sm:$0xf]
      %v531 = vld [vmem:[%s1 + $0x280] sm:$0xf]
      %v532 = vld [vmem:[%s1 + $0x284] sm:$0xf]
      %v533 = vld [vmem:[%s1 + $0x288] sm:$0xf]
      %v534 = vld [vmem:[%s1 + $0x28c] sm:$0xf]
      %v535 = vld [vmem:[%s1 + $0x290] sm:$0xf]
      %v536 = vld [vmem:[%s1 + $0x294] sm:$0xf]
      %v537 = vld [vmem:[%s1 + $0x298] sm:$0xf]
      %v538 = vld [vmem:[%s1 + $0x29c] sm:$0xf]
      %v539 = vld [vmem:[%s1 + $0x2a0] sm:$0xf]
      %v540 = vld [vmem:[%s1 + $0x2a4] sm:$0xf]
      %v541 = vld [vmem:[%s1 + $0x2a8] sm:$0xf]
      %v542 = vld [vmem:[%s1 + $0x2ac] sm:$0xf]
      %v543 = vld [vmem:[%s1 + $0x2b0] sm:$0xf]
      %v544 = vld [vmem:[%s1 + $0x2b4] sm:$0xf]
      %v545 = vld [vmem:[%s1 + $0x2b8] sm:$0xf]
      %v546 = vld [vmem:[%s1 + $0x2bc] sm:$0xf]
      %v547 = vld [vmem:[%s1 + $0x2c0] sm:$0xf]
      %v548 = vld [vmem:[%s1 + $0x2c4] sm:$0xf]
      %v549 = vld [vmem:[%s1 + $0x2c8] sm:$0xf]
      %v550 = vld [vmem:[%s1 + $0x2cc] sm:$0xf]
      %v551 = vld [vmem:[%s1 + $0x2d0] sm:$0xf]
      %v552 = vld [vmem:[%s1 + $0x2d4] sm:$0xf]
      %v553 = vld [vmem:[%s1 + $0x2d8] sm:$0xf]
      %v554 = vld [vmem:[%s1 + $0x2dc] sm:$0xf]
      %v555 = vld [vmem:[%s1 + $0x2e0] sm:$0xf]
      %v556 = vld [vmem:[%s1 + $0x2e4] sm:$0xf]
      %v557 = vld [vmem:[%s1 + $0x2e8] sm:$0xf]
      %v558 = vld [vmem:[%s1 + $0x2ec] sm:$0xf]
      %v559 = vld [vmem:[%s1 + $0x2f0] sm:$0xf]
      %v560 = vld [vmem:[%s1 + $0x2f4] sm:$0xf]
      %v561 = vld [vmem:[%s1 + $0x2f8] sm:$0xf]
      %v562 = vld [vmem:[%s1 + $0x2fc] sm:$0xf]
      %v563 = vld [vmem:[%s1 + $0x300] sm:$0xf]
      %v564 = vld [vmem:[%s1 + $0x304] sm:$0xf]
      %v565 = vld [vmem:[%s1 + $0x308] sm:$0xf]
      %v566 = vld [vmem:[%s1 + $0x30c] sm:$0xf]
      %v567 = vld [vmem:[%s1 + $0x310] sm:$0xf]
      %v568 = vld [vmem:[%s1 + $0x314] sm:$0xf]
      %v569 = vld [vmem:[%s1 + $0x318] sm:$0xf]
      %v570 = vld [vmem:[%s1 + $0x31c] sm:$0xf]
      %v571 = vld [vmem:[%s1 + $0x320] sm:$0xf]
      %v572 = vld [vmem:[%s1 + $0x324] sm:$0xf]
      %v573 = vld [vmem:[%s1 + $0x328] sm:$0xf]
      %v574 = vld [vmem:[%s1 + $0x32c] sm:$0xf]
      %v575 = vld [vmem:[%s1 + $0x330] sm:$0xf]
      %v576 = vld [vmem:[%s1 + $0x334] sm:$0xf]
      %v577 = vld [vmem:[%s1 + $0x338] sm:$0xf]
      %v578 = vld [vmem:[%s1 + $0x33c] sm:$0xf]
      %v579 = vld [vmem:[%s1 + $0x340] sm:$0xf]
      %v580 = vld [vmem:[%s1 + $0x344] sm:$0xf]
      %v581 = vld [vmem:[%s1 + $0x348] sm:$0xf]
      %v582 = vld [vmem:[%s1 + $0x34c] sm:$0xf]
      %v583 = vld [vmem:[%s1 + $0x350] sm:$0xf]
      %v584 = vld [vmem:[%s1 + $0x354] sm:$0xf]
      %v585 = vld [vmem:[%s1 + $0x358] sm:$0xf]
      %v586 = vld [vmem:[%s1 + $0x35c] sm:$0xf]
      %v587 = vld [vmem:[%s1 + $0x360] sm:$0xf]
      %v588 = vld [vmem:[%s1 + $0x364] sm:$0xf]
      %v589 = vld [vmem:[%s1 + $0x368] sm:$0xf]
      %v590 = vld [vmem:[%s1 + $0x36c] sm:$0xf]
      %v591 = vld [vmem:[%s1 + $0x370] sm:$0xf]
      %v592 = vld [vmem:[%s1 + $0x374] sm:$0xf]
      %v593 = vld [vmem:[%s1 + $0x378] sm:$0xf]
      %v594 = vld [vmem:[%s1 + $0x37c] sm:$0xf]
      %v595 = vld [vmem:[%s1 + $0x380] sm:$0xf]
      %v596 = vld [vmem:[%s1 + $0x384] sm:$0xf]
      %v597 = vld [vmem:[%s1 + $0x388] sm:$0xf]
      %v598 = vld [vmem:[%s1 + $0x38c] sm:$0xf]
      %v599 = vld [vmem:[%s1 + $0x390] sm:$0xf]
      %v600 = vld [vmem:[%s1 + $0x394] sm:$0xf]
      %v601 = vld [vmem:[%s1 + $0x398] sm:$0xf]
      %v602 = vld [vmem:[%s1 + $0x39c] sm:$0xf]
      %v603 = vld [vmem:[%s1 + $0x3a0] sm:$0xf]
      %v604 = vld [vmem:[%s1 + $0x3a4] sm:$0xf]
      %v605 = vld [vmem:[%s1 + $0x3a8] sm:$0xf]
      %v606 = vld [vmem:[%s1 + $0x3ac] sm:$0xf]
      %v607 = vld [vmem:[%s1 + $0x3b0] sm:$0xf]
      %v608 = vld [vmem:[%s1 + $0x3b4] sm:$0xf]
      %v609 = vld [vmem:[%s1 + $0x3b8] sm:$0xf]
      %v610 = vld [vmem:[%s1 + $0x3bc] sm:$0xf]
      %v611 = vld [vmem:[%s1 + $0x3c0] sm:$0xf]
      %v612 = vld [vmem:[%s1 + $0x3c4] sm:$0xf]
      %v613 = vld [vmem:[%s1 + $0x3c8] sm:$0xf]
      %v614 = vld [vmem:[%s1 + $0x3cc] sm:$0xf]
      %v615 = vld [vmem:[%s1 + $0x3d0] sm:$0xf]
      %v616 = vld [vmem:[%s1 + $0x3d4] sm:$0xf]
      %v617 = vld [vmem:[%s1 + $0x3d8] sm:$0xf]
      %v618 = vld [vmem:[%s1 + $0x3dc] sm:$0xf]
      %v619 = vld [vmem:[%s1 + $0x3e0] sm:$0xf]
      %v620 = vld [vmem:[%s1 + $0x3e4] sm:$0xf]
      %v621 = vld [vmem:[%s1 + $0x3e8] sm:$0xf]
      %v622 = vld [vmem:[%s1 + $0x3ec] sm:$0xf]
      %v623 = vld [vmem:[%s1 + $0x3f0] sm:$0xf]
      %v624 = vld [vmem:[%s1 + $0x3f4] sm:$0xf]
      %v625 = vld [vmem:[%s1 + $0x3f8] sm:$0xf]
      %v626 = vld [vmem:[%s1 + $0x3fc] sm:$0xf]
      %v627 = vld [vmem:[%s1 + $0x400] sm:$0xf]
      %v628 = vld [vmem:[%s1 + $0x404] sm:$0xf]
      %v629 = vld [vmem:[%s1 + $0x408] sm:$0xf]
      %v630 = vld [vmem:[%s1 + $0x40c] sm:$0xf]
      %v631 = vld [vmem:[%s1 + $0x410] sm:$0xf]
      %v632 = vld [vmem:[%s1 + $0x414] sm:$0xf]
      %v633 = vld [vmem:[%s1 + $0x418] sm:$0xf]
      %v634 = vld [vmem:[%s1 + $0x41c] sm:$0xf]
      %v635 = vld [vmem:[%s1 + $0x420] sm:$0xf]
      %v636 = vld [vmem:[%s1 + $0x424] sm:$0xf]
      %v637 = vld [vmem:[%s1 + $0x428] sm:$0xf]
      %v638 = vld [vmem:[%s1 + $0x42c] sm:$0xf]
      %v639 = vld [vmem:[%s1 + $0x430] sm:$0xf]
      %v640 = vld [vmem:[%s1 + $0x434] sm:$0xf]
      %v641 = vld [vmem:[%s1 + $0x438] sm:$0xf]
      %v642 = vld [vmem:[%s1 + $0x43c] sm:$0xf]
      %v643 = vld [vmem:[%s1 + $0x440] sm:$0xf]
      %v644 = vld [vmem:[%s1 + $0x444] sm:$0xf]
      %v645 = vld [vmem:[%s1 + $0x448] sm:$0xf]
      %v646 = vld [vmem:[%s1 + $0x44c] sm:$0xf]
      %v647 = vld [vmem:[%s1 + $0x450] sm:$0xf]
      %v648 = vld [vmem:[%s1 + $0x454] sm:$0xf]
      %v649 = vld [vmem:[%s1 + $0x458] sm:$0xf]
      %v650 = vld [vmem:[%s1 + $0x45c] sm:$0xf]
      %v651 = vld [vmem:[%s1 + $0x460] sm:$0xf]
      %v652 = vld [vmem:[%s1 + $0x464] sm:$0xf]
      %v653 = vld [vmem:[%s1 + $0x468] sm:$0xf]
      %v654 = vld [vmem:[%s1 + $0x46c] sm:$0xf]
      %v655 = vld [vmem:[%s1 + $0x470] sm:$0xf]
      %v656 = vld [vmem:[%s1 + $0x474] sm:$0xf]
      %v657 = vld [vmem:[%s1 + $0x478] sm:$0xf]
      %v658 = vld [vmem:[%s1 + $0x47c] sm:$0xf]
      %v659 = vld [vmem:[%s1 + $0x480] sm:$0xf]
      %v660 = vld [vmem:[%s1 + $0x484] sm:$0xf]
      %v661 = vld [vmem:[%s1 + $0x488] sm:$0xf]
      %v662 = vld [vmem:[%s1 + $0x48c] sm:$0xf]
      %v663 = vld [vmem:[%s1 + $0x490] sm:$0xf]
      %v664 = vld [vmem:[%s1 + $0x494] sm:$0xf]
      %v665 = vld [vmem:[%s1 + $0x498] sm:$0xf]
      %v666 = vld [vmem:[%s1 + $0x49c] sm:$0xf]
      %v667 = vld [vmem:[%s1 + $0x4a0] sm:$0xf]
      %v668 = vld [vmem:[%s1 + $0x4a4] sm:$0xf]
      %v669 = vld [vmem:[%s1 + $0x4a8] sm:$0xf]
      %v670 = vld [vmem:[%s1 + $0x4ac] sm:$0xf]
      %v671 = vld [vmem:[%s1 + $0x4b0] sm:$0xf]
      %v672 = vld [vmem:[%s1 + $0x4b4] sm:$0xf]
      %v673 = vld [vmem:[%s1 + $0x4b8] sm:$0xf]
      %v674 = vld [vmem:[%s1 + $0x4bc] sm:$0xf]
      %v675 = vld [vmem:[%s1 + $0x4c0] sm:$0xf]
      %v676 = vld [vmem:[%s1 + $0x4c4] sm:$0xf]
      %v677 = vld [vmem:[%s1 + $0x4c8] sm:$0xf]
      %v678 = vld [vmem:[%s1 + $0x4cc] sm:$0xf]
      %v679 = vld [vmem:[%s1 + $0x4d0] sm:$0xf]
      %v680 = vld [vmem:[%s1 + $0x4d4] sm:$0xf]
      %v681 = vld [vmem:[%s1 + $0x4d8] sm:$0xf]
      %v682 = vld [vmem:[%s1 + $0x4dc] sm:$0xf]
      %v683 = vld [vmem:[%s1 + $0x4e0] sm:$0xf]
      %v684 = vld [vmem:[%s1 + $0x4e4] sm:$0xf]
      %v685 = vld [vmem:[%s1 + $0x4e8] sm:$0xf]
      %v686 = vld [vmem:[%s1 + $0x4ec] sm:$0xf]
      %v687 = vld [vmem:[%s1 + $0x4f0] sm:$0xf]
      %v688 = vld [vmem:[%s1 + $0x4f4] sm:$0xf]
      %v689 = vld [vmem:[%s1 + $0x4f8] sm:$0xf]
      %v690 = vld [vmem:[%s1 + $0x4fc] sm:$0xf]
      %v691 = vld [vmem:[%s1 + $0x500] sm:$0xf]
      %v692 = vld [vmem:[%s1 + $0x504] sm:$0xf]
      %v693 = vld [vmem:[%s1 + $0x508] sm:$0xf]
      %v694 = vld [vmem:[%s1 + $0x50c] sm:$0xf]
      %v695 = vld [vmem:[%s1 + $0x510] sm:$0xf]
      %v696 = vld [vmem:[%s1 + $0x514] sm:$0xf]
      %v697 = vld [vmem:[%s1 + $0x518] sm:$0xf]
      %v698 = vld [vmem:[%s1 + $0x51c] sm:$0xf]
      %v699 = vld [vmem:[%s1 + $0x520] sm:$0xf]
      %v700 = vld [vmem:[%s1 + $0x524] sm:$0xf]
      %v701 = vld [vmem:[%s1 + $0x528] sm:$0xf]
      %v702 = vld [vmem:[%s1 + $0x52c] sm:$0xf]
      %v703 = vld [vmem:[%s1 + $0x530] sm:$0xf]
      %v704 = vld [vmem:[%s1 + $0x534] sm:$0xf]
      %v705 = vld [vmem:[%s1 + $0x538] sm:$0xf]
      %v706 = vld [vmem:[%s1 + $0x53c] sm:$0xf]
      %v707 = vld [vmem:[%s1 + $0x540] sm:$0xf]
      %v708 = vld [vmem:[%s1 + $0x544] sm:$0xf]
      %v709 = vld [vmem:[%s1 + $0x548] sm:$0xf]
      %v710 = vld [vmem:[%s1 + $0x54c] sm:$0xf]
      %v711 = vld [vmem:[%s1 + $0x550] sm:$0xf]
      %v712 = vld [vmem:[%s1 + $0x554] sm:$0xf]
      %v713 = vld [vmem:[%s1 + $0x558] sm:$0xf]
      %v714 = vld [vmem:[%s1 + $0x55c] sm:$0xf]
      %v715 = vld [vmem:[%s1 + $0x560] sm:$0xf]
      %v716 = vld [vmem:[%s1 + $0x564] sm:$0xf]
      %v717 = vld [vmem:[%s1 + $0x568] sm:$0xf]
      %v718 = vld [vmem:[%s1 + $0x56c] sm:$0xf]
      %v719 = vld [vmem:[%s1 + $0x570] sm:$0xf]
      %v720 = vld [vmem:[%s1 + $0x574] sm:$0xf]
      %v721 = vld [vmem:[%s1 + $0x578] sm:$0xf]
      %v722 = vld [vmem:[%s1 + $0x57c] sm:$0xf]
      %v723 = vld [vmem:[%s1 + $0x580] sm:$0xf]
      %v724 = vld [vmem:[%s1 + $0x584] sm:$0xf]
      %v725 = vld [vmem:[%s1 + $0x588] sm:$0xf]
      %v726 = vld [vmem:[%s1 + $0x58c] sm:$0xf]
      %v727 = vld [vmem:[%s1 + $0x590] sm:$0xf]
      %v728 = vld [vmem:[%s1 + $0x594] sm:$0xf]
      %v729 = vld [vmem:[%s1 + $0x598] sm:$0xf]
      %v730 = vld [vmem:[%s1 + $0x59c] sm:$0xf]
      %v731 = vld [vmem:[%s1 + $0x5a0] sm:$0xf]
      %v732 = vld [vmem:[%s1 + $0x5a4] sm:$0xf]
      %v733 = vld [vmem:[%s1 + $0x5a8] sm:$0xf]
      %v734 = vld [vmem:[%s1 + $0x5ac] sm:$0xf]
      %v735 = vld [vmem:[%s1 + $0x5b0] sm:$0xf]
      %v736 = vld [vmem:[%s1 + $0x5b4] sm:$0xf]
      %v737 = vld [vmem:[%s1 + $0x5b8] sm:$0xf]
      %v738 = vld [vmem:[%s1 + $0x5bc] sm:$0xf]
      %v739 = vld [vmem:[%s1 + $0x5c0] sm:$0xf]
      %v740 = vld [vmem:[%s1 + $0x5c4] sm:$0xf]
      %v741 = vld [vmem:[%s1 + $0x5c8] sm:$0xf]
      %v742 = vld [vmem:[%s1 + $0x5cc] sm:$0xf]
      %v743 = vld [vmem:[%s1 + $0x5d0] sm:$0xf]
      %v744 = vld [vmem:[%s1 + $0x5d4] sm:$0xf]
      %v745 = vld [vmem:[%s1 + $0x5d8] sm:$0xf]
      %v746 = vld [vmem:[%s1 + $0x5dc] sm:$0xf]
      %v747 = vld [vmem:[%s1 + $0x5e0] sm:$0xf]
      %v748 = vld [vmem:[%s1 + $0x5e4] sm:$0xf]
      %v749 = vld [vmem:[%s1 + $0x5e8] sm:$0xf]
      %v750 = vld [vmem:[%s1 + $0x5ec] sm:$0xf]
      %v751 = vld [vmem:[%s1 + $0x5f0] sm:$0xf]
      %v752 = vld [vmem:[%s1 + $0x5f4] sm:$0xf]
      %v753 = vld [vmem:[%s1 + $0x5f8] sm:$0xf]
      %v754 = vld [vmem:[%s1 + $0x5fc] sm:$0xf]
      %v755 = vld [vmem:[%s1 + $0x600] sm:$0xf]
      %v756 = vld [vmem:[%s1 + $0x604] sm:$0xf]
      %v757 = vld [vmem:[%s1 + $0x608] sm:$0xf]
      %v758 = vld [vmem:[%s1 + $0x60c] sm:$0xf]
      %v759 = vld [vmem:[%s1 + $0x610] sm:$0xf]
      %v760 = vld [vmem:[%s1 + $0x614] sm:$0xf]
      %v761 = vld [vmem:[%s1 + $0x618] sm:$0xf]
      %v762 = vld [vmem:[%s1 + $0x61c] sm:$0xf]
      %v763 = vld [vmem:[%s1 + $0x620] sm:$0xf]
      %v764 = vld [vmem:[%s1 + $0x624] sm:$0xf]
      %v765 = vld [vmem:[%s1 + $0x628] sm:$0xf]
      %v766 = vld [vmem:[%s1 + $0x62c] sm:$0xf]
      %v767 = vld [vmem:[%s1 + $0x630] sm:$0xf]
      %v768 = vld [vmem:[%s1 + $0x634] sm:$0xf]
      %v769 = vld [vmem:[%s1 + $0x638] sm:$0xf]
      %v770 = vld [vmem:[%s1 + $0x63c] sm:$0xf]
      %v771 = vld [vmem:[%s1 + $0x640] sm:$0xf]
      %v772 = vld [vmem:[%s1 + $0x644] sm:$0xf]
      %v773 = vld [vmem:[%s1 + $0x648] sm:$0xf]
      %v774 = vld [vmem:[%s1 + $0x64c] sm:$0xf]
      %v775 = vld [vmem:[%s1 + $0x650] sm:$0xf]
      %v776 = vld [vmem:[%s1 + $0x654] sm:$0xf]
      %v777 = vld [vmem:[%s1 + $0x658] sm:$0xf]
      %v778 = vld [vmem:[%s1 + $0x65c] sm:$0xf]
      %v779 = vld [vmem:[%s1 + $0x660] sm:$0xf]
      %v780 = vld [vmem:[%s1 + $0x664] sm:$0xf]
      %v781 = vld [vmem:[%s1 + $0x668] sm:$0xf]
      %v782 = vld [vmem:[%s1 + $0x66c] sm:$0xf]
      %v783 = vld [vmem:[%s1 + $0x670] sm:$0xf]
      %v784 = vld [vmem:[%s1 + $0x674] sm:$0xf]
      %v785 = vld [vmem:[%s1 + $0x678] sm:$0xf]
      %v786 = vld [vmem:[%s1 + $0x67c] sm:$0xf]
      %v787 = vld [vmem:[%s1 + $0x680] sm:$0xf]
      %v788 = vld [vmem:[%s1 + $0x684] sm:$0xf]
      %v789 = vld [vmem:[%s1 + $0x688] sm:$0xf]
      %v790 = vld [vmem:[%s1 + $0x68c] sm:$0xf]
      %v791 = vld [vmem:[%s1 + $0x690] sm:$0xf]
      %v792 = vld [vmem:[%s1 + $0x694] sm:$0xf]
      %v793 = vld [vmem:[%s1 + $0x698] sm:$0xf]
      %v794 = vld [vmem:[%s1 + $0x69c] sm:$0xf]
      %v795 = vld [vmem:[%s1 + $0x6a0] sm:$0xf]
      %v796 = vld [vmem:[%s1 + $0x6a4] sm:$0xf]
      %v797 = vld [vmem:[%s1 + $0x6a8] sm:$0xf]
      %v798 = vld [vmem:[%s1 + $0x6ac] sm:$0xf]
      %v799 = vld [vmem:[%s1 + $0x6b0] sm:$0xf]
      %v800 = vld [vmem:[%s1 + $0x6b4] sm:$0xf]
      %v801 = vld [vmem:[%s1 + $0x6b8] sm:$0xf]
      %v802 = vld [vmem:[%s1 + $0x6bc] sm:$0xf]
      %v803 = vld [vmem:[%s1 + $0x6c0] sm:$0xf]
      %v804 = vld [vmem:[%s1 + $0x6c4] sm:$0xf]
      %v805 = vld [vmem:[%s1 + $0x6c8] sm:$0xf]
      %v806 = vld [vmem:[%s1 + $0x6cc] sm:$0xf]
      %v807 = vld [vmem:[%s1 + $0x6d0] sm:$0xf]
      %v808 = vld [vmem:[%s1 + $0x6d4] sm:$0xf]
      %v809 = vld [vmem:[%s1 + $0x6d8] sm:$0xf]
      %v810 = vld [vmem:[%s1 + $0x6dc] sm:$0xf]
      %v811 = vld [vmem:[%s1 + $0x6e0] sm:$0xf]
      %v812 = vld [vmem:[%s1 + $0x6e4] sm:$0xf]
      %v813 = vld [vmem:[%s1 + $0x6e8] sm:$0xf]
      %v814 = vld [vmem:[%s1 + $0x6ec] sm:$0xf]
      %v815 = vld [vmem:[%s1 + $0x6f0] sm:$0xf]
      %v816 = vld [vmem:[%s1 + $0x6f4] sm:$0xf]
      %v817 = vld [vmem:[%s1 + $0x6f8] sm:$0xf]
      %v818 = vld [vmem:[%s1 + $0x6fc] sm:$0xf]
      %v819 = vld [vmem:[%s1 + $0x700] sm:$0xf]
      %v820 = vld [vmem:[%s1 + $0x704] sm:$0xf]
      %v821 = vld [vmem:[%s1 + $0x708] sm:$0xf]
      %v822 = vld [vmem:[%s1 + $0x70c] sm:$0xf]
      %v823 = vld [vmem:[%s1 + $0x710] sm:$0xf]
      %v824 = vld [vmem:[%s1 + $0x714] sm:$0xf]
      %v825 = vld [vmem:[%s1 + $0x718] sm:$0xf]
      %v826 = vld [vmem:[%s1 + $0x71c] sm:$0xf]
      %v827 = vld [vmem:[%s1 + $0x720] sm:$0xf]
      %v828 = vld [vmem:[%s1 + $0x724] sm:$0xf]
      %v829 = vld [vmem:[%s1 + $0x728] sm:$0xf]
      %v830 = vld [vmem:[%s1 + $0x72c] sm:$0xf]
      %v831 = vld [vmem:[%s1 + $0x730] sm:$0xf]
      %v832 = vld [vmem:[%s1 + $0x734] sm:$0xf]
      %v833 = vld [vmem:[%s1 + $0x738] sm:$0xf]
      %v834 = vld [vmem:[%s1 + $0x73c] sm:$0xf]
      %v835 = vld [vmem:[%s1 + $0x740] sm:$0xf]
      %v836 = vld [vmem:[%s1 + $0x744] sm:$0xf]
      %v837 = vld [vmem:[%s1 + $0x748] sm:$0xf]
      %v838 = vld [vmem:[%s1 + $0x74c] sm:$0xf]
      %v839 = vld [vmem:[%s1 + $0x750] sm:$0xf]
      %v840 = vld [vmem:[%s1 + $0x754] sm:$0xf]
      %v841 = vld [vmem:[%s1 + $0x758] sm:$0xf]
      %v842 = vld [vmem:[%s1 + $0x75c] sm:$0xf]
      %v843 = vld [vmem:[%s1 + $0x760] sm:$0xf]
      %v844 = vld [vmem:[%s1 + $0x764] sm:$0xf]
      %v845 = vld [vmem:[%s1 + $0x768] sm:$0xf]
      %v846 = vld [vmem:[%s1 + $0x76c] sm:$0xf]
      %v847 = vld [vmem:[%s1 + $0x770] sm:$0xf]
      %v848 = vld [vmem:[%s1 + $0x774] sm:$0xf]
      %v849 = vld [vmem:[%s1 + $0x778] sm:$0xf]
      %v850 = vld [vmem:[%s1 + $0x77c] sm:$0xf]
      %v851 = vld [vmem:[%s1 + $0x780] sm:$0xf]
      %v852 = vld [vmem:[%s1 + $0x784] sm:$0xf]
      %v853 = vld [vmem:[%s1 + $0x788] sm:$0xf]
      %v854 = vld [vmem:[%s1 + $0x78c] sm:$0xf]
      %v855 = vld [vmem:[%s1 + $0x790] sm:$0xf]
      %v856 = vld [vmem:[%s1 + $0x794] sm:$0xf]
      %v857 = vld [vmem:[%s1 + $0x798] sm:$0xf]
      %v858 = vld [vmem:[%s1 + $0x79c] sm:$0xf]
      %v859 = vld [vmem:[%s1 + $0x7a0] sm:$0xf]
      %v860 = vld [vmem:[%s1 + $0x7a4] sm:$0xf]
      %v861 = vld [vmem:[%s1 + $0x7a8] sm:$0xf]
      %v862 = vld [vmem:[%s1 + $0x7ac] sm:$0xf]
      %v863 = vld [vmem:[%s1 + $0x7b0] sm:$0xf]
      %v864 = vld [vmem:[%s1 + $0x7b4] sm:$0xf]
      %v865 = vld [vmem:[%s1 + $0x7b8] sm:$0xf]
      %v866 = vld [vmem:[%s1 + $0x7bc] sm:$0xf]
      %v867 = vld [vmem:[%s1 + $0x7c0] sm:$0xf]
      %v868 = vld [vmem:[%s1 + $0x7c4] sm:$0xf]
      %v869 = vld [vmem:[%s1 + $0x7c8] sm:$0xf]
      %v870 = vld [vmem:[%s1 + $0x7cc] sm:$0xf]
      %v871 = vld [vmem:[%s1 + $0x7d0] sm:$0xf]
      %v872 = vld [vmem:[%s1 + $0x7d4] sm:$0xf]
      %v873 = vld [vmem:[%s1 + $0x7d8] sm:$0xf]
      %v874 = vld [vmem:[%s1 + $0x7dc] sm:$0xf]
      %v875 = vld [vmem:[%s1 + $0x7e0] sm:$0xf]
      %v876 = vld [vmem:[%s1 + $0x7e4] sm:$0xf]
      %v877 = vld [vmem:[%s1 + $0x7e8] sm:$0xf]
      %v878 = vld [vmem:[%s1 + $0x7ec] sm:$0xf]
      %v879 = vld [vmem:[%s1 + $0x7f0] sm:$0xf]
      %v880 = vld [vmem:[%s1 + $0x7f4] sm:$0xf]
      %v881 = vld [vmem:[%s1 + $0x7f8] sm:$0xf]
      %v882 = vld [vmem:[%s1 + $0x7fc] sm:$0xf]
      %v883 = vld [vmem:[%s1 + $0x800] sm:$0xf]
      %v884 = vld [vmem:[%s1 + $0x804] sm:$0xf]
      %v885 = vld [vmem:[%s1 + $0x808] sm:$0xf]
      %v886 = vld [vmem:[%s1 + $0x80c] sm:$0xf]
      %v887 = vld [vmem:[%s1 + $0x810] sm:$0xf]
      %v888 = vld [vmem:[%s1 + $0x814] sm:$0xf]
      %v889 = vld [vmem:[%s1 + $0x818] sm:$0xf]
      %v890 = vld [vmem:[%s1 + $0x81c] sm:$0xf]
      %v891 = vld [vmem:[%s1 + $0x820] sm:$0xf]
      %v892 = vld [vmem:[%s1 + $0x824] sm:$0xf]
      %v893 = vld [vmem:[%s1 + $0x828] sm:$0xf]
      %v894 = vld [vmem:[%s1 + $0x82c] sm:$0xf]
      %v895 = vld [vmem:[%s1 + $0x830] sm:$0xf]
      %v896 = vld [vmem:[%s1 + $0x834] sm:$0xf]
      %v897 = vld [vmem:[%s1 + $0x838] sm:$0xf]
      %v898 = vld [vmem:[%s1 + $0x83c] sm:$0xf]
      %v899 = vld [vmem:[%s1 + $0x840] sm:$0xf]
      %v900 = vld [vmem:[%s1 + $0x844] sm:$0xf]
      %v901 = vld [vmem:[%s1 + $0x848] sm:$0xf]
      %v902 = vld [vmem:[%s1 + $0x84c] sm:$0xf]
      %v903 = vld [vmem:[%s1 + $0x850] sm:$0xf]
      %v904 = vld [vmem:[%s1 + $0x854] sm:$0xf]
      %v905 = vld [vmem:[%s1 + $0x858] sm:$0xf]
      %v906 = vld [vmem:[%s1 + $0x85c] sm:$0xf]
      %v907 = vld [vmem:[%s1 + $0x860] sm:$0xf]
      %v908 = vld [vmem:[%s1 + $0x864] sm:$0xf]
      %v909 = vld [vmem:[%s1 + $0x868] sm:$0xf]
      %v910 = vld [vmem:[%s1 + $0x86c] sm:$0xf]
      %v911 = vld [vmem:[%s1 + $0x870] sm:$0xf]
      %v912 = vld [vmem:[%s1 + $0x874] sm:$0xf]
      %v913 = vld [vmem:[%s1 + $0x878] sm:$0xf]
      %v914 = vld [vmem:[%s1 + $0x87c] sm:$0xf]
      %v915 = vld [vmem:[%s1 + $0x880] sm:$0xf]
      %v916 = vld [vmem:[%s1 + $0x884] sm:$0xf]
      %v917 = vld [vmem:[%s1 + $0x888] sm:$0xf]
      %v918 = vld [vmem:[%s1 + $0x88c] sm:$0xf]
      %v919 = vld [vmem:[%s1 + $0x890] sm:$0xf]
      %v920 = vld [vmem:[%s1 + $0x894] sm:$0xf]
      %v921 = vld [vmem:[%s1 + $0x898] sm:$0xf]
      %v922 = vld [vmem:[%s1 + $0x89c] sm:$0xf]
      %v923 = vld [vmem:[%s1 + $0x8a0] sm:$0xf]
      %v924 = vld [vmem:[%s1 + $0x8a4] sm:$0xf]
      %v925 = vld [vmem:[%s1 + $0x8a8] sm:$0xf]
      %v926 = vld [vmem:[%s1 + $0x8ac] sm:$0xf]
      %v927 = vld [vmem:[%s1 + $0x8b0] sm:$0xf]
      %v928 = vld [vmem:[%s1 + $0x8b4] sm:$0xf]
      %v929 = vld [vmem:[%s1 + $0x8b8] sm:$0xf]
      %v930 = vld [vmem:[%s1 + $0x8bc] sm:$0xf]
      %v931 = vld [vmem:[%s1 + $0x8c0] sm:$0xf]
      %v932 = vld [vmem:[%s1 + $0x8c4] sm:$0xf]
      %v933 = vld [vmem:[%s1 + $0x8c8] sm:$0xf]
      %v934 = vld [vmem:[%s1 + $0x8cc] sm:$0xf]
      %v935 = vld [vmem:[%s1 + $0x8d0] sm:$0xf]
      %v936 = vld [vmem:[%s1 + $0x8d4] sm:$0xf]
      %v937 = vld [vmem:[%s1 + $0x8d8] sm:$0xf]
      %v938 = vld [vmem:[%s1 + $0x8dc] sm:$0xf]
      %v939 = vld [vmem:[%s1 + $0x8e0] sm:$0xf]
      %v940 = vld [vmem:[%s1 + $0x8e4] sm:$0xf]
      %v941 = vld [vmem:[%s1 + $0x8e8] sm:$0xf]
      %v942 = vld [vmem:[%s1 + $0x8ec] sm:$0xf]
      %v943 = vld [vmem:[%s1 + $0x8f0] sm:$0xf]
      %v944 = vld [vmem:[%s1 + $0x8f4] sm:$0xf]
      %v945 = vld [vmem:[%s1 + $0x8f8] sm:$0xf]
      %v946 = vld [vmem:[%s1 + $0x8fc] sm:$0xf]
      %v947 = vld [vmem:[%s1 + $0x900] sm:$0xf]
      %v948 = vld [vmem:[%s1 + $0x904] sm:$0xf]
      %v949 = vld [vmem:[%s1 + $0x908] sm:$0xf]
      %v950 = vld [vmem:[%s1 + $0x90c] sm:$0xf]
      %v951 = vld [vmem:[%s1 + $0x910] sm:$0xf]
      %v952 = vld [vmem:[%s1 + $0x914] sm:$0xf]
      %v953 = vld [vmem:[%s1 + $0x918] sm:$0xf]
      %v954 = vld [vmem:[%s1 + $0x91c] sm:$0xf]
      %v955 = vld [vmem:[%s1 + $0x920] sm:$0xf]
      %v956 = vld [vmem:[%s1 + $0x924] sm:$0xf]
      %v957 = vld [vmem:[%s1 + $0x928] sm:$0xf]
      %v958 = vld [vmem:[%s1 + $0x92c] sm:$0xf]
      %v959 = vld [vmem:[%s1 + $0x930] sm:$0xf]
      %v960 = vld [vmem:[%s1 + $0x934] sm:$0xf]
      %v961 = vld [vmem:[%s1 + $0x938] sm:$0xf]
      %v962 = vld [vmem:[%s1 + $0x93c] sm:$0xf]
      %v963 = vld [vmem:[%s1 + $0x940] sm:$0xf]
      %v964 = vld [vmem:[%s1 + $0x944] sm:$0xf]
      %v965 = vld [vmem:[%s1 + $0x948] sm:$0xf]
      %v966 = vld [vmem:[%s1 + $0x94c] sm:$0xf]
      %v967 = vld [vmem:[%s1 + $0x950] sm:$0xf]
      %v968 = vld [vmem:[%s1 + $0x954] sm:$0xf]
      %v969 = vld [vmem:[%s1 + $0x958] sm:$0xf]
      %v970 = vld [vmem:[%s1 + $0x95c] sm:$0xf]
      %v971 = vld [vmem:[%s1 + $0x960] sm:$0xf]
      %v972 = vld [vmem:[%s1 + $0x964] sm:$0xf]
      %v973 = vld [vmem:[%s1 + $0x968] sm:$0xf]
      %v974 = vld [vmem:[%s1 + $0x96c] sm:$0xf]
      %v975 = vld [vmem:[%s1 + $0x970] sm:$0xf]
      %v976 = vld [vmem:[%s1 + $0x974] sm:$0xf]
      %v977 = vld [vmem:[%s1 + $0x978] sm:$0xf]
      %v978 = vld [vmem:[%s1 + $0x97c] sm:$0xf]
      %v979 = vld [vmem:[%s1 + $0x980] sm:$0xf]
      %v980 = vld [vmem:[%s1 + $0x984] sm:$0xf]
      %v981 = vld [vmem:[%s1 + $0x988] sm:$0xf]
      %v982 = vld [vmem:[%s1 + $0x98c] sm:$0xf]
      %v983 = vld [vmem:[%s1 + $0x990] sm:$0xf]
      %v984 = vld [vmem:[%s1 + $0x994] sm:$0xf]
      %v985 = vld [vmem:[%s1 + $0x998] sm:$0xf]
      %v986 = vld [vmem:[%s1 + $0x99c] sm:$0xf]
      %v987 = vld [vmem:[%s1 + $0x9a0] sm:$0xf]
      %v988 = vld [vmem:[%s1 + $0x9a4] sm:$0xf]
      %v989 = vld [vmem:[%s1 + $0x9a8] sm:$0xf]
      %v990 = vld [vmem:[%s1 + $0x9ac] sm:$0xf]
      %v991 = vld [vmem:[%s1 + $0x9b0] sm:$0xf]
      %v992 = vld [vmem:[%s1 + $0x9b4] sm:$0xf]
      %v993 = vld [vmem:[%s1 + $0x9b8] sm:$0xf]
      %v994 = vld [vmem:[%s1 + $0x9bc] sm:$0xf]
      %v995 = vld [vmem:[%s1 + $0x9c0] sm:$0xf]
      %v996 = vld [vmem:[%s1 + $0x9c4] sm:$0xf]
      %v997 = vld [vmem:[%s1 + $0x9c8] sm:$0xf]
      %v998 = vld [vmem:[%s1 + $0x9cc] sm:$0xf]
      %v999 = vld [vmem:[%s1 + $0x9d0] sm:$0xf]
      %v1000 = vld [vmem:[%s1 + $0x9d4] sm:$0xf]
      %v1001 = vld [vmem:[%s1 + $0x9d8] sm:$0xf]
      %v1002 = vld [vmem:[%s1 + $0x9dc] sm:$0xf]
      %v1003 = vld [vmem:[%s1 + $0x9e0] sm:$0xf]
      %v1004 = vld [vmem:[%s1 + $0x9e4] sm:$0xf]
      %v1005 = vld [vmem:[%s1 + $0x9e8] sm:$0xf]
      %v1006 = vld [vmem:[%s1 + $0x9ec] sm:$0xf]
      %v1007 = vld [vmem:[%s1 + $0x9f0] sm:$0xf]
      %v1008 = vld [vmem:[%s1 + $0x9f4] sm:$0xf]
      %v1009 = vld [vmem:[%s1 + $0x9f8] sm:$0xf]
      %v1010 = vld [vmem:[%s1 + $0x9fc] sm:$0xf]
      %v1011 = vld [vmem:[%s1 + $0xa00] sm:$0xf]
      %v1012 = vld [vmem:[%s1 + $0xa04] sm:$0xf]
      %v1013 = vld [vmem:[%s1 + $0xa08] sm:$0xf]
      %v1014 = vld [vmem:[%s1 + $0xa0c] sm:$0xf]
      %v1015 = vld [vmem:[%s1 + $0xa10] sm:$0xf]
      %v1016 = vld [vmem:[%s1 + $0xa14] sm:$0xf]
      %v1017 = vld [vmem:[%s1 + $0xa18] sm:$0xf]
      %v1018 = vld [vmem:[%s1 + $0xa1c] sm:$0xf]
      %v1019 = vld [vmem:[%s1 + $0xa20] sm:$0xf]
      %v1020 = vld [vmem:[%s1 + $0xa24] sm:$0xf]
      %v1021 = vld [vmem:[%s1 + $0xa28] sm:$0xf]
      %v1022 = vld [vmem:[%s1 + $0xa2c] sm:$0xf]
      %v1023 = vld [vmem:[%s1 + $0xa30] sm:$0xf]
      %v1024 = vld [vmem:[%s1 + $0xa34] sm:$0xf]
      %v1025 = vld [vmem:[%s1 + $0xa38] sm:$0xf]
      %v1026 = vld [vmem:[%s1 + $0xa3c] sm:$0xf]
      %v1027 = vld [vmem:[%s1 + $0xa40] sm:$0xf]
      %v1028 = vld [vmem:[%s1 + $0xa44] sm:$0xf]
      %v1029 = vld [vmem:[%s1 + $0xa48] sm:$0xf]
      %v1030 = vld [vmem:[%s1 + $0xa4c] sm:$0xf]
      %v1031 = vld [vmem:[%s1 + $0xa50] sm:$0xf]
      %v1032 = vld [vmem:[%s1 + $0xa54] sm:$0xf]
      %v1033 = vld [vmem:[%s1 + $0xa58] sm:$0xf]
      %v1034 = vld [vmem:[%s1 + $0xa5c] sm:$0xf]
      %v1035 = vld [vmem:[%s1 + $0xa60] sm:$0xf]
      %v1036 = vld [vmem:[%s1 + $0xa64] sm:$0xf]
      %v1037 = vld [vmem:[%s1 + $0xa68] sm:$0xf]
      %v1038 = vld [vmem:[%s1 + $0xa6c] sm:$0xf]
      %v1039 = vld [vmem:[%s1 + $0xa70] sm:$0xf]
      %v1040 = vld [vmem:[%s1 + $0xa74] sm:$0xf]
      %v1041 = vld [vmem:[%s1 + $0xa78] sm:$0xf]
      %v1042 = vld [vmem:[%s1 + $0xa7c] sm:$0xf]
      %v1043 = vld [vmem:[%s1 + $0xa80] sm:$0xf]
      %v1044 = vld [vmem:[%s1 + $0xa84] sm:$0xf]
      %v1045 = vld [vmem:[%s1 + $0xa88] sm:$0xf]
      %v1046 = vld [vmem:[%s1 + $0xa8c] sm:$0xf]
      %v1047 = vld [vmem:[%s1 + $0xa90] sm:$0xf]
      %v1048 = vld [vmem:[%s1 + $0xa94] sm:$0xf]
      %v1049 = vld [vmem:[%s1 + $0xa98] sm:$0xf]
      %v1050 = vld [vmem:[%s1 + $0xa9c] sm:$0xf]
      %v1051 = vld [vmem:[%s1 + $0xaa0] sm:$0xf]
      %v1052 = vld [vmem:[%s1 + $0xaa4] sm:$0xf]
      %v1053 = vld [vmem:[%s1 + $0xaa8] sm:$0xf]
      %v1054 = vld [vmem:[%s1 + $0xaac] sm:$0xf]
      %v1055 = vld [vmem:[%s1 + $0xab0] sm:$0xf]
      %v1056 = vld [vmem:[%s1 + $0xab4] sm:$0xf]
      %v1057 = vld [vmem:[%s1 + $0xab8] sm:$0xf]
      %v1058 = vld [vmem:[%s1 + $0xabc] sm:$0xf]
      %v1059 = vld [vmem:[%s1 + $0xac0] sm:$0xf]
      %v1060 = vld [vmem:[%s1 + $0xac4] sm:$0xf]
      %v1061 = vld [vmem:[%s1 + $0xac8] sm:$0xf]
      %v1062 = vld [vmem:[%s1 + $0xacc] sm:$0xf]
      %v1063 = vld [vmem:[%s1 + $0xad0] sm:$0xf]
      %v1064 = vld [vmem:[%s1 + $0xad4] sm:$0xf]
      %v1065 = vld [vmem:[%s1 + $0xad8] sm:$0xf]
      %v1066 = vld [vmem:[%s1 + $0xadc] sm:$0xf]
      %v1067 = vld [vmem:[%s1 + $0xae0] sm:$0xf]
      %v1068 = vld [vmem:[%s1 + $0xae4] sm:$0xf]
      %v1069 = vld [vmem:[%s1 + $0xae8] sm:$0xf]
      %v1070 = vld [vmem:[%s1 + $0xaec] sm:$0xf]
      %v1071 = vld [vmem:[%s1 + $0xaf0] sm:$0xf]
      %v1072 = vld [vmem:[%s1 + $0xaf4] sm:$0xf]
      %v1073 = vld [vmem:[%s1 + $0xaf8] sm:$0xf]
      %v1074 = vld [vmem:[%s1 + $0xafc] sm:$0xf]
      %v1075 = vld [vmem:[%s1 + $0xb00] sm:$0xf]
      %v1076 = vld [vmem:[%s1 + $0xb04] sm:$0xf]
      %v1077 = vld [vmem:[%s1 + $0xb08] sm:$0xf]
      %v1078 = vld [vmem:[%s1 + $0xb0c] sm:$0xf]
      %v1079 = vld [vmem:[%s1 + $0xb10] sm:$0xf]
      %v1080 = vld [vmem:[%s1 + $0xb14] sm:$0xf]
      %v1081 = vld [vmem:[%s1 + $0xb18] sm:$0xf]
      %v1082 = vld [vmem:[%s1 + $0xb1c] sm:$0xf]
      %v1083 = vld [vmem:[%s1 + $0xb20] sm:$0xf]
      %v1084 = vld [vmem:[%s1 + $0xb24] sm:$0xf]
      %v1085 = vld [vmem:[%s1 + $0xb28] sm:$0xf]
      %v1086 = vld [vmem:[%s1 + $0xb2c] sm:$0xf]
      %v1087 = vld [vmem:[%s1 + $0xb30] sm:$0xf]
      %v1088 = vld [vmem:[%s1 + $0xb34] sm:$0xf]
      %v1089 = vld [vmem:[%s1 + $0xb38] sm:$0xf]
      %v1090 = vld [vmem:[%s1 + $0xb3c] sm:$0xf]
      %v1091 = vld [vmem:[%s1 + $0xb40] sm:$0xf]
      %v1092 = vld [vmem:[%s1 + $0xb44] sm:$0xf]
      %v1093 = vld [vmem:[%s1 + $0xb48] sm:$0xf]
      %v1094 = vld [vmem:[%s1 + $0xb4c] sm:$0xf]
      %v1095 = vld [vmem:[%s1 + $0xb50] sm:$0xf]
      %v1096 = vld [vmem:[%s1 + $0xb54] sm:$0xf]
      %v1097 = vld [vmem:[%s1 + $0xb58] sm:$0xf]
      %v1098 = vld [vmem:[%s1 + $0xb5c] sm:$0xf]
      %v1099 = vld [vmem:[%s1 + $0xb60] sm:$0xf]
      %v1100 = vld [vmem:[%s1 + $0xb64] sm:$0xf]
      %v1101 = vld [vmem:[%s1 + $0xb68] sm:$0xf]
      %v1102 = vld [vmem:[%s1 + $0xb6c] sm:$0xf]
      %v1103 = vld [vmem:[%s1 + $0xb70] sm:$0xf]
      %v1104 = vld [vmem:[%s1 + $0xb74] sm:$0xf]
      %v1105 = vld [vmem:[%s1 + $0xb78] sm:$0xf]
      %v1106 = vld [vmem:[%s1 + $0xb7c] sm:$0xf]
      %v1107 = vld [vmem:[%s1 + $0xb80] sm:$0xf]
      %v1108 = vld [vmem:[%s1 + $0xb84] sm:$0xf]
      %v1109 = vld [vmem:[%s1 + $0xb88] sm:$0xf]
      %v1110 = vld [vmem:[%s1 + $0xb8c] sm:$0xf]
      %v1111 = vld [vmem:[%s1 + $0xb90] sm:$0xf]
      %v1112 = vld [vmem:[%s1 + $0xb94] sm:$0xf]
      %v1113 = vld [vmem:[%s1 + $0xb98] sm:$0xf]
      %v1114 = vld [vmem:[%s1 + $0xb9c] sm:$0xf]
      %v1115 = vld [vmem:[%s1 + $0xba0] sm:$0xf]
      %v1116 = vld [vmem:[%s1 + $0xba4] sm:$0xf]
      %v1117 = vld [vmem:[%s1 + $0xba8] sm:$0xf]
      %v1118 = vld [vmem:[%s1 + $0xbac] sm:$0xf]
      %v1119 = vld [vmem:[%s1 + $0xbb0] sm:$0xf]
      %v1120 = vld [vmem:[%s1 + $0xbb4] sm:$0xf]
      %v1121 = vld [vmem:[%s1 + $0xbb8] sm:$0xf]
      %v1122 = vld [vmem:[%s1 + $0xbbc] sm:$0xf]
      %v1123 = vld [vmem:[%s1 + $0xbc0] sm:$0xf]
      %v1124 = vld [vmem:[%s1 + $0xbc4] sm:$0xf]
      %v1125 = vld [vmem:[%s1 + $0xbc8] sm:$0xf]
      %v1126 = vld [vmem:[%s1 + $0xbcc] sm:$0xf]
      %v1127 = vld [vmem:[%s1 + $0xbd0] sm:$0xf]
      %v1128 = vld [vmem:[%s1 + $0xbd4] sm:$0xf]
      %v1129 = vld [vmem:[%s1 + $0xbd8] sm:$0xf]
      %v1130 = vld [vmem:[%s1 + $0xbdc] sm:$0xf]
      %v1131 = vld [vmem:[%s1 + $0xbe0] sm:$0xf]
      %v1132 = vld [vmem:[%s1 + $0xbe4] sm:$0xf]
      %v1133 = vld [vmem:[%s1 + $0xbe8] sm:$0xf]
      %v1134 = vld [vmem:[%s1 + $0xbec] sm:$0xf]
      %v1135 = vld [vmem:[%s1 + $0xbf0] sm:$0xf]
      %v1136 = vld [vmem:[%s1 + $0xbf4] sm:$0xf]
      %v1137 = vld [vmem:[%s1 + $0xbf8] sm:$0xf]
      %v1138 = vld [vmem:[%s1 + $0xbfc] sm:$0xf]
      %v1139 = vld [vmem:[%s1 + $0xc00] sm:$0xf]
      %v1140 = vld [vmem:[%s1 + $0xc04] sm:$0xf]
      %v1141 = vld [vmem:[%s1 + $0xc08] sm:$0xf]
      %v1142 = vld [vmem:[%s1 + $0xc0c] sm:$0xf]
      %v1143 = vld [vmem:[%s1 + $0xc10] sm:$0xf]
      %v1144 = vld [vmem:[%s1 + $0xc14] sm:$0xf]
      %v1145 = vld [vmem:[%s1 + $0xc18] sm:$0xf]
      %v1146 = vld [vmem:[%s1 + $0xc1c] sm:$0xf]
      %v1147 = vld [vmem:[%s1 + $0xc20] sm:$0xf]
      %v1148 = vld [vmem:[%s1 + $0xc24] sm:$0xf]
      %v1149 = vld [vmem:[%s1 + $0xc28] sm:$0xf]
      %v1150 = vld [vmem:[%s1 + $0xc2c] sm:$0xf]
      %v1151 = vld [vmem:[%s1 + $0xc30] sm:$0xf]
      %v1152 = vld [vmem:[%s1 + $0xc34] sm:$0xf]
      %v1153 = vld [vmem:[%s1 + $0xc38] sm:$0xf]
      %v1154 = vld [vmem:[%s1 + $0xc3c] sm:$0xf]
      %v1155 = vld [vmem:[%s1 + $0xc40] sm:$0xf]
      %v1156 = vld [vmem:[%s1 + $0xc44] sm:$0xf]
      %v1157 = vld [vmem:[%s1 + $0xc48] sm:$0xf]
      %v1158 = vld [vmem:[%s1 + $0xc4c] sm:$0xf]
      %v1159 = vld [vmem:[%s1 + $0xc50] sm:$0xf]
      %v1160 = vld [vmem:[%s1 + $0xc54] sm:$0xf]
      %v1161 = vld [vmem:[%s1 + $0xc58] sm:$0xf]
      %v1162 = vld [vmem:[%s1 + $0xc5c] sm:$0xf]
      %v1163 = vld [vmem:[%s1 + $0xc60] sm:$0xf]
      %v1164 = vld [vmem:[%s1 + $0xc64] sm:$0xf]
      %v1165 = vld [vmem:[%s1 + $0xc68] sm:$0xf]
      %v1166 = vld [vmem:[%s1 + $0xc6c] sm:$0xf]
      %v1167 = vld [vmem:[%s1 + $0xc70] sm:$0xf]
      %v1168 = vld [vmem:[%s1 + $0xc74] sm:$0xf]
      %v1169 = vld [vmem:[%s1 + $0xc78] sm:$0xf]
      %v1170 = vld [vmem:[%s1 + $0xc7c] sm:$0xf]
      %v1171 = vld [vmem:[%s1 + $0xc80] sm:$0xf]
      %v1172 = vld [vmem:[%s1 + $0xc84] sm:$0xf]
      %v1173 = vld [vmem:[%s1 + $0xc88] sm:$0xf]
      %v1174 = vld [vmem:[%s1 + $0xc8c] sm:$0xf]
      %v1175 = vld [vmem:[%s1 + $0xc90] sm:$0xf]
      %v1176 = vld [vmem:[%s1 + $0xc94] sm:$0xf]
      %v1177 = vld [vmem:[%s1 + $0xc98] sm:$0xf]
      %v1178 = vld [vmem:[%s1 + $0xc9c] sm:$0xf]
      %v1179 = vld [vmem:[%s1 + $0xca0] sm:$0xf]
      %v1180 = vld [vmem:[%s1 + $0xca4] sm:$0xf]
      %v1181 = vld [vmem:[%s1 + $0xca8] sm:$0xf]
      %v1182 = vld [vmem:[%s1 + $0xcac] sm:$0xf]
      %v1183 = vld [vmem:[%s1 + $0xcb0] sm:$0xf]
      %v1184 = vld [vmem:[%s1 + $0xcb4] sm:$0xf]
      %v1185 = vld [vmem:[%s1 + $0xcb8] sm:$0xf]
      %v1186 = vld [vmem:[%s1 + $0xcbc] sm:$0xf]
      %v1187 = vld [vmem:[%s1 + $0xcc0] sm:$0xf]
      %v1188 = vld [vmem:[%s1 + $0xcc4] sm:$0xf]
      %v1189 = vld [vmem:[%s1 + $0xcc8] sm:$0xf]
      %v1190 = vld [vmem:[%s1 + $0xccc] sm:$0xf]
      %v1191 = vld [vmem:[%s1 + $0xcd0] sm:$0xf]
      %v1192 = vld [vmem:[%s1 + $0xcd4] sm:$0xf]
      %v1193 = vld [vmem:[%s1 + $0xcd8] sm:$0xf]
      %v1194 = vld [vmem:[%s1 + $0xcdc] sm:$0xf]
      %v1195 = vld [vmem:[%s1 + $0xce0] sm:$0xf]
      %v1196 = vld [vmem:[%s1 + $0xce4] sm:$0xf]
      %v1197 = vld [vmem:[%s1 + $0xce8] sm:$0xf]
      %v1198 = vld [vmem:[%s1 + $0xcec] sm:$0xf]
      %v1199 = vld [vmem:[%s1 + $0xcf0] sm:$0xf]
      %v1200 = vld [vmem:[%s1 + $0xcf4] sm:$0xf]
      %v1201 = vld [vmem:[%s1 + $0xcf8] sm:$0xf]
      %v1202 = vld [vmem:[%s1 + $0xcfc] sm:$0xf]
      %v1203 = vld [vmem:[%s1 + $0xd00] sm:$0xf]
      %v1204 = vld [vmem:[%s1 + $0xd04] sm:$0xf]
      %v1205 = vld [vmem:[%s1 + $0xd08] sm:$0xf]
      %v1206 = vld [vmem:[%s1 + $0xd0c] sm:$0xf]
      %v1207 = vld [vmem:[%s1 + $0xd10] sm:$0xf]
      %v1208 = vld [vmem:[%s1 + $0xd14] sm:$0xf]
      %v1209 = vld [vmem:[%s1 + $0xd18] sm:$0xf]
      %v1210 = vld [vmem:[%s1 + $0xd1c] sm:$0xf]
      %v1211 = vld [vmem:[%s1 + $0xd20] sm:$0xf]
      %v1212 = vld [vmem:[%s1 + $0xd24] sm:$0xf]
      %v1213 = vld [vmem:[%s1 + $0xd28] sm:$0xf]
      %v1214 = vld [vmem:[%s1 + $0xd2c] sm:$0xf]
      %v1215 = vld [vmem:[%s1 + $0xd30] sm:$0xf]
      %v1216 = vld [vmem:[%s1 + $0xd34] sm:$0xf]
      %v1217 = vld [vmem:[%s1 + $0xd38] sm:$0xf]
      %v1218 = vld [vmem:[%s1 + $0xd3c] sm:$0xf]
      %v1219 = vld [vmem:[%s1 + $0xd40] sm:$0xf]
      %v1220 = vld [vmem:[%s1 + $0xd44] sm:$0xf]
      %v1221 = vld [vmem:[%s1 + $0xd48] sm:$0xf]
      %v1222 = vld [vmem:[%s1 + $0xd4c] sm:$0xf]
      %v1223 = vld [vmem:[%s1 + $0xd50] sm:$0xf]
      %v1224 = vld [vmem:[%s1 + $0xd54] sm:$0xf]
      %v1225 = vld [vmem:[%s1 + $0xd58] sm:$0xf]
      %v1226 = vld [vmem:[%s1 + $0xd5c] sm:$0xf]
      %v1227 = vld [vmem:[%s1 + $0xd60] sm:$0xf]
      %v1228 = vld [vmem:[%s1 + $0xd64] sm:$0xf]
      %v1229 = vld [vmem:[%s1 + $0xd68] sm:$0xf]
      %v1230 = vld [vmem:[%s1 + $0xd6c] sm:$0xf]
      %v1231 = vld [vmem:[%s1 + $0xd70] sm:$0xf]
      %v1232 = vld [vmem:[%s1 + $0xd74] sm:$0xf]
      %v1233 = vld [vmem:[%s1 + $0xd78] sm:$0xf]
      %v1234 = vld [vmem:[%s1 + $0xd7c] sm:$0xf]
      %v1235 = vld [vmem:[%s1 + $0xd80] sm:$0xf]
      %v1236 = vld [vmem:[%s1 + $0xd84] sm:$0xf]
      %v1237 = vld [vmem:[%s1 + $0xd88] sm:$0xf]
      %v1238 = vld [vmem:[%s1 + $0xd8c] sm:$0xf]
      %v1239 = vld [vmem:[%s1 + $0xd90] sm:$0xf]
      %v1240 = vld [vmem:[%s1 + $0xd94] sm:$0xf]
      %v1241 = vld [vmem:[%s1 + $0xd98] sm:$0xf]
      %v1242 = vld [vmem:[%s1 + $0xd9c] sm:$0xf]
      %v1243 = vld [vmem:[%s1 + $0xda0] sm:$0xf]
      %v1244 = vld [vmem:[%s1 + $0xda4] sm:$0xf]
      %v1245 = vld [vmem:[%s1 + $0xda8] sm:$0xf]
      %v1246 = vld [vmem:[%s1 + $0xdac] sm:$0xf]
      %v1247 = vld [vmem:[%s1 + $0xdb0] sm:$0xf]
      %v1248 = vld [vmem:[%s1 + $0xdb4] sm:$0xf]
      %v1249 = vld [vmem:[%s1 + $0xdb8] sm:$0xf]
      %v1250 = vld [vmem:[%s1 + $0xdbc] sm:$0xf]
      %v1251 = vld [vmem:[%s1 + $0xdc0] sm:$0xf]
      %v1252 = vld [vmem:[%s1 + $0xdc4] sm:$0xf]
      %v1253 = vld [vmem:[%s1 + $0xdc8] sm:$0xf]
      %v1254 = vld [vmem:[%s1 + $0xdcc] sm:$0xf]
      %v1255 = vld [vmem:[%s1 + $0xdd0] sm:$0xf]
      %v1256 = vld [vmem:[%s1 + $0xdd4] sm:$0xf]
      %v1257 = vld [vmem:[%s1 + $0xdd8] sm:$0xf]
      %v1258 = vld [vmem:[%s1 + $0xddc] sm:$0xf]
      %v1259 = vld [vmem:[%s1 + $0xde0] sm:$0xf]
      %v1260 = vld [vmem:[%s1 + $0xde4] sm:$0xf]
      %v1261 = vld [vmem:[%s1 + $0xde8] sm:$0xf]
      %v1262 = vld [vmem:[%s1 + $0xdec] sm:$0xf]
      %v1263 = vld [vmem:[%s1 + $0xdf0] sm:$0xf]
      %v1264 = vld [vmem:[%s1 + $0xdf4] sm:$0xf]
      %v1265 = vld [vmem:[%s1 + $0xdf8] sm:$0xf]
      %v1266 = vld [vmem:[%s1 + $0xdfc] sm:$0xf]
      %v1267 = vld [vmem:[%s1 + $0xe00] sm:$0xf]
      %v1268 = vld [vmem:[%s1 + $0xe04] sm:$0xf]
      %v1269 = vld [vmem:[%s1 + $0xe08] sm:$0xf]
      %v1270 = vld [vmem:[%s1 + $0xe0c] sm:$0xf]
      %v1271 = vld [vmem:[%s1 + $0xe10] sm:$0xf]
      %v1272 = vld [vmem:[%s1 + $0xe14] sm:$0xf]
      %v1273 = vld [vmem:[%s1 + $0xe18] sm:$0xf]
      %v1274 = vld [vmem:[%s1 + $0xe1c] sm:$0xf]
      %v1275 = vld [vmem:[%s1 + $0xe20] sm:$0xf]
      %v1276 = vld [vmem:[%s1 + $0xe24] sm:$0xf]
      %v1277 = vld [vmem:[%s1 + $0xe28] sm:$0xf]
      %v1278 = vld [vmem:[%s1 + $0xe2c] sm:$0xf]
      %v1279 = vld [vmem:[%s1 + $0xe30] sm:$0xf]
      %v1280 = vld [vmem:[%s1 + $0xe34] sm:$0xf]
      %v1281 = vld [vmem:[%s1 + $0xe38] sm:$0xf]
      %v1282 = vld [vmem:[%s1 + $0xe3c] sm:$0xf]
      %v1283 = vld [vmem:[%s1 + $0xe40] sm:$0xf]
      %v1284 = vld [vmem:[%s1 + $0xe44] sm:$0xf]
      %v1285 = vld [vmem:[%s1 + $0xe48] sm:$0xf]
      %v1286 = vld [vmem:[%s1 + $0xe4c] sm:$0xf]
      %v1287 = vld [vmem:[%s1 + $0xe50] sm:$0xf]
      %v1288 = vld [vmem:[%s1 + $0xe54] sm:$0xf]
      %v1289 = vld [vmem:[%s1 + $0xe58] sm:$0xf]
      %v1290 = vld [vmem:[%s1 + $0xe5c] sm:$0xf]
      %v1291 = vld [vmem:[%s1 + $0xe60] sm:$0xf]
      %v1292 = vld [vmem:[%s1 + $0xe64] sm:$0xf]
      %v1293 = vld [vmem:[%s1 + $0xe68] sm:$0xf]
      %v1294 = vld [vmem:[%s1 + $0xe6c] sm:$0xf]
      %v1295 = vld [vmem:[%s1 + $0xe70] sm:$0xf]
      %v1296 = vld [vmem:[%s1 + $0xe74] sm:$0xf]
      %v1297 = vld [vmem:[%s1 + $0xe78] sm:$0xf]
      %v1298 = vld [vmem:[%s1 + $0xe7c] sm:$0xf]
      %v1299 = vld [vmem:[%s1 + $0xe80] sm:$0xf]
      %v1300 = vld [vmem:[%s1 + $0xe84] sm:$0xf]
      %v1301 = vld [vmem:[%s1 + $0xe88] sm:$0xf]
      %v1302 = vld [vmem:[%s1 + $0xe8c] sm:$0xf]
      %v1303 = vld [vmem:[%s1 + $0xe90] sm:$0xf]
      %v1304 = vld [vmem:[%s1 + $0xe94] sm:$0xf]
      %v1305 = vld [vmem:[%s1 + $0xe98] sm:$0xf]
      %v1306 = vld [vmem:[%s1 + $0xe9c] sm:$0xf]
      %v1307 = vld [vmem:[%s1 + $0xea0] sm:$0xf]
      %v1308 = vld [vmem:[%s1 + $0xea4] sm:$0xf]
      %v1309 = vld [vmem:[%s1 + $0xea8] sm:$0xf]
      %v1310 = vld [vmem:[%s1 + $0xeac] sm:$0xf]
      %v1311 = vld [vmem:[%s1 + $0xeb0] sm:$0xf]
      %v1312 = vld [vmem:[%s1 + $0xeb4] sm:$0xf]
      %v1313 = vld [vmem:[%s1 + $0xeb8] sm:$0xf]
      %v1314 = vld [vmem:[%s1 + $0xebc] sm:$0xf]
      %v1315 = vld [vmem:[%s1 + $0xec0] sm:$0xf]
      %v1316 = vld [vmem:[%s1 + $0xec4] sm:$0xf]
      %v1317 = vld [vmem:[%s1 + $0xec8] sm:$0xf]
      %v1318 = vld [vmem:[%s1 + $0xecc] sm:$0xf]
      %v1319 = vld [vmem:[%s1 + $0xed0] sm:$0xf]
      %v1320 = vld [vmem:[%s1 + $0xed4] sm:$0xf]
      %v1321 = vld [vmem:[%s1 + $0xed8] sm:$0xf]
      %v1322 = vld [vmem:[%s1 + $0xedc] sm:$0xf]
      %v1323 = vld [vmem:[%s1 + $0xee0] sm:$0xf]
      %v1324 = vld [vmem:[%s1 + $0xee4] sm:$0xf]
      %v1325 = vld [vmem:[%s1 + $0xee8] sm:$0xf]
      %v1326 = vld [vmem:[%s1 + $0xeec] sm:$0xf]
      %v1327 = vld [vmem:[%s1 + $0xef0] sm:$0xf]
      %v1328 = vld [vmem:[%s1 + $0xef4] sm:$0xf]
      %v1329 = vld [vmem:[%s1 + $0xef8] sm:$0xf]
      %v1330 = vld [vmem:[%s1 + $0xefc] sm:$0xf]
      %v1331 = vld [vmem:[%s1 + $0xf00] sm:$0xf]
      %v1332 = vld [vmem:[%s1 + $0xf04] sm:$0xf]
      %v1333 = vld [vmem:[%s1 + $0xf08] sm:$0xf]
      %v1334 = vld [vmem:[%s1 + $0xf0c] sm:$0xf]
      %v1335 = vld [vmem:[%s1 + $0xf10] sm:$0xf]
      %v1336 = vld [vmem:[%s1 + $0xf14] sm:$0xf]
      %v1337 = vld [vmem:[%s1 + $0xf18] sm:$0xf]
      %v1338 = vld [vmem:[%s1 + $0xf1c] sm:$0xf]
      %v1339 = vld [vmem:[%s1 + $0xf20] sm:$0xf]
      %v1340 = vld [vmem:[%s1 + $0xf24] sm:$0xf]
      %v1341 = vld [vmem:[%s1 + $0xf28] sm:$0xf]
      %v1342 = vld [vmem:[%s1 + $0xf2c] sm:$0xf]
      %v1343 = vld [vmem:[%s1 + $0xf30] sm:$0xf]
      %v1344 = vld [vmem:[%s1 + $0xf34] sm:$0xf]
      %v1345 = vld [vmem:[%s1 + $0xf38] sm:$0xf]
      %v1346 = vld [vmem:[%s1 + $0xf3c] sm:$0xf]
      %v1347 = vld [vmem:[%s1 + $0xf40] sm:$0xf]
      %v1348 = vld [vmem:[%s1 + $0xf44] sm:$0xf]
      %v1349 = vld [vmem:[%s1 + $0xf48] sm:$0xf]
      %v1350 = vld [vmem:[%s1 + $0xf4c] sm:$0xf]
      %v1351 = vld [vmem:[%s1 + $0xf50] sm:$0xf]
      %v1352 = vld [vmem:[%s1 + $0xf54] sm:$0xf]
      %v1353 = vld [vmem:[%s1 + $0xf58] sm:$0xf]
      %v1354 = vld [vmem:[%s1 + $0xf5c] sm:$0xf]
      %v1355 = vld [vmem:[%s1 + $0xf60] sm:$0xf]
      %v1356 = vld [vmem:[%s1 + $0xf64] sm:$0xf]
      %v1357 = vld [vmem:[%s1 + $0xf68] sm:$0xf]
      %v1358 = vld [vmem:[%s1 + $0xf6c] sm:$0xf]
      %v1359 = vld [vmem:[%s1 + $0xf70] sm:$0xf]
      %v1360 = vld [vmem:[%s1 + $0xf74] sm:$0xf]
      %v1361 = vld [vmem:[%s1 + $0xf78] sm:$0xf]
      %v1362 = vld [vmem:[%s1 + $0xf7c] sm:$0xf]
      %v1363 = vld [vmem:[%s1 + $0xf80] sm:$0xf]
      %v1364 = vld [vmem:[%s1 + $0xf84] sm:$0xf]
      %v1365 = vld [vmem:[%s1 + $0xf88] sm:$0xf]
      %v1366 = vld [vmem:[%s1 + $0xf8c] sm:$0xf]
      %v1367 = vld [vmem:[%s1 + $0xf90] sm:$0xf]
      %v1368 = vld [vmem:[%s1 + $0xf94] sm:$0xf]
      %v1369 = vld [vmem:[%s1 + $0xf98] sm:$0xf]
      %v1370 = vld [vmem:[%s1 + $0xf9c] sm:$0xf]
      %v1371 = vld [vmem:[%s1 + $0xfa0] sm:$0xf]
      %v1372 = vld [vmem:[%s1 + $0xfa4] sm:$0xf]
      %v1373 = vld [vmem:[%s1 + $0xfa8] sm:$0xf]
      %v1374 = vld [vmem:[%s1 + $0xfac] sm:$0xf]
      %v1375 = vld [vmem:[%s1 + $0xfb0] sm:$0xf]
      %v1376 = vld [vmem:[%s1 + $0xfb4] sm:$0xf]
      %v1377 = vld [vmem:[%s1 + $0xfb8] sm:$0xf]
      %v1378 = vld [vmem:[%s1 + $0xfbc] sm:$0xf]
      %v1379 = vld [vmem:[%s1 + $0xfc0] sm:$0xf]
      %v1380 = vld [vmem:[%s1 + $0xfc4] sm:$0xf]
      %v1381 = vld [vmem:[%s1 + $0xfc8] sm:$0xf]
      %v1382 = vld [vmem:[%s1 + $0xfcc] sm:$0xf]
      %v1383 = vld [vmem:[%s1 + $0xfd0] sm:$0xf]
      %v1384 = vld [vmem:[%s1 + $0xfd4] sm:$0xf]
      %v1385 = vld [vmem:[%s1 + $0xfd8] sm:$0xf]
      %v1386 = vld [vmem:[%s1 + $0xfdc] sm:$0xf]
      %v1387 = vld [vmem:[%s1 + $0xfe0] sm:$0xf]
      %v1388 = vld [vmem:[%s1 + $0xfe4] sm:$0xf]
      %v1389 = vld [vmem:[%s1 + $0xfe8] sm:$0xf]
      %v1390 = vld [vmem:[%s1 + $0xfec] sm:$0xf]
      %v1391 = vld [vmem:[%s1 + $0xff0] sm:$0xf]
      %v1392 = vld [vmem:[%s1 + $0xff4] sm:$0xf]
      %v1393 = vld [vmem:[%s1 + $0xff8] sm:$0xf]
      %v1394 = vld [vmem:[%s1 + $0xffc] sm:$0xf]
      %v1395 = vld [vmem:[%s1 + $0x1000] sm:$0xf]
      %v1396 = vld [vmem:[%s1 + $0x1004] sm:$0xf]
      %v1397 = vld [vmem:[%s1 + $0x1008] sm:$0xf]
      %v1398 = vld [vmem:[%s1 + $0x100c] sm:$0xf]
      %v1399 = vld [vmem:[%s1 + $0x1010] sm:$0xf]
      %v1400 = vld [vmem:[%s1 + $0x1014] sm:$0xf]
      %v1401 = vld [vmem:[%s1 + $0x1018] sm:$0xf]
      %v1402 = vld [vmem:[%s1 + $0x101c] sm:$0xf]
      %v1403 = vld [vmem:[%s1 + $0x1020] sm:$0xf]
      %v1404 = vld [vmem:[%s1 + $0x1024] sm:$0xf]
      %v1405 = vld [vmem:[%s1 + $0x1028] sm:$0xf]
      %v1406 = vld [vmem:[%s1 + $0x102c] sm:$0xf]
      %v1407 = vld [vmem:[%s1 + $0x1030] sm:$0xf]
      %v1408 = vld [vmem:[%s1 + $0x1034] sm:$0xf]
      %v1409 = vld [vmem:[%s1 + $0x1038] sm:$0xf]
      %v1410 = vld [vmem:[%s1 + $0x103c] sm:$0xf]
      %v1411 = vld [vmem:[%s1 + $0x1040] sm:$0xf]
      %v1412 = vld [vmem:[%s1 + $0x1044] sm:$0xf]
      %v1413 = vld [vmem:[%s1 + $0x1048] sm:$0xf]
      %v1414 = vld [vmem:[%s1 + $0x104c] sm:$0xf]
      %v1415 = vld [vmem:[%s1 + $0x1050] sm:$0xf]
      %v1416 = vld [vmem:[%s1 + $0x1054] sm:$0xf]
      %v1417 = vld [vmem:[%s1 + $0x1058] sm:$0xf]
      %v1418 = vld [vmem:[%s1 + $0x105c] sm:$0xf]
      %v1419 = vld [vmem:[%s1 + $0x1060] sm:$0xf]
      %v1420 = vld [vmem:[%s1 + $0x1064] sm:$0xf]
      %v1421 = vld [vmem:[%s1 + $0x1068] sm:$0xf]
      %v1422 = vld [vmem:[%s1 + $0x106c] sm:$0xf]
      %v1423 = vld [vmem:[%s1 + $0x1070] sm:$0xf]
      %v1424 = vld [vmem:[%s1 + $0x1074] sm:$0xf]
      %v1425 = vld [vmem:[%s1 + $0x1078] sm:$0xf]
      %v1426 = vld [vmem:[%s1 + $0x107c] sm:$0xf]
      %v1427 = vld [vmem:[%s1 + $0x1080] sm:$0xf]
      %v1428 = vld [vmem:[%s1 + $0x1084] sm:$0xf]
      %v1429 = vld [vmem:[%s1 + $0x1088] sm:$0xf]
      %v1430 = vld [vmem:[%s1 + $0x108c] sm:$0xf]
      %v1431 = vld [vmem:[%s1 + $0x1090] sm:$0xf]
      %v1432 = vld [vmem:[%s1 + $0x1094] sm:$0xf]
      %v1433 = vld [vmem:[%s1 + $0x1098] sm:$0xf]
      %v1434 = vld [vmem:[%s1 + $0x109c] sm:$0xf]
      %v1435 = vld [vmem:[%s1 + $0x10a0] sm:$0xf]
      %v1436 = vld [vmem:[%s1 + $0x10a4] sm:$0xf]
      %v1437 = vld [vmem:[%s1 + $0x10a8] sm:$0xf]
      %v1438 = vld [vmem:[%s1 + $0x10ac] sm:$0xf]
      %v1439 = vld [vmem:[%s1 + $0x10b0] sm:$0xf]
      %v1440 = vld [vmem:[%s1 + $0x10b4] sm:$0xf]
      %v1441 = vld [vmem:[%s1 + $0x10b8] sm:$0xf]
      %v1442 = vld [vmem:[%s1 + $0x10bc] sm:$0xf]
      %v1443 = vld [vmem:[%s1 + $0x10c0] sm:$0xf]
      %v1444 = vld [vmem:[%s1 + $0x10c4] sm:$0xf]
      %v1445 = vld [vmem:[%s1 + $0x10c8] sm:$0xf]
      %v1446 = vld [vmem:[%s1 + $0x10cc] sm:$0xf]
      %v1447 = vld [vmem:[%s1 + $0x10d0] sm:$0xf]
      %v1448 = vld [vmem:[%s1 + $0x10d4] sm:$0xf]
      %v1449 = vld [vmem:[%s1 + $0x10d8] sm:$0xf]
      %v1450 = vld [vmem:[%s1 + $0x10dc] sm:$0xf]
      %v1451 = vld [vmem:[%s1 + $0x10e0] sm:$0xf]
      %v1452 = vld [vmem:[%s1 + $0x10e4] sm:$0xf]
      %v1453 = vld [vmem:[%s1 + $0x10e8] sm:$0xf]
      %v1454 = vld [vmem:[%s1 + $0x10ec] sm:$0xf]
      %v1455 = vld [vmem:[%s1 + $0x10f0] sm:$0xf]
      %v1456 = vld [vmem:[%s1 + $0x10f4] sm:$0xf]
      %v1457 = vld [vmem:[%s1 + $0x10f8] sm:$0xf]
      %v1458 = vld [vmem:[%s1 + $0x10fc] sm:$0xf]
      %v1459 = vld [vmem:[%s1 + $0x1100] sm:$0xf]
      %v1460 = vld [vmem:[%s1 + $0x1104] sm:$0xf]
      %v1461 = vld [vmem:[%s1 + $0x1108] sm:$0xf]
      %v1462 = vld [vmem:[%s1 + $0x110c] sm:$0xf]
      %v1463 = vld [vmem:[%s1 + $0x1110] sm:$0xf]
      %v1464 = vld [vmem:[%s1 + $0x1114] sm:$0xf]
      %v1465 = vld [vmem:[%s1 + $0x1118] sm:$0xf]
      %v1466 = vld [vmem:[%s1 + $0x111c] sm:$0xf]
      %v1467 = vld [vmem:[%s1 + $0x1120] sm:$0xf]
      %v1468 = vld [vmem:[%s1 + $0x1124] sm:$0xf]
      %v1469 = vld [vmem:[%s1 + $0x1128] sm:$0xf]
      %v1470 = vld [vmem:[%s1 + $0x112c] sm:$0xf]
      %v1471 = vld [vmem:[%s1 + $0x1130] sm:$0xf]
      %v1472 = vld [vmem:[%s1 + $0x1134] sm:$0xf]
      %v1473 = vld [vmem:[%s1 + $0x1138] sm:$0xf]
      %v1474 = vld [vmem:[%s1 + $0x113c] sm:$0xf]
      %v1475 = vld [vmem:[%s1 + $0x1140] sm:$0xf]
      %v1476 = vld [vmem:[%s1 + $0x1144] sm:$0xf]
      %v1477 = vld [vmem:[%s1 + $0x1148] sm:$0xf]
      %v1478 = vld [vmem:[%s1 + $0x114c] sm:$0xf]
      %v1479 = vld [vmem:[%s1 + $0x1150] sm:$0xf]
      %v1480 = vld [vmem:[%s1 + $0x1154] sm:$0xf]
      %v1481 = vld [vmem:[%s1 + $0x1158] sm:$0xf]
      %v1482 = vld [vmem:[%s1 + $0x115c] sm:$0xf]
      %v1483 = vld [vmem:[%s1 + $0x1160] sm:$0xf]
      %v1484 = vld [vmem:[%s1 + $0x1164] sm:$0xf]
      %v1485 = vld [vmem:[%s1 + $0x1168] sm:$0xf]
      %v1486 = vld [vmem:[%s1 + $0x116c] sm:$0xf]
      %v1487 = vld [vmem:[%s1 + $0x1170] sm:$0xf]
      %v1488 = vld [vmem:[%s1 + $0x1174] sm:$0xf]
      %v1489 = vld [vmem:[%s1 + $0x1178] sm:$0xf]
      %v1490 = vld [vmem:[%s1 + $0x117c] sm:$0xf]
      %v1491 = vld [vmem:[%s1 + $0x1180] sm:$0xf]
      %v1492 = vld [vmem:[%s1 + $0x1184] sm:$0xf]
      %v1493 = vld [vmem:[%s1 + $0x1188] sm:$0xf]
      %v1494 = vld [vmem:[%s1 + $0x118c] sm:$0xf]
      %v1495 = vld [vmem:[%s1 + $0x1190] sm:$0xf]
      %v1496 = vld [vmem:[%s1 + $0x1194] sm:$0xf]
      %v1497 = vld [vmem:[%s1 + $0x1198] sm:$0xf]
      %v1498 = vld [vmem:[%s1 + $0x119c] sm:$0xf]
      %v1499 = vld [vmem:[%s1 + $0x11a0] sm:$0xf]
      %v1500 = vld [vmem:[%s1 + $0x11a4] sm:$0xf]
      %v1501 = vld [vmem:[%s1 + $0x11a8] sm:$0xf]
      %v1502 = vld [vmem:[%s1 + $0x11ac] sm:$0xf]
      %v1503 = vld [vmem:[%s1 + $0x11b0] sm:$0xf]
      %v1504 = vld [vmem:[%s1 + $0x11b4] sm:$0xf]
      %v1505 = vld [vmem:[%s1 + $0x11b8] sm:$0xf]
      %v1506 = vld [vmem:[%s1 + $0x11bc] sm:$0xf]
      %v1507 = vld [vmem:[%s1 + $0x11c0] sm:$0xf]
      %v1508 = vld [vmem:[%s1 + $0x11c4] sm:$0xf]
      %v1509 = vld [vmem:[%s1 + $0x11c8] sm:$0xf]
      %v1510 = vld [vmem:[%s1 + $0x11cc] sm:$0xf]
      %v1511 = vld [vmem:[%s1 + $0x11d0] sm:$0xf]
      %v1512 = vld [vmem:[%s1 + $0x11d4] sm:$0xf]
      %v1513 = vld [vmem:[%s1 + $0x11d8] sm:$0xf]
      %v1514 = vld [vmem:[%s1 + $0x11dc] sm:$0xf]
      %v1515 = vld [vmem:[%s1 + $0x11e0] sm:$0xf]
      %v1516 = vld [vmem:[%s1 + $0x11e4] sm:$0xf]
      %v1517 = vld [vmem:[%s1 + $0x11e8] sm:$0xf]
      %v1518 = vld [vmem:[%s1 + $0x11ec] sm:$0xf]
      %v1519 = vld [vmem:[%s1 + $0x11f0] sm:$0xf]
      %v1520 = vld [vmem:[%s1 + $0x11f4] sm:$0xf]
      %v1521 = vld [vmem:[%s1 + $0x11f8] sm:$0xf]
      %v1522 = vld [vmem:[%s1 + $0x11fc] sm:$0xf]
      %v1523 = vld [vmem:[%s1 + $0x1200] sm:$0xf]
      %v1524 = vld [vmem:[%s1 + $0x1204] sm:$0xf]
      %v1525 = vld [vmem:[%s1 + $0x1208] sm:$0xf]
      %v1526 = vld [vmem:[%s1 + $0x120c] sm:$0xf]
      %v1527 = vld [vmem:[%s1 + $0x1210] sm:$0xf]
      %v1528 = vld [vmem:[%s1 + $0x1214] sm:$0xf]
      %v1529 = vld [vmem:[%s1 + $0x1218] sm:$0xf]
      %v1530 = vld [vmem:[%s1 + $0x121c] sm:$0xf]
      %v1531 = vld [vmem:[%s1 + $0x1220] sm:$0xf]
      %v1532 = vld [vmem:[%s1 + $0x1224] sm:$0xf]
      %v1533 = vld [vmem:[%s1 + $0x1228] sm:$0xf]
      %v1534 = vld [vmem:[%s1 + $0x122c] sm:$0xf]
      %v1535 = vld [vmem:[%s1 + $0x1230] sm:$0xf]
      %v1536 = vld [vmem:[%s1 + $0x1234] sm:$0xf]
      %v1537 = vld [vmem:[%s1 + $0x1238] sm:$0xf]
      %v1538 = vld [vmem:[%s1 + $0x123c] sm:$0xf]
      %v1539 = vld [vmem:[%s1 + $0x1240] sm:$0xf]
      %v1540 = vld [vmem:[%s1 + $0x1244] sm:$0xf]
      %v1541 = vld [vmem:[%s1 + $0x1248] sm:$0xf]
      %v1542 = vld [vmem:[%s1 + $0x124c] sm:$0xf]
      %v1543 = vld [vmem:[%s1 + $0x1250] sm:$0xf]
      %v1544 = vld [vmem:[%s1 + $0x1254] sm:$0xf]
      %v1545 = vld [vmem:[%s1 + $0x1258] sm:$0xf]
      %v1546 = vld [vmem:[%s1 + $0x125c] sm:$0xf]
      %v1547 = vld [vmem:[%s1 + $0x1260] sm:$0xf]
      %v1548 = vld [vmem:[%s1 + $0x1264] sm:$0xf]
      %v1549 = vld [vmem:[%s1 + $0x1268] sm:$0xf]
      %v1550 = vld [vmem:[%s1 + $0x126c] sm:$0xf]
      %v1551 = vld [vmem:[%s1 + $0x1270] sm:$0xf]
      %v1552 = vld [vmem:[%s1 + $0x1274] sm:$0xf]
      %v1553 = vld [vmem:[%s1 + $0x1278] sm:$0xf]
      %v1554 = vld [vmem:[%s1 + $0x127c] sm:$0xf]
      %v1555 = vld [vmem:[%s1 + $0x1280] sm:$0xf]
      %v1556 = vld [vmem:[%s1 + $0x1284] sm:$0xf]
      %v1557 = vld [vmem:[%s1 + $0x1288] sm:$0xf]
      %v1558 = vld [vmem:[%s1 + $0x128c] sm:$0xf]
      %v1559 = vld [vmem:[%s1 + $0x1290] sm:$0xf]
      %v1560 = vld [vmem:[%s1 + $0x1294] sm:$0xf]
      %v1561 = vld [vmem:[%s1 + $0x1298] sm:$0xf]
      %v1562 = vld [vmem:[%s1 + $0x129c] sm:$0xf]
      %v1563 = vld [vmem:[%s1 + $0x12a0] sm:$0xf]
      %v1564 = vld [vmem:[%s1 + $0x12a4] sm:$0xf]
      %v1565 = vld [vmem:[%s1 + $0x12a8] sm:$0xf]
      %v1566 = vld [vmem:[%s1 + $0x12ac] sm:$0xf]
      %v1567 = vld [vmem:[%s1 + $0x12b0] sm:$0xf]
      %v1568 = vld [vmem:[%s1 + $0x12b4] sm:$0xf]
      %v1569 = vld [vmem:[%s1 + $0x12b8] sm:$0xf]
      %v1570 = vld [vmem:[%s1 + $0x12bc] sm:$0xf]
      %v1571 = vld [vmem:[%s1 + $0x12c0] sm:$0xf]
      %v1572 = vld [vmem:[%s1 + $0x12c4] sm:$0xf]
      %v1573 = vld [vmem:[%s1 + $0x12c8] sm:$0xf]
      %v1574 = vld [vmem:[%s1 + $0x12cc] sm:$0xf]
      %v1575 = vld [vmem:[%s1 + $0x12d0] sm:$0xf]
      %v1576 = vld [vmem:[%s1 + $0x12d4] sm:$0xf]
      %v1577 = vld [vmem:[%s1 + $0x12d8] sm:$0xf]
      %v1578 = vld [vmem:[%s1 + $0x12dc] sm:$0xf]
      %v1579 = vld [vmem:[%s1 + $0x12e0] sm:$0xf]
      %v1580 = vld [vmem:[%s1 + $0x12e4] sm:$0xf]
      %v1581 = vld [vmem:[%s1 + $0x12e8] sm:$0xf]
      %v1582 = vld [vmem:[%s1 + $0x12ec] sm:$0xf]
      %v1583 = vld [vmem:[%s1 + $0x12f0] sm:$0xf]
      %v1584 = vld [vmem:[%s1 + $0x12f4] sm:$0xf]
      %v1585 = vld [vmem:[%s1 + $0x12f8] sm:$0xf]
      %v1586 = vld [vmem:[%s1 + $0x12fc] sm:$0xf]
      %v1587 = vld [vmem:[%s1 + $0x1300] sm:$0xf]
      %v1588 = vld [vmem:[%s1 + $0x1304] sm:$0xf]
      %v1589 = vld [vmem:[%s1 + $0x1308] sm:$0xf]
      %v1590 = vld [vmem:[%s1 + $0x130c] sm:$0xf]
      %v1591 = vld [vmem:[%s1 + $0x1310] sm:$0xf]
      %v1592 = vld [vmem:[%s1 + $0x1314] sm:$0xf]
      %v1593 = vld [vmem:[%s1 + $0x1318] sm:$0xf]
      %v1594 = vld [vmem:[%s1 + $0x131c] sm:$0xf]
      %v1595 = vld [vmem:[%s1 + $0x1320] sm:$0xf]
      %v1596 = vld [vmem:[%s1 + $0x1324] sm:$0xf]
      %v1597 = vld [vmem:[%s1 + $0x1328] sm:$0xf]
      %v1598 = vld [vmem:[%s1 + $0x132c] sm:$0xf]
      %v1599 = vld [vmem:[%s1 + $0x1330] sm:$0xf]
      %v1600 = vld [vmem:[%s1 + $0x1334] sm:$0xf]
      %v1601 = vld [vmem:[%s1 + $0x1338] sm:$0xf]
      %v1602 = vld [vmem:[%s1 + $0x133c] sm:$0xf]
      %v1603 = vld [vmem:[%s1 + $0x1340] sm:$0xf]
      %v1604 = vld [vmem:[%s1 + $0x1344] sm:$0xf]
      %v1605 = vld [vmem:[%s1 + $0x1348] sm:$0xf]
      %v1606 = vld [vmem:[%s1 + $0x134c] sm:$0xf]
      %v1607 = vld [vmem:[%s1 + $0x1350] sm:$0xf]
      %v1608 = vld [vmem:[%s1 + $0x1354] sm:$0xf]
      %v1609 = vld [vmem:[%s1 + $0x1358] sm:$0xf]
      %v1610 = vld [vmem:[%s1 + $0x135c] sm:$0xf]
      %v1611 = vld [vmem:[%s1 + $0x1360] sm:$0xf]
      %v1612 = vld [vmem:[%s1 + $0x1364] sm:$0xf]
      %v1613 = vld [vmem:[%s1 + $0x1368] sm:$0xf]
      %v1614 = vld [vmem:[%s1 + $0x136c] sm:$0xf]
      %v1615 = vld [vmem:[%s1 + $0x1370] sm:$0xf]
      %v1616 = vld [vmem:[%s1 + $0x1374] sm:$0xf]
      %v1617 = vld [vmem:[%s1 + $0x1378] sm:$0xf]
      %v1618 = vld [vmem:[%s1 + $0x137c] sm:$0xf]
      %v1619 = vld [vmem:[%s1 + $0x1380] sm:$0xf]
      %v1620 = vld [vmem:[%s1 + $0x1384] sm:$0xf]
      %v1621 = vld [vmem:[%s1 + $0x1388] sm:$0xf]
      %v1622 = vld [vmem:[%s1 + $0x138c] sm:$0xf]
      %v1623 = vld [vmem:[%s1 + $0x1390] sm:$0xf]
      %v1624 = vld [vmem:[%s1 + $0x1394] sm:$0xf]
      %v1625 = vld [vmem:[%s1 + $0x1398] sm:$0xf]
      %v1626 = vld [vmem:[%s1 + $0x139c] sm:$0xf]
      %v1627 = vld [vmem:[%s1 + $0x13a0] sm:$0xf]
      %v1628 = vld [vmem:[%s1 + $0x13a4] sm:$0xf]
      %v1629 = vld [vmem:[%s1 + $0x13a8] sm:$0xf]
      %v1630 = vld [vmem:[%s1 + $0x13ac] sm:$0xf]
      %v1631 = vld [vmem:[%s1 + $0x13b0] sm:$0xf]
      %v1632 = vld [vmem:[%s1 + $0x13b4] sm:$0xf]
      %v1633 = vld [vmem:[%s1 + $0x13b8] sm:$0xf]
      %v1634 = vld [vmem:[%s1 + $0x13bc] sm:$0xf]
      %v1635 = vld [vmem:[%s1 + $0x13c0] sm:$0xf]
      %v1636 = vld [vmem:[%s1 + $0x13c4] sm:$0xf]
      %v1637 = vld [vmem:[%s1 + $0x13c8] sm:$0xf]
      %v1638 = vld [vmem:[%s1 + $0x13cc] sm:$0xf]
      %v1639 = vld [vmem:[%s1 + $0x13d0] sm:$0xf]
      %v1640 = vld [vmem:[%s1 + $0x13d4] sm:$0xf]
      %v1641 = vld [vmem:[%s1 + $0x13d8] sm:$0xf]
      %v1642 = vld [vmem:[%s1 + $0x13dc] sm:$0xf]
      %v1643 = vld [vmem:[%s1 + $0x13e0] sm:$0xf]
      %v1644 = vld [vmem:[%s1 + $0x13e4] sm:$0xf]
      %v1645 = vld [vmem:[%s1 + $0x13e8] sm:$0xf]
      %v1646 = vld [vmem:[%s1 + $0x13ec] sm:$0xf]
      %v1647 = vld [vmem:[%s1 + $0x13f0] sm:$0xf]
      %v1648 = vld [vmem:[%s1 + $0x13f4] sm:$0xf]
      %v1649 = vld [vmem:[%s1 + $0x13f8] sm:$0xf]
      %v1650 = vld [vmem:[%s1 + $0x13fc] sm:$0xf]
      %v1651 = vld [vmem:[%s1 + $0x1400] sm:$0xf]
      %v1652 = vld [vmem:[%s1 + $0x1404] sm:$0xf]
      %v1653 = vld [vmem:[%s1 + $0x1408] sm:$0xf]
      %v1654 = vld [vmem:[%s1 + $0x140c] sm:$0xf]
      %v1655 = vld [vmem:[%s1 + $0x1410] sm:$0xf]
      %v1656 = vld [vmem:[%s1 + $0x1414] sm:$0xf]
      %v1657 = vld [vmem:[%s1 + $0x1418] sm:$0xf]
      %v1658 = vld [vmem:[%s1 + $0x141c] sm:$0xf]
      %v1659 = vld [vmem:[%s1 + $0x1420] sm:$0xf]
      %v1660 = vld [vmem:[%s1 + $0x1424] sm:$0xf]
      %v1661 = vld [vmem:[%s1 + $0x1428] sm:$0xf]
      %v1662 = vld [vmem:[%s1 + $0x142c] sm:$0xf]
      %v1663 = vld [vmem:[%s1 + $0x1430] sm:$0xf]
      %v1664 = vld [vmem:[%s1 + $0x1434] sm:$0xf]
      %v1665 = vld [vmem:[%s1 + $0x1438] sm:$0xf]
      %v1666 = vld [vmem:[%s1 + $0x143c] sm:$0xf]
      %v1667 = vld [vmem:[%s1 + $0x1440] sm:$0xf]
      %v1668 = vld [vmem:[%s1 + $0x1444] sm:$0xf]
      %v1669 = vld [vmem:[%s1 + $0x1448] sm:$0xf]
      %v1670 = vld [vmem:[%s1 + $0x144c] sm:$0xf]
      %v1671 = vld [vmem:[%s1 + $0x1450] sm:$0xf]
      %v1672 = vld [vmem:[%s1 + $0x1454] sm:$0xf]
      %v1673 = vld [vmem:[%s1 + $0x1458] sm:$0xf]
      %v1674 = vld [vmem:[%s1 + $0x145c] sm:$0xf]
      %v1675 = vld [vmem:[%s1 + $0x1460] sm:$0xf]
      %v1676 = vld [vmem:[%s1 + $0x1464] sm:$0xf]
      %v1677 = vld [vmem:[%s1 + $0x1468] sm:$0xf]
      %v1678 = vld [vmem:[%s1 + $0x146c] sm:$0xf]
      %v1679 = vld [vmem:[%s1 + $0x1470] sm:$0xf]
      %v1680 = vld [vmem:[%s1 + $0x1474] sm:$0xf]
      %v1681 = vld [vmem:[%s1 + $0x1478] sm:$0xf]
      %v1682 = vld [vmem:[%s1 + $0x147c] sm:$0xf]
      %v1683 = vld [vmem:[%s1 + $0x1480] sm:$0xf]
      %v1684 = vld [vmem:[%s1 + $0x1484] sm:$0xf]
      %v1685 = vld [vmem:[%s1 + $0x1488] sm:$0xf]
      %v1686 = vld [vmem:[%s1 + $0x148c] sm:$0xf]
      %v1687 = vld [vmem:[%s1 + $0x1490] sm:$0xf]
      %v1688 = vld [vmem:[%s1 + $0x1494] sm:$0xf]
      %v1689 = vld [vmem:[%s1 + $0x1498] sm:$0xf]
      %v1690 = vld [vmem:[%s1 + $0x149c] sm:$0xf]
      %v1691 = vld [vmem:[%s1 + $0x14a0] sm:$0xf]
      %v1692 = vld [vmem:[%s1 + $0x14a4] sm:$0xf]
      %v1693 = vld [vmem:[%s1 + $0x14a8] sm:$0xf]
      %v1694 = vld [vmem:[%s1 + $0x14ac] sm:$0xf]
      %v1695 = vld [vmem:[%s1 + $0x14b0] sm:$0xf]
      %v1696 = vld [vmem:[%s1 + $0x14b4] sm:$0xf]
      %v1697 = vld [vmem:[%s1 + $0x14b8] sm:$0xf]
      %v1698 = vld [vmem:[%s1 + $0x14bc] sm:$0xf]
      %v1699 = vld [vmem:[%s1 + $0x14c0] sm:$0xf]
      %v1700 = vld [vmem:[%s1 + $0x14c4] sm:$0xf]
      %v1701 = vld [vmem:[%s1 + $0x14c8] sm:$0xf]
      %v1702 = vld [vmem:[%s1 + $0x14cc] sm:$0xf]
      %v1703 = vld [vmem:[%s1 + $0x14d0] sm:$0xf]
      %v1704 = vld [vmem:[%s1 + $0x14d4] sm:$0xf]
      %v1705 = vld [vmem:[%s1 + $0x14d8] sm:$0xf]
      %v1706 = vld [vmem:[%s1 + $0x14dc] sm:$0xf]
      %v1707 = vld [vmem:[%s1 + $0x14e0] sm:$0xf]
      %v1708 = vld [vmem:[%s1 + $0x14e4] sm:$0xf]
      %v1709 = vld [vmem:[%s1 + $0x14e8] sm:$0xf]
      %v1710 = vld [vmem:[%s1 + $0x14ec] sm:$0xf]
      %v1711 = vld [vmem:[%s1 + $0x14f0] sm:$0xf]
      %v1712 = vld [vmem:[%s1 + $0x14f4] sm:$0xf]
      %v1713 = vld [vmem:[%s1 + $0x14f8] sm:$0xf]
      %v1714 = vld [vmem:[%s1 + $0x14fc] sm:$0xf]
      %v1715 = vld [vmem:[%s1 + $0x1500] sm:$0xf]
      %v1716 = vld [vmem:[%s1 + $0x1504] sm:$0xf]
      %v1717 = vld [vmem:[%s1 + $0x1508] sm:$0xf]
      %v1718 = vld [vmem:[%s1 + $0x150c] sm:$0xf]
      %v1719 = vld [vmem:[%s1 + $0x1510] sm:$0xf]
      %v1720 = vld [vmem:[%s1 + $0x1514] sm:$0xf]
      %v1721 = vld [vmem:[%s1 + $0x1518] sm:$0xf]
      %v1722 = vld [vmem:[%s1 + $0x151c] sm:$0xf]
      %v1723 = vld [vmem:[%s1 + $0x1520] sm:$0xf]
      %v1724 = vld [vmem:[%s1 + $0x1524] sm:$0xf]
      %v1725 = vld [vmem:[%s1 + $0x1528] sm:$0xf]
      %v1726 = vld [vmem:[%s1 + $0x152c] sm:$0xf]
      %v1727 = vld [vmem:[%s1 + $0x1530] sm:$0xf]
      %v1728 = vld [vmem:[%s1 + $0x1534] sm:$0xf]
      %v1729 = vld [vmem:[%s1 + $0x1538] sm:$0xf]
      %v1730 = vld [vmem:[%s1 + $0x153c] sm:$0xf]
      %v1731 = vld [vmem:[%s1 + $0x1540] sm:$0xf]
      %v1732 = vld [vmem:[%s1 + $0x1544] sm:$0xf]
      %v1733 = vld [vmem:[%s1 + $0x1548] sm:$0xf]
      %v1734 = vld [vmem:[%s1 + $0x154c] sm:$0xf]
      %v1735 = vld [vmem:[%s1 + $0x1550] sm:$0xf]
      %v1736 = vld [vmem:[%s1 + $0x1554] sm:$0xf]
      %v1737 = vld [vmem:[%s1 + $0x1558] sm:$0xf]
      %v1738 = vld [vmem:[%s1 + $0x155c] sm:$0xf]
      %v1739 = vld [vmem:[%s1 + $0x1560] sm:$0xf]
      %v1740 = vld [vmem:[%s1 + $0x1564] sm:$0xf]
      %v1741 = vld [vmem:[%s1 + $0x1568] sm:$0xf]
      %v1742 = vld [vmem:[%s1 + $0x156c] sm:$0xf]
      %v1743 = vld [vmem:[%s1 + $0x1570] sm:$0xf]
      %v1744 = vld [vmem:[%s1 + $0x1574] sm:$0xf]
      %v1745 = vld [vmem:[%s1 + $0x1578] sm:$0xf]
      %v1746 = vld [vmem:[%s1 + $0x157c] sm:$0xf]
      %v1747 = vld [vmem:[%s1 + $0x1580] sm:$0xf]
      %v1748 = vld [vmem:[%s1 + $0x1584] sm:$0xf]
      %v1749 = vld [vmem:[%s1 + $0x1588] sm:$0xf]
      %v1750 = vld [vmem:[%s1 + $0x158c] sm:$0xf]
      %v1751 = vld [vmem:[%s1 + $0x1590] sm:$0xf]
      %v1752 = vld [vmem:[%s1 + $0x1594] sm:$0xf]
      %v1753 = vld [vmem:[%s1 + $0x1598] sm:$0xf]
      %v1754 = vld [vmem:[%s1 + $0x159c] sm:$0xf]
      %v1755 = vld [vmem:[%s1 + $0x15a0] sm:$0xf]
      %v1756 = vld [vmem:[%s1 + $0x15a4] sm:$0xf]
      %v1757 = vld [vmem:[%s1 + $0x15a8] sm:$0xf]
      %v1758 = vld [vmem:[%s1 + $0x15ac] sm:$0xf]
      %v1759 = vld [vmem:[%s1 + $0x15b0] sm:$0xf]
      %v1760 = vld [vmem:[%s1 + $0x15b4] sm:$0xf]
      %v1761 = vld [vmem:[%s1 + $0x15b8] sm:$0xf]
      %v1762 = vld [vmem:[%s1 + $0x15bc] sm:$0xf]
      %v1763 = vld [vmem:[%s1 + $0x15c0] sm:$0xf]
      %v1764 = vld [vmem:[%s1 + $0x15c4] sm:$0xf]
      %v1765 = vld [vmem:[%s1 + $0x15c8] sm:$0xf]
      %v1766 = vld [vmem:[%s1 + $0x15cc] sm:$0xf]
      %v1767 = vld [vmem:[%s1 + $0x15d0] sm:$0xf]
      %v1768 = vld [vmem:[%s1 + $0x15d4] sm:$0xf]
      %v1769 = vld [vmem:[%s1 + $0x15d8] sm:$0xf]
      %v1770 = vld [vmem:[%s1 + $0x15dc] sm:$0xf]
      %v1771 = vld [vmem:[%s1 + $0x15e0] sm:$0xf]
      %v1772 = vld [vmem:[%s1 + $0x15e4] sm:$0xf]
      %v1773 = vld [vmem:[%s1 + $0x15e8] sm:$0xf]
      %v1774 = vld [vmem:[%s1 + $0x15ec] sm:$0xf]
      %v1775 = vld [vmem:[%s1 + $0x15f0] sm:$0xf]
      %v1776 = vld [vmem:[%s1 + $0x15f4] sm:$0xf]
      %v1777 = vld [vmem:[%s1 + $0x15f8] sm:$0xf]
      %v1778 = vld [vmem:[%s1 + $0x15fc] sm:$0xf]
      %v1779 = vld [vmem:[%s1 + $0x1600] sm:$0xf]
      %v1780 = vld [vmem:[%s1 + $0x1604] sm:$0xf]
      %v1781 = vld [vmem:[%s1 + $0x1608] sm:$0xf]
      %v1782 = vld [vmem:[%s1 + $0x160c] sm:$0xf]
      %v1783 = vld [vmem:[%s1 + $0x1610] sm:$0xf]
      %v1784 = vld [vmem:[%s1 + $0x1614] sm:$0xf]
      %v1785 = vld [vmem:[%s1 + $0x1618] sm:$0xf]
      %v1786 = vld [vmem:[%s1 + $0x161c] sm:$0xf]
      %v1787 = vld [vmem:[%s1 + $0x1620] sm:$0xf]
      %v1788 = vld [vmem:[%s1 + $0x1624] sm:$0xf]
      %v1789 = vld [vmem:[%s1 + $0x1628] sm:$0xf]
      %v1790 = vld [vmem:[%s1 + $0x162c] sm:$0xf]
      %v1791 = vld [vmem:[%s1 + $0x1630] sm:$0xf]
      %v1792 = vld [vmem:[%s1 + $0x1634] sm:$0xf]
      %v1793 = vld [vmem:[%s1 + $0x1638] sm:$0xf]
      %v1794 = vld [vmem:[%s1 + $0x163c] sm:$0xf]
      %v1795 = vld [vmem:[%s1 + $0x1640] sm:$0xf]
      %v1796 = vld [vmem:[%s1 + $0x1644] sm:$0xf]
      %v1797 = vld [vmem:[%s1 + $0x1648] sm:$0xf]
      %v1798 = vld [vmem:[%s1 + $0x164c] sm:$0xf]
      %v1799 = vld [vmem:[%s1 + $0x1650] sm:$0xf]
      %v1800 = vld [vmem:[%s1 + $0x1654] sm:$0xf]
      %v1801 = vld [vmem:[%s1 + $0x1658] sm:$0xf]
      %v1802 = vld [vmem:[%s1 + $0x165c] sm:$0xf]
      %v1803 = vld [vmem:[%s1 + $0x1660] sm:$0xf]
      %v1804 = vld [vmem:[%s1 + $0x1664] sm:$0xf]
      %v1805 = vld [vmem:[%s1 + $0x1668] sm:$0xf]
      %v1806 = vld [vmem:[%s1 + $0x166c] sm:$0xf]
      %v1807 = vld [vmem:[%s1 + $0x1670] sm:$0xf]
      %v1808 = vld [vmem:[%s1 + $0x1674] sm:$0xf]
      %v1809 = vld [vmem:[%s1 + $0x1678] sm:$0xf]
      %v1810 = vld [vmem:[%s1 + $0x167c] sm:$0xf]
      %v1811 = vld [vmem:[%s1 + $0x1680] sm:$0xf]
      %v1812 = vld [vmem:[%s1 + $0x1684] sm:$0xf]
      %v1813 = vld [vmem:[%s1 + $0x1688] sm:$0xf]
      %v1814 = vld [vmem:[%s1 + $0x168c] sm:$0xf]
      %v1815 = vld [vmem:[%s1 + $0x1690] sm:$0xf]
      %v1816 = vld [vmem:[%s1 + $0x1694] sm:$0xf]
      %v1817 = vld [vmem:[%s1 + $0x1698] sm:$0xf]
      %v1818 = vld [vmem:[%s1 + $0x169c] sm:$0xf]
      %v1819 = vld [vmem:[%s1 + $0x16a0] sm:$0xf]
      %v1820 = vld [vmem:[%s1 + $0x16a4] sm:$0xf]
      %v1821 = vld [vmem:[%s1 + $0x16a8] sm:$0xf]
      %v1822 = vld [vmem:[%s1 + $0x16ac] sm:$0xf]
      %v1823 = vld [vmem:[%s1 + $0x16b0] sm:$0xf]
      %v1824 = vld [vmem:[%s1 + $0x16b4] sm:$0xf]
      %v1825 = vld [vmem:[%s1 + $0x16b8] sm:$0xf]
      %v1826 = vld [vmem:[%s1 + $0x16bc] sm:$0xf]
      %v1827 = vld [vmem:[%s1 + $0x16c0] sm:$0xf]
      %v1828 = vld [vmem:[%s1 + $0x16c4] sm:$0xf]
      %v1829 = vld [vmem:[%s1 + $0x16c8] sm:$0xf]
      %v1830 = vld [vmem:[%s1 + $0x16cc] sm:$0xf]
      %v1831 = vld [vmem:[%s1 + $0x16d0] sm:$0xf]
      %v1832 = vld [vmem:[%s1 + $0x16d4] sm:$0xf]
      %v1833 = vld [vmem:[%s1 + $0x16d8] sm:$0xf]
      %v1834 = vld [vmem:[%s1 + $0x16dc] sm:$0xf]
      %v1835 = vld [vmem:[%s1 + $0x16e0] sm:$0xf]
      %v1836 = vld [vmem:[%s1 + $0x16e4] sm:$0xf]
      %v1837 = vld [vmem:[%s1 + $0x16e8] sm:$0xf]
      %v1838 = vld [vmem:[%s1 + $0x16ec] sm:$0xf]
      %v1839 = vld [vmem:[%s1 + $0x16f0] sm:$0xf]
      %v1840 = vld [vmem:[%s1 + $0x16f4] sm:$0xf]
      %v1841 = vld [vmem:[%s1 + $0x16f8] sm:$0xf]
      %v1842 = vld [vmem:[%s1 + $0x16fc] sm:$0xf]
      %v1843 = vld [vmem:[%s1 + $0x1700] sm:$0xf]
      %v1844 = vld [vmem:[%s1 + $0x1704] sm:$0xf]
      %v1845 = vld [vmem:[%s1 + $0x1708] sm:$0xf]
      %v1846 = vld [vmem:[%s1 + $0x170c] sm:$0xf]
      %v1847 = vld [vmem:[%s1 + $0x1710] sm:$0xf]
      %v1848 = vld [vmem:[%s1 + $0x1714] sm:$0xf]
      %v1849 = vld [vmem:[%s1 + $0x1718] sm:$0xf]
      %v1850 = vld [vmem:[%s1 + $0x171c] sm:$0xf]
      %v1851 = vld [vmem:[%s1 + $0x1720] sm:$0xf]
      %v1852 = vld [vmem:[%s1 + $0x1724] sm:$0xf]
      %v1853 = vld [vmem:[%s1 + $0x1728] sm:$0xf]
      %v1854 = vld [vmem:[%s1 + $0x172c] sm:$0xf]
      %v1855 = vld [vmem:[%s1 + $0x1730] sm:$0xf]
      %v1856 = vld [vmem:[%s1 + $0x1734] sm:$0xf]
      %v1857 = vld [vmem:[%s1 + $0x1738] sm:$0xf]
      %v1858 = vld [vmem:[%s1 + $0x173c] sm:$0xf]
      %v1859 = vld [vmem:[%s1 + $0x1740] sm:$0xf]
      %v1860 = vld [vmem:[%s1 + $0x1744] sm:$0xf]
      %v1861 = vld [vmem:[%s1 + $0x1748] sm:$0xf]
      %v1862 = vld [vmem:[%s1 + $0x174c] sm:$0xf]
      %v1863 = vld [vmem:[%s1 + $0x1750] sm:$0xf]
      %v1864 = vld [vmem:[%s1 + $0x1754] sm:$0xf]
      %v1865 = vld [vmem:[%s1 + $0x1758] sm:$0xf]
      %v1866 = vld [vmem:[%s1 + $0x175c] sm:$0xf]
      %v1867 = vld [vmem:[%s1 + $0x1760] sm:$0xf]
      %v1868 = vld [vmem:[%s1 + $0x1764] sm:$0xf]
      %v1869 = vld [vmem:[%s1 + $0x1768] sm:$0xf]
      %v1870 = vld [vmem:[%s1 + $0x176c] sm:$0xf]
      %v1871 = vld [vmem:[%s1 + $0x1770] sm:$0xf]
      %v1872 = vld [vmem:[%s1 + $0x1774] sm:$0xf]
      %v1873 = vld [vmem:[%s1 + $0x1778] sm:$0xf]
      %v1874 = vld [vmem:[%s1 + $0x177c] sm:$0xf]
      %v1875 = vld [vmem:[%s1 + $0x1780] sm:$0xf]
      %v1876 = vld [vmem:[%s1 + $0x1784] sm:$0xf]
      %v1877 = vld [vmem:[%s1 + $0x1788] sm:$0xf]
      %v1878 = vld [vmem:[%s1 + $0x178c] sm:$0xf]
      %v1879 = vld [vmem:[%s1 + $0x1790] sm:$0xf]
      %v1880 = vld [vmem:[%s1 + $0x1794] sm:$0xf]
      %v1881 = vld [vmem:[%s1 + $0x1798] sm:$0xf]
      %v1882 = vld [vmem:[%s1 + $0x179c] sm:$0xf]
      %v1883 = vld [vmem:[%s1 + $0x17a0] sm:$0xf]
      %v1884 = vld [vmem:[%s1 + $0x17a4] sm:$0xf]
      %v1885 = vld [vmem:[%s1 + $0x17a8] sm:$0xf]
      %v1886 = vld [vmem:[%s1 + $0x17ac] sm:$0xf]
      %v1887 = vld [vmem:[%s1 + $0x17b0] sm:$0xf]
      %v1888 = vld [vmem:[%s1 + $0x17b4] sm:$0xf]
      %v1889 = vld [vmem:[%s1 + $0x17b8] sm:$0xf]
      %v1890 = vld [vmem:[%s1 + $0x17bc] sm:$0xf]
      %v1891 = vld [vmem:[%s1 + $0x17c0] sm:$0xf]
      %v1892 = vld [vmem:[%s1 + $0x17c4] sm:$0xf]
      %v1893 = vld [vmem:[%s1 + $0x17c8] sm:$0xf]
      %v1894 = vld [vmem:[%s1 + $0x17cc] sm:$0xf]
      %v1895 = vld [vmem:[%s1 + $0x17d0] sm:$0xf]
      %v1896 = vld [vmem:[%s1 + $0x17d4] sm:$0xf]
      %v1897 = vld [vmem:[%s1 + $0x17d8] sm:$0xf]
      %v1898 = vld [vmem:[%s1 + $0x17dc] sm:$0xf]
      %v1899 = vld [vmem:[%s1 + $0x17e0] sm:$0xf]
      %v1900 = vld [vmem:[%s1 + $0x17e4] sm:$0xf]
      %v1901 = vld [vmem:[%s1 + $0x17e8] sm:$0xf]
      %v1902 = vld [vmem:[%s1 + $0x17ec] sm:$0xf]
      %v1903 = vld [vmem:[%s1 + $0x17f0] sm:$0xf]
      %v1904 = vld [vmem:[%s1 + $0x17f4] sm:$0xf]
      %v1905 = vld [vmem:[%s1 + $0x17f8] sm:$0xf]
      %v1906 = vld [vmem:[%s1 + $0x17fc] sm:$0xf]
      %v1907 = vld [vmem:[%s1 + $0x1800] sm:$0xf]
      %v1908 = vld [vmem:[%s1 + $0x1804] sm:$0xf]
      %v1909 = vld [vmem:[%s1 + $0x1808] sm:$0xf]
      %v1910 = vld [vmem:[%s1 + $0x180c] sm:$0xf]
      %v1911 = vld [vmem:[%s1 + $0x1810] sm:$0xf]
      %v1912 = vld [vmem:[%s1 + $0x1814] sm:$0xf]
      %v1913 = vld [vmem:[%s1 + $0x1818] sm:$0xf]
      %v1914 = vld [vmem:[%s1 + $0x181c] sm:$0xf]
      %v1915 = vld [vmem:[%s1 + $0x1820] sm:$0xf]
      %v1916 = vld [vmem:[%s1 + $0x1824] sm:$0xf]
      %v1917 = vld [vmem:[%s1 + $0x1828] sm:$0xf]
      %v1918 = vld [vmem:[%s1 + $0x182c] sm:$0xf]
      %v1919 = vld [vmem:[%s1 + $0x1830] sm:$0xf]
      %v1920 = vld [vmem:[%s1 + $0x1834] sm:$0xf]
      %v1921 = vld [vmem:[%s1 + $0x1838] sm:$0xf]
      %v1922 = vld [vmem:[%s1 + $0x183c] sm:$0xf]
      %v1923 = vld [vmem:[%s1 + $0x1840] sm:$0xf]
      %v1924 = vld [vmem:[%s1 + $0x1844] sm:$0xf]
      %v1925 = vld [vmem:[%s1 + $0x1848] sm:$0xf]
      %v1926 = vld [vmem:[%s1 + $0x184c] sm:$0xf]
      %v1927 = vld [vmem:[%s1 + $0x1850] sm:$0xf]
      %v1928 = vld [vmem:[%s1 + $0x1854] sm:$0xf]
      %v1929 = vld [vmem:[%s1 + $0x1858] sm:$0xf]
      %v1930 = vld [vmem:[%s1 + $0x185c] sm:$0xf]
      %v1931 = vld [vmem:[%s1 + $0x1860] sm:$0xf]
      %v1932 = vld [vmem:[%s1 + $0x1864] sm:$0xf]
      %v1933 = vld [vmem:[%s1 + $0x1868] sm:$0xf]
      %v1934 = vld [vmem:[%s1 + $0x186c] sm:$0xf]
      %v1935 = vld [vmem:[%s1 + $0x1870] sm:$0xf]
      %v1936 = vld [vmem:[%s1 + $0x1874] sm:$0xf]
      %v1937 = vld [vmem:[%s1 + $0x1878] sm:$0xf]
      %v1938 = vld [vmem:[%s1 + $0x187c] sm:$0xf]
      %v1939 = vld [vmem:[%s4] sm:$0x1]
      %v1941 = vlaneseq
      %v1942 = vshrl.u32 %v1941, 7
      %v1943 = vsub.s32 0, %v1942
      %v1944 = vrot.slane %v1939, %v1943
      %v1995 = vunpack.c.l.b16 %v322
      %v1996 = vunpack.c.h.b16 %v322
      %v1997 = vunpack.c.l.b16 %v323
      %v1998 = vunpack.c.h.b16 %v323
      %v1999 = vunpack.c.l.b16 %v324
      %v2000 = vunpack.c.h.b16 %v324
      %v2001 = vunpack.c.l.b16 %v325
      %v2002 = vunpack.c.h.b16 %v325
      %v2003 = vunpack.c.l.b16 %v326
      %v2004 = vunpack.c.h.b16 %v326
      %v2005 = vunpack.c.l.b16 %v327
      %v2006 = vunpack.c.h.b16 %v327
      %v2007 = vunpack.c.l.b16 %v328
      %v2008 = vunpack.c.h.b16 %v328
      %v2009 = vunpack.c.l.b16 %v329
      %v2010 = vunpack.c.h.b16 %v329
      %v2011 = vunpack.c.l.b16 %v330
      %v2012 = vunpack.c.h.b16 %v330
      %v2013 = vunpack.c.l.b16 %v331
      %v2014 = vunpack.c.h.b16 %v331
      %v2015 = vunpack.c.l.b16 %v332
      %v2016 = vunpack.c.h.b16 %v332
      %v2017 = vunpack.c.l.b16 %v333
      %v2018 = vunpack.c.h.b16 %v333
      %v2019 = vunpack.c.l.b16 %v334
      %v2020 = vunpack.c.h.b16 %v334
      %v2021 = vunpack.c.l.b16 %v335
      %v2022 = vunpack.c.h.b16 %v335
      %v2023 = vunpack.c.l.b16 %v336
      %v2024 = vunpack.c.h.b16 %v336
      %v2025 = vunpack.c.l.b16 %v337
      %v2026 = vunpack.c.h.b16 %v337
      %v2027 = vunpack.c.l.b16 %v338
      %v2028 = vunpack.c.h.b16 %v338
      %v2029 = vunpack.c.l.b16 %v339
      %v2030 = vunpack.c.h.b16 %v339
      %v2031 = vunpack.c.l.b16 %v340
      %v2032 = vunpack.c.h.b16 %v340
      %v2033 = vunpack.c.l.b16 %v341
      %v2034 = vunpack.c.h.b16 %v341
      %v2035 = vunpack.c.l.b16 %v342
      %v2036 = vunpack.c.h.b16 %v342
      %v2037 = vunpack.c.l.b16 %v343
      %v2038 = vunpack.c.h.b16 %v343
      %v2039 = vunpack.c.l.b16 %v344
      %v2040 = vunpack.c.h.b16 %v344
      %v2041 = vunpack.c.l.b16 %v345
      %v2042 = vunpack.c.h.b16 %v345
      %v2043 = vunpack.c.l.b16 %v346
      %v2044 = vunpack.c.h.b16 %v346
      %v2045 = vunpack.c.l.b16 %v347
      %v2046 = vunpack.c.h.b16 %v347
      %v2047 = vunpack.c.l.b16 %v348
      %v2048 = vunpack.c.h.b16 %v348
      %v2049 = vunpack.c.l.b16 %v349
      %v2050 = vunpack.c.h.b16 %v349
      %v2051 = vunpack.c.l.b16 %v350
      %v2052 = vunpack.c.h.b16 %v350
      %v2053 = vunpack.c.l.b16 %v351
      %v2054 = vunpack.c.h.b16 %v351
      %v2055 = vunpack.c.l.b16 %v352
      %v2056 = vunpack.c.h.b16 %v352
      %v2057 = vunpack.c.l.b16 %v353
      %v2058 = vunpack.c.h.b16 %v353
      %v2059 = vunpack.c.l.b16 %v354
      %v2060 = vunpack.c.h.b16 %v354
      %v2061 = vunpack.c.l.b16 %v355
      %v2062 = vunpack.c.h.b16 %v355
      %v2063 = vunpack.c.l.b16 %v356
      %v2064 = vunpack.c.h.b16 %v356
      %v2065 = vunpack.c.l.b16 %v357
      %v2066 = vunpack.c.h.b16 %v357
      %v2067 = vunpack.c.l.b16 %v358
      %v2068 = vunpack.c.h.b16 %v358
      %v2069 = vunpack.c.l.b16 %v359
      %v2070 = vunpack.c.h.b16 %v359
      %v2071 = vunpack.c.l.b16 %v360
      %v2072 = vunpack.c.h.b16 %v360
      %v2073 = vunpack.c.l.b16 %v361
      %v2074 = vunpack.c.h.b16 %v361
      %v2075 = vunpack.c.l.b16 %v362
      %v2076 = vunpack.c.h.b16 %v362
      %v2077 = vunpack.c.l.b16 %v363
      %v2078 = vunpack.c.h.b16 %v363
      %v2079 = vunpack.c.l.b16 %v364
      %v2080 = vunpack.c.h.b16 %v364
      %v2081 = vunpack.c.l.b16 %v365
      %v2082 = vunpack.c.h.b16 %v365
      %v2083 = vunpack.c.l.b16 %v366
      %v2084 = vunpack.c.h.b16 %v366
      %v2085 = vunpack.c.l.b16 %v367
      %v2086 = vunpack.c.h.b16 %v367
      %v2087 = vunpack.c.l.b16 %v368
      %v2088 = vunpack.c.h.b16 %v368
      %v2089 = vunpack.c.l.b16 %v369
      %v2090 = vunpack.c.h.b16 %v369
      %v2091 = vunpack.c.l.b16 %v370
      %v2092 = vunpack.c.h.b16 %v370
      %v2093 = vpack.c.b16 %v1995, %v1995
      %v2094 = vpack.c.b16 %v1996, %v1996
      %v2095 = vpack.c.b16 %v1997, %v1997
      %v2096 = vpack.c.b16 %v1998, %v1998
      %v2097 = vpack.c.b16 %v1999, %v1999
      %v2098 = vpack.c.b16 %v2000, %v2000
      %v2099 = vpack.c.b16 %v2001, %v2001
      %v2100 = vpack.c.b16 %v2002, %v2002
      %v2101 = vpack.c.b16 %v2003, %v2003
      %v2102 = vpack.c.b16 %v2004, %v2004
      %v2103 = vpack.c.b16 %v2005, %v2005
      %v2104 = vpack.c.b16 %v2006, %v2006
      %v2105 = vpack.c.b16 %v2007, %v2007
      %v2106 = vpack.c.b16 %v2008, %v2008
      %v2107 = vpack.c.b16 %v2009, %v2009
      %v2108 = vpack.c.b16 %v2010, %v2010
      %v2109 = vpack.c.b16 %v2011, %v2011
      %v2110 = vpack.c.b16 %v2012, %v2012
      %v2111 = vpack.c.b16 %v2013, %v2013
      %v2112 = vpack.c.b16 %v2014, %v2014
      %v2113 = vpack.c.b16 %v2015, %v2015
      %v2114 = vpack.c.b16 %v2016, %v2016
      %v2115 = vpack.c.b16 %v2017, %v2017
      %v2116 = vpack.c.b16 %v2018, %v2018
      %v2117 = vpack.c.b16 %v2019, %v2019
      %v2118 = vpack.c.b16 %v2020, %v2020
      %v2119 = vpack.c.b16 %v2021, %v2021
      %v2120 = vpack.c.b16 %v2022, %v2022
      %v2121 = vpack.c.b16 %v2023, %v2023
      %v2122 = vpack.c.b16 %v2024, %v2024
      %v2123 = vpack.c.b16 %v2025, %v2025
      %v2124 = vpack.c.b16 %v2026, %v2026
      %v2125 = vpack.c.b16 %v2027, %v2027
      %v2126 = vpack.c.b16 %v2028, %v2028
      %v2127 = vpack.c.b16 %v2029, %v2029
      %v2128 = vpack.c.b16 %v2030, %v2030
      %v2129 = vpack.c.b16 %v2031, %v2031
      %v2130 = vpack.c.b16 %v2032, %v2032
      %v2131 = vpack.c.b16 %v2033, %v2033
      %v2132 = vpack.c.b16 %v2034, %v2034
      %v2133 = vpack.c.b16 %v2035, %v2035
      %v2134 = vpack.c.b16 %v2036, %v2036
      %v2135 = vpack.c.b16 %v2037, %v2037
      %v2136 = vpack.c.b16 %v2038, %v2038
      %v2137 = vpack.c.b16 %v2039, %v2039
      %v2138 = vpack.c.b16 %v2040, %v2040
      %v2139 = vpack.c.b16 %v2041, %v2041
      %v2140 = vpack.c.b16 %v2042, %v2042
      %v2141 = vpack.c.b16 %v2043, %v2043
      %v2142 = vpack.c.b16 %v2044, %v2044
      %v2143 = vpack.c.b16 %v2045, %v2045
      %v2144 = vpack.c.b16 %v2046, %v2046
      %v2145 = vpack.c.b16 %v2047, %v2047
      %v2146 = vpack.c.b16 %v2048, %v2048
      %v2147 = vpack.c.b16 %v2049, %v2049
      %v2148 = vpack.c.b16 %v2050, %v2050
      %v2149 = vpack.c.b16 %v2051, %v2051
      %v2150 = vpack.c.b16 %v2052, %v2052
      %v2151 = vpack.c.b16 %v2053, %v2053
      %v2152 = vpack.c.b16 %v2054, %v2054
      %v2153 = vpack.c.b16 %v2055, %v2055
      %v2154 = vpack.c.b16 %v2056, %v2056
      %v2155 = vpack.c.b16 %v2057, %v2057
      %v2156 = vpack.c.b16 %v2058, %v2058
      %v2157 = vpack.c.b16 %v2059, %v2059
      %v2158 = vpack.c.b16 %v2060, %v2060
      %v2159 = vpack.c.b16 %v2061, %v2061
      %v2160 = vpack.c.b16 %v2062, %v2062
      %v2161 = vpack.c.b16 %v2063, %v2063
      %v2162 = vpack.c.b16 %v2064, %v2064
      %v2163 = vpack.c.b16 %v2065, %v2065
      %v2164 = vpack.c.b16 %v2066, %v2066
      %v2165 = vpack.c.b16 %v2067, %v2067
      %v2166 = vpack.c.b16 %v2068, %v2068
      %v2167 = vpack.c.b16 %v2069, %v2069
      %v2168 = vpack.c.b16 %v2070, %v2070
      %v2169 = vpack.c.b16 %v2071, %v2071
      %v2170 = vpack.c.b16 %v2072, %v2072
      %v2171 = vpack.c.b16 %v2073, %v2073
      %v2172 = vpack.c.b16 %v2074, %v2074
      %v2173 = vpack.c.b16 %v2075, %v2075
      %v2174 = vpack.c.b16 %v2076, %v2076
      %v2175 = vpack.c.b16 %v2077, %v2077
      %v2176 = vpack.c.b16 %v2078, %v2078
      %v2177 = vpack.c.b16 %v2079, %v2079
      %v2178 = vpack.c.b16 %v2080, %v2080
      %v2179 = vpack.c.b16 %v2081, %v2081
      %v2180 = vpack.c.b16 %v2082, %v2082
      %v2181 = vpack.c.b16 %v2083, %v2083
      %v2182 = vpack.c.b16 %v2084, %v2084
      %v2183 = vpack.c.b16 %v2085, %v2085
      %v2184 = vpack.c.b16 %v2086, %v2086
      %v2185 = vpack.c.b16 %v2087, %v2087
      %v2186 = vpack.c.b16 %v2088, %v2088
      %v2187 = vpack.c.b16 %v2089, %v2089
      %v2188 = vpack.c.b16 %v2090, %v2090
      %v2189 = vpack.c.b16 %v2091, %v2091
      %v2190 = vpack.c.b16 %v2092, %v2092
      %v3857 = vunpack.c.l.b16 %v371
      %v3858 = vunpack.c.l.b16 %v372
      %v3859 = vunpack.c.l.b16 %v373
      %v3860 = vunpack.c.l.b16 %v374
      %v3861 = vunpack.c.l.b16 %v375
      %v3862 = vunpack.c.l.b16 %v376
      %v3863 = vunpack.c.l.b16 %v377
      %v3864 = vunpack.c.l.b16 %v378
      %v3865 = vunpack.c.l.b16 %v379
      %v3866 = vunpack.c.l.b16 %v380
      %v3867 = vunpack.c.l.b16 %v381
      %v3868 = vunpack.c.l.b16 %v382
      %v3869 = vunpack.c.l.b16 %v383
      %v3870 = vunpack.c.l.b16 %v384
      %v3871 = vunpack.c.l.b16 %v385
      %v3872 = vunpack.c.l.b16 %v386
      %v3873 = vunpack.c.l.b16 %v387
      %v3874 = vunpack.c.l.b16 %v388
      %v3875 = vunpack.c.l.b16 %v389
      %v3876 = vunpack.c.l.b16 %v390
      %v3877 = vunpack.c.l.b16 %v391
      %v3878 = vunpack.c.l.b16 %v392
      %v3879 = vunpack.c.l.b16 %v393
      %v3880 = vunpack.c.l.b16 %v394
      %v3881 = vunpack.c.l.b16 %v395
      %v3882 = vunpack.c.l.b16 %v396
      %v3883 = vunpack.c.l.b16 %v397
      %v3884 = vunpack.c.l.b16 %v398
      %v3885 = vunpack.c.l.b16 %v399
      %v3886 = vunpack.c.l.b16 %v400
      %v3887 = vunpack.c.l.b16 %v401
      %v3888 = vunpack.c.l.b16 %v402
      %v3889 = vunpack.c.l.b16 %v403
      %v3890 = vunpack.c.l.b16 %v404
      %v3891 = vunpack.c.l.b16 %v405
      %v3892 = vunpack.c.l.b16 %v406
      %v3893 = vunpack.c.l.b16 %v407
      %v3894 = vunpack.c.l.b16 %v408
      %v3895 = vunpack.c.l.b16 %v409
      %v3896 = vunpack.c.l.b16 %v410
      %v3897 = vunpack.c.l.b16 %v411
      %v3898 = vunpack.c.l.b16 %v412
      %v3899 = vunpack.c.l.b16 %v413
      %v3900 = vunpack.c.l.b16 %v414
      %v3901 = vunpack.c.l.b16 %v415
      %v3902 = vunpack.c.l.b16 %v416
      %v3903 = vunpack.c.l.b16 %v417
      %v3904 = vunpack.c.l.b16 %v418
      %v3905 = vunpack.c.l.b16 %v419
      %v3906 = vunpack.c.l.b16 %v420
      %v3907 = vunpack.c.l.b16 %v421
      %v3908 = vunpack.c.l.b16 %v422
      %v3909 = vunpack.c.l.b16 %v423
      %v3910 = vunpack.c.l.b16 %v424
      %v3911 = vunpack.c.l.b16 %v425
      %v3912 = vunpack.c.l.b16 %v426
      %v3913 = vunpack.c.l.b16 %v427
      %v3914 = vunpack.c.l.b16 %v428
      %v3915 = vunpack.c.l.b16 %v429
      %v3916 = vunpack.c.l.b16 %v430
      %v3917 = vunpack.c.l.b16 %v431
      %v3918 = vunpack.c.l.b16 %v432
      %v3919 = vunpack.c.l.b16 %v433
      %v3920 = vunpack.c.l.b16 %v434
      %v3921 = vunpack.c.l.b16 %v435
      %v3922 = vunpack.c.l.b16 %v436
      %v3923 = vunpack.c.l.b16 %v437
      %v3924 = vunpack.c.l.b16 %v438
      %v3925 = vunpack.c.l.b16 %v439
      %v3926 = vunpack.c.l.b16 %v440
      %v3927 = vunpack.c.l.b16 %v441
      %v3928 = vunpack.c.l.b16 %v442
      %v3929 = vunpack.c.l.b16 %v443
      %v3930 = vunpack.c.l.b16 %v444
      %v3931 = vunpack.c.l.b16 %v445
      %v3932 = vunpack.c.l.b16 %v446
      %v3933 = vunpack.c.l.b16 %v447
      %v3934 = vunpack.c.l.b16 %v448
      %v3935 = vunpack.c.l.b16 %v449
      %v3936 = vunpack.c.l.b16 %v450
      %v3937 = vunpack.c.l.b16 %v451
      %v3938 = vunpack.c.l.b16 %v452
      %v3939 = vunpack.c.l.b16 %v453
      %v3940 = vunpack.c.l.b16 %v454
      %v3941 = vunpack.c.l.b16 %v455
      %v3942 = vunpack.c.l.b16 %v456
      %v3943 = vunpack.c.l.b16 %v457
      %v3944 = vunpack.c.l.b16 %v458
      %v3945 = vunpack.c.l.b16 %v459
      %v3946 = vunpack.c.l.b16 %v460
      %v3947 = vunpack.c.l.b16 %v461
      %v3948 = vunpack.c.l.b16 %v462
      %v3949 = vunpack.c.l.b16 %v463
      %v3950 = vunpack.c.l.b16 %v464
      %v3951 = vunpack.c.l.b16 %v465
      %v3952 = vunpack.c.l.b16 %v466
      %v3953 = vunpack.c.l.b16 %v467
      %v3954 = vunpack.c.l.b16 %v468
      %v3955 = vunpack.c.l.b16 %v469
      %v3956 = vunpack.c.l.b16 %v470
      %v3957 = vunpack.c.l.b16 %v471
      %v3958 = vunpack.c.l.b16 %v472
      %v3959 = vunpack.c.l.b16 %v473
      %v3960 = vunpack.c.l.b16 %v474
      %v3961 = vunpack.c.l.b16 %v475
      %v3962 = vunpack.c.l.b16 %v476
      %v3963 = vunpack.c.l.b16 %v477
      %v3964 = vunpack.c.l.b16 %v478
      %v3965 = vunpack.c.l.b16 %v479
      %v3966 = vunpack.c.l.b16 %v480
      %v3967 = vunpack.c.l.b16 %v481
      %v3968 = vunpack.c.l.b16 %v482
      %v3969 = vunpack.c.l.b16 %v483
      %v3970 = vunpack.c.l.b16 %v484
      %v3971 = vunpack.c.l.b16 %v485
      %v3972 = vunpack.c.l.b16 %v486
      %v3973 = vunpack.c.l.b16 %v487
      %v3974 = vunpack.c.l.b16 %v488
      %v3975 = vunpack.c.l.b16 %v489
      %v3976 = vunpack.c.l.b16 %v490
      %v3977 = vunpack.c.l.b16 %v491
      %v3978 = vunpack.c.l.b16 %v492
      %v3979 = vunpack.c.l.b16 %v493
      %v3980 = vunpack.c.l.b16 %v494
      %v3981 = vunpack.c.l.b16 %v495
      %v3982 = vunpack.c.l.b16 %v496
      %v3983 = vunpack.c.l.b16 %v497
      %v3984 = vunpack.c.l.b16 %v498
      %v3985 = vunpack.c.l.b16 %v499
      %v3986 = vunpack.c.l.b16 %v500
      %v3987 = vunpack.c.l.b16 %v501
      %v3988 = vunpack.c.l.b16 %v502
      %v3989 = vunpack.c.l.b16 %v503
      %v3990 = vunpack.c.l.b16 %v504
      %v3991 = vunpack.c.l.b16 %v505
      %v3992 = vunpack.c.l.b16 %v506
      %v3993 = vunpack.c.l.b16 %v507
      %v3994 = vunpack.c.l.b16 %v508
      %v3995 = vunpack.c.l.b16 %v509
      %v3996 = vunpack.c.l.b16 %v510
      %v3997 = vunpack.c.l.b16 %v511
      %v3998 = vunpack.c.l.b16 %v512
      %v3999 = vunpack.c.l.b16 %v513
      %v4000 = vunpack.c.l.b16 %v514
      %v4001 = vunpack.c.l.b16 %v515
      %v4002 = vunpack.c.l.b16 %v516
      %v4003 = vunpack.c.l.b16 %v517
      %v4004 = vunpack.c.l.b16 %v518
      %v4005 = vunpack.c.l.b16 %v519
      %v4006 = vunpack.c.l.b16 %v520
      %v4007 = vunpack.c.l.b16 %v521
      %v4008 = vunpack.c.l.b16 %v522
      %v4009 = vunpack.c.l.b16 %v523
      %v4010 = vunpack.c.l.b16 %v524
      %v4011 = vunpack.c.l.b16 %v525
      %v4012 = vunpack.c.l.b16 %v526
      %v4013 = vunpack.c.l.b16 %v527
      %v4014 = vunpack.c.l.b16 %v528
      %v4015 = vunpack.c.l.b16 %v529
      %v4016 = vunpack.c.l.b16 %v530
      %v4017 = vunpack.c.l.b16 %v531
      %v4018 = vunpack.c.l.b16 %v532
      %v4019 = vunpack.c.l.b16 %v533
      %v4020 = vunpack.c.l.b16 %v534
      %v4021 = vunpack.c.l.b16 %v535
      %v4022 = vunpack.c.l.b16 %v536
      %v4023 = vunpack.c.l.b16 %v537
      %v4024 = vunpack.c.l.b16 %v538
      %v4025 = vunpack.c.l.b16 %v539
      %v4026 = vunpack.c.l.b16 %v540
      %v4027 = vunpack.c.l.b16 %v541
      %v4028 = vunpack.c.l.b16 %v542
      %v4029 = vunpack.c.l.b16 %v543
      %v4030 = vunpack.c.l.b16 %v544
      %v4031 = vunpack.c.l.b16 %v545
      %v4032 = vunpack.c.l.b16 %v546
      %v4033 = vunpack.c.l.b16 %v547
      %v4034 = vunpack.c.l.b16 %v548
      %v4035 = vunpack.c.l.b16 %v549
      %v4036 = vunpack.c.l.b16 %v550
      %v4037 = vunpack.c.l.b16 %v551
      %v4038 = vunpack.c.l.b16 %v552
      %v4039 = vunpack.c.l.b16 %v553
      %v4040 = vunpack.c.l.b16 %v554
      %v4041 = vunpack.c.l.b16 %v555
      %v4042 = vunpack.c.l.b16 %v556
      %v4043 = vunpack.c.l.b16 %v557
      %v4044 = vunpack.c.l.b16 %v558
      %v4045 = vunpack.c.l.b16 %v559
      %v4046 = vunpack.c.l.b16 %v560
      %v4047 = vunpack.c.l.b16 %v561
      %v4048 = vunpack.c.l.b16 %v562
      %v4049 = vunpack.c.l.b16 %v563
      %v4050 = vunpack.c.l.b16 %v564
      %v4051 = vunpack.c.l.b16 %v565
      %v4052 = vunpack.c.l.b16 %v566
      %v4053 = vunpack.c.l.b16 %v567
      %v4054 = vunpack.c.l.b16 %v568
      %v4055 = vunpack.c.l.b16 %v569
      %v4056 = vunpack.c.l.b16 %v570
      %v4057 = vunpack.c.l.b16 %v571
      %v4058 = vunpack.c.l.b16 %v572
      %v4059 = vunpack.c.l.b16 %v573
      %v4060 = vunpack.c.l.b16 %v574
      %v4061 = vunpack.c.l.b16 %v575
      %v4062 = vunpack.c.l.b16 %v576
      %v4063 = vunpack.c.l.b16 %v577
      %v4064 = vunpack.c.l.b16 %v578
      %v4065 = vunpack.c.l.b16 %v579
      %v4066 = vunpack.c.l.b16 %v580
      %v4067 = vunpack.c.l.b16 %v581
      %v4068 = vunpack.c.l.b16 %v582
      %v4069 = vunpack.c.l.b16 %v583
      %v4070 = vunpack.c.l.b16 %v584
      %v4071 = vunpack.c.l.b16 %v585
      %v4072 = vunpack.c.l.b16 %v586
      %v4073 = vunpack.c.l.b16 %v587
      %v4074 = vunpack.c.l.b16 %v588
      %v4075 = vunpack.c.l.b16 %v589
      %v4076 = vunpack.c.l.b16 %v590
      %v4077 = vunpack.c.l.b16 %v591
      %v4078 = vunpack.c.l.b16 %v592
      %v4079 = vunpack.c.l.b16 %v593
      %v4080 = vunpack.c.l.b16 %v594
      %v4081 = vunpack.c.l.b16 %v595
      %v4082 = vunpack.c.l.b16 %v596
      %v4083 = vunpack.c.l.b16 %v597
      %v4084 = vunpack.c.l.b16 %v598
      %v4085 = vunpack.c.l.b16 %v599
      %v4086 = vunpack.c.l.b16 %v600
      %v4087 = vunpack.c.l.b16 %v601
      %v4088 = vunpack.c.l.b16 %v602
      %v4089 = vunpack.c.l.b16 %v603
      %v4090 = vunpack.c.l.b16 %v604
      %v4091 = vunpack.c.l.b16 %v605
      %v4092 = vunpack.c.l.b16 %v606
      %v4093 = vunpack.c.l.b16 %v607
      %v4094 = vunpack.c.l.b16 %v608
      %v4095 = vunpack.c.l.b16 %v609
      %v4096 = vunpack.c.l.b16 %v610
      %v4097 = vunpack.c.l.b16 %v611
      %v4098 = vunpack.c.l.b16 %v612
      %v4099 = vunpack.c.l.b16 %v613
      %v4100 = vunpack.c.l.b16 %v614
      %v4101 = vunpack.c.l.b16 %v615
      %v4102 = vunpack.c.l.b16 %v616
      %v4103 = vunpack.c.l.b16 %v617
      %v4104 = vunpack.c.l.b16 %v618
      %v4105 = vunpack.c.l.b16 %v619
      %v4106 = vunpack.c.l.b16 %v620
      %v4107 = vunpack.c.l.b16 %v621
      %v4108 = vunpack.c.l.b16 %v622
      %v4109 = vunpack.c.l.b16 %v623
      %v4110 = vunpack.c.l.b16 %v624
      %v4111 = vunpack.c.l.b16 %v625
      %v4112 = vunpack.c.l.b16 %v626
      %v4113 = vunpack.c.l.b16 %v627
      %v4114 = vunpack.c.l.b16 %v628
      %v4115 = vunpack.c.l.b16 %v629
      %v4116 = vunpack.c.l.b16 %v630
      %v4117 = vunpack.c.l.b16 %v631
      %v4118 = vunpack.c.l.b16 %v632
      %v4119 = vunpack.c.l.b16 %v633
      %v4120 = vunpack.c.l.b16 %v634
      %v4121 = vunpack.c.l.b16 %v635
      %v4122 = vunpack.c.l.b16 %v636
      %v4123 = vunpack.c.l.b16 %v637
      %v4124 = vunpack.c.l.b16 %v638
      %v4125 = vunpack.c.l.b16 %v639
      %v4126 = vunpack.c.l.b16 %v640
      %v4127 = vunpack.c.l.b16 %v641
      %v4128 = vunpack.c.l.b16 %v642
      %v4129 = vunpack.c.l.b16 %v643
      %v4130 = vunpack.c.l.b16 %v644
      %v4131 = vunpack.c.l.b16 %v645
      %v4132 = vunpack.c.l.b16 %v646
      %v4133 = vunpack.c.l.b16 %v647
      %v4134 = vunpack.c.l.b16 %v648
      %v4135 = vunpack.c.l.b16 %v649
      %v4136 = vunpack.c.l.b16 %v650
      %v4137 = vunpack.c.l.b16 %v651
      %v4138 = vunpack.c.l.b16 %v652
      %v4139 = vunpack.c.l.b16 %v653
      %v4140 = vunpack.c.l.b16 %v654
      %v4141 = vunpack.c.l.b16 %v655
      %v4142 = vunpack.c.l.b16 %v656
      %v4143 = vunpack.c.l.b16 %v657
      %v4144 = vunpack.c.l.b16 %v658
      %v4145 = vunpack.c.l.b16 %v659
      %v4146 = vunpack.c.l.b16 %v660
      %v4147 = vunpack.c.l.b16 %v661
      %v4148 = vunpack.c.l.b16 %v662
      %v4149 = vunpack.c.l.b16 %v663
      %v4150 = vunpack.c.l.b16 %v664
      %v4151 = vunpack.c.l.b16 %v665
      %v4152 = vunpack.c.l.b16 %v666
      %v4153 = vunpack.c.l.b16 %v667
      %v4154 = vunpack.c.l.b16 %v668
      %v4155 = vunpack.c.l.b16 %v669
      %v4156 = vunpack.c.l.b16 %v670
      %v4157 = vunpack.c.l.b16 %v671
      %v4158 = vunpack.c.l.b16 %v672
      %v4159 = vunpack.c.l.b16 %v673
      %v4160 = vunpack.c.l.b16 %v674
      %v4161 = vunpack.c.l.b16 %v675
      %v4162 = vunpack.c.l.b16 %v676
      %v4163 = vunpack.c.l.b16 %v677
      %v4164 = vunpack.c.l.b16 %v678
      %v4165 = vunpack.c.l.b16 %v679
      %v4166 = vunpack.c.l.b16 %v680
      %v4167 = vunpack.c.l.b16 %v681
      %v4168 = vunpack.c.l.b16 %v682
      %v4169 = vunpack.c.l.b16 %v683
      %v4170 = vunpack.c.l.b16 %v684
      %v4171 = vunpack.c.l.b16 %v685
      %v4172 = vunpack.c.l.b16 %v686
      %v4173 = vunpack.c.l.b16 %v687
      %v4174 = vunpack.c.l.b16 %v688
      %v4175 = vunpack.c.l.b16 %v689
      %v4176 = vunpack.c.l.b16 %v690
      %v4177 = vunpack.c.l.b16 %v691
      %v4178 = vunpack.c.l.b16 %v692
      %v4179 = vunpack.c.l.b16 %v693
      %v4180 = vunpack.c.l.b16 %v694
      %v4181 = vunpack.c.l.b16 %v695
      %v4182 = vunpack.c.l.b16 %v696
      %v4183 = vunpack.c.l.b16 %v697
      %v4184 = vunpack.c.l.b16 %v698
      %v4185 = vunpack.c.l.b16 %v699
      %v4186 = vunpack.c.l.b16 %v700
      %v4187 = vunpack.c.l.b16 %v701
      %v4188 = vunpack.c.l.b16 %v702
      %v4189 = vunpack.c.l.b16 %v703
      %v4190 = vunpack.c.l.b16 %v704
      %v4191 = vunpack.c.l.b16 %v705
      %v4192 = vunpack.c.l.b16 %v706
      %v4193 = vunpack.c.l.b16 %v707
      %v4194 = vunpack.c.l.b16 %v708
      %v4195 = vunpack.c.l.b16 %v709
      %v4196 = vunpack.c.l.b16 %v710
      %v4197 = vunpack.c.l.b16 %v711
      %v4198 = vunpack.c.l.b16 %v712
      %v4199 = vunpack.c.l.b16 %v713
      %v4200 = vunpack.c.l.b16 %v714
      %v4201 = vunpack.c.l.b16 %v715
      %v4202 = vunpack.c.l.b16 %v716
      %v4203 = vunpack.c.l.b16 %v717
      %v4204 = vunpack.c.l.b16 %v718
      %v4205 = vunpack.c.l.b16 %v719
      %v4206 = vunpack.c.l.b16 %v720
      %v4207 = vunpack.c.l.b16 %v721
      %v4208 = vunpack.c.l.b16 %v722
      %v4209 = vunpack.c.l.b16 %v723
      %v4210 = vunpack.c.l.b16 %v724
      %v4211 = vunpack.c.l.b16 %v725
      %v4212 = vunpack.c.l.b16 %v726
      %v4213 = vunpack.c.l.b16 %v727
      %v4214 = vunpack.c.l.b16 %v728
      %v4215 = vunpack.c.l.b16 %v729
      %v4216 = vunpack.c.l.b16 %v730
      %v4217 = vunpack.c.l.b16 %v731
      %v4218 = vunpack.c.l.b16 %v732
      %v4219 = vunpack.c.l.b16 %v733
      %v4220 = vunpack.c.l.b16 %v734
      %v4221 = vunpack.c.l.b16 %v735
      %v4222 = vunpack.c.l.b16 %v736
      %v4223 = vunpack.c.l.b16 %v737
      %v4224 = vunpack.c.l.b16 %v738
      %v4225 = vunpack.c.l.b16 %v739
      %v4226 = vunpack.c.l.b16 %v740
      %v4227 = vunpack.c.l.b16 %v741
      %v4228 = vunpack.c.l.b16 %v742
      %v4229 = vunpack.c.l.b16 %v743
      %v4230 = vunpack.c.l.b16 %v744
      %v4231 = vunpack.c.l.b16 %v745
      %v4232 = vunpack.c.l.b16 %v746
      %v4233 = vunpack.c.l.b16 %v747
      %v4234 = vunpack.c.l.b16 %v748
      %v4235 = vunpack.c.l.b16 %v749
      %v4236 = vunpack.c.l.b16 %v750
      %v4237 = vunpack.c.l.b16 %v751
      %v4238 = vunpack.c.l.b16 %v752
      %v4239 = vunpack.c.l.b16 %v753
      %v4240 = vunpack.c.l.b16 %v754
      %v4241 = vunpack.c.l.b16 %v755
      %v4242 = vunpack.c.l.b16 %v756
      %v4243 = vunpack.c.l.b16 %v757
      %v4244 = vunpack.c.l.b16 %v758
      %v4245 = vunpack.c.l.b16 %v759
      %v4246 = vunpack.c.l.b16 %v760
      %v4247 = vunpack.c.l.b16 %v761
      %v4248 = vunpack.c.l.b16 %v762
      %v4249 = vunpack.c.l.b16 %v763
      %v4250 = vunpack.c.l.b16 %v764
      %v4251 = vunpack.c.l.b16 %v765
      %v4252 = vunpack.c.l.b16 %v766
      %v4253 = vunpack.c.l.b16 %v767
      %v4254 = vunpack.c.l.b16 %v768
      %v4255 = vunpack.c.l.b16 %v769
      %v4256 = vunpack.c.l.b16 %v770
      %v4257 = vunpack.c.l.b16 %v771
      %v4258 = vunpack.c.l.b16 %v772
      %v4259 = vunpack.c.l.b16 %v773
      %v4260 = vunpack.c.l.b16 %v774
      %v4261 = vunpack.c.l.b16 %v775
      %v4262 = vunpack.c.l.b16 %v776
      %v4263 = vunpack.c.l.b16 %v777
      %v4264 = vunpack.c.l.b16 %v778
      %v4265 = vunpack.c.l.b16 %v779
      %v4266 = vunpack.c.l.b16 %v780
      %v4267 = vunpack.c.l.b16 %v781
      %v4268 = vunpack.c.l.b16 %v782
      %v4269 = vunpack.c.l.b16 %v783
      %v4270 = vunpack.c.l.b16 %v784
      %v4271 = vunpack.c.l.b16 %v785
      %v4272 = vunpack.c.l.b16 %v786
      %v4273 = vunpack.c.l.b16 %v787
      %v4274 = vunpack.c.l.b16 %v788
      %v4275 = vunpack.c.l.b16 %v789
      %v4276 = vunpack.c.l.b16 %v790
      %v4277 = vunpack.c.l.b16 %v791
      %v4278 = vunpack.c.l.b16 %v792
      %v4279 = vunpack.c.l.b16 %v793
      %v4280 = vunpack.c.l.b16 %v794
      %v4281 = vunpack.c.l.b16 %v795
      %v4282 = vunpack.c.l.b16 %v796
      %v4283 = vunpack.c.l.b16 %v797
      %v4284 = vunpack.c.l.b16 %v798
      %v4285 = vunpack.c.l.b16 %v799
      %v4286 = vunpack.c.l.b16 %v800
      %v4287 = vunpack.c.l.b16 %v801
      %v4288 = vunpack.c.l.b16 %v802
      %v4289 = vunpack.c.l.b16 %v803
      %v4290 = vunpack.c.l.b16 %v804
      %v4291 = vunpack.c.l.b16 %v805
      %v4292 = vunpack.c.l.b16 %v806
      %v4293 = vunpack.c.l.b16 %v807
      %v4294 = vunpack.c.l.b16 %v808
      %v4295 = vunpack.c.l.b16 %v809
      %v4296 = vunpack.c.l.b16 %v810
      %v4297 = vunpack.c.l.b16 %v811
      %v4298 = vunpack.c.l.b16 %v812
      %v4299 = vunpack.c.l.b16 %v813
      %v4300 = vunpack.c.l.b16 %v814
      %v4301 = vunpack.c.l.b16 %v815
      %v4302 = vunpack.c.l.b16 %v816
      %v4303 = vunpack.c.l.b16 %v817
      %v4304 = vunpack.c.l.b16 %v818
      %v4305 = vunpack.c.l.b16 %v819
      %v4306 = vunpack.c.l.b16 %v820
      %v4307 = vunpack.c.l.b16 %v821
      %v4308 = vunpack.c.l.b16 %v822
      %v4309 = vunpack.c.l.b16 %v823
      %v4310 = vunpack.c.l.b16 %v824
      %v4311 = vunpack.c.l.b16 %v825
      %v4312 = vunpack.c.l.b16 %v826
      %v4313 = vunpack.c.l.b16 %v827
      %v4314 = vunpack.c.l.b16 %v828
      %v4315 = vunpack.c.l.b16 %v829
      %v4316 = vunpack.c.l.b16 %v830
      %v4317 = vunpack.c.l.b16 %v831
      %v4318 = vunpack.c.l.b16 %v832
      %v4319 = vunpack.c.l.b16 %v833
      %v4320 = vunpack.c.l.b16 %v834
      %v4321 = vunpack.c.l.b16 %v835
      %v4322 = vunpack.c.l.b16 %v836
      %v4323 = vunpack.c.l.b16 %v837
      %v4324 = vunpack.c.l.b16 %v838
      %v4325 = vunpack.c.l.b16 %v839
      %v4326 = vunpack.c.l.b16 %v840
      %v4327 = vunpack.c.l.b16 %v841
      %v4328 = vunpack.c.l.b16 %v842
      %v4329 = vunpack.c.l.b16 %v843
      %v4330 = vunpack.c.l.b16 %v844
      %v4331 = vunpack.c.l.b16 %v845
      %v4332 = vunpack.c.l.b16 %v846
      %v4333 = vunpack.c.l.b16 %v847
      %v4334 = vunpack.c.l.b16 %v848
      %v4335 = vunpack.c.l.b16 %v849
      %v4336 = vunpack.c.l.b16 %v850
      %v4337 = vunpack.c.l.b16 %v851
      %v4338 = vunpack.c.l.b16 %v852
      %v4339 = vunpack.c.l.b16 %v853
      %v4340 = vunpack.c.l.b16 %v854
      %v4341 = vunpack.c.l.b16 %v855
      %v4342 = vunpack.c.l.b16 %v856
      %v4343 = vunpack.c.l.b16 %v857
      %v4344 = vunpack.c.l.b16 %v858
      %v4345 = vunpack.c.l.b16 %v859
      %v4346 = vunpack.c.l.b16 %v860
      %v4347 = vunpack.c.l.b16 %v861
      %v4348 = vunpack.c.l.b16 %v862
      %v4349 = vunpack.c.l.b16 %v863
      %v4350 = vunpack.c.l.b16 %v864
      %v4351 = vunpack.c.l.b16 %v865
      %v4352 = vunpack.c.l.b16 %v866
      %v4353 = vunpack.c.l.b16 %v867
      %v4354 = vunpack.c.l.b16 %v868
      %v4355 = vunpack.c.l.b16 %v869
      %v4356 = vunpack.c.l.b16 %v870
      %v4357 = vunpack.c.l.b16 %v871
      %v4358 = vunpack.c.l.b16 %v872
      %v4359 = vunpack.c.l.b16 %v873
      %v4360 = vunpack.c.l.b16 %v874
      %v4361 = vunpack.c.l.b16 %v875
      %v4362 = vunpack.c.l.b16 %v876
      %v4363 = vunpack.c.l.b16 %v877
      %v4364 = vunpack.c.l.b16 %v878
      %v4365 = vunpack.c.l.b16 %v879
      %v4366 = vunpack.c.l.b16 %v880
      %v4367 = vunpack.c.l.b16 %v881
      %v4368 = vunpack.c.l.b16 %v882
      %v4369 = vunpack.c.l.b16 %v883
      %v4370 = vunpack.c.l.b16 %v884
      %v4371 = vunpack.c.l.b16 %v885
      %v4372 = vunpack.c.l.b16 %v886
      %v4373 = vunpack.c.l.b16 %v887
      %v4374 = vunpack.c.l.b16 %v888
      %v4375 = vunpack.c.l.b16 %v889
      %v4376 = vunpack.c.l.b16 %v890
      %v4377 = vunpack.c.l.b16 %v891
      %v4378 = vunpack.c.l.b16 %v892
      %v4379 = vunpack.c.l.b16 %v893
      %v4380 = vunpack.c.l.b16 %v894
      %v4381 = vunpack.c.l.b16 %v895
      %v4382 = vunpack.c.l.b16 %v896
      %v4383 = vunpack.c.l.b16 %v897
      %v4384 = vunpack.c.l.b16 %v898
      %v4385 = vunpack.c.l.b16 %v899
      %v4386 = vunpack.c.l.b16 %v900
      %v4387 = vunpack.c.l.b16 %v901
      %v4388 = vunpack.c.l.b16 %v902
      %v4389 = vunpack.c.l.b16 %v903
      %v4390 = vunpack.c.l.b16 %v904
      %v4391 = vunpack.c.l.b16 %v905
      %v4392 = vunpack.c.l.b16 %v906
      %v4393 = vunpack.c.l.b16 %v907
      %v4394 = vunpack.c.l.b16 %v908
      %v4395 = vunpack.c.l.b16 %v909
      %v4396 = vunpack.c.l.b16 %v910
      %v4397 = vunpack.c.l.b16 %v911
      %v4398 = vunpack.c.l.b16 %v912
      %v4399 = vunpack.c.l.b16 %v913
      %v4400 = vunpack.c.l.b16 %v914
      %v4401 = vunpack.c.l.b16 %v915
      %v4402 = vunpack.c.l.b16 %v916
      %v4403 = vunpack.c.l.b16 %v917
      %v4404 = vunpack.c.l.b16 %v918
      %v4405 = vunpack.c.l.b16 %v919
      %v4406 = vunpack.c.l.b16 %v920
      %v4407 = vunpack.c.l.b16 %v921
      %v4408 = vunpack.c.l.b16 %v922
      %v4409 = vunpack.c.l.b16 %v923
      %v4410 = vunpack.c.l.b16 %v924
      %v4411 = vunpack.c.l.b16 %v925
      %v4412 = vunpack.c.l.b16 %v926
      %v4413 = vunpack.c.l.b16 %v927
      %v4414 = vunpack.c.l.b16 %v928
      %v4415 = vunpack.c.l.b16 %v929
      %v4416 = vunpack.c.l.b16 %v930
      %v4417 = vunpack.c.l.b16 %v931
      %v4418 = vunpack.c.l.b16 %v932
      %v4419 = vunpack.c.l.b16 %v933
      %v4420 = vunpack.c.l.b16 %v934
      %v4421 = vunpack.c.l.b16 %v935
      %v4422 = vunpack.c.l.b16 %v936
      %v4423 = vunpack.c.l.b16 %v937
      %v4424 = vunpack.c.l.b16 %v938
      %v4425 = vunpack.c.l.b16 %v939
      %v4426 = vunpack.c.l.b16 %v940
      %v4427 = vunpack.c.l.b16 %v941
      %v4428 = vunpack.c.l.b16 %v942
      %v4429 = vunpack.c.l.b16 %v943
      %v4430 = vunpack.c.l.b16 %v944
      %v4431 = vunpack.c.l.b16 %v945
      %v4432 = vunpack.c.l.b16 %v946
      %v4433 = vunpack.c.l.b16 %v947
      %v4434 = vunpack.c.l.b16 %v948
      %v4435 = vunpack.c.l.b16 %v949
      %v4436 = vunpack.c.l.b16 %v950
      %v4437 = vunpack.c.l.b16 %v951
      %v4438 = vunpack.c.l.b16 %v952
      %v4439 = vunpack.c.l.b16 %v953
      %v4440 = vunpack.c.l.b16 %v954
      %v4441 = vunpack.c.l.b16 %v955
      %v4442 = vunpack.c.l.b16 %v956
      %v4443 = vunpack.c.l.b16 %v957
      %v4444 = vunpack.c.l.b16 %v958
      %v4445 = vunpack.c.l.b16 %v959
      %v4446 = vunpack.c.l.b16 %v960
      %v4447 = vunpack.c.l.b16 %v961
      %v4448 = vunpack.c.l.b16 %v962
      %v4449 = vunpack.c.l.b16 %v963
      %v4450 = vunpack.c.l.b16 %v964
      %v4451 = vunpack.c.l.b16 %v965
      %v4452 = vunpack.c.l.b16 %v966
      %v4453 = vunpack.c.l.b16 %v967
      %v4454 = vunpack.c.l.b16 %v968
      %v4455 = vunpack.c.l.b16 %v969
      %v4456 = vunpack.c.l.b16 %v970
      %v4457 = vunpack.c.l.b16 %v971
      %v4458 = vunpack.c.l.b16 %v972
      %v4459 = vunpack.c.l.b16 %v973
      %v4460 = vunpack.c.l.b16 %v974
      %v4461 = vunpack.c.l.b16 %v975
      %v4462 = vunpack.c.l.b16 %v976
      %v4463 = vunpack.c.l.b16 %v977
      %v4464 = vunpack.c.l.b16 %v978
      %v4465 = vunpack.c.l.b16 %v979
      %v4466 = vunpack.c.l.b16 %v980
      %v4467 = vunpack.c.l.b16 %v981
      %v4468 = vunpack.c.l.b16 %v982
      %v4469 = vunpack.c.l.b16 %v983
      %v4470 = vunpack.c.l.b16 %v984
      %v4471 = vunpack.c.l.b16 %v985
      %v4472 = vunpack.c.l.b16 %v986
      %v4473 = vunpack.c.l.b16 %v987
      %v4474 = vunpack.c.l.b16 %v988
      %v4475 = vunpack.c.l.b16 %v989
      %v4476 = vunpack.c.l.b16 %v990
      %v4477 = vunpack.c.l.b16 %v991
      %v4478 = vunpack.c.l.b16 %v992
      %v4479 = vunpack.c.l.b16 %v993
      %v4480 = vunpack.c.l.b16 %v994
      %v4481 = vunpack.c.l.b16 %v995
      %v4482 = vunpack.c.l.b16 %v996
      %v4483 = vunpack.c.l.b16 %v997
      %v4484 = vunpack.c.l.b16 %v998
      %v4485 = vunpack.c.l.b16 %v999
      %v4486 = vunpack.c.l.b16 %v1000
      %v4487 = vunpack.c.l.b16 %v1001
      %v4488 = vunpack.c.l.b16 %v1002
      %v4489 = vunpack.c.l.b16 %v1003
      %v4490 = vunpack.c.l.b16 %v1004
      %v4491 = vunpack.c.l.b16 %v1005
      %v4492 = vunpack.c.l.b16 %v1006
      %v4493 = vunpack.c.l.b16 %v1007
      %v4494 = vunpack.c.l.b16 %v1008
      %v4495 = vunpack.c.l.b16 %v1009
      %v4496 = vunpack.c.l.b16 %v1010
      %v4497 = vunpack.c.l.b16 %v1011
      %v4498 = vunpack.c.l.b16 %v1012
      %v4499 = vunpack.c.l.b16 %v1013
      %v4500 = vunpack.c.l.b16 %v1014
      %v4501 = vunpack.c.l.b16 %v1015
      %v4502 = vunpack.c.l.b16 %v1016
      %v4503 = vunpack.c.l.b16 %v1017
      %v4504 = vunpack.c.l.b16 %v1018
      %v4505 = vunpack.c.l.b16 %v1019
      %v4506 = vunpack.c.l.b16 %v1020
      %v4507 = vunpack.c.l.b16 %v1021
      %v4508 = vunpack.c.l.b16 %v1022
      %v4509 = vunpack.c.l.b16 %v1023
      %v4510 = vunpack.c.l.b16 %v1024
      %v4511 = vunpack.c.l.b16 %v1025
      %v4512 = vunpack.c.l.b16 %v1026
      %v4513 = vunpack.c.l.b16 %v1027
      %v4514 = vunpack.c.l.b16 %v1028
      %v4515 = vunpack.c.l.b16 %v1029
      %v4516 = vunpack.c.l.b16 %v1030
      %v4517 = vunpack.c.l.b16 %v1031
      %v4518 = vunpack.c.l.b16 %v1032
      %v4519 = vunpack.c.l.b16 %v1033
      %v4520 = vunpack.c.l.b16 %v1034
      %v4521 = vunpack.c.l.b16 %v1035
      %v4522 = vunpack.c.l.b16 %v1036
      %v4523 = vunpack.c.l.b16 %v1037
      %v4524 = vunpack.c.l.b16 %v1038
      %v4525 = vunpack.c.l.b16 %v1039
      %v4526 = vunpack.c.l.b16 %v1040
      %v4527 = vunpack.c.l.b16 %v1041
      %v4528 = vunpack.c.l.b16 %v1042
      %v4529 = vunpack.c.l.b16 %v1043
      %v4530 = vunpack.c.l.b16 %v1044
      %v4531 = vunpack.c.l.b16 %v1045
      %v4532 = vunpack.c.l.b16 %v1046
      %v4533 = vunpack.c.l.b16 %v1047
      %v4534 = vunpack.c.l.b16 %v1048
      %v4535 = vunpack.c.l.b16 %v1049
      %v4536 = vunpack.c.l.b16 %v1050
      %v4537 = vunpack.c.l.b16 %v1051
      %v4538 = vunpack.c.l.b16 %v1052
      %v4539 = vunpack.c.l.b16 %v1053
      %v4540 = vunpack.c.l.b16 %v1054
      %v4541 = vunpack.c.l.b16 %v1055
      %v4542 = vunpack.c.l.b16 %v1056
      %v4543 = vunpack.c.l.b16 %v1057
      %v4544 = vunpack.c.l.b16 %v1058
      %v4545 = vunpack.c.l.b16 %v1059
      %v4546 = vunpack.c.l.b16 %v1060
      %v4547 = vunpack.c.l.b16 %v1061
      %v4548 = vunpack.c.l.b16 %v1062
      %v4549 = vunpack.c.l.b16 %v1063
      %v4550 = vunpack.c.l.b16 %v1064
      %v4551 = vunpack.c.l.b16 %v1065
      %v4552 = vunpack.c.l.b16 %v1066
      %v4553 = vunpack.c.l.b16 %v1067
      %v4554 = vunpack.c.l.b16 %v1068
      %v4555 = vunpack.c.l.b16 %v1069
      %v4556 = vunpack.c.l.b16 %v1070
      %v4557 = vunpack.c.l.b16 %v1071
      %v4558 = vunpack.c.l.b16 %v1072
      %v4559 = vunpack.c.l.b16 %v1073
      %v4560 = vunpack.c.l.b16 %v1074
      %v4561 = vunpack.c.l.b16 %v1075
      %v4562 = vunpack.c.l.b16 %v1076
      %v4563 = vunpack.c.l.b16 %v1077
      %v4564 = vunpack.c.l.b16 %v1078
      %v4565 = vunpack.c.l.b16 %v1079
      %v4566 = vunpack.c.l.b16 %v1080
      %v4567 = vunpack.c.l.b16 %v1081
      %v4568 = vunpack.c.l.b16 %v1082
      %v4569 = vunpack.c.l.b16 %v1083
      %v4570 = vunpack.c.l.b16 %v1084
      %v4571 = vunpack.c.l.b16 %v1085
      %v4572 = vunpack.c.l.b16 %v1086
      %v4573 = vunpack.c.l.b16 %v1087
      %v4574 = vunpack.c.l.b16 %v1088
      %v4575 = vunpack.c.l.b16 %v1089
      %v4576 = vunpack.c.l.b16 %v1090
      %v4577 = vunpack.c.l.b16 %v1091
      %v4578 = vunpack.c.l.b16 %v1092
      %v4579 = vunpack.c.l.b16 %v1093
      %v4580 = vunpack.c.l.b16 %v1094
      %v4581 = vunpack.c.l.b16 %v1095
      %v4582 = vunpack.c.l.b16 %v1096
      %v4583 = vunpack.c.l.b16 %v1097
      %v4584 = vunpack.c.l.b16 %v1098
      %v4585 = vunpack.c.l.b16 %v1099
      %v4586 = vunpack.c.l.b16 %v1100
      %v4587 = vunpack.c.l.b16 %v1101
      %v4588 = vunpack.c.l.b16 %v1102
      %v4589 = vunpack.c.l.b16 %v1103
      %v4590 = vunpack.c.l.b16 %v1104
      %v4591 = vunpack.c.l.b16 %v1105
      %v4592 = vunpack.c.l.b16 %v1106
      %v4593 = vunpack.c.l.b16 %v1107
      %v4594 = vunpack.c.l.b16 %v1108
      %v4595 = vunpack.c.l.b16 %v1109
      %v4596 = vunpack.c.l.b16 %v1110
      %v4597 = vunpack.c.l.b16 %v1111
      %v4598 = vunpack.c.l.b16 %v1112
      %v4599 = vunpack.c.l.b16 %v1113
      %v4600 = vunpack.c.l.b16 %v1114
      %v4601 = vunpack.c.l.b16 %v1115
      %v4602 = vunpack.c.l.b16 %v1116
      %v4603 = vunpack.c.l.b16 %v1117
      %v4604 = vunpack.c.l.b16 %v1118
      %v4605 = vunpack.c.l.b16 %v1119
      %v4606 = vunpack.c.l.b16 %v1120
      %v4607 = vunpack.c.l.b16 %v1121
      %v4608 = vunpack.c.l.b16 %v1122
      %v4609 = vunpack.c.l.b16 %v1123
      %v4610 = vunpack.c.l.b16 %v1124
      %v4611 = vunpack.c.l.b16 %v1125
      %v4612 = vunpack.c.l.b16 %v1126
      %v4613 = vunpack.c.l.b16 %v1127
      %v4614 = vunpack.c.l.b16 %v1128
      %v4615 = vunpack.c.l.b16 %v1129
      %v4616 = vunpack.c.l.b16 %v1130
      %v4617 = vunpack.c.l.b16 %v1131
      %v4618 = vunpack.c.l.b16 %v1132
      %v4619 = vunpack.c.l.b16 %v1133
      %v4620 = vunpack.c.l.b16 %v1134
      %v4621 = vunpack.c.l.b16 %v1135
      %v4622 = vunpack.c.l.b16 %v1136
      %v4623 = vunpack.c.l.b16 %v1137
      %v4624 = vunpack.c.l.b16 %v1138
      %v4625 = vunpack.c.l.b16 %v1139
      %v4626 = vunpack.c.l.b16 %v1140
      %v4627 = vunpack.c.l.b16 %v1141
      %v4628 = vunpack.c.l.b16 %v1142
      %v4629 = vunpack.c.l.b16 %v1143
      %v4630 = vunpack.c.l.b16 %v1144
      %v4631 = vunpack.c.l.b16 %v1145
      %v4632 = vunpack.c.l.b16 %v1146
      %v4633 = vunpack.c.l.b16 %v1147
      %v4634 = vunpack.c.l.b16 %v1148
      %v4635 = vunpack.c.l.b16 %v1149
      %v4636 = vunpack.c.l.b16 %v1150
      %v4637 = vunpack.c.l.b16 %v1151
      %v4638 = vunpack.c.l.b16 %v1152
      %v4639 = vunpack.c.l.b16 %v1153
      %v4640 = vunpack.c.l.b16 %v1154
      %v4641 = vunpack.c.l.b16 %v1155
      %v4642 = vunpack.c.l.b16 %v1156
      %v4643 = vunpack.c.l.b16 %v1157
      %v4644 = vunpack.c.l.b16 %v1158
      %v4645 = vunpack.c.l.b16 %v1159
      %v4646 = vunpack.c.l.b16 %v1160
      %v4647 = vunpack.c.l.b16 %v1161
      %v4648 = vunpack.c.l.b16 %v1162
      %v4649 = vunpack.c.l.b16 %v1163
      %v4650 = vunpack.c.l.b16 %v1164
      %v4651 = vunpack.c.l.b16 %v1165
      %v4652 = vunpack.c.l.b16 %v1166
      %v4653 = vunpack.c.l.b16 %v1167
      %v4654 = vunpack.c.l.b16 %v1168
      %v4655 = vunpack.c.l.b16 %v1169
      %v4656 = vunpack.c.l.b16 %v1170
      %v4657 = vunpack.c.l.b16 %v1171
      %v4658 = vunpack.c.l.b16 %v1172
      %v4659 = vunpack.c.l.b16 %v1173
      %v4660 = vunpack.c.l.b16 %v1174
      %v4661 = vunpack.c.l.b16 %v1175
      %v4662 = vunpack.c.l.b16 %v1176
      %v4663 = vunpack.c.l.b16 %v1177
      %v4664 = vunpack.c.l.b16 %v1178
      %v4665 = vunpack.c.l.b16 %v1179
      %v4666 = vunpack.c.l.b16 %v1180
      %v4667 = vunpack.c.l.b16 %v1181
      %v4668 = vunpack.c.l.b16 %v1182
      %v4669 = vunpack.c.l.b16 %v1183
      %v4670 = vunpack.c.l.b16 %v1184
      %v4671 = vunpack.c.l.b16 %v1185
      %v4672 = vunpack.c.l.b16 %v1186
      %v4673 = vunpack.c.l.b16 %v1187
      %v4674 = vunpack.c.l.b16 %v1188
      %v4675 = vunpack.c.l.b16 %v1189
      %v4676 = vunpack.c.l.b16 %v1190
      %v4677 = vunpack.c.l.b16 %v1191
      %v4678 = vunpack.c.l.b16 %v1192
      %v4679 = vunpack.c.l.b16 %v1193
      %v4680 = vunpack.c.l.b16 %v1194
      %v4681 = vunpack.c.l.b16 %v1195
      %v4682 = vunpack.c.l.b16 %v1196
      %v4683 = vunpack.c.l.b16 %v1197
      %v4684 = vunpack.c.l.b16 %v1198
      %v4685 = vunpack.c.l.b16 %v1199
      %v4686 = vunpack.c.l.b16 %v1200
      %v4687 = vunpack.c.l.b16 %v1201
      %v4688 = vunpack.c.l.b16 %v1202
      %v4689 = vunpack.c.l.b16 %v1203
      %v4690 = vunpack.c.l.b16 %v1204
      %v4691 = vunpack.c.l.b16 %v1205
      %v4692 = vunpack.c.l.b16 %v1206
      %v4693 = vunpack.c.l.b16 %v1207
      %v4694 = vunpack.c.l.b16 %v1208
      %v4695 = vunpack.c.l.b16 %v1209
      %v4696 = vunpack.c.l.b16 %v1210
      %v4697 = vunpack.c.l.b16 %v1211
      %v4698 = vunpack.c.l.b16 %v1212
      %v4699 = vunpack.c.l.b16 %v1213
      %v4700 = vunpack.c.l.b16 %v1214
      %v4701 = vunpack.c.l.b16 %v1215
      %v4702 = vunpack.c.l.b16 %v1216
      %v4703 = vunpack.c.l.b16 %v1217
      %v4704 = vunpack.c.l.b16 %v1218
      %v4705 = vunpack.c.l.b16 %v1219
      %v4706 = vunpack.c.l.b16 %v1220
      %v4707 = vunpack.c.l.b16 %v1221
      %v4708 = vunpack.c.l.b16 %v1222
      %v4709 = vunpack.c.l.b16 %v1223
      %v4710 = vunpack.c.l.b16 %v1224
      %v4711 = vunpack.c.l.b16 %v1225
      %v4712 = vunpack.c.l.b16 %v1226
      %v4713 = vunpack.c.l.b16 %v1227
      %v4714 = vunpack.c.l.b16 %v1228
      %v4715 = vunpack.c.l.b16 %v1229
      %v4716 = vunpack.c.l.b16 %v1230
      %v4717 = vunpack.c.l.b16 %v1231
      %v4718 = vunpack.c.l.b16 %v1232
      %v4719 = vunpack.c.l.b16 %v1233
      %v4720 = vunpack.c.l.b16 %v1234
      %v4721 = vunpack.c.l.b16 %v1235
      %v4722 = vunpack.c.l.b16 %v1236
      %v4723 = vunpack.c.l.b16 %v1237
      %v4724 = vunpack.c.l.b16 %v1238
      %v4725 = vunpack.c.l.b16 %v1239
      %v4726 = vunpack.c.l.b16 %v1240
      %v4727 = vunpack.c.l.b16 %v1241
      %v4728 = vunpack.c.l.b16 %v1242
      %v4729 = vunpack.c.l.b16 %v1243
      %v4730 = vunpack.c.l.b16 %v1244
      %v4731 = vunpack.c.l.b16 %v1245
      %v4732 = vunpack.c.l.b16 %v1246
      %v4733 = vunpack.c.l.b16 %v1247
      %v4734 = vunpack.c.l.b16 %v1248
      %v4735 = vunpack.c.l.b16 %v1249
      %v4736 = vunpack.c.l.b16 %v1250
      %v4737 = vunpack.c.l.b16 %v1251
      %v4738 = vunpack.c.l.b16 %v1252
      %v4739 = vunpack.c.l.b16 %v1253
      %v4740 = vunpack.c.l.b16 %v1254
      %v4741 = vunpack.c.l.b16 %v1255
      %v4742 = vunpack.c.l.b16 %v1256
      %v4743 = vunpack.c.l.b16 %v1257
      %v4744 = vunpack.c.l.b16 %v1258
      %v4745 = vunpack.c.l.b16 %v1259
      %v4746 = vunpack.c.l.b16 %v1260
      %v4747 = vunpack.c.l.b16 %v1261
      %v4748 = vunpack.c.l.b16 %v1262
      %v4749 = vunpack.c.l.b16 %v1263
      %v4750 = vunpack.c.l.b16 %v1264
      %v4751 = vunpack.c.l.b16 %v1265
      %v4752 = vunpack.c.l.b16 %v1266
      %v4753 = vunpack.c.l.b16 %v1267
      %v4754 = vunpack.c.l.b16 %v1268
      %v4755 = vunpack.c.l.b16 %v1269
      %v4756 = vunpack.c.l.b16 %v1270
      %v4757 = vunpack.c.l.b16 %v1271
      %v4758 = vunpack.c.l.b16 %v1272
      %v4759 = vunpack.c.l.b16 %v1273
      %v4760 = vunpack.c.l.b16 %v1274
      %v4761 = vunpack.c.l.b16 %v1275
      %v4762 = vunpack.c.l.b16 %v1276
      %v4763 = vunpack.c.l.b16 %v1277
      %v4764 = vunpack.c.l.b16 %v1278
      %v4765 = vunpack.c.l.b16 %v1279
      %v4766 = vunpack.c.l.b16 %v1280
      %v4767 = vunpack.c.l.b16 %v1281
      %v4768 = vunpack.c.l.b16 %v1282
      %v4769 = vunpack.c.l.b16 %v1283
      %v4770 = vunpack.c.l.b16 %v1284
      %v4771 = vunpack.c.l.b16 %v1285
      %v4772 = vunpack.c.l.b16 %v1286
      %v4773 = vunpack.c.l.b16 %v1287
      %v4774 = vunpack.c.l.b16 %v1288
      %v4775 = vunpack.c.l.b16 %v1289
      %v4776 = vunpack.c.l.b16 %v1290
      %v4777 = vunpack.c.l.b16 %v1291
      %v4778 = vunpack.c.l.b16 %v1292
      %v4779 = vunpack.c.l.b16 %v1293
      %v4780 = vunpack.c.l.b16 %v1294
      %v4781 = vunpack.c.l.b16 %v1295
      %v4782 = vunpack.c.l.b16 %v1296
      %v4783 = vunpack.c.l.b16 %v1297
      %v4784 = vunpack.c.l.b16 %v1298
      %v4785 = vunpack.c.l.b16 %v1299
      %v4786 = vunpack.c.l.b16 %v1300
      %v4787 = vunpack.c.l.b16 %v1301
      %v4788 = vunpack.c.l.b16 %v1302
      %v4789 = vunpack.c.l.b16 %v1303
      %v4790 = vunpack.c.l.b16 %v1304
      %v4791 = vunpack.c.l.b16 %v1305
      %v4792 = vunpack.c.l.b16 %v1306
      %v4793 = vunpack.c.l.b16 %v1307
      %v4794 = vunpack.c.l.b16 %v1308
      %v4795 = vunpack.c.l.b16 %v1309
      %v4796 = vunpack.c.l.b16 %v1310
      %v4797 = vunpack.c.l.b16 %v1311
      %v4798 = vunpack.c.l.b16 %v1312
      %v4799 = vunpack.c.l.b16 %v1313
      %v4800 = vunpack.c.l.b16 %v1314
      %v4801 = vunpack.c.l.b16 %v1315
      %v4802 = vunpack.c.l.b16 %v1316
      %v4803 = vunpack.c.l.b16 %v1317
      %v4804 = vunpack.c.l.b16 %v1318
      %v4805 = vunpack.c.l.b16 %v1319
      %v4806 = vunpack.c.l.b16 %v1320
      %v4807 = vunpack.c.l.b16 %v1321
      %v4808 = vunpack.c.l.b16 %v1322
      %v4809 = vunpack.c.l.b16 %v1323
      %v4810 = vunpack.c.l.b16 %v1324
      %v4811 = vunpack.c.l.b16 %v1325
      %v4812 = vunpack.c.l.b16 %v1326
      %v4813 = vunpack.c.l.b16 %v1327
      %v4814 = vunpack.c.l.b16 %v1328
      %v4815 = vunpack.c.l.b16 %v1329
      %v4816 = vunpack.c.l.b16 %v1330
      %v4817 = vunpack.c.l.b16 %v1331
      %v4818 = vunpack.c.l.b16 %v1332
      %v4819 = vunpack.c.l.b16 %v1333
      %v4820 = vunpack.c.l.b16 %v1334
      %v4821 = vunpack.c.l.b16 %v1335
      %v4822 = vunpack.c.l.b16 %v1336
      %v4823 = vunpack.c.l.b16 %v1337
      %v4824 = vunpack.c.l.b16 %v1338
      %v4825 = vunpack.c.l.b16 %v1339
      %v4826 = vunpack.c.l.b16 %v1340
      %v4827 = vunpack.c.l.b16 %v1341
      %v4828 = vunpack.c.l.b16 %v1342
      %v4829 = vunpack.c.l.b16 %v1343
      %v4830 = vunpack.c.l.b16 %v1344
      %v4831 = vunpack.c.l.b16 %v1345
      %v4832 = vunpack.c.l.b16 %v1346
      %v4833 = vunpack.c.l.b16 %v1347
      %v4834 = vunpack.c.l.b16 %v1348
      %v4835 = vunpack.c.l.b16 %v1349
      %v4836 = vunpack.c.l.b16 %v1350
      %v4837 = vunpack.c.l.b16 %v1351
      %v4838 = vunpack.c.l.b16 %v1352
      %v4839 = vunpack.c.l.b16 %v1353
      %v4840 = vunpack.c.l.b16 %v1354
      %v4841 = vunpack.c.l.b16 %v1355
      %v4842 = vunpack.c.l.b16 %v1356
      %v4843 = vunpack.c.l.b16 %v1357
      %v4844 = vunpack.c.l.b16 %v1358
      %v4845 = vunpack.c.l.b16 %v1359
      %v4846 = vunpack.c.l.b16 %v1360
      %v4847 = vunpack.c.l.b16 %v1361
      %v4848 = vunpack.c.l.b16 %v1362
      %v4849 = vunpack.c.l.b16 %v1363
      %v4850 = vunpack.c.l.b16 %v1364
      %v4851 = vunpack.c.l.b16 %v1365
      %v4852 = vunpack.c.l.b16 %v1366
      %v4853 = vunpack.c.l.b16 %v1367
      %v4854 = vunpack.c.l.b16 %v1368
      %v4855 = vunpack.c.l.b16 %v1369
      %v4856 = vunpack.c.l.b16 %v1370
      %v4857 = vunpack.c.l.b16 %v1371
      %v4858 = vunpack.c.l.b16 %v1372
      %v4859 = vunpack.c.l.b16 %v1373
      %v4860 = vunpack.c.l.b16 %v1374
      %v4861 = vunpack.c.l.b16 %v1375
      %v4862 = vunpack.c.l.b16 %v1376
      %v4863 = vunpack.c.l.b16 %v1377
      %v4864 = vunpack.c.l.b16 %v1378
      %v4865 = vunpack.c.l.b16 %v1379
      %v4866 = vunpack.c.l.b16 %v1380
      %v4867 = vunpack.c.l.b16 %v1381
      %v4868 = vunpack.c.l.b16 %v1382
      %v4869 = vunpack.c.l.b16 %v1383
      %v4870 = vunpack.c.l.b16 %v1384
      %v4871 = vunpack.c.l.b16 %v1385
      %v4872 = vunpack.c.l.b16 %v1386
      %v4873 = vunpack.c.l.b16 %v1387
      %v4874 = vunpack.c.l.b16 %v1388
      %v4875 = vunpack.c.l.b16 %v1389
      %v4876 = vunpack.c.l.b16 %v1390
      %v4877 = vunpack.c.l.b16 %v1391
      %v4878 = vunpack.c.l.b16 %v1392
      %v4879 = vunpack.c.l.b16 %v1393
      %v4880 = vunpack.c.l.b16 %v1394
      %v4881 = vunpack.c.l.b16 %v1395
      %v4882 = vunpack.c.l.b16 %v1396
      %v4883 = vunpack.c.l.b16 %v1397
      %v4884 = vunpack.c.l.b16 %v1398
      %v4885 = vunpack.c.l.b16 %v1399
      %v4886 = vunpack.c.l.b16 %v1400
      %v4887 = vunpack.c.l.b16 %v1401
      %v4888 = vunpack.c.l.b16 %v1402
      %v4889 = vunpack.c.l.b16 %v1403
      %v4890 = vunpack.c.l.b16 %v1404
      %v4891 = vunpack.c.l.b16 %v1405
      %v4892 = vunpack.c.l.b16 %v1406
      %v4893 = vunpack.c.l.b16 %v1407
      %v4894 = vunpack.c.l.b16 %v1408
      %v4895 = vunpack.c.l.b16 %v1409
      %v4896 = vunpack.c.l.b16 %v1410
      %v4897 = vunpack.c.l.b16 %v1411
      %v4898 = vunpack.c.l.b16 %v1412
      %v4899 = vunpack.c.l.b16 %v1413
      %v4900 = vunpack.c.l.b16 %v1414
      %v4901 = vunpack.c.l.b16 %v1415
      %v4902 = vunpack.c.l.b16 %v1416
      %v4903 = vunpack.c.l.b16 %v1417
      %v4904 = vunpack.c.l.b16 %v1418
      %v4905 = vunpack.c.l.b16 %v1419
      %v4906 = vunpack.c.l.b16 %v1420
      %v4907 = vunpack.c.l.b16 %v1421
      %v4908 = vunpack.c.l.b16 %v1422
      %v4909 = vunpack.c.l.b16 %v1423
      %v4910 = vunpack.c.l.b16 %v1424
      %v4911 = vunpack.c.l.b16 %v1425
      %v4912 = vunpack.c.l.b16 %v1426
      %v4913 = vunpack.c.l.b16 %v1427
      %v4914 = vunpack.c.l.b16 %v1428
      %v4915 = vunpack.c.l.b16 %v1429
      %v4916 = vunpack.c.l.b16 %v1430
      %v4917 = vunpack.c.l.b16 %v1431
      %v4918 = vunpack.c.l.b16 %v1432
      %v4919 = vunpack.c.l.b16 %v1433
      %v4920 = vunpack.c.l.b16 %v1434
      %v4921 = vunpack.c.l.b16 %v1435
      %v4922 = vunpack.c.l.b16 %v1436
      %v4923 = vunpack.c.l.b16 %v1437
      %v4924 = vunpack.c.l.b16 %v1438
      %v4925 = vunpack.c.l.b16 %v1439
      %v4926 = vunpack.c.l.b16 %v1440
      %v4927 = vunpack.c.l.b16 %v1441
      %v4928 = vunpack.c.l.b16 %v1442
      %v4929 = vunpack.c.l.b16 %v1443
      %v4930 = vunpack.c.l.b16 %v1444
      %v4931 = vunpack.c.l.b16 %v1445
      %v4932 = vunpack.c.l.b16 %v1446
      %v4933 = vunpack.c.l.b16 %v1447
      %v4934 = vunpack.c.l.b16 %v1448
      %v4935 = vunpack.c.l.b16 %v1449
      %v4936 = vunpack.c.l.b16 %v1450
      %v4937 = vunpack.c.l.b16 %v1451
      %v4938 = vunpack.c.l.b16 %v1452
      %v4939 = vunpack.c.l.b16 %v1453
      %v4940 = vunpack.c.l.b16 %v1454
      %v4941 = vunpack.c.l.b16 %v1455
      %v4942 = vunpack.c.l.b16 %v1456
      %v4943 = vunpack.c.l.b16 %v1457
      %v4944 = vunpack.c.l.b16 %v1458
      %v4945 = vunpack.c.l.b16 %v1459
      %v4946 = vunpack.c.l.b16 %v1460
      %v4947 = vunpack.c.l.b16 %v1461
      %v4948 = vunpack.c.l.b16 %v1462
      %v4949 = vunpack.c.l.b16 %v1463
      %v4950 = vunpack.c.l.b16 %v1464
      %v4951 = vunpack.c.l.b16 %v1465
      %v4952 = vunpack.c.l.b16 %v1466
      %v4953 = vunpack.c.l.b16 %v1467
      %v4954 = vunpack.c.l.b16 %v1468
      %v4955 = vunpack.c.l.b16 %v1469
      %v4956 = vunpack.c.l.b16 %v1470
      %v4957 = vunpack.c.l.b16 %v1471
      %v4958 = vunpack.c.l.b16 %v1472
      %v4959 = vunpack.c.l.b16 %v1473
      %v4960 = vunpack.c.l.b16 %v1474
      %v4961 = vunpack.c.l.b16 %v1475
      %v4962 = vunpack.c.l.b16 %v1476
      %v4963 = vunpack.c.l.b16 %v1477
      %v4964 = vunpack.c.l.b16 %v1478
      %v4965 = vunpack.c.l.b16 %v1479
      %v4966 = vunpack.c.l.b16 %v1480
      %v4967 = vunpack.c.l.b16 %v1481
      %v4968 = vunpack.c.l.b16 %v1482
      %v4969 = vunpack.c.l.b16 %v1483
      %v4970 = vunpack.c.l.b16 %v1484
      %v4971 = vunpack.c.l.b16 %v1485
      %v4972 = vunpack.c.l.b16 %v1486
      %v4973 = vunpack.c.l.b16 %v1487
      %v4974 = vunpack.c.l.b16 %v1488
      %v4975 = vunpack.c.l.b16 %v1489
      %v4976 = vunpack.c.l.b16 %v1490
      %v4977 = vunpack.c.l.b16 %v1491
      %v4978 = vunpack.c.l.b16 %v1492
      %v4979 = vunpack.c.l.b16 %v1493
      %v4980 = vunpack.c.l.b16 %v1494
      %v4981 = vunpack.c.l.b16 %v1495
      %v4982 = vunpack.c.l.b16 %v1496
      %v4983 = vunpack.c.l.b16 %v1497
      %v4984 = vunpack.c.l.b16 %v1498
      %v4985 = vunpack.c.l.b16 %v1499
      %v4986 = vunpack.c.l.b16 %v1500
      %v4987 = vunpack.c.l.b16 %v1501
      %v4988 = vunpack.c.l.b16 %v1502
      %v4989 = vunpack.c.l.b16 %v1503
      %v4990 = vunpack.c.l.b16 %v1504
      %v4991 = vunpack.c.l.b16 %v1505
      %v4992 = vunpack.c.l.b16 %v1506
      %v4993 = vunpack.c.l.b16 %v1507
      %v4994 = vunpack.c.l.b16 %v1508
      %v4995 = vunpack.c.l.b16 %v1509
      %v4996 = vunpack.c.l.b16 %v1510
      %v4997 = vunpack.c.l.b16 %v1511
      %v4998 = vunpack.c.l.b16 %v1512
      %v4999 = vunpack.c.l.b16 %v1513
      %v5000 = vunpack.c.l.b16 %v1514
      %v5001 = vunpack.c.l.b16 %v1515
      %v5002 = vunpack.c.l.b16 %v1516
      %v5003 = vunpack.c.l.b16 %v1517
      %v5004 = vunpack.c.l.b16 %v1518
      %v5005 = vunpack.c.l.b16 %v1519
      %v5006 = vunpack.c.l.b16 %v1520
      %v5007 = vunpack.c.l.b16 %v1521
      %v5008 = vunpack.c.l.b16 %v1522
      %v5009 = vunpack.c.l.b16 %v1523
      %v5010 = vunpack.c.l.b16 %v1524
      %v5011 = vunpack.c.l.b16 %v1525
      %v5012 = vunpack.c.l.b16 %v1526
      %v5013 = vunpack.c.l.b16 %v1527
      %v5014 = vunpack.c.l.b16 %v1528
      %v5015 = vunpack.c.l.b16 %v1529
      %v5016 = vunpack.c.l.b16 %v1530
      %v5017 = vunpack.c.l.b16 %v1531
      %v5018 = vunpack.c.l.b16 %v1532
      %v5019 = vunpack.c.l.b16 %v1533
      %v5020 = vunpack.c.l.b16 %v1534
      %v5021 = vunpack.c.l.b16 %v1535
      %v5022 = vunpack.c.l.b16 %v1536
      %v5023 = vunpack.c.l.b16 %v1537
      %v5024 = vunpack.c.l.b16 %v1538
      %v5025 = vunpack.c.l.b16 %v1539
      %v5026 = vunpack.c.l.b16 %v1540
      %v5027 = vunpack.c.l.b16 %v1541
      %v5028 = vunpack.c.l.b16 %v1542
      %v5029 = vunpack.c.l.b16 %v1543
      %v5030 = vunpack.c.l.b16 %v1544
      %v5031 = vunpack.c.l.b16 %v1545
      %v5032 = vunpack.c.l.b16 %v1546
      %v5033 = vunpack.c.l.b16 %v1547
      %v5034 = vunpack.c.l.b16 %v1548
      %v5035 = vunpack.c.l.b16 %v1549
      %v5036 = vunpack.c.l.b16 %v1550
      %v5037 = vunpack.c.l.b16 %v1551
      %v5038 = vunpack.c.l.b16 %v1552
      %v5039 = vunpack.c.l.b16 %v1553
      %v5040 = vunpack.c.l.b16 %v1554
      %v5041 = vunpack.c.l.b16 %v1555
      %v5042 = vunpack.c.l.b16 %v1556
      %v5043 = vunpack.c.l.b16 %v1557
      %v5044 = vunpack.c.l.b16 %v1558
      %v5045 = vunpack.c.l.b16 %v1559
      %v5046 = vunpack.c.l.b16 %v1560
      %v5047 = vunpack.c.l.b16 %v1561
      %v5048 = vunpack.c.l.b16 %v1562
      %v5049 = vunpack.c.l.b16 %v1563
      %v5050 = vunpack.c.l.b16 %v1564
      %v5051 = vunpack.c.l.b16 %v1565
      %v5052 = vunpack.c.l.b16 %v1566
      %v5053 = vunpack.c.l.b16 %v1567
      %v5054 = vunpack.c.l.b16 %v1568
      %v5055 = vunpack.c.l.b16 %v1569
      %v5056 = vunpack.c.l.b16 %v1570
      %v5057 = vunpack.c.l.b16 %v1571
      %v5058 = vunpack.c.l.b16 %v1572
      %v5059 = vunpack.c.l.b16 %v1573
      %v5060 = vunpack.c.l.b16 %v1574
      %v5061 = vunpack.c.l.b16 %v1575
      %v5062 = vunpack.c.l.b16 %v1576
      %v5063 = vunpack.c.l.b16 %v1577
      %v5064 = vunpack.c.l.b16 %v1578
      %v5065 = vunpack.c.l.b16 %v1579
      %v5066 = vunpack.c.l.b16 %v1580
      %v5067 = vunpack.c.l.b16 %v1581
      %v5068 = vunpack.c.l.b16 %v1582
      %v5069 = vunpack.c.l.b16 %v1583
      %v5070 = vunpack.c.l.b16 %v1584
      %v5071 = vunpack.c.l.b16 %v1585
      %v5072 = vunpack.c.l.b16 %v1586
      %v5073 = vunpack.c.l.b16 %v1587
      %v5074 = vunpack.c.l.b16 %v1588
      %v5075 = vunpack.c.l.b16 %v1589
      %v5076 = vunpack.c.l.b16 %v1590
      %v5077 = vunpack.c.l.b16 %v1591
      %v5078 = vunpack.c.l.b16 %v1592
      %v5079 = vunpack.c.l.b16 %v1593
      %v5080 = vunpack.c.l.b16 %v1594
      %v5081 = vunpack.c.l.b16 %v1595
      %v5082 = vunpack.c.l.b16 %v1596
      %v5083 = vunpack.c.l.b16 %v1597
      %v5084 = vunpack.c.l.b16 %v1598
      %v5085 = vunpack.c.l.b16 %v1599
      %v5086 = vunpack.c.l.b16 %v1600
      %v5087 = vunpack.c.l.b16 %v1601
      %v5088 = vunpack.c.l.b16 %v1602
      %v5089 = vunpack.c.l.b16 %v1603
      %v5090 = vunpack.c.l.b16 %v1604
      %v5091 = vunpack.c.l.b16 %v1605
      %v5092 = vunpack.c.l.b16 %v1606
      %v5093 = vunpack.c.l.b16 %v1607
      %v5094 = vunpack.c.l.b16 %v1608
      %v5095 = vunpack.c.l.b16 %v1609
      %v5096 = vunpack.c.l.b16 %v1610
      %v5097 = vunpack.c.l.b16 %v1611
      %v5098 = vunpack.c.l.b16 %v1612
      %v5099 = vunpack.c.l.b16 %v1613
      %v5100 = vunpack.c.l.b16 %v1614
      %v5101 = vunpack.c.l.b16 %v1615
      %v5102 = vunpack.c.l.b16 %v1616
      %v5103 = vunpack.c.l.b16 %v1617
      %v5104 = vunpack.c.l.b16 %v1618
      %v5105 = vunpack.c.l.b16 %v1619
      %v5106 = vunpack.c.l.b16 %v1620
      %v5107 = vunpack.c.l.b16 %v1621
      %v5108 = vunpack.c.l.b16 %v1622
      %v5109 = vunpack.c.l.b16 %v1623
      %v5110 = vunpack.c.l.b16 %v1624
      %v5111 = vunpack.c.l.b16 %v1625
      %v5112 = vunpack.c.l.b16 %v1626
      %v5113 = vunpack.c.l.b16 %v1627
      %v5114 = vunpack.c.l.b16 %v1628
      %v5115 = vunpack.c.l.b16 %v1629
      %v5116 = vunpack.c.l.b16 %v1630
      %v5117 = vunpack.c.l.b16 %v1631
      %v5118 = vunpack.c.l.b16 %v1632
      %v5119 = vunpack.c.l.b16 %v1633
      %v5120 = vunpack.c.l.b16 %v1634
      %v5121 = vunpack.c.l.b16 %v1635
      %v5122 = vunpack.c.l.b16 %v1636
      %v5123 = vunpack.c.l.b16 %v1637
      %v5124 = vunpack.c.l.b16 %v1638
      %v5125 = vunpack.c.l.b16 %v1639
      %v5126 = vunpack.c.l.b16 %v1640
      %v5127 = vunpack.c.l.b16 %v1641
      %v5128 = vunpack.c.l.b16 %v1642
      %v5129 = vunpack.c.l.b16 %v1643
      %v5130 = vunpack.c.l.b16 %v1644
      %v5131 = vunpack.c.l.b16 %v1645
      %v5132 = vunpack.c.l.b16 %v1646
      %v5133 = vunpack.c.l.b16 %v1647
      %v5134 = vunpack.c.l.b16 %v1648
      %v5135 = vunpack.c.l.b16 %v1649
      %v5136 = vunpack.c.l.b16 %v1650
      %v5137 = vunpack.c.l.b16 %v1651
      %v5138 = vunpack.c.l.b16 %v1652
      %v5139 = vunpack.c.l.b16 %v1653
      %v5140 = vunpack.c.l.b16 %v1654
      %v5141 = vunpack.c.l.b16 %v1655
      %v5142 = vunpack.c.l.b16 %v1656
      %v5143 = vunpack.c.l.b16 %v1657
      %v5144 = vunpack.c.l.b16 %v1658
      %v5145 = vunpack.c.l.b16 %v1659
      %v5146 = vunpack.c.l.b16 %v1660
      %v5147 = vunpack.c.l.b16 %v1661
      %v5148 = vunpack.c.l.b16 %v1662
      %v5149 = vunpack.c.l.b16 %v1663
      %v5150 = vunpack.c.l.b16 %v1664
      %v5151 = vunpack.c.l.b16 %v1665
      %v5152 = vunpack.c.l.b16 %v1666
      %v5153 = vunpack.c.l.b16 %v1667
      %v5154 = vunpack.c.l.b16 %v1668
      %v5155 = vunpack.c.l.b16 %v1669
      %v5156 = vunpack.c.l.b16 %v1670
      %v5157 = vunpack.c.l.b16 %v1671
      %v5158 = vunpack.c.l.b16 %v1672
      %v5159 = vunpack.c.l.b16 %v1673
      %v5160 = vunpack.c.l.b16 %v1674
      %v5161 = vunpack.c.l.b16 %v1675
      %v5162 = vunpack.c.l.b16 %v1676
      %v5163 = vunpack.c.l.b16 %v1677
      %v5164 = vunpack.c.l.b16 %v1678
      %v5165 = vunpack.c.l.b16 %v1679
      %v5166 = vunpack.c.l.b16 %v1680
      %v5167 = vunpack.c.l.b16 %v1681
      %v5168 = vunpack.c.l.b16 %v1682
      %v5169 = vunpack.c.l.b16 %v1683
      %v5170 = vunpack.c.l.b16 %v1684
      %v5171 = vunpack.c.l.b16 %v1685
      %v5172 = vunpack.c.l.b16 %v1686
      %v5173 = vunpack.c.l.b16 %v1687
      %v5174 = vunpack.c.l.b16 %v1688
      %v5175 = vunpack.c.l.b16 %v1689
      %v5176 = vunpack.c.l.b16 %v1690
      %v5177 = vunpack.c.l.b16 %v1691
      %v5178 = vunpack.c.l.b16 %v1692
      %v5179 = vunpack.c.l.b16 %v1693
      %v5180 = vunpack.c.l.b16 %v1694
      %v5181 = vunpack.c.l.b16 %v1695
      %v5182 = vunpack.c.l.b16 %v1696
      %v5183 = vunpack.c.l.b16 %v1697
      %v5184 = vunpack.c.l.b16 %v1698
      %v5185 = vunpack.c.l.b16 %v1699
      %v5186 = vunpack.c.l.b16 %v1700
      %v5187 = vunpack.c.l.b16 %v1701
      %v5188 = vunpack.c.l.b16 %v1702
      %v5189 = vunpack.c.l.b16 %v1703
      %v5190 = vunpack.c.l.b16 %v1704
      %v5191 = vunpack.c.l.b16 %v1705
      %v5192 = vunpack.c.l.b16 %v1706
      %v5193 = vunpack.c.l.b16 %v1707
      %v5194 = vunpack.c.l.b16 %v1708
      %v5195 = vunpack.c.l.b16 %v1709
      %v5196 = vunpack.c.l.b16 %v1710
      %v5197 = vunpack.c.l.b16 %v1711
      %v5198 = vunpack.c.l.b16 %v1712
      %v5199 = vunpack.c.l.b16 %v1713
      %v5200 = vunpack.c.l.b16 %v1714
      %v5201 = vunpack.c.l.b16 %v1715
      %v5202 = vunpack.c.l.b16 %v1716
      %v5203 = vunpack.c.l.b16 %v1717
      %v5204 = vunpack.c.l.b16 %v1718
      %v5205 = vunpack.c.l.b16 %v1719
      %v5206 = vunpack.c.l.b16 %v1720
      %v5207 = vunpack.c.l.b16 %v1721
      %v5208 = vunpack.c.l.b16 %v1722
      %v5209 = vunpack.c.l.b16 %v1723
      %v5210 = vunpack.c.l.b16 %v1724
      %v5211 = vunpack.c.l.b16 %v1725
      %v5212 = vunpack.c.l.b16 %v1726
      %v5213 = vunpack.c.l.b16 %v1727
      %v5214 = vunpack.c.l.b16 %v1728
      %v5215 = vunpack.c.l.b16 %v1729
      %v5216 = vunpack.c.l.b16 %v1730
      %v5217 = vunpack.c.l.b16 %v1731
      %v5218 = vunpack.c.l.b16 %v1732
      %v5219 = vunpack.c.l.b16 %v1733
      %v5220 = vunpack.c.l.b16 %v1734
      %v5221 = vunpack.c.l.b16 %v1735
      %v5222 = vunpack.c.l.b16 %v1736
      %v5223 = vunpack.c.l.b16 %v1737
      %v5224 = vunpack.c.l.b16 %v1738
      %v5225 = vunpack.c.l.b16 %v1739
      %v5226 = vunpack.c.l.b16 %v1740
      %v5227 = vunpack.c.l.b16 %v1741
      %v5228 = vunpack.c.l.b16 %v1742
      %v5229 = vunpack.c.l.b16 %v1743
      %v5230 = vunpack.c.l.b16 %v1744
      %v5231 = vunpack.c.l.b16 %v1745
      %v5232 = vunpack.c.l.b16 %v1746
      %v5233 = vunpack.c.l.b16 %v1747
      %v5234 = vunpack.c.l.b16 %v1748
      %v5235 = vunpack.c.l.b16 %v1749
      %v5236 = vunpack.c.l.b16 %v1750
      %v5237 = vunpack.c.l.b16 %v1751
      %v5238 = vunpack.c.l.b16 %v1752
      %v5239 = vunpack.c.l.b16 %v1753
      %v5240 = vunpack.c.l.b16 %v1754
      %v5241 = vunpack.c.l.b16 %v1755
      %v5242 = vunpack.c.l.b16 %v1756
      %v5243 = vunpack.c.l.b16 %v1757
      %v5244 = vunpack.c.l.b16 %v1758
      %v5245 = vunpack.c.l.b16 %v1759
      %v5246 = vunpack.c.l.b16 %v1760
      %v5247 = vunpack.c.l.b16 %v1761
      %v5248 = vunpack.c.l.b16 %v1762
      %v5249 = vunpack.c.l.b16 %v1763
      %v5250 = vunpack.c.l.b16 %v1764
      %v5251 = vunpack.c.l.b16 %v1765
      %v5252 = vunpack.c.l.b16 %v1766
      %v5253 = vunpack.c.l.b16 %v1767
      %v5254 = vunpack.c.l.b16 %v1768
      %v5255 = vunpack.c.l.b16 %v1769
      %v5256 = vunpack.c.l.b16 %v1770
      %v5257 = vunpack.c.l.b16 %v1771
      %v5258 = vunpack.c.l.b16 %v1772
      %v5259 = vunpack.c.l.b16 %v1773
      %v5260 = vunpack.c.l.b16 %v1774
      %v5261 = vunpack.c.l.b16 %v1775
      %v5262 = vunpack.c.l.b16 %v1776
      %v5263 = vunpack.c.l.b16 %v1777
      %v5264 = vunpack.c.l.b16 %v1778
      %v5265 = vunpack.c.l.b16 %v1779
      %v5266 = vunpack.c.l.b16 %v1780
      %v5267 = vunpack.c.l.b16 %v1781
      %v5268 = vunpack.c.l.b16 %v1782
      %v5269 = vunpack.c.l.b16 %v1783
      %v5270 = vunpack.c.l.b16 %v1784
      %v5271 = vunpack.c.l.b16 %v1785
      %v5272 = vunpack.c.l.b16 %v1786
      %v5273 = vunpack.c.l.b16 %v1787
      %v5274 = vunpack.c.l.b16 %v1788
      %v5275 = vunpack.c.l.b16 %v1789
      %v5276 = vunpack.c.l.b16 %v1790
      %v5277 = vunpack.c.l.b16 %v1791
      %v5278 = vunpack.c.l.b16 %v1792
      %v5279 = vunpack.c.l.b16 %v1793
      %v5280 = vunpack.c.l.b16 %v1794
      %v5281 = vunpack.c.l.b16 %v1795
      %v5282 = vunpack.c.l.b16 %v1796
      %v5283 = vunpack.c.l.b16 %v1797
      %v5284 = vunpack.c.l.b16 %v1798
      %v5285 = vunpack.c.l.b16 %v1799
      %v5286 = vunpack.c.l.b16 %v1800
      %v5287 = vunpack.c.l.b16 %v1801
      %v5288 = vunpack.c.l.b16 %v1802
      %v5289 = vunpack.c.l.b16 %v1803
      %v5290 = vunpack.c.l.b16 %v1804
      %v5291 = vunpack.c.l.b16 %v1805
      %v5292 = vunpack.c.l.b16 %v1806
      %v5293 = vunpack.c.l.b16 %v1807
      %v5294 = vunpack.c.l.b16 %v1808
      %v5295 = vunpack.c.l.b16 %v1809
      %v5296 = vunpack.c.l.b16 %v1810
      %v5297 = vunpack.c.l.b16 %v1811
      %v5298 = vunpack.c.l.b16 %v1812
      %v5299 = vunpack.c.l.b16 %v1813
      %v5300 = vunpack.c.l.b16 %v1814
      %v5301 = vunpack.c.l.b16 %v1815
      %v5302 = vunpack.c.l.b16 %v1816
      %v5303 = vunpack.c.l.b16 %v1817
      %v5304 = vunpack.c.l.b16 %v1818
      %v5305 = vunpack.c.l.b16 %v1819
      %v5306 = vunpack.c.l.b16 %v1820
      %v5307 = vunpack.c.l.b16 %v1821
      %v5308 = vunpack.c.l.b16 %v1822
      %v5309 = vunpack.c.l.b16 %v1823
      %v5310 = vunpack.c.l.b16 %v1824
      %v5311 = vunpack.c.l.b16 %v1825
      %v5312 = vunpack.c.l.b16 %v1826
      %v5313 = vunpack.c.l.b16 %v1827
      %v5314 = vunpack.c.l.b16 %v1828
      %v5315 = vunpack.c.l.b16 %v1829
      %v5316 = vunpack.c.l.b16 %v1830
      %v5317 = vunpack.c.l.b16 %v1831
      %v5318 = vunpack.c.l.b16 %v1832
      %v5319 = vunpack.c.l.b16 %v1833
      %v5320 = vunpack.c.l.b16 %v1834
      %v5321 = vunpack.c.l.b16 %v1835
      %v5322 = vunpack.c.l.b16 %v1836
      %v5323 = vunpack.c.l.b16 %v1837
      %v5324 = vunpack.c.l.b16 %v1838
      %v5325 = vunpack.c.l.b16 %v1839
      %v5326 = vunpack.c.l.b16 %v1840
      %v5327 = vunpack.c.l.b16 %v1841
      %v5328 = vunpack.c.l.b16 %v1842
      %v5329 = vunpack.c.l.b16 %v1843
      %v5330 = vunpack.c.l.b16 %v1844
      %v5331 = vunpack.c.l.b16 %v1845
      %v5332 = vunpack.c.l.b16 %v1846
      %v5333 = vunpack.c.l.b16 %v1847
      %v5334 = vunpack.c.l.b16 %v1848
      %v5335 = vunpack.c.l.b16 %v1849
      %v5336 = vunpack.c.l.b16 %v1850
      %v5337 = vunpack.c.l.b16 %v1851
      %v5338 = vunpack.c.l.b16 %v1852
      %v5339 = vunpack.c.l.b16 %v1853
      %v5340 = vunpack.c.l.b16 %v1854
      %v5341 = vunpack.c.l.b16 %v1855
      %v5342 = vunpack.c.l.b16 %v1856
      %v5343 = vunpack.c.l.b16 %v1857
      %v5344 = vunpack.c.l.b16 %v1858
      %v5345 = vunpack.c.l.b16 %v1859
      %v5346 = vunpack.c.l.b16 %v1860
      %v5347 = vunpack.c.l.b16 %v1861
      %v5348 = vunpack.c.l.b16 %v1862
      %v5349 = vunpack.c.l.b16 %v1863
      %v5350 = vunpack.c.l.b16 %v1864
      %v5351 = vunpack.c.l.b16 %v1865
      %v5352 = vunpack.c.l.b16 %v1866
      %v5353 = vunpack.c.l.b16 %v1867
      %v5354 = vunpack.c.l.b16 %v1868
      %v5355 = vunpack.c.l.b16 %v1869
      %v5356 = vunpack.c.l.b16 %v1870
      %v5357 = vunpack.c.l.b16 %v1871
      %v5358 = vunpack.c.l.b16 %v1872
      %v5359 = vunpack.c.l.b16 %v1873
      %v5360 = vunpack.c.l.b16 %v1874
      %v5361 = vunpack.c.l.b16 %v1875
      %v5362 = vunpack.c.l.b16 %v1876
      %v5363 = vunpack.c.l.b16 %v1877
      %v5364 = vunpack.c.l.b16 %v1878
      %v5365 = vunpack.c.l.b16 %v1879
      %v5366 = vunpack.c.l.b16 %v1880
      %v5367 = vunpack.c.l.b16 %v1881
      %v5368 = vunpack.c.l.b16 %v1882
      %v5369 = vunpack.c.l.b16 %v1883
      %v5370 = vunpack.c.l.b16 %v1884
      %v5371 = vunpack.c.l.b16 %v1885
      %v5372 = vunpack.c.l.b16 %v1886
      %v5373 = vunpack.c.l.b16 %v1887
      %v5374 = vunpack.c.l.b16 %v1888
      %v5375 = vunpack.c.l.b16 %v1889
      %v5376 = vunpack.c.l.b16 %v1890
      %v5377 = vunpack.c.l.b16 %v1891
      %v5378 = vunpack.c.l.b16 %v1892
      %v5379 = vunpack.c.l.b16 %v1893
      %v5380 = vunpack.c.l.b16 %v1894
      %v5381 = vunpack.c.l.b16 %v1895
      %v5382 = vunpack.c.l.b16 %v1896
      %v5383 = vunpack.c.l.b16 %v1897
      %v5384 = vunpack.c.l.b16 %v1898
      %v5385 = vunpack.c.l.b16 %v1899
      %v5386 = vunpack.c.l.b16 %v1900
      %v5387 = vunpack.c.l.b16 %v1901
      %v5388 = vunpack.c.l.b16 %v1902
      %v5389 = vunpack.c.l.b16 %v1903
      %v5390 = vunpack.c.l.b16 %v1904
      %v5391 = vunpack.c.l.b16 %v1905
      %v5392 = vunpack.c.l.b16 %v1906
      %v5393 = vunpack.c.l.b16 %v1907
      %v5394 = vunpack.c.l.b16 %v1908
      %v5395 = vunpack.c.l.b16 %v1909
      %v5396 = vunpack.c.l.b16 %v1910
      %v5397 = vunpack.c.l.b16 %v1911
      %v5398 = vunpack.c.l.b16 %v1912
      %v5399 = vunpack.c.l.b16 %v1913
      %v5400 = vunpack.c.l.b16 %v1914
      %v5401 = vunpack.c.l.b16 %v1915
      %v5402 = vunpack.c.l.b16 %v1916
      %v5403 = vunpack.c.l.b16 %v1917
      %v5404 = vunpack.c.l.b16 %v1918
      %v5405 = vunpack.c.l.b16 %v1919
      %v5406 = vunpack.c.l.b16 %v1920
      %v5407 = vunpack.c.l.b16 %v1921
      %v5408 = vunpack.c.l.b16 %v1922
      %v5409 = vunpack.c.l.b16 %v1923
      %v5410 = vunpack.c.l.b16 %v1924
      %v5411 = vunpack.c.l.b16 %v1925
      %v5412 = vunpack.c.l.b16 %v1926
      %v5413 = vunpack.c.l.b16 %v1927
      %v5414 = vunpack.c.l.b16 %v1928
      %v5415 = vunpack.c.l.b16 %v1929
      %v5416 = vunpack.c.l.b16 %v1930
      %v5417 = vunpack.c.l.b16 %v1931
      %v5418 = vunpack.c.l.b16 %v1932
      %v5419 = vunpack.c.l.b16 %v1933
      %v5420 = vunpack.c.l.b16 %v1934
      %v5421 = vunpack.c.l.b16 %v1935
      %v5422 = vunpack.c.l.b16 %v1936
      %v5423 = vunpack.c.l.b16 %v1937
      %v5424 = vunpack.c.l.b16 %v1938
      %v5425 = vpack.c.b16 %v3858, %v3857
      %v5426 = vpack.c.b16 %v3860, %v3859
      %v5427 = vpack.c.b16 %v3862, %v3861
      %v5428 = vpack.c.b16 %v3864, %v3863
      %v5429 = vpack.c.b16 %v3866, %v3865
      %v5430 = vpack.c.b16 %v3868, %v3867
      %v5431 = vpack.c.b16 %v3870, %v3869
      %v5432 = vpack.c.b16 %v3872, %v3871
      %v5433 = vpack.c.b16 %v3874, %v3873
      %v5434 = vpack.c.b16 %v3876, %v3875
      %v5435 = vpack.c.b16 %v3878, %v3877
      %v5436 = vpack.c.b16 %v3880, %v3879
      %v5437 = vpack.c.b16 %v3882, %v3881
      %v5438 = vpack.c.b16 %v3884, %v3883
      %v5439 = vpack.c.b16 %v3886, %v3885
      %v5440 = vpack.c.b16 %v3888, %v3887
      %v5441 = vpack.c.b16 %v3890, %v3889
      %v5442 = vpack.c.b16 %v3892, %v3891
      %v5443 = vpack.c.b16 %v3894, %v3893
      %v5444 = vpack.c.b16 %v3896, %v3895
      %v5445 = vpack.c.b16 %v3898, %v3897
      %v5446 = vpack.c.b16 %v3900, %v3899
      %v5447 = vpack.c.b16 %v3902, %v3901
      %v5448 = vpack.c.b16 %v3904, %v3903
      %v5449 = vpack.c.b16 %v3906, %v3905
      %v5450 = vpack.c.b16 %v3908, %v3907
      %v5451 = vpack.c.b16 %v3910, %v3909
      %v5452 = vpack.c.b16 %v3912, %v3911
      %v5453 = vpack.c.b16 %v3914, %v3913
      %v5454 = vpack.c.b16 %v3916, %v3915
      %v5455 = vpack.c.b16 %v3918, %v3917
      %v5456 = vpack.c.b16 %v3920, %v3919
      %v5457 = vpack.c.b16 %v3922, %v3921
      %v5458 = vpack.c.b16 %v3924, %v3923
      %v5459 = vpack.c.b16 %v3926, %v3925
      %v5460 = vpack.c.b16 %v3928, %v3927
      %v5461 = vpack.c.b16 %v3930, %v3929
      %v5462 = vpack.c.b16 %v3932, %v3931
      %v5463 = vpack.c.b16 %v3934, %v3933
      %v5464 = vpack.c.b16 %v3936, %v3935
      %v5465 = vpack.c.b16 %v3938, %v3937
      %v5466 = vpack.c.b16 %v3940, %v3939
      %v5467 = vpack.c.b16 %v3942, %v3941
      %v5468 = vpack.c.b16 %v3944, %v3943
      %v5469 = vpack.c.b16 %v3946, %v3945
      %v5470 = vpack.c.b16 %v3948, %v3947
      %v5471 = vpack.c.b16 %v3950, %v3949
      %v5472 = vpack.c.b16 %v3952, %v3951
      %v5473 = vpack.c.b16 %v3954, %v3953
      %v5474 = vpack.c.b16 %v3956, %v3955
      %v5475 = vpack.c.b16 %v3958, %v3957
      %v5476 = vpack.c.b16 %v3960, %v3959
      %v5477 = vpack.c.b16 %v3962, %v3961
      %v5478 = vpack.c.b16 %v3964, %v3963
      %v5479 = vpack.c.b16 %v3966, %v3965
      %v5480 = vpack.c.b16 %v3968, %v3967
      %v5481 = vpack.c.b16 %v3970, %v3969
      %v5482 = vpack.c.b16 %v3972, %v3971
      %v5483 = vpack.c.b16 %v3974, %v3973
      %v5484 = vpack.c.b16 %v3976, %v3975
      %v5485 = vpack.c.b16 %v3978, %v3977
      %v5486 = vpack.c.b16 %v3980, %v3979
      %v5487 = vpack.c.b16 %v3982, %v3981
      %v5488 = vpack.c.b16 %v3984, %v3983
      %v5489 = vpack.c.b16 %v3986, %v3985
      %v5490 = vpack.c.b16 %v3988, %v3987
      %v5491 = vpack.c.b16 %v3990, %v3989
      %v5492 = vpack.c.b16 %v3992, %v3991
      %v5493 = vpack.c.b16 %v3994, %v3993
      %v5494 = vpack.c.b16 %v3996, %v3995
      %v5495 = vpack.c.b16 %v3998, %v3997
      %v5496 = vpack.c.b16 %v4000, %v3999
      %v5497 = vpack.c.b16 %v4002, %v4001
      %v5498 = vpack.c.b16 %v4004, %v4003
      %v5499 = vpack.c.b16 %v4006, %v4005
      %v5500 = vpack.c.b16 %v4008, %v4007
      %v5501 = vpack.c.b16 %v4010, %v4009
      %v5502 = vpack.c.b16 %v4012, %v4011
      %v5503 = vpack.c.b16 %v4014, %v4013
      %v5504 = vpack.c.b16 %v4016, %v4015
      %v5505 = vpack.c.b16 %v4018, %v4017
      %v5506 = vpack.c.b16 %v4020, %v4019
      %v5507 = vpack.c.b16 %v4022, %v4021
      %v5508 = vpack.c.b16 %v4024, %v4023
      %v5509 = vpack.c.b16 %v4026, %v4025
      %v5510 = vpack.c.b16 %v4028, %v4027
      %v5511 = vpack.c.b16 %v4030, %v4029
      %v5512 = vpack.c.b16 %v4032, %v4031
      %v5513 = vpack.c.b16 %v4034, %v4033
      %v5514 = vpack.c.b16 %v4036, %v4035
      %v5515 = vpack.c.b16 %v4038, %v4037
      %v5516 = vpack.c.b16 %v4040, %v4039
      %v5517 = vpack.c.b16 %v4042, %v4041
      %v5518 = vpack.c.b16 %v4044, %v4043
      %v5519 = vpack.c.b16 %v4046, %v4045
      %v5520 = vpack.c.b16 %v4048, %v4047
      %v5521 = vpack.c.b16 %v4050, %v4049
      %v5522 = vpack.c.b16 %v4052, %v4051
      %v5523 = vpack.c.b16 %v4054, %v4053
      %v5524 = vpack.c.b16 %v4056, %v4055
      %v5525 = vpack.c.b16 %v4058, %v4057
      %v5526 = vpack.c.b16 %v4060, %v4059
      %v5527 = vpack.c.b16 %v4062, %v4061
      %v5528 = vpack.c.b16 %v4064, %v4063
      %v5529 = vpack.c.b16 %v4066, %v4065
      %v5530 = vpack.c.b16 %v4068, %v4067
      %v5531 = vpack.c.b16 %v4070, %v4069
      %v5532 = vpack.c.b16 %v4072, %v4071
      %v5533 = vpack.c.b16 %v4074, %v4073
      %v5534 = vpack.c.b16 %v4076, %v4075
      %v5535 = vpack.c.b16 %v4078, %v4077
      %v5536 = vpack.c.b16 %v4080, %v4079
      %v5537 = vpack.c.b16 %v4082, %v4081
      %v5538 = vpack.c.b16 %v4084, %v4083
      %v5539 = vpack.c.b16 %v4086, %v4085
      %v5540 = vpack.c.b16 %v4088, %v4087
      %v5541 = vpack.c.b16 %v4090, %v4089
      %v5542 = vpack.c.b16 %v4092, %v4091
      %v5543 = vpack.c.b16 %v4094, %v4093
      %v5544 = vpack.c.b16 %v4096, %v4095
      %v5545 = vpack.c.b16 %v4098, %v4097
      %v5546 = vpack.c.b16 %v4100, %v4099
      %v5547 = vpack.c.b16 %v4102, %v4101
      %v5548 = vpack.c.b16 %v4104, %v4103
      %v5549 = vpack.c.b16 %v4106, %v4105
      %v5550 = vpack.c.b16 %v4108, %v4107
      %v5551 = vpack.c.b16 %v4110, %v4109
      %v5552 = vpack.c.b16 %v4112, %v4111
      %v5553 = vpack.c.b16 %v4114, %v4113
      %v5554 = vpack.c.b16 %v4116, %v4115
      %v5555 = vpack.c.b16 %v4118, %v4117
      %v5556 = vpack.c.b16 %v4120, %v4119
      %v5557 = vpack.c.b16 %v4122, %v4121
      %v5558 = vpack.c.b16 %v4124, %v4123
      %v5559 = vpack.c.b16 %v4126, %v4125
      %v5560 = vpack.c.b16 %v4128, %v4127
      %v5561 = vpack.c.b16 %v4130, %v4129
      %v5562 = vpack.c.b16 %v4132, %v4131
      %v5563 = vpack.c.b16 %v4134, %v4133
      %v5564 = vpack.c.b16 %v4136, %v4135
      %v5565 = vpack.c.b16 %v4138, %v4137
      %v5566 = vpack.c.b16 %v4140, %v4139
      %v5567 = vpack.c.b16 %v4142, %v4141
      %v5568 = vpack.c.b16 %v4144, %v4143
      %v5569 = vpack.c.b16 %v4146, %v4145
      %v5570 = vpack.c.b16 %v4148, %v4147
      %v5571 = vpack.c.b16 %v4150, %v4149
      %v5572 = vpack.c.b16 %v4152, %v4151
      %v5573 = vpack.c.b16 %v4154, %v4153
      %v5574 = vpack.c.b16 %v4156, %v4155
      %v5575 = vpack.c.b16 %v4158, %v4157
      %v5576 = vpack.c.b16 %v4160, %v4159
      %v5577 = vpack.c.b16 %v4162, %v4161
      %v5578 = vpack.c.b16 %v4164, %v4163
      %v5579 = vpack.c.b16 %v4166, %v4165
      %v5580 = vpack.c.b16 %v4168, %v4167
      %v5581 = vpack.c.b16 %v4170, %v4169
      %v5582 = vpack.c.b16 %v4172, %v4171
      %v5583 = vpack.c.b16 %v4174, %v4173
      %v5584 = vpack.c.b16 %v4176, %v4175
      %v5585 = vpack.c.b16 %v4178, %v4177
      %v5586 = vpack.c.b16 %v4180, %v4179
      %v5587 = vpack.c.b16 %v4182, %v4181
      %v5588 = vpack.c.b16 %v4184, %v4183
      %v5589 = vpack.c.b16 %v4186, %v4185
      %v5590 = vpack.c.b16 %v4188, %v4187
      %v5591 = vpack.c.b16 %v4190, %v4189
      %v5592 = vpack.c.b16 %v4192, %v4191
      %v5593 = vpack.c.b16 %v4194, %v4193
      %v5594 = vpack.c.b16 %v4196, %v4195
      %v5595 = vpack.c.b16 %v4198, %v4197
      %v5596 = vpack.c.b16 %v4200, %v4199
      %v5597 = vpack.c.b16 %v4202, %v4201
      %v5598 = vpack.c.b16 %v4204, %v4203
      %v5599 = vpack.c.b16 %v4206, %v4205
      %v5600 = vpack.c.b16 %v4208, %v4207
      %v5601 = vpack.c.b16 %v4210, %v4209
      %v5602 = vpack.c.b16 %v4212, %v4211
      %v5603 = vpack.c.b16 %v4214, %v4213
      %v5604 = vpack.c.b16 %v4216, %v4215
      %v5605 = vpack.c.b16 %v4218, %v4217
      %v5606 = vpack.c.b16 %v4220, %v4219
      %v5607 = vpack.c.b16 %v4222, %v4221
      %v5608 = vpack.c.b16 %v4224, %v4223
      %v5609 = vpack.c.b16 %v4226, %v4225
      %v5610 = vpack.c.b16 %v4228, %v4227
      %v5611 = vpack.c.b16 %v4230, %v4229
      %v5612 = vpack.c.b16 %v4232, %v4231
      %v5613 = vpack.c.b16 %v4234, %v4233
      %v5614 = vpack.c.b16 %v4236, %v4235
      %v5615 = vpack.c.b16 %v4238, %v4237
      %v5616 = vpack.c.b16 %v4240, %v4239
      %v5617 = vpack.c.b16 %v4242, %v4241
      %v5618 = vpack.c.b16 %v4244, %v4243
      %v5619 = vpack.c.b16 %v4246, %v4245
      %v5620 = vpack.c.b16 %v4248, %v4247
      %v5621 = vpack.c.b16 %v4250, %v4249
      %v5622 = vpack.c.b16 %v4252, %v4251
      %v5623 = vpack.c.b16 %v4254, %v4253
      %v5624 = vpack.c.b16 %v4256, %v4255
      %v5625 = vpack.c.b16 %v4258, %v4257
      %v5626 = vpack.c.b16 %v4260, %v4259
      %v5627 = vpack.c.b16 %v4262, %v4261
      %v5628 = vpack.c.b16 %v4264, %v4263
      %v5629 = vpack.c.b16 %v4266, %v4265
      %v5630 = vpack.c.b16 %v4268, %v4267
      %v5631 = vpack.c.b16 %v4270, %v4269
      %v5632 = vpack.c.b16 %v4272, %v4271
      %v5633 = vpack.c.b16 %v4274, %v4273
      %v5634 = vpack.c.b16 %v4276, %v4275
      %v5635 = vpack.c.b16 %v4278, %v4277
      %v5636 = vpack.c.b16 %v4280, %v4279
      %v5637 = vpack.c.b16 %v4282, %v4281
      %v5638 = vpack.c.b16 %v4284, %v4283
      %v5639 = vpack.c.b16 %v4286, %v4285
      %v5640 = vpack.c.b16 %v4288, %v4287
      %v5641 = vpack.c.b16 %v4290, %v4289
      %v5642 = vpack.c.b16 %v4292, %v4291
      %v5643 = vpack.c.b16 %v4294, %v4293
      %v5644 = vpack.c.b16 %v4296, %v4295
      %v5645 = vpack.c.b16 %v4298, %v4297
      %v5646 = vpack.c.b16 %v4300, %v4299
      %v5647 = vpack.c.b16 %v4302, %v4301
      %v5648 = vpack.c.b16 %v4304, %v4303
      %v5649 = vpack.c.b16 %v4306, %v4305
      %v5650 = vpack.c.b16 %v4308, %v4307
      %v5651 = vpack.c.b16 %v4310, %v4309
      %v5652 = vpack.c.b16 %v4312, %v4311
      %v5653 = vpack.c.b16 %v4314, %v4313
      %v5654 = vpack.c.b16 %v4316, %v4315
      %v5655 = vpack.c.b16 %v4318, %v4317
      %v5656 = vpack.c.b16 %v4320, %v4319
      %v5657 = vpack.c.b16 %v4322, %v4321
      %v5658 = vpack.c.b16 %v4324, %v4323
      %v5659 = vpack.c.b16 %v4326, %v4325
      %v5660 = vpack.c.b16 %v4328, %v4327
      %v5661 = vpack.c.b16 %v4330, %v4329
      %v5662 = vpack.c.b16 %v4332, %v4331
      %v5663 = vpack.c.b16 %v4334, %v4333
      %v5664 = vpack.c.b16 %v4336, %v4335
      %v5665 = vpack.c.b16 %v4338, %v4337
      %v5666 = vpack.c.b16 %v4340, %v4339
      %v5667 = vpack.c.b16 %v4342, %v4341
      %v5668 = vpack.c.b16 %v4344, %v4343
      %v5669 = vpack.c.b16 %v4346, %v4345
      %v5670 = vpack.c.b16 %v4348, %v4347
      %v5671 = vpack.c.b16 %v4350, %v4349
      %v5672 = vpack.c.b16 %v4352, %v4351
      %v5673 = vpack.c.b16 %v4354, %v4353
      %v5674 = vpack.c.b16 %v4356, %v4355
      %v5675 = vpack.c.b16 %v4358, %v4357
      %v5676 = vpack.c.b16 %v4360, %v4359
      %v5677 = vpack.c.b16 %v4362, %v4361
      %v5678 = vpack.c.b16 %v4364, %v4363
      %v5679 = vpack.c.b16 %v4366, %v4365
      %v5680 = vpack.c.b16 %v4368, %v4367
      %v5681 = vpack.c.b16 %v4370, %v4369
      %v5682 = vpack.c.b16 %v4372, %v4371
      %v5683 = vpack.c.b16 %v4374, %v4373
      %v5684 = vpack.c.b16 %v4376, %v4375
      %v5685 = vpack.c.b16 %v4378, %v4377
      %v5686 = vpack.c.b16 %v4380, %v4379
      %v5687 = vpack.c.b16 %v4382, %v4381
      %v5688 = vpack.c.b16 %v4384, %v4383
      %v5689 = vpack.c.b16 %v4386, %v4385
      %v5690 = vpack.c.b16 %v4388, %v4387
      %v5691 = vpack.c.b16 %v4390, %v4389
      %v5692 = vpack.c.b16 %v4392, %v4391
      %v5693 = vpack.c.b16 %v4394, %v4393
      %v5694 = vpack.c.b16 %v4396, %v4395
      %v5695 = vpack.c.b16 %v4398, %v4397
      %v5696 = vpack.c.b16 %v4400, %v4399
      %v5697 = vpack.c.b16 %v4402, %v4401
      %v5698 = vpack.c.b16 %v4404, %v4403
      %v5699 = vpack.c.b16 %v4406, %v4405
      %v5700 = vpack.c.b16 %v4408, %v4407
      %v5701 = vpack.c.b16 %v4410, %v4409
      %v5702 = vpack.c.b16 %v4412, %v4411
      %v5703 = vpack.c.b16 %v4414, %v4413
      %v5704 = vpack.c.b16 %v4416, %v4415
      %v5705 = vpack.c.b16 %v4418, %v4417
      %v5706 = vpack.c.b16 %v4420, %v4419
      %v5707 = vpack.c.b16 %v4422, %v4421
      %v5708 = vpack.c.b16 %v4424, %v4423
      %v5709 = vpack.c.b16 %v4426, %v4425
      %v5710 = vpack.c.b16 %v4428, %v4427
      %v5711 = vpack.c.b16 %v4430, %v4429
      %v5712 = vpack.c.b16 %v4432, %v4431
      %v5713 = vpack.c.b16 %v4434, %v4433
      %v5714 = vpack.c.b16 %v4436, %v4435
      %v5715 = vpack.c.b16 %v4438, %v4437
      %v5716 = vpack.c.b16 %v4440, %v4439
      %v5717 = vpack.c.b16 %v4442, %v4441
      %v5718 = vpack.c.b16 %v4444, %v4443
      %v5719 = vpack.c.b16 %v4446, %v4445
      %v5720 = vpack.c.b16 %v4448, %v4447
      %v5721 = vpack.c.b16 %v4450, %v4449
      %v5722 = vpack.c.b16 %v4452, %v4451
      %v5723 = vpack.c.b16 %v4454, %v4453
      %v5724 = vpack.c.b16 %v4456, %v4455
      %v5725 = vpack.c.b16 %v4458, %v4457
      %v5726 = vpack.c.b16 %v4460, %v4459
      %v5727 = vpack.c.b16 %v4462, %v4461
      %v5728 = vpack.c.b16 %v4464, %v4463
      %v5729 = vpack.c.b16 %v4466, %v4465
      %v5730 = vpack.c.b16 %v4468, %v4467
      %v5731 = vpack.c.b16 %v4470, %v4469
      %v5732 = vpack.c.b16 %v4472, %v4471
      %v5733 = vpack.c.b16 %v4474, %v4473
      %v5734 = vpack.c.b16 %v4476, %v4475
      %v5735 = vpack.c.b16 %v4478, %v4477
      %v5736 = vpack.c.b16 %v4480, %v4479
      %v5737 = vpack.c.b16 %v4482, %v4481
      %v5738 = vpack.c.b16 %v4484, %v4483
      %v5739 = vpack.c.b16 %v4486, %v4485
      %v5740 = vpack.c.b16 %v4488, %v4487
      %v5741 = vpack.c.b16 %v4490, %v4489
      %v5742 = vpack.c.b16 %v4492, %v4491
      %v5743 = vpack.c.b16 %v4494, %v4493
      %v5744 = vpack.c.b16 %v4496, %v4495
      %v5745 = vpack.c.b16 %v4498, %v4497
      %v5746 = vpack.c.b16 %v4500, %v4499
      %v5747 = vpack.c.b16 %v4502, %v4501
      %v5748 = vpack.c.b16 %v4504, %v4503
      %v5749 = vpack.c.b16 %v4506, %v4505
      %v5750 = vpack.c.b16 %v4508, %v4507
      %v5751 = vpack.c.b16 %v4510, %v4509
      %v5752 = vpack.c.b16 %v4512, %v4511
      %v5753 = vpack.c.b16 %v4514, %v4513
      %v5754 = vpack.c.b16 %v4516, %v4515
      %v5755 = vpack.c.b16 %v4518, %v4517
      %v5756 = vpack.c.b16 %v4520, %v4519
      %v5757 = vpack.c.b16 %v4522, %v4521
      %v5758 = vpack.c.b16 %v4524, %v4523
      %v5759 = vpack.c.b16 %v4526, %v4525
      %v5760 = vpack.c.b16 %v4528, %v4527
      %v5761 = vpack.c.b16 %v4530, %v4529
      %v5762 = vpack.c.b16 %v4532, %v4531
      %v5763 = vpack.c.b16 %v4534, %v4533
      %v5764 = vpack.c.b16 %v4536, %v4535
      %v5765 = vpack.c.b16 %v4538, %v4537
      %v5766 = vpack.c.b16 %v4540, %v4539
      %v5767 = vpack.c.b16 %v4542, %v4541
      %v5768 = vpack.c.b16 %v4544, %v4543
      %v5769 = vpack.c.b16 %v4546, %v4545
      %v5770 = vpack.c.b16 %v4548, %v4547
      %v5771 = vpack.c.b16 %v4550, %v4549
      %v5772 = vpack.c.b16 %v4552, %v4551
      %v5773 = vpack.c.b16 %v4554, %v4553
      %v5774 = vpack.c.b16 %v4556, %v4555
      %v5775 = vpack.c.b16 %v4558, %v4557
      %v5776 = vpack.c.b16 %v4560, %v4559
      %v5777 = vpack.c.b16 %v4562, %v4561
      %v5778 = vpack.c.b16 %v4564, %v4563
      %v5779 = vpack.c.b16 %v4566, %v4565
      %v5780 = vpack.c.b16 %v4568, %v4567
      %v5781 = vpack.c.b16 %v4570, %v4569
      %v5782 = vpack.c.b16 %v4572, %v4571
      %v5783 = vpack.c.b16 %v4574, %v4573
      %v5784 = vpack.c.b16 %v4576, %v4575
      %v5785 = vpack.c.b16 %v4578, %v4577
      %v5786 = vpack.c.b16 %v4580, %v4579
      %v5787 = vpack.c.b16 %v4582, %v4581
      %v5788 = vpack.c.b16 %v4584, %v4583
      %v5789 = vpack.c.b16 %v4586, %v4585
      %v5790 = vpack.c.b16 %v4588, %v4587
      %v5791 = vpack.c.b16 %v4590, %v4589
      %v5792 = vpack.c.b16 %v4592, %v4591
      %v5793 = vpack.c.b16 %v4594, %v4593
      %v5794 = vpack.c.b16 %v4596, %v4595
      %v5795 = vpack.c.b16 %v4598, %v4597
      %v5796 = vpack.c.b16 %v4600, %v4599
      %v5797 = vpack.c.b16 %v4602, %v4601
      %v5798 = vpack.c.b16 %v4604, %v4603
      %v5799 = vpack.c.b16 %v4606, %v4605
      %v5800 = vpack.c.b16 %v4608, %v4607
      %v5801 = vpack.c.b16 %v4610, %v4609
      %v5802 = vpack.c.b16 %v4612, %v4611
      %v5803 = vpack.c.b16 %v4614, %v4613
      %v5804 = vpack.c.b16 %v4616, %v4615
      %v5805 = vpack.c.b16 %v4618, %v4617
      %v5806 = vpack.c.b16 %v4620, %v4619
      %v5807 = vpack.c.b16 %v4622, %v4621
      %v5808 = vpack.c.b16 %v4624, %v4623
      %v5809 = vpack.c.b16 %v4626, %v4625
      %v5810 = vpack.c.b16 %v4628, %v4627
      %v5811 = vpack.c.b16 %v4630, %v4629
      %v5812 = vpack.c.b16 %v4632, %v4631
      %v5813 = vpack.c.b16 %v4634, %v4633
      %v5814 = vpack.c.b16 %v4636, %v4635
      %v5815 = vpack.c.b16 %v4638, %v4637
      %v5816 = vpack.c.b16 %v4640, %v4639
      %v5817 = vpack.c.b16 %v4642, %v4641
      %v5818 = vpack.c.b16 %v4644, %v4643
      %v5819 = vpack.c.b16 %v4646, %v4645
      %v5820 = vpack.c.b16 %v4648, %v4647
      %v5821 = vpack.c.b16 %v4650, %v4649
      %v5822 = vpack.c.b16 %v4652, %v4651
      %v5823 = vpack.c.b16 %v4654, %v4653
      %v5824 = vpack.c.b16 %v4656, %v4655
      %v5825 = vpack.c.b16 %v4658, %v4657
      %v5826 = vpack.c.b16 %v4660, %v4659
      %v5827 = vpack.c.b16 %v4662, %v4661
      %v5828 = vpack.c.b16 %v4664, %v4663
      %v5829 = vpack.c.b16 %v4666, %v4665
      %v5830 = vpack.c.b16 %v4668, %v4667
      %v5831 = vpack.c.b16 %v4670, %v4669
      %v5832 = vpack.c.b16 %v4672, %v4671
      %v5833 = vpack.c.b16 %v4674, %v4673
      %v5834 = vpack.c.b16 %v4676, %v4675
      %v5835 = vpack.c.b16 %v4678, %v4677
      %v5836 = vpack.c.b16 %v4680, %v4679
      %v5837 = vpack.c.b16 %v4682, %v4681
      %v5838 = vpack.c.b16 %v4684, %v4683
      %v5839 = vpack.c.b16 %v4686, %v4685
      %v5840 = vpack.c.b16 %v4688, %v4687
      %v5841 = vpack.c.b16 %v4690, %v4689
      %v5842 = vpack.c.b16 %v4692, %v4691
      %v5843 = vpack.c.b16 %v4694, %v4693
      %v5844 = vpack.c.b16 %v4696, %v4695
      %v5845 = vpack.c.b16 %v4698, %v4697
      %v5846 = vpack.c.b16 %v4700, %v4699
      %v5847 = vpack.c.b16 %v4702, %v4701
      %v5848 = vpack.c.b16 %v4704, %v4703
      %v5849 = vpack.c.b16 %v4706, %v4705
      %v5850 = vpack.c.b16 %v4708, %v4707
      %v5851 = vpack.c.b16 %v4710, %v4709
      %v5852 = vpack.c.b16 %v4712, %v4711
      %v5853 = vpack.c.b16 %v4714, %v4713
      %v5854 = vpack.c.b16 %v4716, %v4715
      %v5855 = vpack.c.b16 %v4718, %v4717
      %v5856 = vpack.c.b16 %v4720, %v4719
      %v5857 = vpack.c.b16 %v4722, %v4721
      %v5858 = vpack.c.b16 %v4724, %v4723
      %v5859 = vpack.c.b16 %v4726, %v4725
      %v5860 = vpack.c.b16 %v4728, %v4727
      %v5861 = vpack.c.b16 %v4730, %v4729
      %v5862 = vpack.c.b16 %v4732, %v4731
      %v5863 = vpack.c.b16 %v4734, %v4733
      %v5864 = vpack.c.b16 %v4736, %v4735
      %v5865 = vpack.c.b16 %v4738, %v4737
      %v5866 = vpack.c.b16 %v4740, %v4739
      %v5867 = vpack.c.b16 %v4742, %v4741
      %v5868 = vpack.c.b16 %v4744, %v4743
      %v5869 = vpack.c.b16 %v4746, %v4745
      %v5870 = vpack.c.b16 %v4748, %v4747
      %v5871 = vpack.c.b16 %v4750, %v4749
      %v5872 = vpack.c.b16 %v4752, %v4751
      %v5873 = vpack.c.b16 %v4754, %v4753
      %v5874 = vpack.c.b16 %v4756, %v4755
      %v5875 = vpack.c.b16 %v4758, %v4757
      %v5876 = vpack.c.b16 %v4760, %v4759
      %v5877 = vpack.c.b16 %v4762, %v4761
      %v5878 = vpack.c.b16 %v4764, %v4763
      %v5879 = vpack.c.b16 %v4766, %v4765
      %v5880 = vpack.c.b16 %v4768, %v4767
      %v5881 = vpack.c.b16 %v4770, %v4769
      %v5882 = vpack.c.b16 %v4772, %v4771
      %v5883 = vpack.c.b16 %v4774, %v4773
      %v5884 = vpack.c.b16 %v4776, %v4775
      %v5885 = vpack.c.b16 %v4778, %v4777
      %v5886 = vpack.c.b16 %v4780, %v4779
      %v5887 = vpack.c.b16 %v4782, %v4781
      %v5888 = vpack.c.b16 %v4784, %v4783
      %v5889 = vpack.c.b16 %v4786, %v4785
      %v5890 = vpack.c.b16 %v4788, %v4787
      %v5891 = vpack.c.b16 %v4790, %v4789
      %v5892 = vpack.c.b16 %v4792, %v4791
      %v5893 = vpack.c.b16 %v4794, %v4793
      %v5894 = vpack.c.b16 %v4796, %v4795
      %v5895 = vpack.c.b16 %v4798, %v4797
      %v5896 = vpack.c.b16 %v4800, %v4799
      %v5897 = vpack.c.b16 %v4802, %v4801
      %v5898 = vpack.c.b16 %v4804, %v4803
      %v5899 = vpack.c.b16 %v4806, %v4805
      %v5900 = vpack.c.b16 %v4808, %v4807
      %v5901 = vpack.c.b16 %v4810, %v4809
      %v5902 = vpack.c.b16 %v4812, %v4811
      %v5903 = vpack.c.b16 %v4814, %v4813
      %v5904 = vpack.c.b16 %v4816, %v4815
      %v5905 = vpack.c.b16 %v4818, %v4817
      %v5906 = vpack.c.b16 %v4820, %v4819
      %v5907 = vpack.c.b16 %v4822, %v4821
      %v5908 = vpack.c.b16 %v4824, %v4823
      %v5909 = vpack.c.b16 %v4826, %v4825
      %v5910 = vpack.c.b16 %v4828, %v4827
      %v5911 = vpack.c.b16 %v4830, %v4829
      %v5912 = vpack.c.b16 %v4832, %v4831
      %v5913 = vpack.c.b16 %v4834, %v4833
      %v5914 = vpack.c.b16 %v4836, %v4835
      %v5915 = vpack.c.b16 %v4838, %v4837
      %v5916 = vpack.c.b16 %v4840, %v4839
      %v5917 = vpack.c.b16 %v4842, %v4841
      %v5918 = vpack.c.b16 %v4844, %v4843
      %v5919 = vpack.c.b16 %v4846, %v4845
      %v5920 = vpack.c.b16 %v4848, %v4847
      %v5921 = vpack.c.b16 %v4850, %v4849
      %v5922 = vpack.c.b16 %v4852, %v4851
      %v5923 = vpack.c.b16 %v4854, %v4853
      %v5924 = vpack.c.b16 %v4856, %v4855
      %v5925 = vpack.c.b16 %v4858, %v4857
      %v5926 = vpack.c.b16 %v4860, %v4859
      %v5927 = vpack.c.b16 %v4862, %v4861
      %v5928 = vpack.c.b16 %v4864, %v4863
      %v5929 = vpack.c.b16 %v4866, %v4865
      %v5930 = vpack.c.b16 %v4868, %v4867
      %v5931 = vpack.c.b16 %v4870, %v4869
      %v5932 = vpack.c.b16 %v4872, %v4871
      %v5933 = vpack.c.b16 %v4874, %v4873
      %v5934 = vpack.c.b16 %v4876, %v4875
      %v5935 = vpack.c.b16 %v4878, %v4877
      %v5936 = vpack.c.b16 %v4880, %v4879
      %v5937 = vpack.c.b16 %v4882, %v4881
      %v5938 = vpack.c.b16 %v4884, %v4883
      %v5939 = vpack.c.b16 %v4886, %v4885
      %v5940 = vpack.c.b16 %v4888, %v4887
      %v5941 = vpack.c.b16 %v4890, %v4889
      %v5942 = vpack.c.b16 %v4892, %v4891
      %v5943 = vpack.c.b16 %v4894, %v4893
      %v5944 = vpack.c.b16 %v4896, %v4895
      %v5945 = vpack.c.b16 %v4898, %v4897
      %v5946 = vpack.c.b16 %v4900, %v4899
      %v5947 = vpack.c.b16 %v4902, %v4901
      %v5948 = vpack.c.b16 %v4904, %v4903
      %v5949 = vpack.c.b16 %v4906, %v4905
      %v5950 = vpack.c.b16 %v4908, %v4907
      %v5951 = vpack.c.b16 %v4910, %v4909
      %v5952 = vpack.c.b16 %v4912, %v4911
      %v5953 = vpack.c.b16 %v4914, %v4913
      %v5954 = vpack.c.b16 %v4916, %v4915
      %v5955 = vpack.c.b16 %v4918, %v4917
      %v5956 = vpack.c.b16 %v4920, %v4919
      %v5957 = vpack.c.b16 %v4922, %v4921
      %v5958 = vpack.c.b16 %v4924, %v4923
      %v5959 = vpack.c.b16 %v4926, %v4925
      %v5960 = vpack.c.b16 %v4928, %v4927
      %v5961 = vpack.c.b16 %v4930, %v4929
      %v5962 = vpack.c.b16 %v4932, %v4931
      %v5963 = vpack.c.b16 %v4934, %v4933
      %v5964 = vpack.c.b16 %v4936, %v4935
      %v5965 = vpack.c.b16 %v4938, %v4937
      %v5966 = vpack.c.b16 %v4940, %v4939
      %v5967 = vpack.c.b16 %v4942, %v4941
      %v5968 = vpack.c.b16 %v4944, %v4943
      %v5969 = vpack.c.b16 %v4946, %v4945
      %v5970 = vpack.c.b16 %v4948, %v4947
      %v5971 = vpack.c.b16 %v4950, %v4949
      %v5972 = vpack.c.b16 %v4952, %v4951
      %v5973 = vpack.c.b16 %v4954, %v4953
      %v5974 = vpack.c.b16 %v4956, %v4955
      %v5975 = vpack.c.b16 %v4958, %v4957
      %v5976 = vpack.c.b16 %v4960, %v4959
      %v5977 = vpack.c.b16 %v4962, %v4961
      %v5978 = vpack.c.b16 %v4964, %v4963
      %v5979 = vpack.c.b16 %v4966, %v4965
      %v5980 = vpack.c.b16 %v4968, %v4967
      %v5981 = vpack.c.b16 %v4970, %v4969
      %v5982 = vpack.c.b16 %v4972, %v4971
      %v5983 = vpack.c.b16 %v4974, %v4973
      %v5984 = vpack.c.b16 %v4976, %v4975
      %v5985 = vpack.c.b16 %v4978, %v4977
      %v5986 = vpack.c.b16 %v4980, %v4979
      %v5987 = vpack.c.b16 %v4982, %v4981
      %v5988 = vpack.c.b16 %v4984, %v4983
      %v5989 = vpack.c.b16 %v4986, %v4985
      %v5990 = vpack.c.b16 %v4988, %v4987
      %v5991 = vpack.c.b16 %v4990, %v4989
      %v5992 = vpack.c.b16 %v4992, %v4991
      %v5993 = vpack.c.b16 %v4994, %v4993
      %v5994 = vpack.c.b16 %v4996, %v4995
      %v5995 = vpack.c.b16 %v4998, %v4997
      %v5996 = vpack.c.b16 %v5000, %v4999
      %v5997 = vpack.c.b16 %v5002, %v5001
      %v5998 = vpack.c.b16 %v5004, %v5003
      %v5999 = vpack.c.b16 %v5006, %v5005
      %v6000 = vpack.c.b16 %v5008, %v5007
      %v6001 = vpack.c.b16 %v5010, %v5009
      %v6002 = vpack.c.b16 %v5012, %v5011
      %v6003 = vpack.c.b16 %v5014, %v5013
      %v6004 = vpack.c.b16 %v5016, %v5015
      %v6005 = vpack.c.b16 %v5018, %v5017
      %v6006 = vpack.c.b16 %v5020, %v5019
      %v6007 = vpack.c.b16 %v5022, %v5021
      %v6008 = vpack.c.b16 %v5024, %v5023
      %v6009 = vpack.c.b16 %v5026, %v5025
      %v6010 = vpack.c.b16 %v5028, %v5027
      %v6011 = vpack.c.b16 %v5030, %v5029
      %v6012 = vpack.c.b16 %v5032, %v5031
      %v6013 = vpack.c.b16 %v5034, %v5033
      %v6014 = vpack.c.b16 %v5036, %v5035
      %v6015 = vpack.c.b16 %v5038, %v5037
      %v6016 = vpack.c.b16 %v5040, %v5039
      %v6017 = vpack.c.b16 %v5042, %v5041
      %v6018 = vpack.c.b16 %v5044, %v5043
      %v6019 = vpack.c.b16 %v5046, %v5045
      %v6020 = vpack.c.b16 %v5048, %v5047
      %v6021 = vpack.c.b16 %v5050, %v5049
      %v6022 = vpack.c.b16 %v5052, %v5051
      %v6023 = vpack.c.b16 %v5054, %v5053
      %v6024 = vpack.c.b16 %v5056, %v5055
      %v6025 = vpack.c.b16 %v5058, %v5057
      %v6026 = vpack.c.b16 %v5060, %v5059
      %v6027 = vpack.c.b16 %v5062, %v5061
      %v6028 = vpack.c.b16 %v5064, %v5063
      %v6029 = vpack.c.b16 %v5066, %v5065
      %v6030 = vpack.c.b16 %v5068, %v5067
      %v6031 = vpack.c.b16 %v5070, %v5069
      %v6032 = vpack.c.b16 %v5072, %v5071
      %v6033 = vpack.c.b16 %v5074, %v5073
      %v6034 = vpack.c.b16 %v5076, %v5075
      %v6035 = vpack.c.b16 %v5078, %v5077
      %v6036 = vpack.c.b16 %v5080, %v5079
      %v6037 = vpack.c.b16 %v5082, %v5081
      %v6038 = vpack.c.b16 %v5084, %v5083
      %v6039 = vpack.c.b16 %v5086, %v5085
      %v6040 = vpack.c.b16 %v5088, %v5087
      %v6041 = vpack.c.b16 %v5090, %v5089
      %v6042 = vpack.c.b16 %v5092, %v5091
      %v6043 = vpack.c.b16 %v5094, %v5093
      %v6044 = vpack.c.b16 %v5096, %v5095
      %v6045 = vpack.c.b16 %v5098, %v5097
      %v6046 = vpack.c.b16 %v5100, %v5099
      %v6047 = vpack.c.b16 %v5102, %v5101
      %v6048 = vpack.c.b16 %v5104, %v5103
      %v6049 = vpack.c.b16 %v5106, %v5105
      %v6050 = vpack.c.b16 %v5108, %v5107
      %v6051 = vpack.c.b16 %v5110, %v5109
      %v6052 = vpack.c.b16 %v5112, %v5111
      %v6053 = vpack.c.b16 %v5114, %v5113
      %v6054 = vpack.c.b16 %v5116, %v5115
      %v6055 = vpack.c.b16 %v5118, %v5117
      %v6056 = vpack.c.b16 %v5120, %v5119
      %v6057 = vpack.c.b16 %v5122, %v5121
      %v6058 = vpack.c.b16 %v5124, %v5123
      %v6059 = vpack.c.b16 %v5126, %v5125
      %v6060 = vpack.c.b16 %v5128, %v5127
      %v6061 = vpack.c.b16 %v5130, %v5129
      %v6062 = vpack.c.b16 %v5132, %v5131
      %v6063 = vpack.c.b16 %v5134, %v5133
      %v6064 = vpack.c.b16 %v5136, %v5135
      %v6065 = vpack.c.b16 %v5138, %v5137
      %v6066 = vpack.c.b16 %v5140, %v5139
      %v6067 = vpack.c.b16 %v5142, %v5141
      %v6068 = vpack.c.b16 %v5144, %v5143
      %v6069 = vpack.c.b16 %v5146, %v5145
      %v6070 = vpack.c.b16 %v5148, %v5147
      %v6071 = vpack.c.b16 %v5150, %v5149
      %v6072 = vpack.c.b16 %v5152, %v5151
      %v6073 = vpack.c.b16 %v5154, %v5153
      %v6074 = vpack.c.b16 %v5156, %v5155
      %v6075 = vpack.c.b16 %v5158, %v5157
      %v6076 = vpack.c.b16 %v5160, %v5159
      %v6077 = vpack.c.b16 %v5162, %v5161
      %v6078 = vpack.c.b16 %v5164, %v5163
      %v6079 = vpack.c.b16 %v5166, %v5165
      %v6080 = vpack.c.b16 %v5168, %v5167
      %v6081 = vpack.c.b16 %v5170, %v5169
      %v6082 = vpack.c.b16 %v5172, %v5171
      %v6083 = vpack.c.b16 %v5174, %v5173
      %v6084 = vpack.c.b16 %v5176, %v5175
      %v6085 = vpack.c.b16 %v5178, %v5177
      %v6086 = vpack.c.b16 %v5180, %v5179
      %v6087 = vpack.c.b16 %v5182, %v5181
      %v6088 = vpack.c.b16 %v5184, %v5183
      %v6089 = vpack.c.b16 %v5186, %v5185
      %v6090 = vpack.c.b16 %v5188, %v5187
      %v6091 = vpack.c.b16 %v5190, %v5189
      %v6092 = vpack.c.b16 %v5192, %v5191
      %v6093 = vpack.c.b16 %v5194, %v5193
      %v6094 = vpack.c.b16 %v5196, %v5195
      %v6095 = vpack.c.b16 %v5198, %v5197
      %v6096 = vpack.c.b16 %v5200, %v5199
      %v6097 = vpack.c.b16 %v5202, %v5201
      %v6098 = vpack.c.b16 %v5204, %v5203
      %v6099 = vpack.c.b16 %v5206, %v5205
      %v6100 = vpack.c.b16 %v5208, %v5207
      %v6101 = vpack.c.b16 %v5210, %v5209
      %v6102 = vpack.c.b16 %v5212, %v5211
      %v6103 = vpack.c.b16 %v5214, %v5213
      %v6104 = vpack.c.b16 %v5216, %v5215
      %v6105 = vpack.c.b16 %v5218, %v5217
      %v6106 = vpack.c.b16 %v5220, %v5219
      %v6107 = vpack.c.b16 %v5222, %v5221
      %v6108 = vpack.c.b16 %v5224, %v5223
      %v6109 = vpack.c.b16 %v5226, %v5225
      %v6110 = vpack.c.b16 %v5228, %v5227
      %v6111 = vpack.c.b16 %v5230, %v5229
      %v6112 = vpack.c.b16 %v5232, %v5231
      %v6113 = vpack.c.b16 %v5234, %v5233
      %v6114 = vpack.c.b16 %v5236, %v5235
      %v6115 = vpack.c.b16 %v5238, %v5237
      %v6116 = vpack.c.b16 %v5240, %v5239
      %v6117 = vpack.c.b16 %v5242, %v5241
      %v6118 = vpack.c.b16 %v5244, %v5243
      %v6119 = vpack.c.b16 %v5246, %v5245
      %v6120 = vpack.c.b16 %v5248, %v5247
      %v6121 = vpack.c.b16 %v5250, %v5249
      %v6122 = vpack.c.b16 %v5252, %v5251
      %v6123 = vpack.c.b16 %v5254, %v5253
      %v6124 = vpack.c.b16 %v5256, %v5255
      %v6125 = vpack.c.b16 %v5258, %v5257
      %v6126 = vpack.c.b16 %v5260, %v5259
      %v6127 = vpack.c.b16 %v5262, %v5261
      %v6128 = vpack.c.b16 %v5264, %v5263
      %v6129 = vpack.c.b16 %v5266, %v5265
      %v6130 = vpack.c.b16 %v5268, %v5267
      %v6131 = vpack.c.b16 %v5270, %v5269
      %v6132 = vpack.c.b16 %v5272, %v5271
      %v6133 = vpack.c.b16 %v5274, %v5273
      %v6134 = vpack.c.b16 %v5276, %v5275
      %v6135 = vpack.c.b16 %v5278, %v5277
      %v6136 = vpack.c.b16 %v5280, %v5279
      %v6137 = vpack.c.b16 %v5282, %v5281
      %v6138 = vpack.c.b16 %v5284, %v5283
      %v6139 = vpack.c.b16 %v5286, %v5285
      %v6140 = vpack.c.b16 %v5288, %v5287
      %v6141 = vpack.c.b16 %v5290, %v5289
      %v6142 = vpack.c.b16 %v5292, %v5291
      %v6143 = vpack.c.b16 %v5294, %v5293
      %v6144 = vpack.c.b16 %v5296, %v5295
      %v6145 = vpack.c.b16 %v5298, %v5297
      %v6146 = vpack.c.b16 %v5300, %v5299
      %v6147 = vpack.c.b16 %v5302, %v5301
      %v6148 = vpack.c.b16 %v5304, %v5303
      %v6149 = vpack.c.b16 %v5306, %v5305
      %v6150 = vpack.c.b16 %v5308, %v5307
      %v6151 = vpack.c.b16 %v5310, %v5309
      %v6152 = vpack.c.b16 %v5312, %v5311
      %v6153 = vpack.c.b16 %v5314, %v5313
      %v6154 = vpack.c.b16 %v5316, %v5315
      %v6155 = vpack.c.b16 %v5318, %v5317
      %v6156 = vpack.c.b16 %v5320, %v5319
      %v6157 = vpack.c.b16 %v5322, %v5321
      %v6158 = vpack.c.b16 %v5324, %v5323
      %v6159 = vpack.c.b16 %v5326, %v5325
      %v6160 = vpack.c.b16 %v5328, %v5327
      %v6161 = vpack.c.b16 %v5330, %v5329
      %v6162 = vpack.c.b16 %v5332, %v5331
      %v6163 = vpack.c.b16 %v5334, %v5333
      %v6164 = vpack.c.b16 %v5336, %v5335
      %v6165 = vpack.c.b16 %v5338, %v5337
      %v6166 = vpack.c.b16 %v5340, %v5339
      %v6167 = vpack.c.b16 %v5342, %v5341
      %v6168 = vpack.c.b16 %v5344, %v5343
      %v6169 = vpack.c.b16 %v5346, %v5345
      %v6170 = vpack.c.b16 %v5348, %v5347
      %v6171 = vpack.c.b16 %v5350, %v5349
      %v6172 = vpack.c.b16 %v5352, %v5351
      %v6173 = vpack.c.b16 %v5354, %v5353
      %v6174 = vpack.c.b16 %v5356, %v5355
      %v6175 = vpack.c.b16 %v5358, %v5357
      %v6176 = vpack.c.b16 %v5360, %v5359
      %v6177 = vpack.c.b16 %v5362, %v5361
      %v6178 = vpack.c.b16 %v5364, %v5363
      %v6179 = vpack.c.b16 %v5366, %v5365
      %v6180 = vpack.c.b16 %v5368, %v5367
      %v6181 = vpack.c.b16 %v5370, %v5369
      %v6182 = vpack.c.b16 %v5372, %v5371
      %v6183 = vpack.c.b16 %v5374, %v5373
      %v6184 = vpack.c.b16 %v5376, %v5375
      %v6185 = vpack.c.b16 %v5378, %v5377
      %v6186 = vpack.c.b16 %v5380, %v5379
      %v6187 = vpack.c.b16 %v5382, %v5381
      %v6188 = vpack.c.b16 %v5384, %v5383
      %v6189 = vpack.c.b16 %v5386, %v5385
      %v6190 = vpack.c.b16 %v5388, %v5387
      %v6191 = vpack.c.b16 %v5390, %v5389
      %v6192 = vpack.c.b16 %v5392, %v5391
      %v6193 = vpack.c.b16 %v5394, %v5393
      %v6194 = vpack.c.b16 %v5396, %v5395
      %v6195 = vpack.c.b16 %v5398, %v5397
      %v6196 = vpack.c.b16 %v5400, %v5399
      %v6197 = vpack.c.b16 %v5402, %v5401
      %v6198 = vpack.c.b16 %v5404, %v5403
      %v6199 = vpack.c.b16 %v5406, %v5405
      %v6200 = vpack.c.b16 %v5408, %v5407
      %v6201 = vpack.c.b16 %v5410, %v5409
      %v6202 = vpack.c.b16 %v5412, %v5411
      %v6203 = vpack.c.b16 %v5414, %v5413
      %v6204 = vpack.c.b16 %v5416, %v5415
      %v6205 = vpack.c.b16 %v5418, %v5417
      %v6206 = vpack.c.b16 %v5420, %v5419
      %v6207 = vpack.c.b16 %v5422, %v5421
      %v6208 = vpack.c.b16 %v5424, %v5423
      %6993 = vmatprep.subr.bf16.mxu0 0
      %6994 = vmatpush1.bf16.msra.mxu0 %v5425
      %6995 = vmatprep.subr.bf16.mxu0 0
      %6996 = vmatpush1.bf16.msra.mxu0 %v5426
      %6997 = vmatprep.subr.bf16.mxu0 0
      %6998 = vmatpush1.bf16.msra.mxu0 %v5427
      %6999 = vmatprep.subr.bf16.mxu0 0
      %7000 = vmatpush1.bf16.msra.mxu0 %v5428
      %7001 = vmatprep.subr.bf16.mxu0 0
      %7002 = vmatpush1.bf16.msra.mxu0 %v5429
      %7003 = vmatprep.subr.bf16.mxu0 0
      %7004 = vmatpush1.bf16.msra.mxu0 %v5430
      %7005 = vmatprep.subr.bf16.mxu0 0
      %7006 = vmatpush1.bf16.msra.mxu0 %v5431
      %7007 = vmatprep.subr.bf16.mxu0 0
      %7008 = vmatpush1.bf16.msra.mxu0 %v5432
      %7009 = vmatprep.subr.bf16.mxu0 0
      %7010 = vmatpush1.bf16.msra.mxu0 %v5433
      %7011 = vmatprep.subr.bf16.mxu0 0
      %7012 = vmatpush1.bf16.msra.mxu0 %v5434
      %7013 = vmatprep.subr.bf16.mxu0 0
      %7014 = vmatpush1.bf16.msra.mxu0 %v5435
      %7015 = vmatprep.subr.bf16.mxu0 0
      %7016 = vmatpush1.bf16.msra.mxu0 %v5436
      %7017 = vmatprep.subr.bf16.mxu0 0
      %7018 = vmatpush1.bf16.msra.mxu0 %v5437
      %7019 = vmatprep.subr.bf16.mxu0 0
      %7020 = vmatpush1.bf16.msra.mxu0 %v5438
      %7021 = vmatprep.subr.bf16.mxu0 0
      %7022 = vmatpush1.bf16.msra.mxu0 %v5439
      %7023 = vmatprep.subr.bf16.mxu0 0
      %7024 = vmatpush1.bf16.msra.mxu0 %v5440
      %7025 = vmatprep.mubr.bf16.mxu0 %v2094
      %7026 = vmatmul.mubr.bf16.gmra.mrb[0].mxu0 %v2093
      %v7027 = vpop.f32.mrb[0].mxu0
      %v7028 = vadd.f32 %v1944, %v7027
      %v7029 = vpop.f32.mrb[0].mxu0
      %v7030 = vpop.f32.mrb[0].mxu0
      %v7031 = vpop.f32.mrb[0].mxu0
      %7032 = vdwg.mxu0
      %7033 = vmatprep.subr.bf16.mxu0 0
      %7034 = vmatpush1.bf16.msra.mxu0 %v5441
      %7035 = vmatprep.subr.bf16.mxu0 0
      %7036 = vmatpush1.bf16.msra.mxu0 %v5442
      %7037 = vmatprep.subr.bf16.mxu0 0
      %7038 = vmatpush1.bf16.msra.mxu0 %v5443
      %7039 = vmatprep.subr.bf16.mxu0 0
      %7040 = vmatpush1.bf16.msra.mxu0 %v5444
      %7041 = vmatprep.subr.bf16.mxu0 0
      %7042 = vmatpush1.bf16.msra.mxu0 %v5445
      %7043 = vmatprep.subr.bf16.mxu0 0
      %7044 = vmatpush1.bf16.msra.mxu0 %v5446
      %7045 = vmatprep.subr.bf16.mxu0 0
      %7046 = vmatpush1.bf16.msra.mxu0 %v5447
      %7047 = vmatprep.subr.bf16.mxu0 0
      %7048 = vmatpush1.bf16.msra.mxu0 %v5448
      %7049 = vmatprep.subr.bf16.mxu0 0
      %7050 = vmatpush1.bf16.msra.mxu0 %v5449
      %7051 = vmatprep.subr.bf16.mxu0 0
      %7052 = vmatpush1.bf16.msra.mxu0 %v5450
      %7053 = vmatprep.subr.bf16.mxu0 0
      %7054 = vmatpush1.bf16.msra.mxu0 %v5451
      %7055 = vmatprep.subr.bf16.mxu0 0
      %7056 = vmatpush1.bf16.msra.mxu0 %v5452
      %7057 = vmatprep.subr.bf16.mxu0 0
      %7058 = vmatpush1.bf16.msra.mxu0 %v5453
      %7059 = vmatprep.subr.bf16.mxu0 0
      %7060 = vmatpush1.bf16.msra.mxu0 %v5454
      %7061 = vmatprep.subr.bf16.mxu0 0
      %7062 = vmatpush1.bf16.msra.mxu0 %v5455
      %7063 = vmatprep.subr.bf16.mxu0 0
      %7064 = vmatpush1.bf16.msra.mxu0 %v5456
      %7065 = vmatprep.mubr.bf16.mxu0 %v2096
      %7066 = vmatmul.mubr.bf16.gmra.mrb[0].mxu0 %v2095
      %v7067 = vpop.f32.mrb[0].mxu0
      %v7068 = vadd.f32 %v7028, %v7067
      %v7069 = vpop.f32.mrb[0].mxu0
      %v7070 = vpop.f32.mrb[0].mxu0
      %v7071 = vpop.f32.mrb[0].mxu0
      %7072 = vdwg.mxu0
      %7073 = vmatprep.subr.bf16.mxu0 0
      %7074 = vmatpush1.bf16.msra.mxu0 %v5457
      %7075 = vmatprep.subr.bf16.mxu0 0
      %7076 = vmatpush1.bf16.msra.mxu0 %v5458
      %7077 = vmatprep.subr.bf16.mxu0 0
      %7078 = vmatpush1.bf16.msra.mxu0 %v5459
      %7079 = vmatprep.subr.bf16.mxu0 0
      %7080 = vmatpush1.bf16.msra.mxu0 %v5460
      %7081 = vmatprep.subr.bf16.mxu0 0
      %7082 = vmatpush1.bf16.msra.mxu0 %v5461
      %7083 = vmatprep.subr.bf16.mxu0 0
      %7084 = vmatpush1.bf16.msra.mxu0 %v5462
      %7085 = vmatprep.subr.bf16.mxu0 0
      %7086 = vmatpush1.bf16.msra.mxu0 %v5463
      %7087 = vmatprep.subr.bf16.mxu0 0
      %7088 = vmatpush1.bf16.msra.mxu0 %v5464
      %7089 = vmatprep.subr.bf16.mxu0 0
      %7090 = vmatpush1.bf16.msra.mxu0 %v5465
      %7091 = vmatprep.subr.bf16.mxu0 0
      %7092 = vmatpush1.bf16.msra.mxu0 %v5466
      %7093 = vmatprep.subr.bf16.mxu0 0
      %7094 = vmatpush1.bf16.msra.mxu0 %v5467
      %7095 = vmatprep.subr.bf16.mxu0 0
      %7096 = vmatpush1.bf16.msra.mxu0 %v5468
      %7097 = vmatprep.subr.bf16.mxu0 0
      %7098 = vmatpush1.bf16.msra.mxu0 %v5469
      %7099 = vmatprep.subr.bf16.mxu0 0
      %7100 = vmatpush1.bf16.msra.mxu0 %v5470
      %7101 = vmatprep.subr.bf16.mxu0 0
      %7102 = vmatpush1.bf16.msra.mxu0 %v5471
      %7103 = vmatprep.subr.bf16.mxu0 0
      %7104 = vmatpush1.bf16.msra.mxu0 %v5472
      %7105 = vmatprep.mubr.bf16.mxu0 %v2098
      %7106 = vmatmul.mubr.bf16.gmra.mrb[0].mxu0 %v2097
      %v7107 = vpop.f32.mrb[0].mxu0
      %v7108 = vadd.f32 %v7068, %v7107
      %v7109 = vpop.f32.mrb[0].mxu0
      %v7110 = vpop.f32.mrb[0].mxu0
      %v7111 = vpop.f32.mrb[0].mxu0
      %7112 = vdwg.mxu0
      %7113 = vmatprep.subr.bf16.mxu0 0
      %7114 = vmatpush1.bf16.msra.mxu0 %v5473
      %7115 = vmatprep.subr.bf16.mxu0 0
      %7116 = vmatpush1.bf16.msra.mxu0 %v5474
      %7117 = vmatprep.subr.bf16.mxu0 0
      %7118 = vmatpush1.bf16.msra.mxu0 %v5475
      %7119 = vmatprep.subr.bf16.mxu0 0
      %7120 = vmatpush1.bf16.msra.mxu0 %v5476
      %7121 = vmatprep.subr.bf16.mxu0 0
      %7122 = vmatpush1.bf16.msra.mxu0 %v5477
      %7123 = vmatprep.subr.bf16.mxu0 0
      %7124 = vmatpush1.bf16.msra.mxu0 %v5478
      %7125 = vmatprep.subr.bf16.mxu0 0
      %7126 = vmatpush1.bf16.msra.mxu0 %v5479
      %7127 = vmatprep.subr.bf16.mxu0 0
      %7128 = vmatpush1.bf16.msra.mxu0 %v5480
      %7129 = vmatprep.subr.bf16.mxu0 0
      %7130 = vmatpush1.bf16.msra.mxu0 %v5481
      %7131 = vmatprep.subr.bf16.mxu0 0
      %7132 = vmatpush1.bf16.msra.mxu0 %v5482
      %7133 = vmatprep.subr.bf16.mxu0 0
      %7134 = vmatpush1.bf16.msra.mxu0 %v5483
      %7135 = vmatprep.subr.bf16.mxu0 0
      %7136 = vmatpush1.bf16.msra.mxu0 %v5484
      %7137 = vmatprep.subr.bf16.mxu0 0
      %7138 = vmatpush1.bf16.msra.mxu0 %v5485
      %7139 = vmatprep.subr.bf16.mxu0 0
      %7140 = vmatpush1.bf16.msra.mxu0 %v5486
      %7141 = vmatprep.subr.bf16.mxu0 0
      %7142 = vmatpush1.bf16.msra.mxu0 %v5487
      %7143 = vmatprep.subr.bf16.mxu0 0
      %7144 = vmatpush1.bf16.msra.mxu0 %v5488
      %7145 = vmatprep.mubr.bf16.mxu0 %v2100
      %7146 = vmatmul.mubr.bf16.gmra.mrb[0].mxu0 %v2099
      %v7147 = vpop.f32.mrb[0].mxu0
      %v7148 = vadd.f32 %v7108, %v7147
      %v7149 = vpop.f32.mrb[0].mxu0
      %v7150 = vpop.f32.mrb[0].mxu0
      %v7151 = vpop.f32.mrb[0].mxu0
      %7152 = vdwg.mxu0
      %7153 = vmatprep.subr.bf16.mxu0 0
      %7154 = vmatpush1.bf16.msra.mxu0 %v5489
      %7155 = vmatprep.subr.bf16.mxu0 0
      %7156 = vmatpush1.bf16.msra.mxu0 %v5490
      %7157 = vmatprep.subr.bf16.mxu0 0
      %7158 = vmatpush1.bf16.msra.mxu0 %v5491
      %7159 = vmatprep.subr.bf16.mxu0 0
      %7160 = vmatpush1.bf16.msra.mxu0 %v5492
      %7161 = vmatprep.subr.bf16.mxu0 0
      %7162 = vmatpush1.bf16.msra.mxu0 %v5493
      %7163 = vmatprep.subr.bf16.mxu0 0
      %7164 = vmatpush1.bf16.msra.mxu0 %v5494
      %7165 = vmatprep.subr.bf16.mxu0 0
      %7166 = vmatpush1.bf16.msra.mxu0 %v5495
      %7167 = vmatprep.subr.bf16.mxu0 0
      %7168 = vmatpush1.bf16.msra.mxu0 %v5496
      %7169 = vmatprep.subr.bf16.mxu0 0
      %7170 = vmatpush1.bf16.msra.mxu0 %v5497
      %7171 = vmatprep.subr.bf16.mxu0 0
      %7172 = vmatpush1.bf16.msra.mxu0 %v5498
      %7173 = vmatprep.subr.bf16.mxu0 0
      %7174 = vmatpush1.bf16.msra.mxu0 %v5499
      %7175 = vmatprep.subr.bf16.mxu0 0
      %7176 = vmatpush1.bf16.msra.mxu0 %v5500
      %7177 = vmatprep.subr.bf16.mxu0 0
      %7178 = vmatpush1.bf16.msra.mxu0 %v5501
      %7179 = vmatprep.subr.bf16.mxu0 0
      %7180 = vmatpush1.bf16.msra.mxu0 %v5502
      %7181 = vmatprep.subr.bf16.mxu0 0
      %7182 = vmatpush1.bf16.msra.mxu0 %v5503
      %7183 = vmatprep.subr.bf16.mxu0 0
      %7184 = vmatpush1.bf16.msra.mxu0 %v5504
      %7185 = vmatprep.mubr.bf16.mxu0 %v2102
      %7186 = vmatmul.mubr.bf16.gmra.mrb[0].mxu0 %v2101
      %v7187 = vpop.f32.mrb[0].mxu0
      %v7188 = vadd.f32 %v7148, %v7187
      %v7189 = vpop.f32.mrb[0].mxu0
      %v7190 = vpop.f32.mrb[0].mxu0
      %v7191 = vpop.f32.mrb[0].mxu0
      %7192 = vdwg.mxu0
      %7193 = vmatprep.subr.bf16.mxu0 0
      %7194 = vmatpush1.bf16.msra.mxu0 %v5505
      %7195 = vmatprep.subr.bf16.mxu0 0
      %7196 = vmatpush1.bf16.msra.mxu0 %v5506
      %7197 = vmatprep.subr.bf16.mxu0 0
      %7198 = vmatpush1.bf16.msra.mxu0 %v5507
      %7199 = vmatprep.subr.bf16.mxu0 0
      %7200 = vmatpush1.bf16.msra.mxu0 %v5508
      %7201 = vmatprep.subr.bf16.mxu0 0
      %7202 = vmatpush1.bf16.msra.mxu0 %v5509
      %7203 = vmatprep.subr.bf16.mxu0 0
      %7204 = vmatpush1.bf16.msra.mxu0 %v5510
      %7205 = vmatprep.subr.bf16.mxu0 0
      %7206 = vmatpush1.bf16.msra.mxu0 %v5511
      %7207 = vmatprep.subr.bf16.mxu0 0
      %7208 = vmatpush1.bf16.msra.mxu0 %v5512
      %7209 = vmatprep.subr.bf16.mxu0 0
      %7210 = vmatpush1.bf16.msra.mxu0 %v5513
      %7211 = vmatprep.subr.bf16.mxu0 0
      %7212 = vmatpush1.bf16.msra.mxu0 %v5514
      %7213 = vmatprep.subr.bf16.mxu0 0
      %7214 = vmatpush1.bf16.msra.mxu0 %v5515
      %7215 = vmatprep.subr.bf16.mxu0 0
      %7216 = vmatpush1.bf16.msra.mxu0 %v5516
      %7217 = vmatprep.subr.bf16.mxu0 0
      %7218 = vmatpush1.bf16.msra.mxu0 %v5517
      %7219 = vmatprep.subr.bf16.mxu0 0
      %7220 = vmatpush1.bf16.msra.mxu0 %v5518
      %7221 = vmatprep.subr.bf16.mxu0 0
      %7222 = vmatpush1.bf16.msra.mxu0 %v5519
      %7223 = vmatprep.subr.bf16.mxu0 0
      %7224 = vmatpush1.bf16.msra.mxu0 %v5520
      %7225 = vmatprep.mubr.bf16.mxu0 %v2104
      %7226 = vmatmul.mubr.bf16.gmra.mrb[0].mxu0 %v2103
      %v7227 = vpop.f32.mrb[0].mxu0
      %v7228 = vadd.f32 %v7188, %v7227
      %v7229 = vpop.f32.mrb[0].mxu0
      %v7230 = vpop.f32.mrb[0].mxu0
      %v7231 = vpop.f32.mrb[0].mxu0
      %7232 = vdwg.mxu0
      %7233 = vmatprep.subr.bf16.mxu0 0
      %7234 = vmatpush1.bf16.msra.mxu0 %v5521
      %7235 = vmatprep.subr.bf16.mxu0 0
      %7236 = vmatpush1.bf16.msra.mxu0 %v5522
      %7237 = vmatprep.subr.bf16.mxu0 0
      %7238 = vmatpush1.bf16.msra.mxu0 %v5523
      %7239 = vmatprep.subr.bf16.mxu0 0
      %7240 = vmatpush1.bf16.msra.mxu0 %v5524
      %7241 = vmatprep.subr.bf16.mxu0 0
      %7242 = vmatpush1.bf16.msra.mxu0 %v5525
      %7243 = vmatprep.subr.bf16.mxu0 0
      %7244 = vmatpush1.bf16.msra.mxu0 %v5526
      %7245 = vmatprep.subr.bf16.mxu0 0
      %7246 = vmatpush1.bf16.msra.mxu0 %v5527
      %7247 = vmatprep.subr.bf16.mxu0 0
      %7248 = vmatpush1.bf16.msra.mxu0 %v5528
      %7249 = vmatprep.subr.bf16.mxu0 0
      %7250 = vmatpush1.bf16.msra.mxu0 %v5529
      %7251 = vmatprep.subr.bf16.mxu0 0
      %7252 = vmatpush1.bf16.msra.mxu0 %v5530
      %7253 = vmatprep.subr.bf16.mxu0 0
      %7254 = vmatpush1.bf16.msra.mxu0 %v5531
      %7255 = vmatprep.subr.bf16.mxu0 0
      %7256 = vmatpush1.bf16.msra.mxu0 %v5532
      %7257 = vmatprep.subr.bf16.mxu0 0
      %7258 = vmatpush1.bf16.msra.mxu0 %v5533
      %7259 = vmatprep.subr.bf16.mxu0 0
      %7260 = vmatpush1.bf16.msra.mxu0 %v5534
      %7261 = vmatprep.subr.bf16.mxu0 0
      %7262 = vmatpush1.bf16.msra.mxu0 %v5535
      %7263 = vmatprep.subr.bf16.mxu0 0
      %7264 = vmatpush1.bf16.msra.mxu0 %v5536
      %7265 = vmatprep.mubr.bf16.mxu0 %v2106
      %7266 = vmatmul.mubr.bf16.gmra.mrb[0].mxu0 %v2105
      %v7267 = vpop.f32.mrb[0].mxu0
      %v7268 = vadd.f32 %v7228, %v7267
      %v7269 = vpop.f32.mrb[0].mxu0
      %v7270 = vpop.f32.mrb[0].mxu0
      %v7271 = vpop.f32.mrb[0].mxu0
      %7272 = vdwg.mxu0
      %7273 = vmatprep.subr.bf16.mxu0 0
      %7274 = vmatpush1.bf16.msra.mxu0 %v5537
      %7275 = vmatprep.subr.bf16.mxu0 0
      %7276 = vmatpush1.bf16.msra.mxu0 %v5538
      %7277 = vmatprep.subr.bf16.mxu0 0
      %7278 = vmatpush1.bf16.msra.mxu0 %v5539
      %7279 = vmatprep.subr.bf16.mxu0 0
      %7280 = vmatpush1.bf16.msra.mxu0 %v5540
      %7281 = vmatprep.subr.bf16.mxu0 0
      %7282 = vmatpush1.bf16.msra.mxu0 %v5541
      %7283 = vmatprep.subr.bf16.mxu0 0
      %7284 = vmatpush1.bf16.msra.mxu0 %v5542
      %7285 = vmatprep.subr.bf16.mxu0 0
      %7286 = vmatpush1.bf16.msra.mxu0 %v5543
      %7287 = vmatprep.subr.bf16.mxu0 0
      %7288 = vmatpush1.bf16.msra.mxu0 %v5544
      %7289 = vmatprep.subr.bf16.mxu0 0
      %7290 = vmatpush1.bf16.msra.mxu0 %v5545
      %7291 = vmatprep.subr.bf16.mxu0 0
      %7292 = vmatpush1.bf16.msra.mxu0 %v5546
      %7293 = vmatprep.subr.bf16.mxu0 0
      %7294 = vmatpush1.bf16.msra.mxu0 %v5547
      %7295 = vmatprep.subr.bf16.mxu0 0
      %7296 = vmatpush1.bf16.msra.mxu0 %v5548
      %7297 = vmatprep.subr.bf16.mxu0 0
      %7298 = vmatpush1.bf16.msra.mxu0 %v5549
      %7299 = vmatprep.subr.bf16.mxu0 0
      %7300 = vmatpush1.bf16.msra.mxu0 %v5550
      %7301 = vmatprep.subr.bf16.mxu0 0
      %7302 = vmatpush1.bf16.msra.mxu0 %v5551
      %7303 = vmatprep.subr.bf16.mxu0 0
      %7304 = vmatpush1.bf16.msra.mxu0 %v5552
      %7305 = vmatprep.mubr.bf16.mxu0 %v2108
      %7306 = vmatmul.mubr.bf16.gmra.mrb[0].mxu0 %v2107
      %v7307 = vpop.f32.mrb[0].mxu0
      %v7308 = vadd.f32 %v7268, %v7307
      %v7309 = vpop.f32.mrb[0].mxu0
      %v7310 = vpop.f32.mrb[0].mxu0
      %v7311 = vpop.f32.mrb[0].mxu0
      %7312 = vdwg.mxu0
      %7313 = vmatprep.subr.bf16.mxu0 0
      %7314 = vmatpush1.bf16.msra.mxu0 %v5553
      %7315 = vmatprep.subr.bf16.mxu0 0
      %7316 = vmatpush1.bf16.msra.mxu0 %v5554
      %7317 = vmatprep.subr.bf16.mxu0 0
      %7318 = vmatpush1.bf16.msra.mxu0 %v5555
      %7319 = vmatprep.subr.bf16.mxu0 0
      %7320 = vmatpush1.bf16.msra.mxu0 %v5556
      %7321 = vmatprep.subr.bf16.mxu0 0
      %7322 = vmatpush1.bf16.msra.mxu0 %v5557
      %7323 = vmatprep.subr.bf16.mxu0 0
      %7324 = vmatpush1.bf16.msra.mxu0 %v5558
      %7325 = vmatprep.subr.bf16.mxu0 0
      %7326 = vmatpush1.bf16.msra.mxu0 %v5559
      %7327 = vmatprep.subr.bf16.mxu0 0
      %7328 = vmatpush1.bf16.msra.mxu0 %v5560
      %7329 = vmatprep.subr.bf16.mxu0 0
      %7330 = vmatpush1.bf16.msra.mxu0 %v5561
      %7331 = vmatprep.subr.bf16.mxu0 0
      %7332 = vmatpush1.bf16.msra.mxu0 %v5562
      %7333 = vmatprep.subr.bf16.mxu0 0
      %7334 = vmatpush1.bf16.msra.mxu0 %v5563
      %7335 = vmatprep.subr.bf16.mxu0 0
      %7336 = vmatpush1.bf16.msra.mxu0 %v5564
      %7337 = vmatprep.subr.bf16.mxu0 0
      %7338 = vmatpush1.bf16.msra.mxu0 %v5565
      %7339 = vmatprep.subr.bf16.mxu0 0
      %7340 = vmatpush1.bf16.msra.mxu0 %v5566
      %7341 = vmatprep.subr.bf16.mxu0 0
      %7342 = vmatpush1.bf16.msra.mxu0 %v5567
      %7343 = vmatprep.subr.bf16.mxu0 0
      %7344 = vmatpush1.bf16.msra.mxu0 %v5568
      %7345 = vmatprep.mubr.bf16.mxu0 %v2110
      %7346 = vmatmul.mubr.bf16.gmra.mrb[0].mxu0 %v2109
      %v7347 = vpop.f32.mrb[0].mxu0
      %v7348 = vadd.f32 %v7308, %v7347
      %v7349 = vpop.f32.mrb[0].mxu0
      %v7350 = vpop.f32.mrb[0].mxu0
      %v7351 = vpop.f32.mrb[0].mxu0
      %7352 = vdwg.mxu0
      %7353 = vmatprep.subr.bf16.mxu0 0
      %7354 = vmatpush1.bf16.msra.mxu0 %v5569
      %7355 = vmatprep.subr.bf16.mxu0 0
      %7356 = vmatpush1.bf16.msra.mxu0 %v5570
      %7357 = vmatprep.subr.bf16.mxu0 0
      %7358 = vmatpush1.bf16.msra.mxu0 %v5571
      %7359 = vmatprep.subr.bf16.mxu0 0
      %7360 = vmatpush1.bf16.msra.mxu0 %v5572
      %7361 = vmatprep.subr.bf16.mxu0 0
      %7362 = vmatpush1.bf16.msra.mxu0 %v5573
      %7363 = vmatprep.subr.bf16.mxu0 0
      %7364 = vmatpush1.bf16.msra.mxu0 %v5574
      %7365 = vmatprep.subr.bf16.mxu0 0
      %7366 = vmatpush1.bf16.msra.mxu0 %v5575
      %7367 = vmatprep.subr.bf16.mxu0 0
      %7368 = vmatpush1.bf16.msra.mxu0 %v5576
      %7369 = vmatprep.subr.bf16.mxu0 0
      %7370 = vmatpush1.bf16.msra.mxu0 %v5577
      %7371 = vmatprep.subr.bf16.mxu0 0
      %7372 = vmatpush1.bf16.msra.mxu0 %v5578
      %7373 = vmatprep.subr.bf16.mxu0 0
      %7374 = vmatpush1.bf16.msra.mxu0 %v5579
      %7375 = vmatprep.subr.bf16.mxu0 0
      %7376 = vmatpush1.bf16.msra.mxu0 %v5580
      %7377 = vmatprep.subr.bf16.mxu0 0
      %7378 = vmatpush1.bf16.msra.mxu0 %v5581
      %7379 = vmatprep.subr.bf16.mxu0 0
      %7380 = vmatpush1.bf16.msra.mxu0 %v5582
      %7381 = vmatprep.subr.bf16.mxu0 0
      %7382 = vmatpush1.bf16.msra.mxu0 %v5583
      %7383 = vmatprep.subr.bf16.mxu0 0
      %7384 = vmatpush1.bf16.msra.mxu0 %v5584
      %7385 = vmatprep.mubr.bf16.mxu0 %v2112
      %7386 = vmatmul.mubr.bf16.gmra.mrb[0].mxu0 %v2111
      %v7387 = vpop.f32.mrb[0].mxu0
      %v7388 = vadd.f32 %v7348, %v7387
      %v7389 = vpop.f32.mrb[0].mxu0
      %v7390 = vpop.f32.mrb[0].mxu0
      %v7391 = vpop.f32.mrb[0].mxu0
      %7392 = vdwg.mxu0
      %7393 = vmatprep.subr.bf16.mxu0 0
      %7394 = vmatpush1.bf16.msra.mxu0 %v5585
      %7395 = vmatprep.subr.bf16.mxu0 0
      %7396 = vmatpush1.bf16.msra.mxu0 %v5586
      %7397 = vmatprep.subr.bf16.mxu0 0
      %7398 = vmatpush1.bf16.msra.mxu0 %v5587
      %7399 = vmatprep.subr.bf16.mxu0 0
      %7400 = vmatpush1.bf16.msra.mxu0 %v5588
      %7401 = vmatprep.subr.bf16.mxu0 0
      %7402 = vmatpush1.bf16.msra.mxu0 %v5589
      %7403 = vmatprep.subr.bf16.mxu0 0
      %7404 = vmatpush1.bf16.msra.mxu0 %v5590
      %7405 = vmatprep.subr.bf16.mxu0 0
      %7406 = vmatpush1.bf16.msra.mxu0 %v5591
      %7407 = vmatprep.subr.bf16.mxu0 0
      %7408 = vmatpush1.bf16.msra.mxu0 %v5592
      %7409 = vmatprep.subr.bf16.mxu0 0
      %7410 = vmatpush1.bf16.msra.mxu0 %v5593
      %7411 = vmatprep.subr.bf16.mxu0 0
      %7412 = vmatpush1.bf16.msra.mxu0 %v5594
      %7413 = vmatprep.subr.bf16.mxu0 0
      %7414 = vmatpush1.bf16.msra.mxu0 %v5595
      %7415 = vmatprep.subr.bf16.mxu0 0
      %7416 = vmatpush1.bf16.msra.mxu0 %v5596
      %7417 = vmatprep.subr.bf16.mxu0 0
      %7418 = vmatpush1.bf16.msra.mxu0 %v5597
      %7419 = vmatprep.subr.bf16.mxu0 0
      %7420 = vmatpush1.bf16.msra.mxu0 %v5598
      %7421 = vmatprep.subr.bf16.mxu0 0
      %7422 = vmatpush1.bf16.msra.mxu0 %v5599
      %7423 = vmatprep.subr.bf16.mxu0 0
      %7424 = vmatpush1.bf16.msra.mxu0 %v5600
      %7425 = vmatprep.mubr.bf16.mxu0 %v2114
      %7426 = vmatmul.mubr.bf16.gmra.mrb[0].mxu0 %v2113
      %v7427 = vpop.f32.mrb[0].mxu0
      %v7428 = vadd.f32 %v7388, %v7427
      %v7429 = vpop.f32.mrb[0].mxu0
      %v7430 = vpop.f32.mrb[0].mxu0
      %v7431 = vpop.f32.mrb[0].mxu0
      %7432 = vdwg.mxu0
      %7433 = vmatprep.subr.bf16.mxu0 0
      %7434 = vmatpush1.bf16.msra.mxu0 %v5601
      %7435 = vmatprep.subr.bf16.mxu0 0
      %7436 = vmatpush1.bf16.msra.mxu0 %v5602
      %7437 = vmatprep.subr.bf16.mxu0 0
      %7438 = vmatpush1.bf16.msra.mxu0 %v5603
      %7439 = vmatprep.subr.bf16.mxu0 0
      %7440 = vmatpush1.bf16.msra.mxu0 %v5604
      %7441 = vmatprep.subr.bf16.mxu0 0
      %7442 = vmatpush1.bf16.msra.mxu0 %v5605
      %7443 = vmatprep.subr.bf16.mxu0 0
      %7444 = vmatpush1.bf16.msra.mxu0 %v5606
      %7445 = vmatprep.subr.bf16.mxu0 0
      %7446 = vmatpush1.bf16.msra.mxu0 %v5607
      %7447 = vmatprep.subr.bf16.mxu0 0
      %7448 = vmatpush1.bf16.msra.mxu0 %v5608
      %7449 = vmatprep.subr.bf16.mxu0 0
      %7450 = vmatpush1.bf16.msra.mxu0 %v5609
      %7451 = vmatprep.subr.bf16.mxu0 0
      %7452 = vmatpush1.bf16.msra.mxu0 %v5610
      %7453 = vmatprep.subr.bf16.mxu0 0
      %7454 = vmatpush1.bf16.msra.mxu0 %v5611
      %7455 = vmatprep.subr.bf16.mxu0 0
      %7456 = vmatpush1.bf16.msra.mxu0 %v5612
      %7457 = vmatprep.subr.bf16.mxu0 0
      %7458 = vmatpush1.bf16.msra.mxu0 %v5613
      %7459 = vmatprep.subr.bf16.mxu0 0
      %7460 = vmatpush1.bf16.msra.mxu0 %v5614
      %7461 = vmatprep.subr.bf16.mxu0 0
      %7462 = vmatpush1.bf16.msra.mxu0 %v5615
      %7463 = vmatprep.subr.bf16.mxu0 0
      %7464 = vmatpush1.bf16.msra.mxu0 %v5616
      %7465 = vmatprep.mubr.bf16.mxu0 %v2116
      %7466 = vmatmul.mubr.bf16.gmra.mrb[0].mxu0 %v2115
      %v7467 = vpop.f32.mrb[0].mxu0
      %v7468 = vadd.f32 %v7428, %v7467
      %v7469 = vpop.f32.mrb[0].mxu0
      %v7470 = vpop.f32.mrb[0].mxu0
      %v7471 = vpop.f32.mrb[0].mxu0
      %7472 = vdwg.mxu0
      %7473 = vmatprep.subr.bf16.mxu0 0
      %7474 = vmatpush1.bf16.msra.mxu0 %v5617
      %7475 = vmatprep.subr.bf16.mxu0 0
      %7476 = vmatpush1.bf16.msra.mxu0 %v5618
      %7477 = vmatprep.subr.bf16.mxu0 0
      %7478 = vmatpush1.bf16.msra.mxu0 %v5619
      %7479 = vmatprep.subr.bf16.mxu0 0
      %7480 = vmatpush1.bf16.msra.mxu0 %v5620
      %7481 = vmatprep.subr.bf16.mxu0 0
      %7482 = vmatpush1.bf16.msra.mxu0 %v5621
      %7483 = vmatprep.subr.bf16.mxu0 0
      %7484 = vmatpush1.bf16.msra.mxu0 %v5622
      %7485 = vmatprep.subr.bf16.mxu0 0
      %7486 = vmatpush1.bf16.msra.mxu0 %v5623
      %7487 = vmatprep.subr.bf16.mxu0 0
      %7488 = vmatpush1.bf16.msra.mxu0 %v5624
      %7489 = vmatprep.subr.bf16.mxu0 0
      %7490 = vmatpush1.bf16.msra.mxu0 %v5625
      %7491 = vmatprep.subr.bf16.mxu0 0
      %7492 = vmatpush1.bf16.msra.mxu0 %v5626
      %7493 = vmatprep.subr.bf16.mxu0 0
      %7494 = vmatpush1.bf16.msra.mxu0 %v5627
      %7495 = vmatprep.subr.bf16.mxu0 0
      %7496 = vmatpush1.bf16.msra.mxu0 %v5628
      %7497 = vmatprep.subr.bf16.mxu0 0
      %7498 = vmatpush1.bf16.msra.mxu0 %v5629
      %7499 = vmatprep.subr.bf16.mxu0 0
      %7500 = vmatpush1.bf16.msra.mxu0 %v5630
      %7501 = vmatprep.subr.bf16.mxu0 0
      %7502 = vmatpush1.bf16.msra.mxu0 %v5631
      %7503 = vmatprep.subr.bf16.mxu0 0
      %7504 = vmatpush1.bf16.msra.mxu0 %v5632
      %7505 = vmatprep.mubr.bf16.mxu0 %v2118
      %7506 = vmatmul.mubr.bf16.gmra.mrb[0].mxu0 %v2117
      %v7507 = vpop.f32.mrb[0].mxu0
      %v7508 = vadd.f32 %v7468, %v7507
      %v7509 = vpop.f32.mrb[0].mxu0
      %v7510 = vpop.f32.mrb[0].mxu0
      %v7511 = vpop.f32.mrb[0].mxu0
      %7512 = vdwg.mxu0
      %7513 = vmatprep.subr.bf16.mxu0 0
      %7514 = vmatpush1.bf16.msra.mxu0 %v5633
      %7515 = vmatprep.subr.bf16.mxu0 0
      %7516 = vmatpush1.bf16.msra.mxu0 %v5634
      %7517 = vmatprep.subr.bf16.mxu0 0
      %7518 = vmatpush1.bf16.msra.mxu0 %v5635
      %7519 = vmatprep.subr.bf16.mxu0 0
      %7520 = vmatpush1.bf16.msra.mxu0 %v5636
      %7521 = vmatprep.subr.bf16.mxu0 0
      %7522 = vmatpush1.bf16.msra.mxu0 %v5637
      %7523 = vmatprep.subr.bf16.mxu0 0
      %7524 = vmatpush1.bf16.msra.mxu0 %v5638
      %7525 = vmatprep.subr.bf16.mxu0 0
      %7526 = vmatpush1.bf16.msra.mxu0 %v5639
      %7527 = vmatprep.subr.bf16.mxu0 0
      %7528 = vmatpush1.bf16.msra.mxu0 %v5640
      %7529 = vmatprep.subr.bf16.mxu0 0
      %7530 = vmatpush1.bf16.msra.mxu0 %v5641
      %7531 = vmatprep.subr.bf16.mxu0 0
      %7532 = vmatpush1.bf16.msra.mxu0 %v5642
      %7533 = vmatprep.subr.bf16.mxu0 0
      %7534 = vmatpush1.bf16.msra.mxu0 %v5643
      %7535 = vmatprep.subr.bf16.mxu0 0
      %7536 = vmatpush1.bf16.msra.mxu0 %v5644
      %7537 = vmatprep.subr.bf16.mxu0 0
      %7538 = vmatpush1.bf16.msra.mxu0 %v5645
      %7539 = vmatprep.subr.bf16.mxu0 0
      %7540 = vmatpush1.bf16.msra.mxu0 %v5646
      %7541 = vmatprep.subr.bf16.mxu0 0
      %7542 = vmatpush1.bf16.msra.mxu0 %v5647
      %7543 = vmatprep.subr.bf16.mxu0 0
      %7544 = vmatpush1.bf16.msra.mxu0 %v5648
      %7545 = vmatprep.mubr.bf16.mxu0 %v2120
      %7546 = vmatmul.mubr.bf16.gmra.mrb[0].mxu0 %v2119
      %v7547 = vpop.f32.mrb[0].mxu0
      %v7548 = vadd.f32 %v7508, %v7547
      %v7549 = vpop.f32.mrb[0].mxu0
      %v7550 = vpop.f32.mrb[0].mxu0
      %v7551 = vpop.f32.mrb[0].mxu0
      %7552 = vdwg.mxu0
      %7553 = vmatprep.subr.bf16.mxu0 0
      %7554 = vmatpush1.bf16.msra.mxu0 %v5649
      %7555 = vmatprep.subr.bf16.mxu0 0
      %7556 = vmatpush1.bf16.msra.mxu0 %v5650
      %7557 = vmatprep.subr.bf16.mxu0 0
      %7558 = vmatpush1.bf16.msra.mxu0 %v5651
      %7559 = vmatprep.subr.bf16.mxu0 0
      %7560 = vmatpush1.bf16.msra.mxu0 %v5652
      %7561 = vmatprep.subr.bf16.mxu0 0
      %7562 = vmatpush1.bf16.msra.mxu0 %v5653
      %7563 = vmatprep.subr.bf16.mxu0 0
      %7564 = vmatpush1.bf16.msra.mxu0 %v5654
      %7565 = vmatprep.subr.bf16.mxu0 0
      %7566 = vmatpush1.bf16.msra.mxu0 %v5655
      %7567 = vmatprep.subr.bf16.mxu0 0
      %7568 = vmatpush1.bf16.msra.mxu0 %v5656
      %7569 = vmatprep.subr.bf16.mxu0 0
      %7570 = vmatpush1.bf16.msra.mxu0 %v5657
      %7571 = vmatprep.subr.bf16.mxu0 0
      %7572 = vmatpush1.bf16.msra.mxu0 %v5658
      %7573 = vmatprep.subr.bf16.mxu0 0
      %7574 = vmatpush1.bf16.msra.mxu0 %v5659
      %7575 = vmatprep.subr.bf16.mxu0 0
      %7576 = vmatpush1.bf16.msra.mxu0 %v5660
      %7577 = vmatprep.subr.bf16.mxu0 0
      %7578 = vmatpush1.bf16.msra.mxu0 %v5661
      %7579 = vmatprep.subr.bf16.mxu0 0
      %7580 = vmatpush1.bf16.msra.mxu0 %v5662
      %7581 = vmatprep.subr.bf16.mxu0 0
      %7582 = vmatpush1.bf16.msra.mxu0 %v5663
      %7583 = vmatprep.subr.bf16.mxu0 0
      %7584 = vmatpush1.bf16.msra.mxu0 %v5664
      %7585 = vmatprep.mubr.bf16.mxu0 %v2122
      %7586 = vmatmul.mubr.bf16.gmra.mrb[0].mxu0 %v2121
      %v7587 = vpop.f32.mrb[0].mxu0
      %v7588 = vadd.f32 %v7548, %v7587
      %v7589 = vpop.f32.mrb[0].mxu0
      %v7590 = vpop.f32.mrb[0].mxu0
      %v7591 = vpop.f32.mrb[0].mxu0
      %7592 = vdwg.mxu0
      %7593 = vmatprep.subr.bf16.mxu0 0
      %7594 = vmatpush1.bf16.msra.mxu0 %v5665
      %7595 = vmatprep.subr.bf16.mxu0 0
      %7596 = vmatpush1.bf16.msra.mxu0 %v5666
      %7597 = vmatprep.subr.bf16.mxu0 0
      %7598 = vmatpush1.bf16.msra.mxu0 %v5667
      %7599 = vmatprep.subr.bf16.mxu0 0
      %7600 = vmatpush1.bf16.msra.mxu0 %v5668
      %7601 = vmatprep.subr.bf16.mxu0 0
      %7602 = vmatpush1.bf16.msra.mxu0 %v5669
      %7603 = vmatprep.subr.bf16.mxu0 0
      %7604 = vmatpush1.bf16.msra.mxu0 %v5670
      %7605 = vmatprep.subr.bf16.mxu0 0
      %7606 = vmatpush1.bf16.msra.mxu0 %v5671
      %7607 = vmatprep.subr.bf16.mxu0 0
      %7608 = vmatpush1.bf16.msra.mxu0 %v5672
      %7609 = vmatprep.subr.bf16.mxu0 0
      %7610 = vmatpush1.bf16.msra.mxu0 %v5673
      %7611 = vmatprep.subr.bf16.mxu0 0
      %7612 = vmatpush1.bf16.msra.mxu0 %v5674
      %7613 = vmatprep.subr.bf16.mxu0 0
      %7614 = vmatpush1.bf16.msra.mxu0 %v5675
      %7615 = vmatprep.subr.bf16.mxu0 0
      %7616 = vmatpush1.bf16.msra.mxu0 %v5676
      %7617 = vmatprep.subr.bf16.mxu0 0
      %7618 = vmatpush1.bf16.msra.mxu0 %v5677
      %7619 = vmatprep.subr.bf16.mxu0 0
      %7620 = vmatpush1.bf16.msra.mxu0 %v5678
      %7621 = vmatprep.subr.bf16.mxu0 0
      %7622 = vmatpush1.bf16.msra.mxu0 %v5679
      %7623 = vmatprep.subr.bf16.mxu0 0
      %7624 = vmatpush1.bf16.msra.mxu0 %v5680
      %7625 = vmatprep.mubr.bf16.mxu0 %v2124
      %7626 = vmatmul.mubr.bf16.gmra.mrb[0].mxu0 %v2123
      %v7627 = vpop.f32.mrb[0].mxu0
      %v7628 = vadd.f32 %v7588, %v7627
      %v7629 = vpop.f32.mrb[0].mxu0
      %v7630 = vpop.f32.mrb[0].mxu0
      %v7631 = vpop.f32.mrb[0].mxu0
      %7632 = vdwg.mxu0
      %7633 = vmatprep.subr.bf16.mxu0 0
      %7634 = vmatpush1.bf16.msra.mxu0 %v5681
      %7635 = vmatprep.subr.bf16.mxu0 0
      %7636 = vmatpush1.bf16.msra.mxu0 %v5682
      %7637 = vmatprep.subr.bf16.mxu0 0
      %7638 = vmatpush1.bf16.msra.mxu0 %v5683
      %7639 = vmatprep.subr.bf16.mxu0 0
      %7640 = vmatpush1.bf16.msra.mxu0 %v5684
      %7641 = vmatprep.subr.bf16.mxu0 0
      %7642 = vmatpush1.bf16.msra.mxu0 %v5685
      %7643 = vmatprep.subr.bf16.mxu0 0
      %7644 = vmatpush1.bf16.msra.mxu0 %v5686
      %7645 = vmatprep.subr.bf16.mxu0 0
      %7646 = vmatpush1.bf16.msra.mxu0 %v5687
      %7647 = vmatprep.subr.bf16.mxu0 0
      %7648 = vmatpush1.bf16.msra.mxu0 %v5688
      %7649 = vmatprep.subr.bf16.mxu0 0
      %7650 = vmatpush1.bf16.msra.mxu0 %v5689
      %7651 = vmatprep.subr.bf16.mxu0 0
      %7652 = vmatpush1.bf16.msra.mxu0 %v5690
      %7653 = vmatprep.subr.bf16.mxu0 0
      %7654 = vmatpush1.bf16.msra.mxu0 %v5691
      %7655 = vmatprep.subr.bf16.mxu0 0
      %7656 = vmatpush1.bf16.msra.mxu0 %v5692
      %7657 = vmatprep.subr.bf16.mxu0 0
      %7658 = vmatpush1.bf16.msra.mxu0 %v5693
      %7659 = vmatprep.subr.bf16.mxu0 0
      %7660 = vmatpush1.bf16.msra.mxu0 %v5694
      %7661 = vmatprep.subr.bf16.mxu0 0
      %7662 = vmatpush1.bf16.msra.mxu0 %v5695
      %7663 = vmatprep.subr.bf16.mxu0 0
      %7664 = vmatpush1.bf16.msra.mxu0 %v5696
      %7665 = vmatprep.mubr.bf16.mxu0 %v2126
      %7666 = vmatmul.mubr.bf16.gmra.mrb[0].mxu0 %v2125
      %v7667 = vpop.f32.mrb[0].mxu0
      %v7668 = vadd.f32 %v7628, %v7667
      %v7669 = vpop.f32.mrb[0].mxu0
      %v7670 = vpop.f32.mrb[0].mxu0
      %v7671 = vpop.f32.mrb[0].mxu0
      %7672 = vdwg.mxu0
      %7673 = vmatprep.subr.bf16.mxu0 0
      %7674 = vmatpush1.bf16.msra.mxu0 %v5697
      %7675 = vmatprep.subr.bf16.mxu0 0
      %7676 = vmatpush1.bf16.msra.mxu0 %v5698
      %7677 = vmatprep.subr.bf16.mxu0 0
      %7678 = vmatpush1.bf16.msra.mxu0 %v5699
      %7679 = vmatprep.subr.bf16.mxu0 0
      %7680 = vmatpush1.bf16.msra.mxu0 %v5700
      %7681 = vmatprep.subr.bf16.mxu0 0
      %7682 = vmatpush1.bf16.msra.mxu0 %v5701
      %7683 = vmatprep.subr.bf16.mxu0 0
      %7684 = vmatpush1.bf16.msra.mxu0 %v5702
      %7685 = vmatprep.subr.bf16.mxu0 0
      %7686 = vmatpush1.bf16.msra.mxu0 %v5703
      %7687 = vmatprep.subr.bf16.mxu0 0
      %7688 = vmatpush1.bf16.msra.mxu0 %v5704
      %7689 = vmatprep.subr.bf16.mxu0 0
      %7690 = vmatpush1.bf16.msra.mxu0 %v5705
      %7691 = vmatprep.subr.bf16.mxu0 0
      %7692 = vmatpush1.bf16.msra.mxu0 %v5706
      %7693 = vmatprep.subr.bf16.mxu0 0
      %7694 = vmatpush1.bf16.msra.mxu0 %v5707
      %7695 = vmatprep.subr.bf16.mxu0 0
      %7696 = vmatpush1.bf16.msra.mxu0 %v5708
      %7697 = vmatprep.subr.bf16.mxu0 0
      %7698 = vmatpush1.bf16.msra.mxu0 %v5709
      %7699 = vmatprep.subr.bf16.mxu0 0
      %7700 = vmatpush1.bf16.msra.mxu0 %v5710
      %7701 = vmatprep.subr.bf16.mxu0 0
      %7702 = vmatpush1.bf16.msra.mxu0 %v5711
      %7703 = vmatprep.subr.bf16.mxu0 0
      %7704 = vmatpush1.bf16.msra.mxu0 %v5712
      %7705 = vmatprep.mubr.bf16.mxu0 %v2128
      %7706 = vmatmul.mubr.bf16.gmra.mrb[0].mxu0 %v2127
      %v7707 = vpop.f32.mrb[0].mxu0
      %v7708 = vadd.f32 %v7668, %v7707
      %v7709 = vpop.f32.mrb[0].mxu0
      %v7710 = vpop.f32.mrb[0].mxu0
      %v7711 = vpop.f32.mrb[0].mxu0
      %7712 = vdwg.mxu0
      %7713 = vmatprep.subr.bf16.mxu0 0
      %7714 = vmatpush1.bf16.msra.mxu0 %v5713
      %7715 = vmatprep.subr.bf16.mxu0 0
      %7716 = vmatpush1.bf16.msra.mxu0 %v5714
      %7717 = vmatprep.subr.bf16.mxu0 0
      %7718 = vmatpush1.bf16.msra.mxu0 %v5715
      %7719 = vmatprep.subr.bf16.mxu0 0
      %7720 = vmatpush1.bf16.msra.mxu0 %v5716
      %7721 = vmatprep.subr.bf16.mxu0 0
      %7722 = vmatpush1.bf16.msra.mxu0 %v5717
      %7723 = vmatprep.subr.bf16.mxu0 0
      %7724 = vmatpush1.bf16.msra.mxu0 %v5718
      %7725 = vmatprep.subr.bf16.mxu0 0
      %7726 = vmatpush1.bf16.msra.mxu0 %v5719
      %7727 = vmatprep.subr.bf16.mxu0 0
      %7728 = vmatpush1.bf16.msra.mxu0 %v5720
      %7729 = vmatprep.subr.bf16.mxu0 0
      %7730 = vmatpush1.bf16.msra.mxu0 %v5721
      %7731 = vmatprep.subr.bf16.mxu0 0
      %7732 = vmatpush1.bf16.msra.mxu0 %v5722
      %7733 = vmatprep.subr.bf16.mxu0 0
      %7734 = vmatpush1.bf16.msra.mxu0 %v5723
      %7735 = vmatprep.subr.bf16.mxu0 0
      %7736 = vmatpush1.bf16.msra.mxu0 %v5724
      %7737 = vmatprep.subr.bf16.mxu0 0
      %7738 = vmatpush1.bf16.msra.mxu0 %v5725
      %7739 = vmatprep.subr.bf16.mxu0 0
      %7740 = vmatpush1.bf16.msra.mxu0 %v5726
      %7741 = vmatprep.subr.bf16.mxu0 0
      %7742 = vmatpush1.bf16.msra.mxu0 %v5727
      %7743 = vmatprep.subr.bf16.mxu0 0
      %7744 = vmatpush1.bf16.msra.mxu0 %v5728
      %7745 = vmatprep.mubr.bf16.mxu0 %v2130
      %7746 = vmatmul.mubr.bf16.gmra.mrb[0].mxu0 %v2129
      %v7747 = vpop.f32.mrb[0].mxu0
      %v7748 = vadd.f32 %v7708, %v7747
      %v7749 = vpop.f32.mrb[0].mxu0
      %v7750 = vpop.f32.mrb[0].mxu0
      %v7751 = vpop.f32.mrb[0].mxu0
      %7752 = vdwg.mxu0
      %7753 = vmatprep.subr.bf16.mxu0 0
      %7754 = vmatpush1.bf16.msra.mxu0 %v5729
      %7755 = vmatprep.subr.bf16.mxu0 0
      %7756 = vmatpush1.bf16.msra.mxu0 %v5730
      %7757 = vmatprep.subr.bf16.mxu0 0
      %7758 = vmatpush1.bf16.msra.mxu0 %v5731
      %7759 = vmatprep.subr.bf16.mxu0 0
      %7760 = vmatpush1.bf16.msra.mxu0 %v5732
      %7761 = vmatprep.subr.bf16.mxu0 0
      %7762 = vmatpush1.bf16.msra.mxu0 %v5733
      %7763 = vmatprep.subr.bf16.mxu0 0
      %7764 = vmatpush1.bf16.msra.mxu0 %v5734
      %7765 = vmatprep.subr.bf16.mxu0 0
      %7766 = vmatpush1.bf16.msra.mxu0 %v5735
      %7767 = vmatprep.subr.bf16.mxu0 0
      %7768 = vmatpush1.bf16.msra.mxu0 %v5736
      %7769 = vmatprep.subr.bf16.mxu0 0
      %7770 = vmatpush1.bf16.msra.mxu0 %v5737
      %7771 = vmatprep.subr.bf16.mxu0 0
      %7772 = vmatpush1.bf16.msra.mxu0 %v5738
      %7773 = vmatprep.subr.bf16.mxu0 0
      %7774 = vmatpush1.bf16.msra.mxu0 %v5739
      %7775 = vmatprep.subr.bf16.mxu0 0
      %7776 = vmatpush1.bf16.msra.mxu0 %v5740
      %7777 = vmatprep.subr.bf16.mxu0 0
      %7778 = vmatpush1.bf16.msra.mxu0 %v5741
      %7779 = vmatprep.subr.bf16.mxu0 0
      %7780 = vmatpush1.bf16.msra.mxu0 %v5742
      %7781 = vmatprep.subr.bf16.mxu0 0
      %7782 = vmatpush1.bf16.msra.mxu0 %v5743
      %7783 = vmatprep.subr.bf16.mxu0 0
      %7784 = vmatpush1.bf16.msra.mxu0 %v5744
      %7785 = vmatprep.mubr.bf16.mxu0 %v2132
      %7786 = vmatmul.mubr.bf16.gmra.mrb[0].mxu0 %v2131
      %v7787 = vpop.f32.mrb[0].mxu0
      %v7788 = vadd.f32 %v7748, %v7787
      %v7789 = vpop.f32.mrb[0].mxu0
      %v7790 = vpop.f32.mrb[0].mxu0
      %v7791 = vpop.f32.mrb[0].mxu0
      %7792 = vdwg.mxu0
      %7793 = vmatprep.subr.bf16.mxu0 0
      %7794 = vmatpush1.bf16.msra.mxu0 %v5745
      %7795 = vmatprep.subr.bf16.mxu0 0
      %7796 = vmatpush1.bf16.msra.mxu0 %v5746
      %7797 = vmatprep.subr.bf16.mxu0 0
      %7798 = vmatpush1.bf16.msra.mxu0 %v5747
      %7799 = vmatprep.subr.bf16.mxu0 0
      %7800 = vmatpush1.bf16.msra.mxu0 %v5748
      %7801 = vmatprep.subr.bf16.mxu0 0
      %7802 = vmatpush1.bf16.msra.mxu0 %v5749
      %7803 = vmatprep.subr.bf16.mxu0 0
      %7804 = vmatpush1.bf16.msra.mxu0 %v5750
      %7805 = vmatprep.subr.bf16.mxu0 0
      %7806 = vmatpush1.bf16.msra.mxu0 %v5751
      %7807 = vmatprep.subr.bf16.mxu0 0
      %7808 = vmatpush1.bf16.msra.mxu0 %v5752
      %7809 = vmatprep.subr.bf16.mxu0 0
      %7810 = vmatpush1.bf16.msra.mxu0 %v5753
      %7811 = vmatprep.subr.bf16.mxu0 0
      %7812 = vmatpush1.bf16.msra.mxu0 %v5754
      %7813 = vmatprep.subr.bf16.mxu0 0
      %7814 = vmatpush1.bf16.msra.mxu0 %v5755
      %7815 = vmatprep.subr.bf16.mxu0 0
      %7816 = vmatpush1.bf16.msra.mxu0 %v5756
      %7817 = vmatprep.subr.bf16.mxu0 0
      %7818 = vmatpush1.bf16.msra.mxu0 %v5757
      %7819 = vmatprep.subr.bf16.mxu0 0
      %7820 = vmatpush1.bf16.msra.mxu0 %v5758
      %7821 = vmatprep.subr.bf16.mxu0 0
      %7822 = vmatpush1.bf16.msra.mxu0 %v5759
      %7823 = vmatprep.subr.bf16.mxu0 0
      %7824 = vmatpush1.bf16.msra.mxu0 %v5760
      %7825 = vmatprep.mubr.bf16.mxu0 %v2134
      %7826 = vmatmul.mubr.bf16.gmra.mrb[0].mxu0 %v2133
      %v7827 = vpop.f32.mrb[0].mxu0
      %v7828 = vadd.f32 %v7788, %v7827
      %v7829 = vpop.f32.mrb[0].mxu0
      %v7830 = vpop.f32.mrb[0].mxu0
      %v7831 = vpop.f32.mrb[0].mxu0
      %7832 = vdwg.mxu0
      %7833 = vmatprep.subr.bf16.mxu0 0
      %7834 = vmatpush1.bf16.msra.mxu0 %v5761
      %7835 = vmatprep.subr.bf16.mxu0 0
      %7836 = vmatpush1.bf16.msra.mxu0 %v5762
      %7837 = vmatprep.subr.bf16.mxu0 0
      %7838 = vmatpush1.bf16.msra.mxu0 %v5763
      %7839 = vmatprep.subr.bf16.mxu0 0
      %7840 = vmatpush1.bf16.msra.mxu0 %v5764
      %7841 = vmatprep.subr.bf16.mxu0 0
      %7842 = vmatpush1.bf16.msra.mxu0 %v5765
      %7843 = vmatprep.subr.bf16.mxu0 0
      %7844 = vmatpush1.bf16.msra.mxu0 %v5766
      %7845 = vmatprep.subr.bf16.mxu0 0
      %7846 = vmatpush1.bf16.msra.mxu0 %v5767
      %7847 = vmatprep.subr.bf16.mxu0 0
      %7848 = vmatpush1.bf16.msra.mxu0 %v5768
      %7849 = vmatprep.subr.bf16.mxu0 0
      %7850 = vmatpush1.bf16.msra.mxu0 %v5769
      %7851 = vmatprep.subr.bf16.mxu0 0
      %7852 = vmatpush1.bf16.msra.mxu0 %v5770
      %7853 = vmatprep.subr.bf16.mxu0 0
      %7854 = vmatpush1.bf16.msra.mxu0 %v5771
      %7855 = vmatprep.subr.bf16.mxu0 0
      %7856 = vmatpush1.bf16.msra.mxu0 %v5772
      %7857 = vmatprep.subr.bf16.mxu0 0
      %7858 = vmatpush1.bf16.msra.mxu0 %v5773
      %7859 = vmatprep.subr.bf16.mxu0 0
      %7860 = vmatpush1.bf16.msra.mxu0 %v5774
      %7861 = vmatprep.subr.bf16.mxu0 0
      %7862 = vmatpush1.bf16.msra.mxu0 %v5775
      %7863 = vmatprep.subr.bf16.mxu0 0
      %7864 = vmatpush1.bf16.msra.mxu0 %v5776
      %7865 = vmatprep.mubr.bf16.mxu0 %v2136
      %7866 = vmatmul.mubr.bf16.gmra.mrb[0].mxu0 %v2135
      %v7867 = vpop.f32.mrb[0].mxu0
      %v7868 = vadd.f32 %v7828, %v7867
      %v7869 = vpop.f32.mrb[0].mxu0
      %v7870 = vpop.f32.mrb[0].mxu0
      %v7871 = vpop.f32.mrb[0].mxu0
      %7872 = vdwg.mxu0
      %7873 = vmatprep.subr.bf16.mxu0 0
      %7874 = vmatpush1.bf16.msra.mxu0 %v5777
      %7875 = vmatprep.subr.bf16.mxu0 0
      %7876 = vmatpush1.bf16.msra.mxu0 %v5778
      %7877 = vmatprep.subr.bf16.mxu0 0
      %7878 = vmatpush1.bf16.msra.mxu0 %v5779
      %7879 = vmatprep.subr.bf16.mxu0 0
      %7880 = vmatpush1.bf16.msra.mxu0 %v5780
      %7881 = vmatprep.subr.bf16.mxu0 0
      %7882 = vmatpush1.bf16.msra.mxu0 %v5781
      %7883 = vmatprep.subr.bf16.mxu0 0
      %7884 = vmatpush1.bf16.msra.mxu0 %v5782
      %7885 = vmatprep.subr.bf16.mxu0 0
      %7886 = vmatpush1.bf16.msra.mxu0 %v5783
      %7887 = vmatprep.subr.bf16.mxu0 0
      %7888 = vmatpush1.bf16.msra.mxu0 %v5784
      %7889 = vmatprep.subr.bf16.mxu0 0
      %7890 = vmatpush1.bf16.msra.mxu0 %v5785
      %7891 = vmatprep.subr.bf16.mxu0 0
      %7892 = vmatpush1.bf16.msra.mxu0 %v5786
      %7893 = vmatprep.subr.bf16.mxu0 0
      %7894 = vmatpush1.bf16.msra.mxu0 %v5787
      %7895 = vmatprep.subr.bf16.mxu0 0
      %7896 = vmatpush1.bf16.msra.mxu0 %v5788
      %7897 = vmatprep.subr.bf16.mxu0 0
      %7898 = vmatpush1.bf16.msra.mxu0 %v5789
      %7899 = vmatprep.subr.bf16.mxu0 0
      %7900 = vmatpush1.bf16.msra.mxu0 %v5790
      %7901 = vmatprep.subr.bf16.mxu0 0
      %7902 = vmatpush1.bf16.msra.mxu0 %v5791
      %7903 = vmatprep.subr.bf16.mxu0 0
      %7904 = vmatpush1.bf16.msra.mxu0 %v5792
      %7905 = vmatprep.mubr.bf16.mxu0 %v2138
      %7906 = vmatmul.mubr.bf16.gmra.mrb[0].mxu0 %v2137
      %v7907 = vpop.f32.mrb[0].mxu0
      %v7908 = vadd.f32 %v7868, %v7907
      %v7909 = vpop.f32.mrb[0].mxu0
      %v7910 = vpop.f32.mrb[0].mxu0
      %v7911 = vpop.f32.mrb[0].mxu0
      %7912 = vdwg.mxu0
      %7913 = vmatprep.subr.bf16.mxu0 0
      %7914 = vmatpush1.bf16.msra.mxu0 %v5793
      %7915 = vmatprep.subr.bf16.mxu0 0
      %7916 = vmatpush1.bf16.msra.mxu0 %v5794
      %7917 = vmatprep.subr.bf16.mxu0 0
      %7918 = vmatpush1.bf16.msra.mxu0 %v5795
      %7919 = vmatprep.subr.bf16.mxu0 0
      %7920 = vmatpush1.bf16.msra.mxu0 %v5796
      %7921 = vmatprep.subr.bf16.mxu0 0
      %7922 = vmatpush1.bf16.msra.mxu0 %v5797
      %7923 = vmatprep.subr.bf16.mxu0 0
      %7924 = vmatpush1.bf16.msra.mxu0 %v5798
      %7925 = vmatprep.subr.bf16.mxu0 0
      %7926 = vmatpush1.bf16.msra.mxu0 %v5799
      %7927 = vmatprep.subr.bf16.mxu0 0
      %7928 = vmatpush1.bf16.msra.mxu0 %v5800
      %7929 = vmatprep.subr.bf16.mxu0 0
      %7930 = vmatpush1.bf16.msra.mxu0 %v5801
      %7931 = vmatprep.subr.bf16.mxu0 0
      %7932 = vmatpush1.bf16.msra.mxu0 %v5802
      %7933 = vmatprep.subr.bf16.mxu0 0
      %7934 = vmatpush1.bf16.msra.mxu0 %v5803
      %7935 = vmatprep.subr.bf16.mxu0 0
      %7936 = vmatpush1.bf16.msra.mxu0 %v5804
      %7937 = vmatprep.subr.bf16.mxu0 0
      %7938 = vmatpush1.bf16.msra.mxu0 %v5805
      %7939 = vmatprep.subr.bf16.mxu0 0
      %7940 = vmatpush1.bf16.msra.mxu0 %v5806
      %7941 = vmatprep.subr.bf16.mxu0 0
      %7942 = vmatpush1.bf16.msra.mxu0 %v5807
      %7943 = vmatprep.subr.bf16.mxu0 0
      %7944 = vmatpush1.bf16.msra.mxu0 %v5808
      %7945 = vmatprep.mubr.bf16.mxu0 %v2140
      %7946 = vmatmul.mubr.bf16.gmra.mrb[0].mxu0 %v2139
      %v7947 = vpop.f32.mrb[0].mxu0
      %v7948 = vadd.f32 %v7908, %v7947
      %v7949 = vpop.f32.mrb[0].mxu0
      %v7950 = vpop.f32.mrb[0].mxu0
      %v7951 = vpop.f32.mrb[0].mxu0
      %7952 = vdwg.mxu0
      %7953 = vmatprep.subr.bf16.mxu0 0
      %7954 = vmatpush1.bf16.msra.mxu0 %v5809
      %7955 = vmatprep.subr.bf16.mxu0 0
      %7956 = vmatpush1.bf16.msra.mxu0 %v5810
      %7957 = vmatprep.subr.bf16.mxu0 0
      %7958 = vmatpush1.bf16.msra.mxu0 %v5811
      %7959 = vmatprep.subr.bf16.mxu0 0
      %7960 = vmatpush1.bf16.msra.mxu0 %v5812
      %7961 = vmatprep.subr.bf16.mxu0 0
      %7962 = vmatpush1.bf16.msra.mxu0 %v5813
      %7963 = vmatprep.subr.bf16.mxu0 0
      %7964 = vmatpush1.bf16.msra.mxu0 %v5814
      %7965 = vmatprep.subr.bf16.mxu0 0
      %7966 = vmatpush1.bf16.msra.mxu0 %v5815
      %7967 = vmatprep.subr.bf16.mxu0 0
      %7968 = vmatpush1.bf16.msra.mxu0 %v5816
      %7969 = vmatprep.subr.bf16.mxu0 0
      %7970 = vmatpush1.bf16.msra.mxu0 %v5817
      %7971 = vmatprep.subr.bf16.mxu0 0
      %7972 = vmatpush1.bf16.msra.mxu0 %v5818
      %7973 = vmatprep.subr.bf16.mxu0 0
      %7974 = vmatpush1.bf16.msra.mxu0 %v5819
      %7975 = vmatprep.subr.bf16.mxu0 0
      %7976 = vmatpush1.bf16.msra.mxu0 %v5820
      %7977 = vmatprep.subr.bf16.mxu0 0
      %7978 = vmatpush1.bf16.msra.mxu0 %v5821
      %7979 = vmatprep.subr.bf16.mxu0 0
      %7980 = vmatpush1.bf16.msra.mxu0 %v5822
      %7981 = vmatprep.subr.bf16.mxu0 0
      %7982 = vmatpush1.bf16.msra.mxu0 %v5823
      %7983 = vmatprep.subr.bf16.mxu0 0
      %7984 = vmatpush1.bf16.msra.mxu0 %v5824
      %7985 = vmatprep.mubr.bf16.mxu0 %v2142
      %7986 = vmatmul.mubr.bf16.gmra.mrb[0].mxu0 %v2141
      %v7987 = vpop.f32.mrb[0].mxu0
      %v7988 = vadd.f32 %v7948, %v7987
      %v7989 = vpop.f32.mrb[0].mxu0
      %v7990 = vpop.f32.mrb[0].mxu0
      %v7991 = vpop.f32.mrb[0].mxu0
      %7992 = vdwg.mxu0
      %7993 = vmatprep.subr.bf16.mxu0 0
      %7994 = vmatpush1.bf16.msra.mxu0 %v5825
      %7995 = vmatprep.subr.bf16.mxu0 0
      %7996 = vmatpush1.bf16.msra.mxu0 %v5826
      %7997 = vmatprep.subr.bf16.mxu0 0
      %7998 = vmatpush1.bf16.msra.mxu0 %v5827
      %7999 = vmatprep.subr.bf16.mxu0 0
      %8000 = vmatpush1.bf16.msra.mxu0 %v5828
      %8001 = vmatprep.subr.bf16.mxu0 0
      %8002 = vmatpush1.bf16.msra.mxu0 %v5829
      %8003 = vmatprep.subr.bf16.mxu0 0
      %8004 = vmatpush1.bf16.msra.mxu0 %v5830
      %8005 = vmatprep.subr.bf16.mxu0 0
      %8006 = vmatpush1.bf16.msra.mxu0 %v5831
      %8007 = vmatprep.subr.bf16.mxu0 0
      %8008 = vmatpush1.bf16.msra.mxu0 %v5832
      %8009 = vmatprep.subr.bf16.mxu0 0
      %8010 = vmatpush1.bf16.msra.mxu0 %v5833
      %8011 = vmatprep.subr.bf16.mxu0 0
      %8012 = vmatpush1.bf16.msra.mxu0 %v5834
      %8013 = vmatprep.subr.bf16.mxu0 0
      %8014 = vmatpush1.bf16.msra.mxu0 %v5835
      %8015 = vmatprep.subr.bf16.mxu0 0
      %8016 = vmatpush1.bf16.msra.mxu0 %v5836
      %8017 = vmatprep.subr.bf16.mxu0 0
      %8018 = vmatpush1.bf16.msra.mxu0 %v5837
      %8019 = vmatprep.subr.bf16.mxu0 0
      %8020 = vmatpush1.bf16.msra.mxu0 %v5838
      %8021 = vmatprep.subr.bf16.mxu0 0
      %8022 = vmatpush1.bf16.msra.mxu0 %v5839
      %8023 = vmatprep.subr.bf16.mxu0 0
      %8024 = vmatpush1.bf16.msra.mxu0 %v5840
      %8025 = vmatprep.mubr.bf16.mxu0 %v2144
      %8026 = vmatmul.mubr.bf16.gmra.mrb[0].mxu0 %v2143
      %v8027 = vpop.f32.mrb[0].mxu0
      %v8028 = vadd.f32 %v7988, %v8027
      %v8029 = vpop.f32.mrb[0].mxu0
      %v8030 = vpop.f32.mrb[0].mxu0
      %v8031 = vpop.f32.mrb[0].mxu0
      %8032 = vdwg.mxu0
      %8033 = vmatprep.subr.bf16.mxu0 0
      %8034 = vmatpush1.bf16.msra.mxu0 %v5841
      %8035 = vmatprep.subr.bf16.mxu0 0
      %8036 = vmatpush1.bf16.msra.mxu0 %v5842
      %8037 = vmatprep.subr.bf16.mxu0 0
      %8038 = vmatpush1.bf16.msra.mxu0 %v5843
      %8039 = vmatprep.subr.bf16.mxu0 0
      %8040 = vmatpush1.bf16.msra.mxu0 %v5844
      %8041 = vmatprep.subr.bf16.mxu0 0
      %8042 = vmatpush1.bf16.msra.mxu0 %v5845
      %8043 = vmatprep.subr.bf16.mxu0 0
      %8044 = vmatpush1.bf16.msra.mxu0 %v5846
      %8045 = vmatprep.subr.bf16.mxu0 0
      %8046 = vmatpush1.bf16.msra.mxu0 %v5847
      %8047 = vmatprep.subr.bf16.mxu0 0
      %8048 = vmatpush1.bf16.msra.mxu0 %v5848
      %8049 = vmatprep.subr.bf16.mxu0 0
      %8050 = vmatpush1.bf16.msra.mxu0 %v5849
      %8051 = vmatprep.subr.bf16.mxu0 0
      %8052 = vmatpush1.bf16.msra.mxu0 %v5850
      %8053 = vmatprep.subr.bf16.mxu0 0
      %8054 = vmatpush1.bf16.msra.mxu0 %v5851
      %8055 = vmatprep.subr.bf16.mxu0 0
      %8056 = vmatpush1.bf16.msra.mxu0 %v5852
      %8057 = vmatprep.subr.bf16.mxu0 0
      %8058 = vmatpush1.bf16.msra.mxu0 %v5853
      %8059 = vmatprep.subr.bf16.mxu0 0
      %8060 = vmatpush1.bf16.msra.mxu0 %v5854
      %8061 = vmatprep.subr.bf16.mxu0 0
      %8062 = vmatpush1.bf16.msra.mxu0 %v5855
      %8063 = vmatprep.subr.bf16.mxu0 0
      %8064 = vmatpush1.bf16.msra.mxu0 %v5856
      %8065 = vmatprep.mubr.bf16.mxu0 %v2146
      %8066 = vmatmul.mubr.bf16.gmra.mrb[0].mxu0 %v2145
      %v8067 = vpop.f32.mrb[0].mxu0
      %v8068 = vadd.f32 %v8028, %v8067
      %v8069 = vpop.f32.mrb[0].mxu0
      %v8070 = vpop.f32.mrb[0].mxu0
      %v8071 = vpop.f32.mrb[0].mxu0
      %8072 = vdwg.mxu0
      %8073 = vmatprep.subr.bf16.mxu0 0
      %8074 = vmatpush1.bf16.msra.mxu0 %v5857
      %8075 = vmatprep.subr.bf16.mxu0 0
      %8076 = vmatpush1.bf16.msra.mxu0 %v5858
      %8077 = vmatprep.subr.bf16.mxu0 0
      %8078 = vmatpush1.bf16.msra.mxu0 %v5859
      %8079 = vmatprep.subr.bf16.mxu0 0
      %8080 = vmatpush1.bf16.msra.mxu0 %v5860
      %8081 = vmatprep.subr.bf16.mxu0 0
      %8082 = vmatpush1.bf16.msra.mxu0 %v5861
      %8083 = vmatprep.subr.bf16.mxu0 0
      %8084 = vmatpush1.bf16.msra.mxu0 %v5862
      %8085 = vmatprep.subr.bf16.mxu0 0
      %8086 = vmatpush1.bf16.msra.mxu0 %v5863
      %8087 = vmatprep.subr.bf16.mxu0 0
      %8088 = vmatpush1.bf16.msra.mxu0 %v5864
      %8089 = vmatprep.subr.bf16.mxu0 0
      %8090 = vmatpush1.bf16.msra.mxu0 %v5865
      %8091 = vmatprep.subr.bf16.mxu0 0
      %8092 = vmatpush1.bf16.msra.mxu0 %v5866
      %8093 = vmatprep.subr.bf16.mxu0 0
      %8094 = vmatpush1.bf16.msra.mxu0 %v5867
      %8095 = vmatprep.subr.bf16.mxu0 0
      %8096 = vmatpush1.bf16.msra.mxu0 %v5868
      %8097 = vmatprep.subr.bf16.mxu0 0
      %8098 = vmatpush1.bf16.msra.mxu0 %v5869
      %8099 = vmatprep.subr.bf16.mxu0 0
      %8100 = vmatpush1.bf16.msra.mxu0 %v5870
      %8101 = vmatprep.subr.bf16.mxu0 0
      %8102 = vmatpush1.bf16.msra.mxu0 %v5871
      %8103 = vmatprep.subr.bf16.mxu0 0
      %8104 = vmatpush1.bf16.msra.mxu0 %v5872
      %8105 = vmatprep.mubr.bf16.mxu0 %v2148
      %8106 = vmatmul.mubr.bf16.gmra.mrb[0].mxu0 %v2147
      %v8107 = vpop.f32.mrb[0].mxu0
      %v8108 = vadd.f32 %v8068, %v8107
      %v8109 = vpop.f32.mrb[0].mxu0
      %v8110 = vpop.f32.mrb[0].mxu0
      %v8111 = vpop.f32.mrb[0].mxu0
      %8112 = vdwg.mxu0
      %8113 = vmatprep.subr.bf16.mxu0 0
      %8114 = vmatpush1.bf16.msra.mxu0 %v5873
      %8115 = vmatprep.subr.bf16.mxu0 0
      %8116 = vmatpush1.bf16.msra.mxu0 %v5874
      %8117 = vmatprep.subr.bf16.mxu0 0
      %8118 = vmatpush1.bf16.msra.mxu0 %v5875
      %8119 = vmatprep.subr.bf16.mxu0 0
      %8120 = vmatpush1.bf16.msra.mxu0 %v5876
      %8121 = vmatprep.subr.bf16.mxu0 0
      %8122 = vmatpush1.bf16.msra.mxu0 %v5877
      %8123 = vmatprep.subr.bf16.mxu0 0
      %8124 = vmatpush1.bf16.msra.mxu0 %v5878
      %8125 = vmatprep.subr.bf16.mxu0 0
      %8126 = vmatpush1.bf16.msra.mxu0 %v5879
      %8127 = vmatprep.subr.bf16.mxu0 0
      %8128 = vmatpush1.bf16.msra.mxu0 %v5880
      %8129 = vmatprep.subr.bf16.mxu0 0
      %8130 = vmatpush1.bf16.msra.mxu0 %v5881
      %8131 = vmatprep.subr.bf16.mxu0 0
      %8132 = vmatpush1.bf16.msra.mxu0 %v5882
      %8133 = vmatprep.subr.bf16.mxu0 0
      %8134 = vmatpush1.bf16.msra.mxu0 %v5883
      %8135 = vmatprep.subr.bf16.mxu0 0
      %8136 = vmatpush1.bf16.msra.mxu0 %v5884
      %8137 = vmatprep.subr.bf16.mxu0 0
      %8138 = vmatpush1.bf16.msra.mxu0 %v5885
      %8139 = vmatprep.subr.bf16.mxu0 0
      %8140 = vmatpush1.bf16.msra.mxu0 %v5886
      %8141 = vmatprep.subr.bf16.mxu0 0
      %8142 = vmatpush1.bf16.msra.mxu0 %v5887
      %8143 = vmatprep.subr.bf16.mxu0 0
      %8144 = vmatpush1.bf16.msra.mxu0 %v5888
      %8145 = vmatprep.mubr.bf16.mxu0 %v2150
      %8146 = vmatmul.mubr.bf16.gmra.mrb[0].mxu0 %v2149
      %v8147 = vpop.f32.mrb[0].mxu0
      %v8148 = vadd.f32 %v8108, %v8147
      %v8149 = vpop.f32.mrb[0].mxu0
      %v8150 = vpop.f32.mrb[0].mxu0
      %v8151 = vpop.f32.mrb[0].mxu0
      %8152 = vdwg.mxu0
      %8153 = vmatprep.subr.bf16.mxu0 0
      %8154 = vmatpush1.bf16.msra.mxu0 %v5889
      %8155 = vmatprep.subr.bf16.mxu0 0
      %8156 = vmatpush1.bf16.msra.mxu0 %v5890
      %8157 = vmatprep.subr.bf16.mxu0 0
      %8158 = vmatpush1.bf16.msra.mxu0 %v5891
      %8159 = vmatprep.subr.bf16.mxu0 0
      %8160 = vmatpush1.bf16.msra.mxu0 %v5892
      %8161 = vmatprep.subr.bf16.mxu0 0
      %8162 = vmatpush1.bf16.msra.mxu0 %v5893
      %8163 = vmatprep.subr.bf16.mxu0 0
      %8164 = vmatpush1.bf16.msra.mxu0 %v5894
      %8165 = vmatprep.subr.bf16.mxu0 0
      %8166 = vmatpush1.bf16.msra.mxu0 %v5895
      %8167 = vmatprep.subr.bf16.mxu0 0
      %8168 = vmatpush1.bf16.msra.mxu0 %v5896
      %8169 = vmatprep.subr.bf16.mxu0 0
      %8170 = vmatpush1.bf16.msra.mxu0 %v5897
      %8171 = vmatprep.subr.bf16.mxu0 0
      %8172 = vmatpush1.bf16.msra.mxu0 %v5898
      %8173 = vmatprep.subr.bf16.mxu0 0
      %8174 = vmatpush1.bf16.msra.mxu0 %v5899
      %8175 = vmatprep.subr.bf16.mxu0 0
      %8176 = vmatpush1.bf16.msra.mxu0 %v5900
      %8177 = vmatprep.subr.bf16.mxu0 0
      %8178 = vmatpush1.bf16.msra.mxu0 %v5901
      %8179 = vmatprep.subr.bf16.mxu0 0
      %8180 = vmatpush1.bf16.msra.mxu0 %v5902
      %8181 = vmatprep.subr.bf16.mxu0 0
      %8182 = vmatpush1.bf16.msra.mxu0 %v5903
      %8183 = vmatprep.subr.bf16.mxu0 0
      %8184 = vmatpush1.bf16.msra.mxu0 %v5904
      %8185 = vmatprep.mubr.bf16.mxu0 %v2152
      %8186 = vmatmul.mubr.bf16.gmra.mrb[0].mxu0 %v2151
      %v8187 = vpop.f32.mrb[0].mxu0
      %v8188 = vadd.f32 %v8148, %v8187
      %v8189 = vpop.f32.mrb[0].mxu0
      %v8190 = vpop.f32.mrb[0].mxu0
      %v8191 = vpop.f32.mrb[0].mxu0
      %8192 = vdwg.mxu0
      %8193 = vmatprep.subr.bf16.mxu0 0
      %8194 = vmatpush1.bf16.msra.mxu0 %v5905
      %8195 = vmatprep.subr.bf16.mxu0 0
      %8196 = vmatpush1.bf16.msra.mxu0 %v5906
      %8197 = vmatprep.subr.bf16.mxu0 0
      %8198 = vmatpush1.bf16.msra.mxu0 %v5907
      %8199 = vmatprep.subr.bf16.mxu0 0
      %8200 = vmatpush1.bf16.msra.mxu0 %v5908
      %8201 = vmatprep.subr.bf16.mxu0 0
      %8202 = vmatpush1.bf16.msra.mxu0 %v5909
      %8203 = vmatprep.subr.bf16.mxu0 0
      %8204 = vmatpush1.bf16.msra.mxu0 %v5910
      %8205 = vmatprep.subr.bf16.mxu0 0
      %8206 = vmatpush1.bf16.msra.mxu0 %v5911
      %8207 = vmatprep.subr.bf16.mxu0 0
      %8208 = vmatpush1.bf16.msra.mxu0 %v5912
      %8209 = vmatprep.subr.bf16.mxu0 0
      %8210 = vmatpush1.bf16.msra.mxu0 %v5913
      %8211 = vmatprep.subr.bf16.mxu0 0
      %8212 = vmatpush1.bf16.msra.mxu0 %v5914
      %8213 = vmatprep.subr.bf16.mxu0 0
      %8214 = vmatpush1.bf16.msra.mxu0 %v5915
      %8215 = vmatprep.subr.bf16.mxu0 0
      %8216 = vmatpush1.bf16.msra.mxu0 %v5916
      %8217 = vmatprep.subr.bf16.mxu0 0
      %8218 = vmatpush1.bf16.msra.mxu0 %v5917
      %8219 = vmatprep.subr.bf16.mxu0 0
      %8220 = vmatpush1.bf16.msra.mxu0 %v5918
      %8221 = vmatprep.subr.bf16.mxu0 0
      %8222 = vmatpush1.bf16.msra.mxu0 %v5919
      %8223 = vmatprep.subr.bf16.mxu0 0
      %8224 = vmatpush1.bf16.msra.mxu0 %v5920
      %8225 = vmatprep.mubr.bf16.mxu0 %v2154
      %8226 = vmatmul.mubr.bf16.gmra.mrb[0].mxu0 %v2153
      %v8227 = vpop.f32.mrb[0].mxu0
      %v8228 = vadd.f32 %v8188, %v8227
      %v8229 = vpop.f32.mrb[0].mxu0
      %v8230 = vpop.f32.mrb[0].mxu0
      %v8231 = vpop.f32.mrb[0].mxu0
      %8232 = vdwg.mxu0
      %8233 = vmatprep.subr.bf16.mxu0 0
      %8234 = vmatpush1.bf16.msra.mxu0 %v5921
      %8235 = vmatprep.subr.bf16.mxu0 0
      %8236 = vmatpush1.bf16.msra.mxu0 %v5922
      %8237 = vmatprep.subr.bf16.mxu0 0
      %8238 = vmatpush1.bf16.msra.mxu0 %v5923
      %8239 = vmatprep.subr.bf16.mxu0 0
      %8240 = vmatpush1.bf16.msra.mxu0 %v5924
      %8241 = vmatprep.subr.bf16.mxu0 0
      %8242 = vmatpush1.bf16.msra.mxu0 %v5925
      %8243 = vmatprep.subr.bf16.mxu0 0
      %8244 = vmatpush1.bf16.msra.mxu0 %v5926
      %8245 = vmatprep.subr.bf16.mxu0 0
      %8246 = vmatpush1.bf16.msra.mxu0 %v5927
      %8247 = vmatprep.subr.bf16.mxu0 0
      %8248 = vmatpush1.bf16.msra.mxu0 %v5928
      %8249 = vmatprep.subr.bf16.mxu0 0
      %8250 = vmatpush1.bf16.msra.mxu0 %v5929
      %8251 = vmatprep.subr.bf16.mxu0 0
      %8252 = vmatpush1.bf16.msra.mxu0 %v5930
      %8253 = vmatprep.subr.bf16.mxu0 0
      %8254 = vmatpush1.bf16.msra.mxu0 %v5931
      %8255 = vmatprep.subr.bf16.mxu0 0
      %8256 = vmatpush1.bf16.msra.mxu0 %v5932
      %8257 = vmatprep.subr.bf16.mxu0 0
      %8258 = vmatpush1.bf16.msra.mxu0 %v5933
      %8259 = vmatprep.subr.bf16.mxu0 0
      %8260 = vmatpush1.bf16.msra.mxu0 %v5934
      %8261 = vmatprep.subr.bf16.mxu0 0
      %8262 = vmatpush1.bf16.msra.mxu0 %v5935
      %8263 = vmatprep.subr.bf16.mxu0 0
      %8264 = vmatpush1.bf16.msra.mxu0 %v5936
      %8265 = vmatprep.mubr.bf16.mxu0 %v2156
      %8266 = vmatmul.mubr.bf16.gmra.mrb[0].mxu0 %v2155
      %v8267 = vpop.f32.mrb[0].mxu0
      %v8268 = vadd.f32 %v8228, %v8267
      %v8269 = vpop.f32.mrb[0].mxu0
      %v8270 = vpop.f32.mrb[0].mxu0
      %v8271 = vpop.f32.mrb[0].mxu0
      %8272 = vdwg.mxu0
      %8273 = vmatprep.subr.bf16.mxu0 0
      %8274 = vmatpush1.bf16.msra.mxu0 %v5937
      %8275 = vmatprep.subr.bf16.mxu0 0
      %8276 = vmatpush1.bf16.msra.mxu0 %v5938
      %8277 = vmatprep.subr.bf16.mxu0 0
      %8278 = vmatpush1.bf16.msra.mxu0 %v5939
      %8279 = vmatprep.subr.bf16.mxu0 0
      %8280 = vmatpush1.bf16.msra.mxu0 %v5940
      %8281 = vmatprep.subr.bf16.mxu0 0
      %8282 = vmatpush1.bf16.msra.mxu0 %v5941
      %8283 = vmatprep.subr.bf16.mxu0 0
      %8284 = vmatpush1.bf16.msra.mxu0 %v5942
      %8285 = vmatprep.subr.bf16.mxu0 0
      %8286 = vmatpush1.bf16.msra.mxu0 %v5943
      %8287 = vmatprep.subr.bf16.mxu0 0
      %8288 = vmatpush1.bf16.msra.mxu0 %v5944
      %8289 = vmatprep.subr.bf16.mxu0 0
      %8290 = vmatpush1.bf16.msra.mxu0 %v5945
      %8291 = vmatprep.subr.bf16.mxu0 0
      %8292 = vmatpush1.bf16.msra.mxu0 %v5946
      %8293 = vmatprep.subr.bf16.mxu0 0
      %8294 = vmatpush1.bf16.msra.mxu0 %v5947
      %8295 = vmatprep.subr.bf16.mxu0 0
      %8296 = vmatpush1.bf16.msra.mxu0 %v5948
      %8297 = vmatprep.subr.bf16.mxu0 0
      %8298 = vmatpush1.bf16.msra.mxu0 %v5949
      %8299 = vmatprep.subr.bf16.mxu0 0
      %8300 = vmatpush1.bf16.msra.mxu0 %v5950
      %8301 = vmatprep.subr.bf16.mxu0 0
      %8302 = vmatpush1.bf16.msra.mxu0 %v5951
      %8303 = vmatprep.subr.bf16.mxu0 0
      %8304 = vmatpush1.bf16.msra.mxu0 %v5952
      %8305 = vmatprep.mubr.bf16.mxu0 %v2158
      %8306 = vmatmul.mubr.bf16.gmra.mrb[0].mxu0 %v2157
      %v8307 = vpop.f32.mrb[0].mxu0
      %v8308 = vadd.f32 %v8268, %v8307
      %v8309 = vpop.f32.mrb[0].mxu0
      %v8310 = vpop.f32.mrb[0].mxu0
      %v8311 = vpop.f32.mrb[0].mxu0
      %8312 = vdwg.mxu0
      %8313 = vmatprep.subr.bf16.mxu0 0
      %8314 = vmatpush1.bf16.msra.mxu0 %v5953
      %8315 = vmatprep.subr.bf16.mxu0 0
      %8316 = vmatpush1.bf16.msra.mxu0 %v5954
      %8317 = vmatprep.subr.bf16.mxu0 0
      %8318 = vmatpush1.bf16.msra.mxu0 %v5955
      %8319 = vmatprep.subr.bf16.mxu0 0
      %8320 = vmatpush1.bf16.msra.mxu0 %v5956
      %8321 = vmatprep.subr.bf16.mxu0 0
      %8322 = vmatpush1.bf16.msra.mxu0 %v5957
      %8323 = vmatprep.subr.bf16.mxu0 0
      %8324 = vmatpush1.bf16.msra.mxu0 %v5958
      %8325 = vmatprep.subr.bf16.mxu0 0
      %8326 = vmatpush1.bf16.msra.mxu0 %v5959
      %8327 = vmatprep.subr.bf16.mxu0 0
      %8328 = vmatpush1.bf16.msra.mxu0 %v5960
      %8329 = vmatprep.subr.bf16.mxu0 0
      %8330 = vmatpush1.bf16.msra.mxu0 %v5961
      %8331 = vmatprep.subr.bf16.mxu0 0
      %8332 = vmatpush1.bf16.msra.mxu0 %v5962
      %8333 = vmatprep.subr.bf16.mxu0 0
      %8334 = vmatpush1.bf16.msra.mxu0 %v5963
      %8335 = vmatprep.subr.bf16.mxu0 0
      %8336 = vmatpush1.bf16.msra.mxu0 %v5964
      %8337 = vmatprep.subr.bf16.mxu0 0
      %8338 = vmatpush1.bf16.msra.mxu0 %v5965
      %8339 = vmatprep.subr.bf16.mxu0 0
      %8340 = vmatpush1.bf16.msra.mxu0 %v5966
      %8341 = vmatprep.subr.bf16.mxu0 0
      %8342 = vmatpush1.bf16.msra.mxu0 %v5967
      %8343 = vmatprep.subr.bf16.mxu0 0
      %8344 = vmatpush1.bf16.msra.mxu0 %v5968
      %8345 = vmatprep.mubr.bf16.mxu0 %v2160
      %8346 = vmatmul.mubr.bf16.gmra.mrb[0].mxu0 %v2159
      %v8347 = vpop.f32.mrb[0].mxu0
      %v8348 = vadd.f32 %v8308, %v8347
      %v8349 = vpop.f32.mrb[0].mxu0
      %v8350 = vpop.f32.mrb[0].mxu0
      %v8351 = vpop.f32.mrb[0].mxu0
      %8352 = vdwg.mxu0
      %8353 = vmatprep.subr.bf16.mxu0 0
      %8354 = vmatpush1.bf16.msra.mxu0 %v5969
      %8355 = vmatprep.subr.bf16.mxu0 0
      %8356 = vmatpush1.bf16.msra.mxu0 %v5970
      %8357 = vmatprep.subr.bf16.mxu0 0
      %8358 = vmatpush1.bf16.msra.mxu0 %v5971
      %8359 = vmatprep.subr.bf16.mxu0 0
      %8360 = vmatpush1.bf16.msra.mxu0 %v5972
      %8361 = vmatprep.subr.bf16.mxu0 0
      %8362 = vmatpush1.bf16.msra.mxu0 %v5973
      %8363 = vmatprep.subr.bf16.mxu0 0
      %8364 = vmatpush1.bf16.msra.mxu0 %v5974
      %8365 = vmatprep.subr.bf16.mxu0 0
      %8366 = vmatpush1.bf16.msra.mxu0 %v5975
      %8367 = vmatprep.subr.bf16.mxu0 0
      %8368 = vmatpush1.bf16.msra.mxu0 %v5976
      %8369 = vmatprep.subr.bf16.mxu0 0
      %8370 = vmatpush1.bf16.msra.mxu0 %v5977
      %8371 = vmatprep.subr.bf16.mxu0 0
      %8372 = vmatpush1.bf16.msra.mxu0 %v5978
      %8373 = vmatprep.subr.bf16.mxu0 0
      %8374 = vmatpush1.bf16.msra.mxu0 %v5979
      %8375 = vmatprep.subr.bf16.mxu0 0
      %8376 = vmatpush1.bf16.msra.mxu0 %v5980
      %8377 = vmatprep.subr.bf16.mxu0 0
      %8378 = vmatpush1.bf16.msra.mxu0 %v5981
      %8379 = vmatprep.subr.bf16.mxu0 0
      %8380 = vmatpush1.bf16.msra.mxu0 %v5982
      %8381 = vmatprep.subr.bf16.mxu0 0
      %8382 = vmatpush1.bf16.msra.mxu0 %v5983
      %8383 = vmatprep.subr.bf16.mxu0 0
      %8384 = vmatpush1.bf16.msra.mxu0 %v5984
      %8385 = vmatprep.mubr.bf16.mxu0 %v2162
      %8386 = vmatmul.mubr.bf16.gmra.mrb[0].mxu0 %v2161
      %v8387 = vpop.f32.mrb[0].mxu0
      %v8388 = vadd.f32 %v8348, %v8387
      %v8389 = vpop.f32.mrb[0].mxu0
      %v8390 = vpop.f32.mrb[0].mxu0
      %v8391 = vpop.f32.mrb[0].mxu0
      %8392 = vdwg.mxu0
      %8393 = vmatprep.subr.bf16.mxu0 0
      %8394 = vmatpush1.bf16.msra.mxu0 %v5985
      %8395 = vmatprep.subr.bf16.mxu0 0
      %8396 = vmatpush1.bf16.msra.mxu0 %v5986
      %8397 = vmatprep.subr.bf16.mxu0 0
      %8398 = vmatpush1.bf16.msra.mxu0 %v5987
      %8399 = vmatprep.subr.bf16.mxu0 0
      %8400 = vmatpush1.bf16.msra.mxu0 %v5988
      %8401 = vmatprep.subr.bf16.mxu0 0
      %8402 = vmatpush1.bf16.msra.mxu0 %v5989
      %8403 = vmatprep.subr.bf16.mxu0 0
      %8404 = vmatpush1.bf16.msra.mxu0 %v5990
      %8405 = vmatprep.subr.bf16.mxu0 0
      %8406 = vmatpush1.bf16.msra.mxu0 %v5991
      %8407 = vmatprep.subr.bf16.mxu0 0
      %8408 = vmatpush1.bf16.msra.mxu0 %v5992
      %8409 = vmatprep.subr.bf16.mxu0 0
      %8410 = vmatpush1.bf16.msra.mxu0 %v5993
      %8411 = vmatprep.subr.bf16.mxu0 0
      %8412 = vmatpush1.bf16.msra.mxu0 %v5994
      %8413 = vmatprep.subr.bf16.mxu0 0
      %8414 = vmatpush1.bf16.msra.mxu0 %v5995
      %8415 = vmatprep.subr.bf16.mxu0 0
      %8416 = vmatpush1.bf16.msra.mxu0 %v5996
      %8417 = vmatprep.subr.bf16.mxu0 0
      %8418 = vmatpush1.bf16.msra.mxu0 %v5997
      %8419 = vmatprep.subr.bf16.mxu0 0
      %8420 = vmatpush1.bf16.msra.mxu0 %v5998
      %8421 = vmatprep.subr.bf16.mxu0 0
      %8422 = vmatpush1.bf16.msra.mxu0 %v5999
      %8423 = vmatprep.subr.bf16.mxu0 0
      %8424 = vmatpush1.bf16.msra.mxu0 %v6000
      %8425 = vmatprep.mubr.bf16.mxu0 %v2164
      %8426 = vmatmul.mubr.bf16.gmra.mrb[0].mxu0 %v2163
      %v8427 = vpop.f32.mrb[0].mxu0
      %v8428 = vadd.f32 %v8388, %v8427
      %v8429 = vpop.f32.mrb[0].mxu0
      %v8430 = vpop.f32.mrb[0].mxu0
      %v8431 = vpop.f32.mrb[0].mxu0
      %8432 = vdwg.mxu0
      %8433 = vmatprep.subr.bf16.mxu0 0
      %8434 = vmatpush1.bf16.msra.mxu0 %v6001
      %8435 = vmatprep.subr.bf16.mxu0 0
      %8436 = vmatpush1.bf16.msra.mxu0 %v6002
      %8437 = vmatprep.subr.bf16.mxu0 0
      %8438 = vmatpush1.bf16.msra.mxu0 %v6003
      %8439 = vmatprep.subr.bf16.mxu0 0
      %8440 = vmatpush1.bf16.msra.mxu0 %v6004
      %8441 = vmatprep.subr.bf16.mxu0 0
      %8442 = vmatpush1.bf16.msra.mxu0 %v6005
      %8443 = vmatprep.subr.bf16.mxu0 0
      %8444 = vmatpush1.bf16.msra.mxu0 %v6006
      %8445 = vmatprep.subr.bf16.mxu0 0
      %8446 = vmatpush1.bf16.msra.mxu0 %v6007
      %8447 = vmatprep.subr.bf16.mxu0 0
      %8448 = vmatpush1.bf16.msra.mxu0 %v6008
      %8449 = vmatprep.subr.bf16.mxu0 0
      %8450 = vmatpush1.bf16.msra.mxu0 %v6009
      %8451 = vmatprep.subr.bf16.mxu0 0
      %8452 = vmatpush1.bf16.msra.mxu0 %v6010
      %8453 = vmatprep.subr.bf16.mxu0 0
      %8454 = vmatpush1.bf16.msra.mxu0 %v6011
      %8455 = vmatprep.subr.bf16.mxu0 0
      %8456 = vmatpush1.bf16.msra.mxu0 %v6012
      %8457 = vmatprep.subr.bf16.mxu0 0
      %8458 = vmatpush1.bf16.msra.mxu0 %v6013
      %8459 = vmatprep.subr.bf16.mxu0 0
      %8460 = vmatpush1.bf16.msra.mxu0 %v6014
      %8461 = vmatprep.subr.bf16.mxu0 0
      %8462 = vmatpush1.bf16.msra.mxu0 %v6015
      %8463 = vmatprep.subr.bf16.mxu0 0
      %8464 = vmatpush1.bf16.msra.mxu0 %v6016
      %8465 = vmatprep.mubr.bf16.mxu0 %v2166
      %8466 = vmatmul.mubr.bf16.gmra.mrb[0].mxu0 %v2165
      %v8467 = vpop.f32.mrb[0].mxu0
      %v8468 = vadd.f32 %v8428, %v8467
      %v8469 = vpop.f32.mrb[0].mxu0
      %v8470 = vpop.f32.mrb[0].mxu0
      %v8471 = vpop.f32.mrb[0].mxu0
      %8472 = vdwg.mxu0
      %8473 = vmatprep.subr.bf16.mxu0 0
      %8474 = vmatpush1.bf16.msra.mxu0 %v6017
      %8475 = vmatprep.subr.bf16.mxu0 0
      %8476 = vmatpush1.bf16.msra.mxu0 %v6018
      %8477 = vmatprep.subr.bf16.mxu0 0
      %8478 = vmatpush1.bf16.msra.mxu0 %v6019
      %8479 = vmatprep.subr.bf16.mxu0 0
      %8480 = vmatpush1.bf16.msra.mxu0 %v6020
      %8481 = vmatprep.subr.bf16.mxu0 0
      %8482 = vmatpush1.bf16.msra.mxu0 %v6021
      %8483 = vmatprep.subr.bf16.mxu0 0
      %8484 = vmatpush1.bf16.msra.mxu0 %v6022
      %8485 = vmatprep.subr.bf16.mxu0 0
      %8486 = vmatpush1.bf16.msra.mxu0 %v6023
      %8487 = vmatprep.subr.bf16.mxu0 0
      %8488 = vmatpush1.bf16.msra.mxu0 %v6024
      %8489 = vmatprep.subr.bf16.mxu0 0
      %8490 = vmatpush1.bf16.msra.mxu0 %v6025
      %8491 = vmatprep.subr.bf16.mxu0 0
      %8492 = vmatpush1.bf16.msra.mxu0 %v6026
      %8493 = vmatprep.subr.bf16.mxu0 0
      %8494 = vmatpush1.bf16.msra.mxu0 %v6027
      %8495 = vmatprep.subr.bf16.mxu0 0
      %8496 = vmatpush1.bf16.msra.mxu0 %v6028
      %8497 = vmatprep.subr.bf16.mxu0 0
      %8498 = vmatpush1.bf16.msra.mxu0 %v6029
      %8499 = vmatprep.subr.bf16.mxu0 0
      %8500 = vmatpush1.bf16.msra.mxu0 %v6030
      %8501 = vmatprep.subr.bf16.mxu0 0
      %8502 = vmatpush1.bf16.msra.mxu0 %v6031
      %8503 = vmatprep.subr.bf16.mxu0 0
      %8504 = vmatpush1.bf16.msra.mxu0 %v6032
      %8505 = vmatprep.mubr.bf16.mxu0 %v2168
      %8506 = vmatmul.mubr.bf16.gmra.mrb[0].mxu0 %v2167
      %v8507 = vpop.f32.mrb[0].mxu0
      %v8508 = vadd.f32 %v8468, %v8507
      %v8509 = vpop.f32.mrb[0].mxu0
      %v8510 = vpop.f32.mrb[0].mxu0
      %v8511 = vpop.f32.mrb[0].mxu0
      %8512 = vdwg.mxu0
      %8513 = vmatprep.subr.bf16.mxu0 0
      %8514 = vmatpush1.bf16.msra.mxu0 %v6033
      %8515 = vmatprep.subr.bf16.mxu0 0
      %8516 = vmatpush1.bf16.msra.mxu0 %v6034
      %8517 = vmatprep.subr.bf16.mxu0 0
      %8518 = vmatpush1.bf16.msra.mxu0 %v6035
      %8519 = vmatprep.subr.bf16.mxu0 0
      %8520 = vmatpush1.bf16.msra.mxu0 %v6036
      %8521 = vmatprep.subr.bf16.mxu0 0
      %8522 = vmatpush1.bf16.msra.mxu0 %v6037
      %8523 = vmatprep.subr.bf16.mxu0 0
      %8524 = vmatpush1.bf16.msra.mxu0 %v6038
      %8525 = vmatprep.subr.bf16.mxu0 0
      %8526 = vmatpush1.bf16.msra.mxu0 %v6039
      %8527 = vmatprep.subr.bf16.mxu0 0
      %8528 = vmatpush1.bf16.msra.mxu0 %v6040
      %8529 = vmatprep.subr.bf16.mxu0 0
      %8530 = vmatpush1.bf16.msra.mxu0 %v6041
      %8531 = vmatprep.subr.bf16.mxu0 0
      %8532 = vmatpush1.bf16.msra.mxu0 %v6042
      %8533 = vmatprep.subr.bf16.mxu0 0
      %8534 = vmatpush1.bf16.msra.mxu0 %v6043
      %8535 = vmatprep.subr.bf16.mxu0 0
      %8536 = vmatpush1.bf16.msra.mxu0 %v6044
      %8537 = vmatprep.subr.bf16.mxu0 0
      %8538 = vmatpush1.bf16.msra.mxu0 %v6045
      %8539 = vmatprep.subr.bf16.mxu0 0
      %8540 = vmatpush1.bf16.msra.mxu0 %v6046
      %8541 = vmatprep.subr.bf16.mxu0 0
      %8542 = vmatpush1.bf16.msra.mxu0 %v6047
      %8543 = vmatprep.subr.bf16.mxu0 0
      %8544 = vmatpush1.bf16.msra.mxu0 %v6048
      %8545 = vmatprep.mubr.bf16.mxu0 %v2170
      %8546 = vmatmul.mubr.bf16.gmra.mrb[0].mxu0 %v2169
      %v8547 = vpop.f32.mrb[0].mxu0
      %v8548 = vadd.f32 %v8508, %v8547
      %v8549 = vpop.f32.mrb[0].mxu0
      %v8550 = vpop.f32.mrb[0].mxu0
      %v8551 = vpop.f32.mrb[0].mxu0
      %8552 = vdwg.mxu0
      %8553 = vmatprep.subr.bf16.mxu0 0
      %8554 = vmatpush1.bf16.msra.mxu0 %v6049
      %8555 = vmatprep.subr.bf16.mxu0 0
      %8556 = vmatpush1.bf16.msra.mxu0 %v6050
      %8557 = vmatprep.subr.bf16.mxu0 0
      %8558 = vmatpush1.bf16.msra.mxu0 %v6051
      %8559 = vmatprep.subr.bf16.mxu0 0
      %8560 = vmatpush1.bf16.msra.mxu0 %v6052
      %8561 = vmatprep.subr.bf16.mxu0 0
      %8562 = vmatpush1.bf16.msra.mxu0 %v6053
      %8563 = vmatprep.subr.bf16.mxu0 0
      %8564 = vmatpush1.bf16.msra.mxu0 %v6054
      %8565 = vmatprep.subr.bf16.mxu0 0
      %8566 = vmatpush1.bf16.msra.mxu0 %v6055
      %8567 = vmatprep.subr.bf16.mxu0 0
      %8568 = vmatpush1.bf16.msra.mxu0 %v6056
      %8569 = vmatprep.subr.bf16.mxu0 0
      %8570 = vmatpush1.bf16.msra.mxu0 %v6057
      %8571 = vmatprep.subr.bf16.mxu0 0
      %8572 = vmatpush1.bf16.msra.mxu0 %v6058
      %8573 = vmatprep.subr.bf16.mxu0 0
      %8574 = vmatpush1.bf16.msra.mxu0 %v6059
      %8575 = vmatprep.subr.bf16.mxu0 0
      %8576 = vmatpush1.bf16.msra.mxu0 %v6060
      %8577 = vmatprep.subr.bf16.mxu0 0
      %8578 = vmatpush1.bf16.msra.mxu0 %v6061
      %8579 = vmatprep.subr.bf16.mxu0 0
      %8580 = vmatpush1.bf16.msra.mxu0 %v6062
      %8581 = vmatprep.subr.bf16.mxu0 0
      %8582 = vmatpush1.bf16.msra.mxu0 %v6063
      %8583 = vmatprep.subr.bf16.mxu0 0
      %8584 = vmatpush1.bf16.msra.mxu0 %v6064
      %8585 = vmatprep.mubr.bf16.mxu0 %v2172
      %8586 = vmatmul.mubr.bf16.gmra.mrb[0].mxu0 %v2171
      %v8587 = vpop.f32.mrb[0].mxu0
      %v8588 = vadd.f32 %v8548, %v8587
      %v8589 = vpop.f32.mrb[0].mxu0
      %v8590 = vpop.f32.mrb[0].mxu0
      %v8591 = vpop.f32.mrb[0].mxu0
      %8592 = vdwg.mxu0
      %8593 = vmatprep.subr.bf16.mxu0 0
      %8594 = vmatpush1.bf16.msra.mxu0 %v6065
      %8595 = vmatprep.subr.bf16.mxu0 0
      %8596 = vmatpush1.bf16.msra.mxu0 %v6066
      %8597 = vmatprep.subr.bf16.mxu0 0
      %8598 = vmatpush1.bf16.msra.mxu0 %v6067
      %8599 = vmatprep.subr.bf16.mxu0 0
      %8600 = vmatpush1.bf16.msra.mxu0 %v6068
      %8601 = vmatprep.subr.bf16.mxu0 0
      %8602 = vmatpush1.bf16.msra.mxu0 %v6069
      %8603 = vmatprep.subr.bf16.mxu0 0
      %8604 = vmatpush1.bf16.msra.mxu0 %v6070
      %8605 = vmatprep.subr.bf16.mxu0 0
      %8606 = vmatpush1.bf16.msra.mxu0 %v6071
      %8607 = vmatprep.subr.bf16.mxu0 0
      %8608 = vmatpush1.bf16.msra.mxu0 %v6072
      %8609 = vmatprep.subr.bf16.mxu0 0
      %8610 = vmatpush1.bf16.msra.mxu0 %v6073
      %8611 = vmatprep.subr.bf16.mxu0 0
      %8612 = vmatpush1.bf16.msra.mxu0 %v6074
      %8613 = vmatprep.subr.bf16.mxu0 0
      %8614 = vmatpush1.bf16.msra.mxu0 %v6075
      %8615 = vmatprep.subr.bf16.mxu0 0
      %8616 = vmatpush1.bf16.msra.mxu0 %v6076
      %8617 = vmatprep.subr.bf16.mxu0 0
      %8618 = vmatpush1.bf16.msra.mxu0 %v6077
      %8619 = vmatprep.subr.bf16.mxu0 0
      %8620 = vmatpush1.bf16.msra.mxu0 %v6078
      %8621 = vmatprep.subr.bf16.mxu0 0
      %8622 = vmatpush1.bf16.msra.mxu0 %v6079
      %8623 = vmatprep.subr.bf16.mxu0 0
      %8624 = vmatpush1.bf16.msra.mxu0 %v6080
      %8625 = vmatprep.mubr.bf16.mxu0 %v2174
      %8626 = vmatmul.mubr.bf16.gmra.mrb[0].mxu0 %v2173
      %v8627 = vpop.f32.mrb[0].mxu0
      %v8628 = vadd.f32 %v8588, %v8627
      %v8629 = vpop.f32.mrb[0].mxu0
      %v8630 = vpop.f32.mrb[0].mxu0
      %v8631 = vpop.f32.mrb[0].mxu0
      %8632 = vdwg.mxu0
      %8633 = vmatprep.subr.bf16.mxu0 0
      %8634 = vmatpush1.bf16.msra.mxu0 %v6081
      %8635 = vmatprep.subr.bf16.mxu0 0
      %8636 = vmatpush1.bf16.msra.mxu0 %v6082
      %8637 = vmatprep.subr.bf16.mxu0 0
      %8638 = vmatpush1.bf16.msra.mxu0 %v6083
      %8639 = vmatprep.subr.bf16.mxu0 0
      %8640 = vmatpush1.bf16.msra.mxu0 %v6084
      %8641 = vmatprep.subr.bf16.mxu0 0
      %8642 = vmatpush1.bf16.msra.mxu0 %v6085
      %8643 = vmatprep.subr.bf16.mxu0 0
      %8644 = vmatpush1.bf16.msra.mxu0 %v6086
      %8645 = vmatprep.subr.bf16.mxu0 0
      %8646 = vmatpush1.bf16.msra.mxu0 %v6087
      %8647 = vmatprep.subr.bf16.mxu0 0
      %8648 = vmatpush1.bf16.msra.mxu0 %v6088
      %8649 = vmatprep.subr.bf16.mxu0 0
      %8650 = vmatpush1.bf16.msra.mxu0 %v6089
      %8651 = vmatprep.subr.bf16.mxu0 0
      %8652 = vmatpush1.bf16.msra.mxu0 %v6090
      %8653 = vmatprep.subr.bf16.mxu0 0
      %8654 = vmatpush1.bf16.msra.mxu0 %v6091
      %8655 = vmatprep.subr.bf16.mxu0 0
      %8656 = vmatpush1.bf16.msra.mxu0 %v6092
      %8657 = vmatprep.subr.bf16.mxu0 0
      %8658 = vmatpush1.bf16.msra.mxu0 %v6093
      %8659 = vmatprep.subr.bf16.mxu0 0
      %8660 = vmatpush1.bf16.msra.mxu0 %v6094
      %8661 = vmatprep.subr.bf16.mxu0 0
      %8662 = vmatpush1.bf16.msra.mxu0 %v6095
      %8663 = vmatprep.subr.bf16.mxu0 0
      %8664 = vmatpush1.bf16.msra.mxu0 %v6096
      %8665 = vmatprep.mubr.bf16.mxu0 %v2176
      %8666 = vmatmul.mubr.bf16.gmra.mrb[0].mxu0 %v2175
      %v8667 = vpop.f32.mrb[0].mxu0
      %v8668 = vadd.f32 %v8628, %v8667
      %v8669 = vpop.f32.mrb[0].mxu0
      %v8670 = vpop.f32.mrb[0].mxu0
      %v8671 = vpop.f32.mrb[0].mxu0
      %8672 = vdwg.mxu0
      %8673 = vmatprep.subr.bf16.mxu0 0
      %8674 = vmatpush1.bf16.msra.mxu0 %v6097
      %8675 = vmatprep.subr.bf16.mxu0 0
      %8676 = vmatpush1.bf16.msra.mxu0 %v6098
      %8677 = vmatprep.subr.bf16.mxu0 0
      %8678 = vmatpush1.bf16.msra.mxu0 %v6099
      %8679 = vmatprep.subr.bf16.mxu0 0
      %8680 = vmatpush1.bf16.msra.mxu0 %v6100
      %8681 = vmatprep.subr.bf16.mxu0 0
      %8682 = vmatpush1.bf16.msra.mxu0 %v6101
      %8683 = vmatprep.subr.bf16.mxu0 0
      %8684 = vmatpush1.bf16.msra.mxu0 %v6102
      %8685 = vmatprep.subr.bf16.mxu0 0
      %8686 = vmatpush1.bf16.msra.mxu0 %v6103
      %8687 = vmatprep.subr.bf16.mxu0 0
      %8688 = vmatpush1.bf16.msra.mxu0 %v6104
      %8689 = vmatprep.subr.bf16.mxu0 0
      %8690 = vmatpush1.bf16.msra.mxu0 %v6105
      %8691 = vmatprep.subr.bf16.mxu0 0
      %8692 = vmatpush1.bf16.msra.mxu0 %v6106
      %8693 = vmatprep.subr.bf16.mxu0 0
      %8694 = vmatpush1.bf16.msra.mxu0 %v6107
      %8695 = vmatprep.subr.bf16.mxu0 0
      %8696 = vmatpush1.bf16.msra.mxu0 %v6108
      %8697 = vmatprep.subr.bf16.mxu0 0
      %8698 = vmatpush1.bf16.msra.mxu0 %v6109
      %8699 = vmatprep.subr.bf16.mxu0 0
      %8700 = vmatpush1.bf16.msra.mxu0 %v6110
      %8701 = vmatprep.subr.bf16.mxu0 0
      %8702 = vmatpush1.bf16.msra.mxu0 %v6111
      %8703 = vmatprep.subr.bf16.mxu0 0
      %8704 = vmatpush1.bf16.msra.mxu0 %v6112
      %8705 = vmatprep.mubr.bf16.mxu0 %v2178
      %8706 = vmatmul.mubr.bf16.gmra.mrb[0].mxu0 %v2177
      %v8707 = vpop.f32.mrb[0].mxu0
      %v8708 = vadd.f32 %v8668, %v8707
      %v8709 = vpop.f32.mrb[0].mxu0
      %v8710 = vpop.f32.mrb[0].mxu0
      %v8711 = vpop.f32.mrb[0].mxu0
      %8712 = vdwg.mxu0
      %8713 = vmatprep.subr.bf16.mxu0 0
      %8714 = vmatpush1.bf16.msra.mxu0 %v6113
      %8715 = vmatprep.subr.bf16.mxu0 0
      %8716 = vmatpush1.bf16.msra.mxu0 %v6114
      %8717 = vmatprep.subr.bf16.mxu0 0
      %8718 = vmatpush1.bf16.msra.mxu0 %v6115
      %8719 = vmatprep.subr.bf16.mxu0 0
      %8720 = vmatpush1.bf16.msra.mxu0 %v6116
      %8721 = vmatprep.subr.bf16.mxu0 0
      %8722 = vmatpush1.bf16.msra.mxu0 %v6117
      %8723 = vmatprep.subr.bf16.mxu0 0
      %8724 = vmatpush1.bf16.msra.mxu0 %v6118
      %8725 = vmatprep.subr.bf16.mxu0 0
      %8726 = vmatpush1.bf16.msra.mxu0 %v6119
      %8727 = vmatprep.subr.bf16.mxu0 0
      %8728 = vmatpush1.bf16.msra.mxu0 %v6120
      %8729 = vmatprep.subr.bf16.mxu0 0
      %8730 = vmatpush1.bf16.msra.mxu0 %v6121
      %8731 = vmatprep.subr.bf16.mxu0 0
      %8732 = vmatpush1.bf16.msra.mxu0 %v6122
      %8733 = vmatprep.subr.bf16.mxu0 0
      %8734 = vmatpush1.bf16.msra.mxu0 %v6123
      %8735 = vmatprep.subr.bf16.mxu0 0
      %8736 = vmatpush1.bf16.msra.mxu0 %v6124
      %8737 = vmatprep.subr.bf16.mxu0 0
      %8738 = vmatpush1.bf16.msra.mxu0 %v6125
      %8739 = vmatprep.subr.bf16.mxu0 0
      %8740 = vmatpush1.bf16.msra.mxu0 %v6126
      %8741 = vmatprep.subr.bf16.mxu0 0
      %8742 = vmatpush1.bf16.msra.mxu0 %v6127
      %8743 = vmatprep.subr.bf16.mxu0 0
      %8744 = vmatpush1.bf16.msra.mxu0 %v6128
      %8745 = vmatprep.mubr.bf16.mxu0 %v2180
      %8746 = vmatmul.mubr.bf16.gmra.mrb[0].mxu0 %v2179
      %v8747 = vpop.f32.mrb[0].mxu0
      %v8748 = vadd.f32 %v8708, %v8747
      %v8749 = vpop.f32.mrb[0].mxu0
      %v8750 = vpop.f32.mrb[0].mxu0
      %v8751 = vpop.f32.mrb[0].mxu0
      %8752 = vdwg.mxu0
      %8753 = vmatprep.subr.bf16.mxu0 0
      %8754 = vmatpush1.bf16.msra.mxu0 %v6129
      %8755 = vmatprep.subr.bf16.mxu0 0
      %8756 = vmatpush1.bf16.msra.mxu0 %v6130
      %8757 = vmatprep.subr.bf16.mxu0 0
      %8758 = vmatpush1.bf16.msra.mxu0 %v6131
      %8759 = vmatprep.subr.bf16.mxu0 0
      %8760 = vmatpush1.bf16.msra.mxu0 %v6132
      %8761 = vmatprep.subr.bf16.mxu0 0
      %8762 = vmatpush1.bf16.msra.mxu0 %v6133
      %8763 = vmatprep.subr.bf16.mxu0 0
      %8764 = vmatpush1.bf16.msra.mxu0 %v6134
      %8765 = vmatprep.subr.bf16.mxu0 0
      %8766 = vmatpush1.bf16.msra.mxu0 %v6135
      %8767 = vmatprep.subr.bf16.mxu0 0
      %8768 = vmatpush1.bf16.msra.mxu0 %v6136
      %8769 = vmatprep.subr.bf16.mxu0 0
      %8770 = vmatpush1.bf16.msra.mxu0 %v6137
      %8771 = vmatprep.subr.bf16.mxu0 0
      %8772 = vmatpush1.bf16.msra.mxu0 %v6138
      %8773 = vmatprep.subr.bf16.mxu0 0
      %8774 = vmatpush1.bf16.msra.mxu0 %v6139
      %8775 = vmatprep.subr.bf16.mxu0 0
      %8776 = vmatpush1.bf16.msra.mxu0 %v6140
      %8777 = vmatprep.subr.bf16.mxu0 0
      %8778 = vmatpush1.bf16.msra.mxu0 %v6141
      %8779 = vmatprep.subr.bf16.mxu0 0
      %8780 = vmatpush1.bf16.msra.mxu0 %v6142
      %8781 = vmatprep.subr.bf16.mxu0 0
      %8782 = vmatpush1.bf16.msra.mxu0 %v6143
      %8783 = vmatprep.subr.bf16.mxu0 0
      %8784 = vmatpush1.bf16.msra.mxu0 %v6144
      %8785 = vmatprep.mubr.bf16.mxu0 %v2182
      %8786 = vmatmul.mubr.bf16.gmra.mrb[0].mxu0 %v2181
      %v8787 = vpop.f32.mrb[0].mxu0
      %v8788 = vadd.f32 %v8748, %v8787
      %v8789 = vpop.f32.mrb[0].mxu0
      %v8790 = vpop.f32.mrb[0].mxu0
      %v8791 = vpop.f32.mrb[0].mxu0
      %8792 = vdwg.mxu0
      %8793 = vmatprep.subr.bf16.mxu0 0
      %8794 = vmatpush1.bf16.msra.mxu0 %v6145
      %8795 = vmatprep.subr.bf16.mxu0 0
      %8796 = vmatpush1.bf16.msra.mxu0 %v6146
      %8797 = vmatprep.subr.bf16.mxu0 0
      %8798 = vmatpush1.bf16.msra.mxu0 %v6147
      %8799 = vmatprep.subr.bf16.mxu0 0
      %8800 = vmatpush1.bf16.msra.mxu0 %v6148
      %8801 = vmatprep.subr.bf16.mxu0 0
      %8802 = vmatpush1.bf16.msra.mxu0 %v6149
      %8803 = vmatprep.subr.bf16.mxu0 0
      %8804 = vmatpush1.bf16.msra.mxu0 %v6150
      %8805 = vmatprep.subr.bf16.mxu0 0
      %8806 = vmatpush1.bf16.msra.mxu0 %v6151
      %8807 = vmatprep.subr.bf16.mxu0 0
      %8808 = vmatpush1.bf16.msra.mxu0 %v6152
      %8809 = vmatprep.subr.bf16.mxu0 0
      %8810 = vmatpush1.bf16.msra.mxu0 %v6153
      %8811 = vmatprep.subr.bf16.mxu0 0
      %8812 = vmatpush1.bf16.msra.mxu0 %v6154
      %8813 = vmatprep.subr.bf16.mxu0 0
      %8814 = vmatpush1.bf16.msra.mxu0 %v6155
      %8815 = vmatprep.subr.bf16.mxu0 0
      %8816 = vmatpush1.bf16.msra.mxu0 %v6156
      %8817 = vmatprep.subr.bf16.mxu0 0
      %8818 = vmatpush1.bf16.msra.mxu0 %v6157
      %8819 = vmatprep.subr.bf16.mxu0 0
      %8820 = vmatpush1.bf16.msra.mxu0 %v6158
      %8821 = vmatprep.subr.bf16.mxu0 0
      %8822 = vmatpush1.bf16.msra.mxu0 %v6159
      %8823 = vmatprep.subr.bf16.mxu0 0
      %8824 = vmatpush1.bf16.msra.mxu0 %v6160
      %8825 = vmatprep.mubr.bf16.mxu0 %v2184
      %8826 = vmatmul.mubr.bf16.gmra.mrb[0].mxu0 %v2183
      %v8827 = vpop.f32.mrb[0].mxu0
      %v8828 = vadd.f32 %v8788, %v8827
      %v8829 = vpop.f32.mrb[0].mxu0
      %v8830 = vpop.f32.mrb[0].mxu0
      %v8831 = vpop.f32.mrb[0].mxu0
      %8832 = vdwg.mxu0
      %8833 = vmatprep.subr.bf16.mxu0 0
      %8834 = vmatpush1.bf16.msra.mxu0 %v6161
      %8835 = vmatprep.subr.bf16.mxu0 0
      %8836 = vmatpush1.bf16.msra.mxu0 %v6162
      %8837 = vmatprep.subr.bf16.mxu0 0
      %8838 = vmatpush1.bf16.msra.mxu0 %v6163
      %8839 = vmatprep.subr.bf16.mxu0 0
      %8840 = vmatpush1.bf16.msra.mxu0 %v6164
      %8841 = vmatprep.subr.bf16.mxu0 0
      %8842 = vmatpush1.bf16.msra.mxu0 %v6165
      %8843 = vmatprep.subr.bf16.mxu0 0
      %8844 = vmatpush1.bf16.msra.mxu0 %v6166
      %8845 = vmatprep.subr.bf16.mxu0 0
      %8846 = vmatpush1.bf16.msra.mxu0 %v6167
      %8847 = vmatprep.subr.bf16.mxu0 0
      %8848 = vmatpush1.bf16.msra.mxu0 %v6168
      %8849 = vmatprep.subr.bf16.mxu0 0
      %8850 = vmatpush1.bf16.msra.mxu0 %v6169
      %8851 = vmatprep.subr.bf16.mxu0 0
      %8852 = vmatpush1.bf16.msra.mxu0 %v6170
      %8853 = vmatprep.subr.bf16.mxu0 0
      %8854 = vmatpush1.bf16.msra.mxu0 %v6171
      %8855 = vmatprep.subr.bf16.mxu0 0
      %8856 = vmatpush1.bf16.msra.mxu0 %v6172
      %8857 = vmatprep.subr.bf16.mxu0 0
      %8858 = vmatpush1.bf16.msra.mxu0 %v6173
      %8859 = vmatprep.subr.bf16.mxu0 0
      %8860 = vmatpush1.bf16.msra.mxu0 %v6174
      %8861 = vmatprep.subr.bf16.mxu0 0
      %8862 = vmatpush1.bf16.msra.mxu0 %v6175
      %8863 = vmatprep.subr.bf16.mxu0 0
      %8864 = vmatpush1.bf16.msra.mxu0 %v6176
      %8865 = vmatprep.mubr.bf16.mxu0 %v2186
      %8866 = vmatmul.mubr.bf16.gmra.mrb[0].mxu0 %v2185
      %v8867 = vpop.f32.mrb[0].mxu0
      %v8868 = vadd.f32 %v8828, %v8867
      %v8869 = vpop.f32.mrb[0].mxu0
      %v8870 = vpop.f32.mrb[0].mxu0
      %v8871 = vpop.f32.mrb[0].mxu0
      %8872 = vdwg.mxu0
      %8873 = vmatprep.subr.bf16.mxu0 0
      %8874 = vmatpush1.bf16.msra.mxu0 %v6177
      %8875 = vmatprep.subr.bf16.mxu0 0
      %8876 = vmatpush1.bf16.msra.mxu0 %v6178
      %8877 = vmatprep.subr.bf16.mxu0 0
      %8878 = vmatpush1.bf16.msra.mxu0 %v6179
      %8879 = vmatprep.subr.bf16.mxu0 0
      %8880 = vmatpush1.bf16.msra.mxu0 %v6180
      %8881 = vmatprep.subr.bf16.mxu0 0
      %8882 = vmatpush1.bf16.msra.mxu0 %v6181
      %8883 = vmatprep.subr.bf16.mxu0 0
      %8884 = vmatpush1.bf16.msra.mxu0 %v6182
      %8885 = vmatprep.subr.bf16.mxu0 0
      %8886 = vmatpush1.bf16.msra.mxu0 %v6183
      %8887 = vmatprep.subr.bf16.mxu0 0
      %8888 = vmatpush1.bf16.msra.mxu0 %v6184
      %8889 = vmatprep.subr.bf16.mxu0 0
      %8890 = vmatpush1.bf16.msra.mxu0 %v6185
      %8891 = vmatprep.subr.bf16.mxu0 0
      %8892 = vmatpush1.bf16.msra.mxu0 %v6186
      %8893 = vmatprep.subr.bf16.mxu0 0
      %8894 = vmatpush1.bf16.msra.mxu0 %v6187
      %8895 = vmatprep.subr.bf16.mxu0 0
      %8896 = vmatpush1.bf16.msra.mxu0 %v6188
      %8897 = vmatprep.subr.bf16.mxu0 0
      %8898 = vmatpush1.bf16.msra.mxu0 %v6189
      %8899 = vmatprep.subr.bf16.mxu0 0
      %8900 = vmatpush1.bf16.msra.mxu0 %v6190
      %8901 = vmatprep.subr.bf16.mxu0 0
      %8902 = vmatpush1.bf16.msra.mxu0 %v6191
      %8903 = vmatprep.subr.bf16.mxu0 0
      %8904 = vmatpush1.bf16.msra.mxu0 %v6192
      %8905 = vmatprep.mubr.bf16.mxu0 %v2188
      %8906 = vmatmul.mubr.bf16.gmra.mrb[0].mxu0 %v2187
      %v8907 = vpop.f32.mrb[0].mxu0
      %v8908 = vadd.f32 %v8868, %v8907
      %v8909 = vpop.f32.mrb[0].mxu0
      %v8910 = vpop.f32.mrb[0].mxu0
      %v8911 = vpop.f32.mrb[0].mxu0
      %8912 = vdwg.mxu0
      %8913 = vmatprep.subr.bf16.mxu0 0
      %8914 = vmatpush1.bf16.msra.mxu0 %v6193
      %8915 = vmatprep.subr.bf16.mxu0 0
      %8916 = vmatpush1.bf16.msra.mxu0 %v6194
      %8917 = vmatprep.subr.bf16.mxu0 0
      %8918 = vmatpush1.bf16.msra.mxu0 %v6195
      %8919 = vmatprep.subr.bf16.mxu0 0
      %8920 = vmatpush1.bf16.msra.mxu0 %v6196
      %8921 = vmatprep.subr.bf16.mxu0 0
      %8922 = vmatpush1.bf16.msra.mxu0 %v6197
      %8923 = vmatprep.subr.bf16.mxu0 0
      %8924 = vmatpush1.bf16.msra.mxu0 %v6198
      %8925 = vmatprep.subr.bf16.mxu0 0
      %8926 = vmatpush1.bf16.msra.mxu0 %v6199
      %8927 = vmatprep.subr.bf16.mxu0 0
      %8928 = vmatpush1.bf16.msra.mxu0 %v6200
      %8929 = vmatprep.subr.bf16.mxu0 0
      %8930 = vmatpush1.bf16.msra.mxu0 %v6201
      %8931 = vmatprep.subr.bf16.mxu0 0
      %8932 = vmatpush1.bf16.msra.mxu0 %v6202
      %8933 = vmatprep.subr.bf16.mxu0 0
      %8934 = vmatpush1.bf16.msra.mxu0 %v6203
      %8935 = vmatprep.subr.bf16.mxu0 0
      %8936 = vmatpush1.bf16.msra.mxu0 %v6204
      %8937 = vmatprep.subr.bf16.mxu0 0
      %8938 = vmatpush1.bf16.msra.mxu0 %v6205
      %8939 = vmatprep.subr.bf16.mxu0 0
      %8940 = vmatpush1.bf16.msra.mxu0 %v6206
      %8941 = vmatprep.subr.bf16.mxu0 0
      %8942 = vmatpush1.bf16.msra.mxu0 %v6207
      %8943 = vmatprep.subr.bf16.mxu0 0
      %8944 = vmatpush1.bf16.msra.mxu0 %v6208
      %8945 = vmatprep.mubr.bf16.mxu0 %v2190
      %8946 = vmatmul.mubr.bf16.gmra.mrb[0].mxu0 %v2189
      %v8947 = vpop.f32.mrb[0].mxu0
      %v8948 = vadd.f32 %v8908, %v8947
      %v8949 = vpop.f32.mrb[0].mxu0
      %v8950 = vpop.f32.mrb[0].mxu0
      %v8951 = vpop.f32.mrb[0].mxu0
      %8952 = vdwg.mxu0
      %v8953 = vmax.f32 %v8948, 0.0
      %v8954 = vld [vmem:[%s2] sm:$0xff]
      %v8955 = vld [vmem:[%s2 + $0x8] sm:$0xff]
      %v8956 = vld [vmem:[%s2 + $0x10] sm:$0xff]
      %v8957 = vld [vmem:[%s2 + $0x18] sm:$0xff]
      %v8958 = vld [vmem:[%s5] sm:$0x1]
      %v8960 = vlaneseq
      %v8961 = vshrl.u32 %v8960, 7
      %v8962 = vsub.s32 0, %v8961
      %v8963 = vrot.slane %v8958, %v8962
      %vm8965 = vcmask 261120
      %v8967 = vsel %vm8965, %v8953, 0
      %8969 = vmatprep.subr.mxu0 0.0
      %8970 = vmatpush1.msra.mxu0 %v8954
      %8971 = vmatprep.subr.mxu0 0.0
      %8972 = vmatpush1.msra.mxu0 %v8955
      %8973 = vmatprep.subr.mxu0 0.0
      %8974 = vmatpush1.msra.mxu0 %v8956
      %8975 = vmatprep.subr.mxu0 0.0
      %8976 = vmatpush1.msra.mxu0 %v8957
      %8977 = vmatprep.subr.mxu0 0.0
      %8978 = vmatpush1.msra.mxu0 0.0
      %8979 = vmatprep.subr.mxu0 0.0
      %8980 = vmatpush1.msra.mxu0 0.0
      %8981 = vmatprep.subr.mxu0 0.0
      %8982 = vmatpush1.msra.mxu0 0.0
      %8983 = vmatprep.subr.mxu0 0.0
      %8984 = vmatpush1.msra.mxu0 0.0
      %8985 = vmatprep.subr.mxu0 0.0
      %8986 = vmatpush1.msra.mxu0 0.0
      %8987 = vmatprep.subr.mxu0 0.0
      %8988 = vmatpush1.msra.mxu0 0.0
      %8989 = vmatprep.subr.mxu0 0.0
      %8990 = vmatpush1.msra.mxu0 0.0
      %8991 = vmatprep.subr.mxu0 0.0
      %8992 = vmatpush1.msra.mxu0 0.0
      %8993 = vmatprep.subr.mxu0 0.0
      %8994 = vmatpush1.msra.mxu0 0.0
      %8995 = vmatprep.subr.mxu0 0.0
      %8996 = vmatpush1.msra.mxu0 0.0
      %8997 = vmatprep.subr.mxu0 0.0
      %8998 = vmatpush1.msra.mxu0 0.0
      %8999 = vmatprep.subr.mxu0 0.0
      %9000 = vmatpush1.msra.mxu0 0.0
      %9001 = vmatprep.subr.mxu0 0.0
      %9002 = vmatpush1.msra.mxu0 0.0
      %9003 = vmatprep.subr.mxu0 0.0
      %9004 = vmatpush1.msra.mxu0 0.0
      %9005 = vmatprep.subr.mxu0 0.0
      %9006 = vmatpush1.msra.mxu0 0.0
      %9007 = vmatprep.subr.mxu0 0.0
      %9008 = vmatpush1.msra.mxu0 0.0
      %9009 = vmatprep.subr.mxu0 0.0
      %9010 = vmatpush1.msra.mxu0 0.0
      %9011 = vmatprep.subr.mxu0 0.0
      %9012 = vmatpush1.msra.mxu0 0.0
      %9013 = vmatprep.subr.mxu0 0.0
      %9014 = vmatpush1.msra.mxu0 0.0
      %9015 = vmatprep.subr.mxu0 0.0
      %9016 = vmatpush1.msra.mxu0 0.0
      %9017 = vmatprep.subr.mxu0 0.0
      %9018 = vmatpush1.msra.mxu0 0.0
      %9019 = vmatprep.subr.mxu0 0.0
      %9020 = vmatpush1.msra.mxu0 0.0
      %9021 = vmatprep.subr.mxu0 0.0
      %9022 = vmatpush1.msra.mxu0 0.0
      %9023 = vmatprep.subr.mxu0 0.0
      %9024 = vmatpush1.msra.mxu0 0.0
      %9025 = vmatprep.subr.mxu0 0.0
      %9026 = vmatpush1.msra.mxu0 0.0
      %9027 = vmatprep.subr.mxu0 0.0
      %9028 = vmatpush1.msra.mxu0 0.0
      %9029 = vmatprep.subr.mxu0 0.0
      %9030 = vmatpush1.msra.mxu0 0.0
      %9031 = vmatprep.subr.mxu0 0.0
      %9032 = vmatpush1.msra.mxu0 0.0
      %9033 = vmatprep.mubr.f32.mxu0 0.0
      %9034 = vmatmul.mubr.f32.gmra.mrb[0].mxu0 %v8967
      %v9035 = vpop.f32.mrb[0].mxu0
      %v9036 = vadd.f32 %v8963, %v9035
      %v9037 = vpop.f32.mrb[0].mxu0
      %9038 = vdwg.mxu0
      %v9039 = vmax.f32 %v9036, 0.0
      %v9040 = vld [vmem:[%s3] sm:$0xff]
      %v9041 = vld [vmem:[%s3 + $0x8] sm:$0xff]
      %v9042 = vld [vmem:[%s3 + $0x10] sm:$0xff]
      %v9043 = vld [vmem:[%s3 + $0x18] sm:$0xff]
      %v9044 = vld [vmem:[%s6] sm:$0x1]
      %v9046 = vlaneseq
      %v9047 = vshrl.u32 %v9046, 7
      %v9048 = vsub.s32 0, %v9047
      %v9049 = vrot.slane %v9044, %v9048
      %v9052 = vsel %vm8965, %v9039, 0
      %9054 = vmatprep.subr.mxu0 0.0
      %9055 = vmatpush1.msra.mxu0 %v9040
      %9056 = vmatprep.subr.mxu0 0.0
      %9057 = vmatpush1.msra.mxu0 %v9041
      %9058 = vmatprep.subr.mxu0 0.0
      %9059 = vmatpush1.msra.mxu0 %v9042
      %9060 = vmatprep.subr.mxu0 0.0
      %9061 = vmatpush1.msra.mxu0 %v9043
      %9062 = vmatprep.subr.mxu0 0.0
      %9063 = vmatpush1.msra.mxu0 0.0
      %9064 = vmatprep.subr.mxu0 0.0
      %9065 = vmatpush1.msra.mxu0 0.0
      %9066 = vmatprep.subr.mxu0 0.0
      %9067 = vmatpush1.msra.mxu0 0.0
      %9068 = vmatprep.subr.mxu0 0.0
      %9069 = vmatpush1.msra.mxu0 0.0
      %9070 = vmatprep.subr.mxu0 0.0
      %9071 = vmatpush1.msra.mxu0 0.0
      %9072 = vmatprep.subr.mxu0 0.0
      %9073 = vmatpush1.msra.mxu0 0.0
      %9074 = vmatprep.subr.mxu0 0.0
      %9075 = vmatpush1.msra.mxu0 0.0
      %9076 = vmatprep.subr.mxu0 0.0
      %9077 = vmatpush1.msra.mxu0 0.0
      %9078 = vmatprep.subr.mxu0 0.0
      %9079 = vmatpush1.msra.mxu0 0.0
      %9080 = vmatprep.subr.mxu0 0.0
      %9081 = vmatpush1.msra.mxu0 0.0
      %9082 = vmatprep.subr.mxu0 0.0
      %9083 = vmatpush1.msra.mxu0 0.0
      %9084 = vmatprep.subr.mxu0 0.0
      %9085 = vmatpush1.msra.mxu0 0.0
      %9086 = vmatprep.subr.mxu0 0.0
      %9087 = vmatpush1.msra.mxu0 0.0
      %9088 = vmatprep.subr.mxu0 0.0
      %9089 = vmatpush1.msra.mxu0 0.0
      %9090 = vmatprep.subr.mxu0 0.0
      %9091 = vmatpush1.msra.mxu0 0.0
      %9092 = vmatprep.subr.mxu0 0.0
      %9093 = vmatpush1.msra.mxu0 0.0
      %9094 = vmatprep.subr.mxu0 0.0
      %9095 = vmatpush1.msra.mxu0 0.0
      %9096 = vmatprep.subr.mxu0 0.0
      %9097 = vmatpush1.msra.mxu0 0.0
      %9098 = vmatprep.subr.mxu0 0.0
      %9099 = vmatpush1.msra.mxu0 0.0
      %9100 = vmatprep.subr.mxu0 0.0
      %9101 = vmatpush1.msra.mxu0 0.0
      %9102 = vmatprep.subr.mxu0 0.0
      %9103 = vmatpush1.msra.mxu0 0.0
      %9104 = vmatprep.subr.mxu0 0.0
      %9105 = vmatpush1.msra.mxu0 0.0
      %9106 = vmatprep.subr.mxu0 0.0
      %9107 = vmatpush1.msra.mxu0 0.0
      %9108 = vmatprep.subr.mxu0 0.0
      %9109 = vmatpush1.msra.mxu0 0.0
      %9110 = vmatprep.subr.mxu0 0.0
      %9111 = vmatpush1.msra.mxu0 0.0
      %9112 = vmatprep.subr.mxu0 0.0
      %9113 = vmatpush1.msra.mxu0 0.0
      %9114 = vmatprep.subr.mxu0 0.0
      %9115 = vmatpush1.msra.mxu0 0.0
      %9116 = vmatprep.subr.mxu0 0.0
      %9117 = vmatpush1.msra.mxu0 0.0
      %9118 = vmatprep.mubr.f32.mxu0 0.0
      %9119 = vmatmul.mubr.f32.gmra.mrb[0].mxu0 %v9052
      %v9120 = vpop.f32.mrb[0].mxu0
      %v9121 = vadd.f32 %v9049, %v9120
      %v9122 = vpop.f32.mrb[0].mxu0
      %9123 = vdwg.mxu0
      %vm9124 = vcmask 23552
      %v9125 = vsel %vm9124, %v9121, -inf
      %9126 = vmax.xlane.f32.xlu0 %v9125
      %v9127 = vpop.xlane.xlu0 %9126
      %v9128 = vsub.f32 %v9121, %v9127
      %v9129 = vmul.f32 %v9128, 1.442695
      %v9130 = vpow.pop %v9129
      %v9131 = vsel %vm9124, %v9130, 0.0
      %9132 = vadd.xlane.f32.xlu0 %v9131
      %v9133 = vpop.xlane.xlu0 %9132
      %v9134 = vrcp.pop %v9133
      %v9135 = vmul.f32 %v9130, %v9134
      %v9136 = vld [vmem:[%s316] sm:$0xff]
      %9138 = vrot.lane.b32.xlu0 %v9136, 2
      %v9139 = vpop.permute.xlu0 %9138
      %v9141 = vsub.f32 %v9136, %v9139
      %v9142 = vmul.f32 %v9141, 0.5
      %9144 = vrot.lane.b32.xlu0 %v9142, 126
      %v9145 = vpop.permute.xlu0 %9144
      %v9147 = vadd.f32 %v9136, %v9145
      %v9148 = vmul.f32 %v9121, 0.1
      %v9149 = vmul.f32 %v9121, 0.2
      %v9150 = vmin.f32 %v9149, 4.1351666
      %9152 = vset.pattern.permute.xlu0 2
      %9153 = vperm.xlu0 %9152, %v9141
      %v9154 = vpop.permute.xlu0 %9153
      %v9156 = vmul.f32 %v9148, %v9154
      %9158 = vset.pattern.permute.xlu0 0
      %9159 = vperm.xlu0 %9158, %v9147
      %v9160 = vpop.permute.xlu0 %9159
      %v9162 = vadd.f32 %v9156, %v9160
      %9163 = vset.pattern.permute.xlu0 3
      %9164 = vperm.xlu0 %9163, %v9141
      %v9165 = vpop.permute.xlu0 %9164
      %v9167 = vmul.f32 %v9148, %v9165
      %9168 = vset.pattern.permute.xlu0 1
      %9169 = vperm.xlu0 %9168, %v9147
      %v9170 = vpop.permute.xlu0 %9169
      %v9172 = vadd.f32 %v9167, %v9170
      %v9173 = vmul.f32 %v9150, 1.442695
      %v9174 = vpow.pop %v9173
      %v9175 = vmul.f32 %v9174, %v9154
      %v9176 = vmul.f32 %v9174, %v9165
      %v9177 = vmul.f32 %v9175, 0.5
      %9179 = vrot.lane.b32.xlu0 %v9177, 122
      %v9180 = vpop.permute.xlu0 %9179
      %v9182 = vsub.f32 %v9162, %v9180
      %v9183 = vmax.f32 %v9182, 0.0
      %v9184 = vmin.f32 %v9183, 32.0
      %v9185 = vmul.f32 %v9176, 0.5
      %9187 = vrot.lane.b32.xlu0 %v9185, 122
      %v9188 = vpop.permute.xlu0 %9187
      %v9190 = vsub.f32 %v9172, %v9188
      %v9191 = vmax.f32 %v9190, 0.0
      %v9192 = vmin.f32 %v9191, 32.0
      %v9193 = vadd.f32 %v9162, %v9180
      %v9194 = vmax.f32 %v9193, 0.0
      %v9195 = vmin.f32 %v9194, 32.0
      %v9196 = vadd.f32 %v9172, %v9188
      %v9197 = vmax.f32 %v9196, 0.0
      %v9198 = vmin.f32 %v9197, 32.0
      %vm9199 = vcmp.ge.f32.partialorder %v9135, 0.1
      %v9200 = vsub.f32 %v9195, %v9184
      %vm9201 = vcmp.ge.f32.partialorder %v9200, 1.0
      %v9202 = vsel %vm9201, 1, 0
      %9203 = vrot.lane.b32.xlu0 %v9202, 125
      %v9204 = vpop.permute.xlu0 %9203
      %vm9205 = vcmp.ne.s32.totalorder %v9204, 0
      %vm9206 = vmand %vm9199, %vm9205
      %v9207 = vsub.f32 %v9198, %v9192
      %vm9208 = vcmp.ge.f32.partialorder %v9207, 1.0
      %v9209 = vsel %vm9208, 1, 0
      %9210 = vrot.lane.b32.xlu0 %v9209, 122
      %v9211 = vpop.permute.xlu0 %9210
      %vm9212 = vcmp.ne.s32.totalorder %v9211, 0
      %vm9213 = vmand %vm9206, %vm9212
      %v9214 = vsel %vm9213, %v9135, -inf
      %9216 = vrot.lane.b32.xlu0 %v9195, 6
      %v9217 = vpop.permute.xlu0 %9216
      %9220 = vrot.lane.b32.xlu0 %v9198, 6
      %v9221 = vpop.permute.xlu0 %9220
      %v9223 = vsel %vm9124, %v9214, %v9184
      %vm9224 = vcmask 48128
      %v9225 = vsel %vm9224, %v9223, %v9192
      %vm9226 = vcmask 72704
      %v9227 = vsel %vm9226, %v9225, %v9217
      %vm9228 = vcmask 97280
      %v9229 = vsel %vm9228, %v9227, %v9221
      %vm9230 = vcmask 121856
      %v9231 = vsel %vm9230, %v9229, 0.0
      %9232 = vst [vmem:[%s320] sm:$0xff] %v9231
      %p9233 = scmp.lt.s32.totalorder %s19, 1
      %s9234 = scalar_select %p9233, %s19, 1
      %s9235 = smul.addr %s9234, 8
      %s9236 = scalar_lea.vmem %s8, %s9235
      // Predicated region
      $region53: #{roi_heads_forward.1} parent=51 // pred_check
        %p9237 = pneg %p215
      $region54: #{roi_heads_forward.1} parent=51 // pred_check_branch
        %9239 = sbr.rel (%p9237) target = $region56
      $region55: #{roi_heads_forward.1} parent=51 // pred_region
        _
      $region56: #{roi_heads_forward.1} parent=51 // pred_fallthru
        _
    $region52: #{roi_heads_forward.1} parent=5 // pred_fallthru
      _
    %p9240 = scmp.le.s32.totalorder 2, %s14
    // Predicated region
    $region57: #{roi_heads_forward.1} parent=5 // pred_check
      %p9241 = pneg %p9240
    $region58: #{roi_heads_forward.1} parent=5 // pred_check_branch
      %9243 = sbr.rel (%p9241) target = $region60
    $region59: #{roi_heads_forward.1} parent=5 // pred_region
      %s9244 = ssub.s32 %s14, 2
      // Predicated region
      $region61: #{roi_heads_forward.1} parent=59 // pred_check
        %p9245 = pneg %p221
      $region62: #{roi_heads_forward.1} parent=59 // pred_check_branch
        %9247 = sbr.rel (%p9245) target = $region64
      $region63: #{roi_heads_forward.1} parent=59 // pred_region
        %p9248 = scmp.lt.s32.totalorder %s20, 1
        %s9249 = scalar_select %p9248, %s20, 1
        %s9250 = smul.addr %s9249, 8
        %s9251 = scalar_lea.vmem %s8, %s9250
      $region64: #{roi_heads_forward.1} parent=59 // pred_fallthru
        _
    $region60: #{roi_heads_forward.1} parent=5 // pred_fallthru
      _
  $region6: #{roi_heads_forward.1} parent=0 // loop_footer
    %s18 = sadd.s32 1, %s14
  $region7: #{roi_heads_forward.1} parent=0 // loop_footer_branch
    %13 = sbr.rel target = $region3
  $region8: #{roi_heads_forward.1} parent=0 // loop_exit
    _

</llo_original>
